<compile_context>
chip_gen: v7x
topology: tpu7x:2x2x1
jax: 0.10.0
libtpu: 0.0.40
codegen_flags: <defaults>
</compile_context>

<pallas_src>
import jax
import jax.numpy as jnp
from jax.experimental import pallas as pl
from jax.experimental.pallas import tpu as pltpu

_H4_PAD = 128  # layer-4 output width padded 64 -> 128 (lane-dense)


def _round_up(x: int, m: int) -> int:
    return ((x + m - 1) // m) * m


def _device_kind() -> str:
    try:
        return jax.devices()[0].device_kind.lower()
    except Exception:
        return ""


def _mlp_kernel(x_ref,
                w1_ref, b1_ref,
                w2_ref, b2_ref,
                w3_ref, b3_ref,
                w4_ref, b4_ref,
                wo_ref, bo_ref,
                out_ref):
    wdt = w1_ref.dtype  # bf16 weights; matmul inputs bf16, accumulation f32

    # layer 1 (folded Linear+BN) -> fused bias + ReLU -> bf16 (halves activation spill)
    h = jnp.dot(x_ref[...].astype(wdt), w1_ref[...], preferred_element_type=jnp.float32)
    h = jnp.maximum(h + b1_ref[...], 0.0).astype(wdt)
    # layer 2 (Dropout: identity in eval)
    h = jnp.dot(h, w2_ref[...], preferred_element_type=jnp.float32)
    h = jnp.maximum(h + b2_ref[...], 0.0).astype(wdt)
    # layer 3
    h = jnp.dot(h, w3_ref[...], preferred_element_type=jnp.float32)
    h = jnp.maximum(h + b3_ref[...], 0.0).astype(wdt)
    # layer 4 (output width zero-padded to 128 at build time -> lane-dense)
    h = jnp.dot(h, w4_ref[...], preferred_element_type=jnp.float32)
    h = jnp.maximum(h + b4_ref[...], 0.0).astype(wdt)
    # output layer (lane-dense padded class width -> unmasked vst)
    out_ref[...] = (jnp.dot(h, wo_ref[...], preferred_element_type=jnp.float32)
                    + bo_ref[...]).astype(out_ref.dtype)


def _build_call(TB, Bp, F, n_pad, params, vmem_limit, single_buffer_weights):
    x_spec = pl.BlockSpec((TB, F), lambda i: (i, 0))
    out_spec = pl.BlockSpec((TB, n_pad), lambda i: (i, 0))
    # Weights/biases: full-array blocks, constant index -> VMEM-resident across grid steps.
    if single_buffer_weights:
        param_specs = [pl.BlockSpec(p.shape, lambda i: (0, 0),
                                    pipeline_mode=pl.Buffered(1))
                       for p in params]
    else:
        param_specs = [pl.BlockSpec(p.shape, lambda i: (0, 0)) for p in params]

    flops = 2 * Bp * (F * 2048 + 2048 * 512 + 512 * 256 + 256 * _H4_PAD + _H4_PAD * n_pad)
    bytes_accessed = (sum(int(p.size) * p.dtype.itemsize for p in params)
                      + Bp * F * 4 + Bp * n_pad * 4)

    return pl.pallas_call(
        _mlp_kernel,
        out_shape=jax.ShapeDtypeStruct((Bp, n_pad), jnp.float32),
        grid=(Bp // TB,),
        in_specs=[x_spec] + param_specs,
        out_specs=out_spec,
        compiler_params=pltpu.CompilerParams(
            dimension_semantics=("parallel",),
            vmem_limit_bytes=vmem_limit,
        ),
        cost_estimate=pl.CostEstimate(
            flops=flops, transcendentals=0, bytes_accessed=bytes_accessed),
    )


def mlp_forward(x, params, n_classes, *, batch_tile=None):
    """x: (B, n_features) f32. params: flat tuple (w1,b1,...,w4,b4,wo_pad,bo_pad)."""
    B, F = x.shape
    n_pad = params[-1].shape[-1]          # lane-dense padded class dim
    kind = _device_kind()

    # Generation-aware batch tile:
    #   v6e: up to 1024 (128 MiB physical VMEM, raised scoped limit)
    #   v5e: 512 (single vst slot; keep MXU the binding unit)
    #   v7x: 512 (64 MiB VMEM/TC) and force grid >= 2 for B >= 32 so both TCs get work.
    if batch_tile is None:
        if "v7" in kind:
            batch_tile = 512
        elif "v6" in kind:
            batch_tile = 1024
        else:
            batch_tile = 512
    TB = min(batch_tile, _round_up(B, 16))
    if "v7" in kind and B >= 32:
        TB = min(TB, _round_up((B + 1) // 2, 16))

    Bp = _round_up(B, TB)
    if Bp != B:
        x = jnp.pad(x, ((0, Bp - B), (0, 0)))

    if "v7" in kind:
        vmem_limit = 48 << 20             # stay well under v7x's 64 MiB per-TC VMEM
    elif TB >= 1024:
        vmem_limit = 96 << 20             # v5e/v6e have 128 MiB physical
    else:
        vmem_limit = 64 << 20

    try:
        out = _build_call(TB, Bp, F, n_pad, params, vmem_limit, True)(x, *params)
    except Exception:
        # Fallback if single-buffered (pl.Buffered(1)) resident weights are unsupported.
        out = _build_call(TB, Bp, F, n_pad, params, vmem_limit, False)(x, *params)
    return out[:B, :n_classes]


def _init_linear(key, in_f, out_f):
    # PyTorch nn.Linear default init: U(-1/sqrt(in_f), 1/sqrt(in_f)) for W and b.
    kw, kb = jax.random.split(key)
    bound = 1.0 / (in_f ** 0.5)
    w_torch = jax.random.uniform(kw, (out_f, in_f), jnp.float32, -bound, bound)
    b = jax.random.uniform(kb, (out_f,), jnp.float32, -bound, bound)
    return w_torch.T, b  # stored as (in, out) for x @ W


def _init_bn(key, n, eps=1e-5):
    # Non-trivial gamma/beta; running_mean=0, running_var=1 (fresh BN, eval mode).
    kg, kb = jax.random.split(key)
    gamma = 1.0 + 0.1 * jax.random.normal(kg, (n,), jnp.float32)
    beta = 0.1 * jax.random.normal(kb, (n,), jnp.float32)
    running_mean = jnp.zeros((n,), jnp.float32)
    running_var = jnp.ones((n,), jnp.float32)
    scale = gamma / jnp.sqrt(running_var + eps)
    shift = beta - running_mean * scale
    return scale, shift


def build_params(key, n_features, n_classes, *, weight_dtype=jnp.bfloat16, lane=128):
    """BN-folded, bf16-weight params; layer-4 width padded to 128, classes padded to 128*k."""
    keys = jax.random.split(key, 9)
    dims = [(n_features, 2048), (2048, 512), (512, 256), (256, 64)]
    params = []
    for i, (din, dout) in enumerate(dims):
        w, b = _init_linear(keys[2 * i], din, dout)
        s, t = _init_bn(keys[2 * i + 1], dout)
        # Fold BN(eval) into Linear:  (xW + b)*s + t == x(W*s) + (b*s + t)
        w_f = w * s[None, :]
        b_f = b * s + t
        if i == len(dims) - 1 and dout < _H4_PAD:
            # Zero-pad layer-4 output width 64 -> 128: padded cols give ReLU(0)=0.
            w_f = jnp.zeros((din, _H4_PAD), jnp.float32).at[:, :dout].set(w_f)
            b_f = jnp.zeros((_H4_PAD,), jnp.float32).at[:dout].set(b_f)
            dout = _H4_PAD
        params += [w_f.astype(weight_dtype), b_f.reshape(1, dout).astype(jnp.float32)]
    wo, bo = _init_linear(keys[8], 64, n_classes)
    n_pad = _round_up(n_classes, lane)
    # Zero-pad K 64 -> 128 (matches padded h4; zero rows contribute nothing) and N to n_pad.
    wo_p = (jnp.zeros((_H4_PAD, n_pad), jnp.float32)
            .at[:64, :n_classes].set(wo).astype(weight_dtype))
    bo_p = jnp.zeros((1, n_pad), jnp.float32).at[:, :n_classes].set(bo)
    params += [wo_p, bo_p]
    return tuple(params)


def reference_forward(x, params, n_classes):
    """Pure-JAX reference with the same precision scheme (bf16 matmul inputs, f32 accumulate)."""
    (w1, b1, w2, b2, w3, b3, w4, b4, wo, bo) = params
    h = x.astype(w1.dtype)
    for w, b in ((w1, b1), (w2, b2), (w3, b3), (w4, b4)):
        h = jnp.dot(h, w, preferred_element_type=jnp.float32) + b
        h = jnp.maximum(h, 0.0).astype(w.dtype)
    out = jnp.dot(h, wo, preferred_element_type=jnp.float32) + bo
    return out[:, :n_classes]


if __name__ == "__main__":
    n_features = 32
    n_classes = 4
    batch = 16

    key = jax.random.PRNGKey(0)
    kx, kp = jax.random.split(key)
    x = jax.random.normal(kx, (batch, n_features), jnp.float32)
    params = build_params(kp, n_features, n_classes)

    out = mlp_forward(x, params, n_classes)
    out = jax.block_until_ready(out)

    ref = reference_forward(x, params, n_classes)
    assert out.shape == (batch, n_classes)
    assert jnp.allclose(out, ref, atol=1e-2, rtol=1e-2), "mismatch vs pure-JAX reference"

    print("KERNEL_OK")
</pallas_src>

<mosaic_0001>
module attributes {stable_mosaic.version = 11 : i64} {
  func.func @_mlp_kernel(%arg0: i32, %arg1: memref<16x32xf32, #tpu.memory_space<vmem>>, %arg2: memref<32x2048xbf16, #tpu.memory_space<vmem>>, %arg3: memref<1x2048xf32, #tpu.memory_space<vmem>>, %arg4: memref<2048x512xbf16, #tpu.memory_space<vmem>>, %arg5: memref<1x512xf32, #tpu.memory_space<vmem>>, %arg6: memref<512x256xbf16, #tpu.memory_space<vmem>>, %arg7: memref<1x256xf32, #tpu.memory_space<vmem>>, %arg8: memref<256x128xbf16, #tpu.memory_space<vmem>>, %arg9: memref<1x128xf32, #tpu.memory_space<vmem>>, %arg10: memref<128x128xbf16, #tpu.memory_space<vmem>>, %arg11: memref<1x128xf32, #tpu.memory_space<vmem>>, %arg12: memref<16x128xf32, #tpu.memory_space<vmem>>) attributes {dimension_semantics = [#tpu.dimension_semantics<parallel>], iteration_bounds = array<i64: 1>, scalar_prefetch = 0 : i64, scratch_operands = 0 : i64, tpu.core_type = #tpu.core_type<tc>, window_params = [{transform_indices = @transform_0, window_bounds = array<i64: 16, 32>}, {pipeline_mode = #tpu.pipeline_mode<synchronous>, transform_indices = @transform_1, window_bounds = array<i64: 32, 2048>}, {pipeline_mode = #tpu.pipeline_mode<synchronous>, transform_indices = @transform_2, window_bounds = array<i64: 1, 2048>}, {pipeline_mode = #tpu.pipeline_mode<synchronous>, transform_indices = @transform_3, window_bounds = array<i64: 2048, 512>}, {pipeline_mode = #tpu.pipeline_mode<synchronous>, transform_indices = @transform_4, window_bounds = array<i64: 1, 512>}, {pipeline_mode = #tpu.pipeline_mode<synchronous>, transform_indices = @transform_5, window_bounds = array<i64: 512, 256>}, {pipeline_mode = #tpu.pipeline_mode<synchronous>, transform_indices = @transform_6, window_bounds = array<i64: 1, 256>}, {pipeline_mode = #tpu.pipeline_mode<synchronous>, transform_indices = @transform_7, window_bounds = array<i64: 256, 128>}, {pipeline_mode = #tpu.pipeline_mode<synchronous>, transform_indices = @transform_8, window_bounds = array<i64: 1, 128>}, {pipeline_mode = #tpu.pipeline_mode<synchronous>, transform_indices = @transform_9, window_bounds = array<i64: 128, 128>}, {pipeline_mode = #tpu.pipeline_mode<synchronous>, transform_indices = @transform_10, window_bounds = array<i64: 1, 128>}, {transform_indices = @transform_11, window_bounds = array<i64: 16, 128>}]} {
    %c0 = arith.constant 0 : index
    %c0_0 = arith.constant 0 : index
    %0 = vector.load %arg1[%c0, %c0_0] : memref<16x32xf32, #tpu.memory_space<vmem>>, vector<16x32xf32>
    %1 = arith.truncf %0 : vector<16x32xf32> to vector<16x32xbf16>
    %c0_1 = arith.constant 0 : index
    %c0_2 = arith.constant 0 : index
    %2 = vector.load %arg2[%c0_1, %c0_2] : memref<32x2048xbf16, #tpu.memory_space<vmem>>, vector<32x2048xbf16>
    %cst = arith.constant dense<0.000000e+00> : vector<16x2048xf32>
    %3 = tpu.matmul %1, %2, %cst {dimension_numbers = #tpu.dot_dimension_numbers<[1], [0], [0], [1], [0, 0, 1, 1], [], []>} : vector<16x32xbf16>, vector<32x2048xbf16>, vector<16x2048xf32> -> vector<16x2048xf32>
    %c0_3 = arith.constant 0 : index
    %c0_4 = arith.constant 0 : index
    %4 = vector.load %arg3[%c0_3, %c0_4] : memref<1x2048xf32, #tpu.memory_space<vmem>>, vector<1x2048xf32>
    %5 = vector.broadcast %4 : vector<1x2048xf32> to vector<16x2048xf32>
    %6 = arith.addf %3, %5 : vector<16x2048xf32>
    %cst_5 = arith.constant 0.000000e+00 : f32
    %7 = vector.broadcast %cst_5 : f32 to vector<16x2048xf32>
    %8 = arith.maximumf %6, %7 : vector<16x2048xf32>
    %9 = arith.truncf %8 : vector<16x2048xf32> to vector<16x2048xbf16>
    %c0_6 = arith.constant 0 : index
    %c0_7 = arith.constant 0 : index
    %10 = vector.load %arg4[%c0_6, %c0_7] : memref<2048x512xbf16, #tpu.memory_space<vmem>>, vector<2048x512xbf16>
    %cst_8 = arith.constant dense<0.000000e+00> : vector<16x512xf32>
    %11 = tpu.matmul %9, %10, %cst_8 {dimension_numbers = #tpu.dot_dimension_numbers<[1], [0], [0], [1], [0, 0, 1, 1], [], []>} : vector<16x2048xbf16>, vector<2048x512xbf16>, vector<16x512xf32> -> vector<16x512xf32>
    %c0_9 = arith.constant 0 : index
    %c0_10 = arith.constant 0 : index
    %12 = vector.load %arg5[%c0_9, %c0_10] : memref<1x512xf32, #tpu.memory_space<vmem>>, vector<1x512xf32>
    %13 = vector.broadcast %12 : vector<1x512xf32> to vector<16x512xf32>
    %14 = arith.addf %11, %13 : vector<16x512xf32>
    %cst_11 = arith.constant 0.000000e+00 : f32
    %15 = vector.broadcast %cst_11 : f32 to vector<16x512xf32>
    %16 = arith.maximumf %14, %15 : vector<16x512xf32>
    %17 = arith.truncf %16 : vector<16x512xf32> to vector<16x512xbf16>
    %c0_12 = arith.constant 0 : index
    %c0_13 = arith.constant 0 : index
    %18 = vector.load %arg6[%c0_12, %c0_13] : memref<512x256xbf16, #tpu.memory_space<vmem>>, vector<512x256xbf16>
    %cst_14 = arith.constant dense<0.000000e+00> : vector<16x256xf32>
    %19 = tpu.matmul %17, %18, %cst_14 {dimension_numbers = #tpu.dot_dimension_numbers<[1], [0], [0], [1], [0, 0, 1, 1], [], []>} : vector<16x512xbf16>, vector<512x256xbf16>, vector<16x256xf32> -> vector<16x256xf32>
    %c0_15 = arith.constant 0 : index
    %c0_16 = arith.constant 0 : index
    %20 = vector.load %arg7[%c0_15, %c0_16] : memref<1x256xf32, #tpu.memory_space<vmem>>, vector<1x256xf32>
    %21 = vector.broadcast %20 : vector<1x256xf32> to vector<16x256xf32>
    %22 = arith.addf %19, %21 : vector<16x256xf32>
    %cst_17 = arith.constant 0.000000e+00 : f32
    %23 = vector.broadcast %cst_17 : f32 to vector<16x256xf32>
    %24 = arith.maximumf %22, %23 : vector<16x256xf32>
    %25 = arith.truncf %24 : vector<16x256xf32> to vector<16x256xbf16>
    %c0_18 = arith.constant 0 : index
    %c0_19 = arith.constant 0 : index
    %26 = vector.load %arg8[%c0_18, %c0_19] : memref<256x128xbf16, #tpu.memory_space<vmem>>, vector<256x128xbf16>
    %cst_20 = arith.constant dense<0.000000e+00> : vector<16x128xf32>
    %27 = tpu.matmul %25, %26, %cst_20 {dimension_numbers = #tpu.dot_dimension_numbers<[1], [0], [0], [1], [0, 0, 1, 1], [], []>} : vector<16x256xbf16>, vector<256x128xbf16>, vector<16x128xf32> -> vector<16x128xf32>
    %c0_21 = arith.constant 0 : index
    %c0_22 = arith.constant 0 : index
    %28 = vector.load %arg9[%c0_21, %c0_22] : memref<1x128xf32, #tpu.memory_space<vmem>>, vector<1x128xf32>
    %29 = vector.broadcast %28 : vector<1x128xf32> to vector<16x128xf32>
    %30 = arith.addf %27, %29 : vector<16x128xf32>
    %cst_23 = arith.constant 0.000000e+00 : f32
    %31 = vector.broadcast %cst_23 : f32 to vector<16x128xf32>
    %32 = arith.maximumf %30, %31 : vector<16x128xf32>
    %33 = arith.truncf %32 : vector<16x128xf32> to vector<16x128xbf16>
    %c0_24 = arith.constant 0 : index
    %c0_25 = arith.constant 0 : index
    %34 = vector.load %arg10[%c0_24, %c0_25] : memref<128x128xbf16, #tpu.memory_space<vmem>>, vector<128x128xbf16>
    %cst_26 = arith.constant dense<0.000000e+00> : vector<16x128xf32>
    %35 = tpu.matmul %33, %34, %cst_26 {dimension_numbers = #tpu.dot_dimension_numbers<[1], [0], [0], [1], [0, 0, 1, 1], [], []>} : vector<16x128xbf16>, vector<128x128xbf16>, vector<16x128xf32> -> vector<16x128xf32>
    %c0_27 = arith.constant 0 : index
    %c0_28 = arith.constant 0 : index
    %36 = vector.load %arg11[%c0_27, %c0_28] : memref<1x128xf32, #tpu.memory_space<vmem>>, vector<1x128xf32>
    %37 = vector.broadcast %36 : vector<1x128xf32> to vector<16x128xf32>
    %38 = arith.addf %35, %37 : vector<16x128xf32>
    %c0_29 = arith.constant 0 : index
    %c0_30 = arith.constant 0 : index
    %39 = vector.load %arg12[%c0_29, %c0_30] : memref<16x128xf32, #tpu.memory_space<vmem>>, vector<16x128xf32>
    tpu.vector_store %arg12[%c0_29, %c0_30], %38 {strides = array<i32>} : memref<16x128xf32, #tpu.memory_space<vmem>>, vector<16x128xf32>,
    return
  }
  func.func @transform_0(%arg0: i32) -> (i32, i32) {
    %c0_i32 = arith.constant 0 : i32
    %c0_i32_0 = arith.constant 0 : i32
    return %arg0, %c0_i32 : i32, i32
  }
  func.func @transform_1(%arg0: i32) -> (i32, i32) {
    %c0_i32 = arith.constant 0 : i32
    %c0_i32_0 = arith.constant 0 : i32
    %c0_i32_1 = arith.constant 0 : i32
    return %c0_i32, %c0_i32_0 : i32, i32
  }
  func.func @transform_2(%arg0: i32) -> (i32, i32) {
    %c0_i32 = arith.constant 0 : i32
    %c0_i32_0 = arith.constant 0 : i32
    %c0_i32_1 = arith.constant 0 : i32
    return %c0_i32, %c0_i32_0 : i32, i32
  }
  func.func @transform_3(%arg0: i32) -> (i32, i32) {
    %c0_i32 = arith.constant 0 : i32
    %c0_i32_0 = arith.constant 0 : i32
    %c0_i32_1 = arith.constant 0 : i32
    return %c0_i32, %c0_i32_0 : i32, i32
  }
  func.func @transform_4(%arg0: i32) -> (i32, i32) {
    %c0_i32 = arith.constant 0 : i32
    %c0_i32_0 = arith.constant 0 : i32
    %c0_i32_1 = arith.constant 0 : i32
    return %c0_i32, %c0_i32_0 : i32, i32
  }
  func.func @transform_5(%arg0: i32) -> (i32, i32) {
    %c0_i32 = arith.constant 0 : i32
    %c0_i32_0 = arith.constant 0 : i32
    %c0_i32_1 = arith.constant 0 : i32
    return %c0_i32, %c0_i32_0 : i32, i32
  }
  func.func @transform_6(%arg0: i32) -> (i32, i32) {
    %c0_i32 = arith.constant 0 : i32
    %c0_i32_0 = arith.constant 0 : i32
    %c0_i32_1 = arith.constant 0 : i32
    return %c0_i32, %c0_i32_0 : i32, i32
  }
  func.func @transform_7(%arg0: i32) -> (i32, i32) {
    %c0_i32 = arith.constant 0 : i32
    %c0_i32_0 = arith.constant 0 : i32
    %c0_i32_1 = arith.constant 0 : i32
    return %c0_i32, %c0_i32_0 : i32, i32
  }
  func.func @transform_8(%arg0: i32) -> (i32, i32) {
    %c0_i32 = arith.constant 0 : i32
    %c0_i32_0 = arith.constant 0 : i32
    %c0_i32_1 = arith.constant 0 : i32
    return %c0_i32, %c0_i32_0 : i32, i32
  }
  func.func @transform_9(%arg0: i32) -> (i32, i32) {
    %c0_i32 = arith.constant 0 : i32
    %c0_i32_0 = arith.constant 0 : i32
    %c0_i32_1 = arith.constant 0 : i32
    return %c0_i32, %c0_i32_0 : i32, i32
  }
  func.func @transform_10(%arg0: i32) -> (i32, i32) {
    %c0_i32 = arith.constant 0 : i32
    %c0_i32_0 = arith.constant 0 : i32
    %c0_i32_1 = arith.constant 0 : i32
    return %c0_i32, %c0_i32_0 : i32, i32
  }
  func.func @transform_11(%arg0: i32) -> (i32, i32) {
    %c0_i32 = arith.constant 0 : i32
    %c0_i32_0 = arith.constant 0 : i32
    return %arg0, %c0_i32 : i32, i32
  }
}

module attributes {stable_mosaic.version = 11 : i64} {
  func.func @_mlp_kernel(%arg0: i32, %arg1: memref<16x32xf32, #tpu.memory_space<vmem>>, %arg2: memref<32x2048xbf16, #tpu.memory_space<vmem>>, %arg3: memref<1x2048xf32, #tpu.memory_space<vmem>>, %arg4: memref<2048x512xbf16, #tpu.memory_space<vmem>>, %arg5: memref<1x512xf32, #tpu.memory_space<vmem>>, %arg6: memref<512x256xbf16, #tpu.memory_space<vmem>>, %arg7: memref<1x256xf32, #tpu.memory_space<vmem>>, %arg8: memref<256x128xbf16, #tpu.memory_space<vmem>>, %arg9: memref<1x128xf32, #tpu.memory_space<vmem>>, %arg10: memref<128x128xbf16, #tpu.memory_space<vmem>>, %arg11: memref<1x128xf32, #tpu.memory_space<vmem>>, %arg12: memref<16x128xf32, #tpu.memory_space<vmem>>) attributes {dimension_semantics = [#tpu.dimension_semantics<parallel>], iteration_bounds = array<i64: 1>, scalar_prefetch = 0 : i64, scratch_operands = 0 : i64, tpu.core_type = #tpu.core_type<tc>, window_params = [{transform_indices = @transform_0, window_bounds = array<i64: 16, 32>}, {pipeline_mode = #tpu.pipeline_mode<synchronous>, transform_indices = @transform_1, window_bounds = array<i64: 32, 2048>}, {pipeline_mode = #tpu.pipeline_mode<synchronous>, transform_indices = @transform_2, window_bounds = array<i64: 1, 2048>}, {pipeline_mode = #tpu.pipeline_mode<synchronous>, transform_indices = @transform_3, window_bounds = array<i64: 2048, 512>}, {pipeline_mode = #tpu.pipeline_mode<synchronous>, transform_indices = @transform_4, window_bounds = array<i64: 1, 512>}, {pipeline_mode = #tpu.pipeline_mode<synchronous>, transform_indices = @transform_5, window_bounds = array<i64: 512, 256>}, {pipeline_mode = #tpu.pipeline_mode<synchronous>, transform_indices = @transform_6, window_bounds = array<i64: 1, 256>}, {pipeline_mode = #tpu.pipeline_mode<synchronous>, transform_indices = @transform_7, window_bounds = array<i64: 256, 128>}, {pipeline_mode = #tpu.pipeline_mode<synchronous>, transform_indices = @transform_8, window_bounds = array<i64: 1, 128>}, {pipeline_mode = #tpu.pipeline_mode<synchronous>, transform_indices = @transform_9, window_bounds = array<i64: 128, 128>}, {pipeline_mode = #tpu.pipeline_mode<synchronous>, transform_indices = @transform_10, window_bounds = array<i64: 1, 128>}, {transform_indices = @transform_11, window_bounds = array<i64: 16, 128>}]} {
    %c0 = arith.constant 0 : index
    %c0_0 = arith.constant 0 : index
    %0 = vector.load %arg1[%c0, %c0_0] : memref<16x32xf32, #tpu.memory_space<vmem>>, vector<16x32xf32>
    %1 = arith.truncf %0 : vector<16x32xf32> to vector<16x32xbf16>
    %c0_1 = arith.constant 0 : index
    %c0_2 = arith.constant 0 : index
    %2 = vector.load %arg2[%c0_1, %c0_2] : memref<32x2048xbf16, #tpu.memory_space<vmem>>, vector<32x2048xbf16>
    %cst = arith.constant dense<0.000000e+00> : vector<16x2048xf32>
    %3 = tpu.matmul %1, %2, %cst {dimension_numbers = #tpu.dot_dimension_numbers<[1], [0], [0], [1], [0, 0, 1, 1], [], []>} : vector<16x32xbf16>, vector<32x2048xbf16>, vector<16x2048xf32> -> vector<16x2048xf32>
    %c0_3 = arith.constant 0 : index
    %c0_4 = arith.constant 0 : index
    %4 = vector.load %arg3[%c0_3, %c0_4] : memref<1x2048xf32, #tpu.memory_space<vmem>>, vector<1x2048xf32>
    %5 = vector.broadcast %4 : vector<1x2048xf32> to vector<16x2048xf32>
    %6 = arith.addf %3, %5 : vector<16x2048xf32>
    %cst_5 = arith.constant 0.000000e+00 : f32
    %7 = vector.broadcast %cst_5 : f32 to vector<16x2048xf32>
    %8 = arith.maximumf %6, %7 : vector<16x2048xf32>
    %9 = arith.truncf %8 : vector<16x2048xf32> to vector<16x2048xbf16>
    %c0_6 = arith.constant 0 : index
    %c0_7 = arith.constant 0 : index
    %10 = vector.load %arg4[%c0_6, %c0_7] : memref<2048x512xbf16, #tpu.memory_space<vmem>>, vector<2048x512xbf16>
    %cst_8 = arith.constant dense<0.000000e+00> : vector<16x512xf32>
    %11 = tpu.matmul %9, %10, %cst_8 {dimension_numbers = #tpu.dot_dimension_numbers<[1], [0], [0], [1], [0, 0, 1, 1], [], []>} : vector<16x2048xbf16>, vector<2048x512xbf16>, vector<16x512xf32> -> vector<16x512xf32>
    %c0_9 = arith.constant 0 : index
    %c0_10 = arith.constant 0 : index
    %12 = vector.load %arg5[%c0_9, %c0_10] : memref<1x512xf32, #tpu.memory_space<vmem>>, vector<1x512xf32>
    %13 = vector.broadcast %12 : vector<1x512xf32> to vector<16x512xf32>
    %14 = arith.addf %11, %13 : vector<16x512xf32>
    %cst_11 = arith.constant 0.000000e+00 : f32
    %15 = vector.broadcast %cst_11 : f32 to vector<16x512xf32>
    %16 = arith.maximumf %14, %15 : vector<16x512xf32>
    %17 = arith.truncf %16 : vector<16x512xf32> to vector<16x512xbf16>
    %c0_12 = arith.constant 0 : index
    %c0_13 = arith.constant 0 : index
    %18 = vector.load %arg6[%c0_12, %c0_13] : memref<512x256xbf16, #tpu.memory_space<vmem>>, vector<512x256xbf16>
    %cst_14 = arith.constant dense<0.000000e+00> : vector<16x256xf32>
    %19 = tpu.matmul %17, %18, %cst_14 {dimension_numbers = #tpu.dot_dimension_numbers<[1], [0], [0], [1], [0, 0, 1, 1], [], []>} : vector<16x512xbf16>, vector<512x256xbf16>, vector<16x256xf32> -> vector<16x256xf32>
    %c0_15 = arith.constant 0 : index
    %c0_16 = arith.constant 0 : index
    %20 = vector.load %arg7[%c0_15, %c0_16] : memref<1x256xf32, #tpu.memory_space<vmem>>, vector<1x256xf32>
    %21 = vector.broadcast %20 : vector<1x256xf32> to vector<16x256xf32>
    %22 = arith.addf %19, %21 : vector<16x256xf32>
    %cst_17 = arith.constant 0.000000e+00 : f32
    %23 = vector.broadcast %cst_17 : f32 to vector<16x256xf32>
    %24 = arith.maximumf %22, %23 : vector<16x256xf32>
    %25 = arith.truncf %24 : vector<16x256xf32> to vector<16x256xbf16>
    %c0_18 = arith.constant 0 : index
    %c0_19 = arith.constant 0 : index
    %26 = vector.load %arg8[%c0_18, %c0_19] : memref<256x128xbf16, #tpu.memory_space<vmem>>, vector<256x128xbf16>
    %cst_20 = arith.constant dense<0.000000e+00> : vector<16x128xf32>
    %27 = tpu.matmul %25, %26, %cst_20 {dimension_numbers = #tpu.dot_dimension_numbers<[1], [0], [0], [1], [0, 0, 1, 1], [], []>} : vector<16x256xbf16>, vector<256x128xbf16>, vector<16x128xf32> -> vector<16x128xf32>
    %c0_21 = arith.constant 0 : index
    %c0_22 = arith.constant 0 : index
    %28 = vector.load %arg9[%c0_21, %c0_22] : memref<1x128xf32, #tpu.memory_space<vmem>>, vector<1x128xf32>
    %29 = vector.broadcast %28 : vector<1x128xf32> to vector<16x128xf32>
    %30 = arith.addf %27, %29 : vector<16x128xf32>
    %cst_23 = arith.constant 0.000000e+00 : f32
    %31 = vector.broadcast %cst_23 : f32 to vector<16x128xf32>
    %32 = arith.maximumf %30, %31 : vector<16x128xf32>
    %33 = arith.truncf %32 : vector<16x128xf32> to vector<16x128xbf16>
    %c0_24 = arith.constant 0 : index
    %c0_25 = arith.constant 0 : index
    %34 = vector.load %arg10[%c0_24, %c0_25] : memref<128x128xbf16, #tpu.memory_space<vmem>>, vector<128x128xbf16>
    %cst_26 = arith.constant dense<0.000000e+00> : vector<16x128xf32>
    %35 = tpu.matmul %33, %34, %cst_26 {dimension_numbers = #tpu.dot_dimension_numbers<[1], [0], [0], [1], [0, 0, 1, 1], [], []>} : vector<16x128xbf16>, vector<128x128xbf16>, vector<16x128xf32> -> vector<16x128xf32>
    %c0_27 = arith.constant 0 : index
    %c0_28 = arith.constant 0 : index
    %36 = vector.load %arg11[%c0_27, %c0_28] : memref<1x128xf32, #tpu.memory_space<vmem>>, vector<1x128xf32>
    %37 = vector.broadcast %36 : vector<1x128xf32> to vector<16x128xf32>
    %38 = arith.addf %35, %37 : vector<16x128xf32>
    %c0_29 = arith.constant 0 : index
    %c0_30 = arith.constant 0 : index
    %39 = vector.load %arg12[%c0_29, %c0_30] : memref<16x128xf32, #tpu.memory_space<vmem>>, vector<16x128xf32>
    tpu.vector_store %arg12[%c0_29, %c0_30], %38 {strides = array<i32>} : memref<16x128xf32, #tpu.memory_space<vmem>>, vector<16x128xf32>,
    return
  }
  func.func @transform_0(%arg0: i32) -> (i32, i32) {
    %c0_i32 = arith.constant 0 : i32
    %c0_i32_0 = arith.constant 0 : i32
    return %arg0, %c0_i32 : i32, i32
  }
  func.func @transform_1(%arg0: i32) -> (i32, i32) {
    %c0_i32 = arith.constant 0 : i32
    %c0_i32_0 = arith.constant 0 : i32
    %c0_i32_1 = arith.constant 0 : i32
    return %c0_i32, %c0_i32_0 : i32, i32
  }
  func.func @transform_2(%arg0: i32) -> (i32, i32) {
    %c0_i32 = arith.constant 0 : i32
    %c0_i32_0 = arith.constant 0 : i32
    %c0_i32_1 = arith.constant 0 : i32
    return %c0_i32, %c0_i32_0 : i32, i32
  }
  func.func @transform_3(%arg0: i32) -> (i32, i32) {
    %c0_i32 = arith.constant 0 : i32
    %c0_i32_0 = arith.constant 0 : i32
    %c0_i32_1 = arith.constant 0 : i32
    return %c0_i32, %c0_i32_0 : i32, i32
  }
  func.func @transform_4(%arg0: i32) -> (i32, i32) {
    %c0_i32 = arith.constant 0 : i32
    %c0_i32_0 = arith.constant 0 : i32
    %c0_i32_1 = arith.constant 0 : i32
    return %c0_i32, %c0_i32_0 : i32, i32
  }
  func.func @transform_5(%arg0: i32) -> (i32, i32) {
    %c0_i32 = arith.constant 0 : i32
    %c0_i32_0 = arith.constant 0 : i32
    %c0_i32_1 = arith.constant 0 : i32
    return %c0_i32, %c0_i32_0 : i32, i32
  }
  func.func @transform_6(%arg0: i32) -> (i32, i32) {
    %c0_i32 = arith.constant 0 : i32
    %c0_i32_0 = arith.constant 0 : i32
    %c0_i32_1 = arith.constant 0 : i32
    return %c0_i32, %c0_i32_0 : i32, i32
  }
  func.func @transform_7(%arg0: i32) -> (i32, i32) {
    %c0_i32 = arith.constant 0 : i32
    %c0_i32_0 = arith.constant 0 : i32
    %c0_i32_1 = arith.constant 0 : i32
    return %c0_i32, %c0_i32_0 : i32, i32
  }
  func.func @transform_8(%arg0: i32) -> (i32, i32) {
    %c0_i32 = arith.constant 0 : i32
    %c0_i32_0 = arith.constant 0 : i32
    %c0_i32_1 = arith.constant 0 : i32
    return %c0_i32, %c0_i32_0 : i32, i32
  }
  func.func @transform_9(%arg0: i32) -> (i32, i32) {
    %c0_i32 = arith.constant 0 : i32
    %c0_i32_0 = arith.constant 0 : i32
    %c0_i32_1 = arith.constant 0 : i32
    return %c0_i32, %c0_i32_0 : i32, i32
  }
  func.func @transform_10(%arg0: i32) -> (i32, i32) {
    %c0_i32 = arith.constant 0 : i32
    %c0_i32_0 = arith.constant 0 : i32
    %c0_i32_1 = arith.constant 0 : i32
    return %c0_i32, %c0_i32_0 : i32, i32
  }
  func.func @transform_11(%arg0: i32) -> (i32, i32) {
    %c0_i32 = arith.constant 0 : i32
    %c0_i32_0 = arith.constant 0 : i32
    return %arg0, %c0_i32 : i32, i32
  }
}

</mosaic_0001>

<llo_original>
// kernel: tpu_custom_call.1
$region0: #{tpu_custom_call.1}
  #allocation0 [shape = 'u32[]', space=smem, size = 0x4, offset = 0x4, fixed_abs, tag = 'smem constant byte address 0x4 - core index']
  #allocation1 [shape = 'u32[144,128]{1,0:T(1,128)}', space=vmem, size = 0x12000, scoped, tag = 'internal scratch']
  %s0 = inlined_call_operand.hbm [shape: f32[16,32], index: 0, kind: input, shape index: {}]
  %s1 = inlined_call_operand.hbm [shape: bf16[32,2048], index: 1, kind: input, shape index: {}]
  %s2 = inlined_call_operand.hbm [shape: f32[1,2048], index: 2, kind: input, shape index: {}]
  %s3 = inlined_call_operand.hbm [shape: bf16[2048,512], index: 3, kind: input, shape index: {}]
  %s4 = inlined_call_operand.hbm [shape: f32[1,512], index: 4, kind: input, shape index: {}]
  %s5 = inlined_call_operand.hbm [shape: bf16[512,256], index: 5, kind: input, shape index: {}]
  %s6 = inlined_call_operand.hbm [shape: f32[1,256], index: 6, kind: input, shape index: {}]
  %s7 = inlined_call_operand.hbm [shape: bf16[256,128], index: 7, kind: input, shape index: {}]
  %s8 = inlined_call_operand.hbm [shape: f32[1,128], index: 8, kind: input, shape index: {}]
  %s9 = inlined_call_operand.hbm [shape: bf16[128,128], index: 9, kind: input, shape index: {}]
  %s10 = inlined_call_operand.hbm [shape: f32[1,128], index: 10, kind: input, shape index: {}]
  %s11 = inlined_call_operand.hbm [shape: f32[16,128], index: 11, kind: output, shape index: {}]
  %s12 = sld [smem:[#allocation0]]
  $region98: #{tpu_custom_call.1} parent=0
    _
  %s14 = ssub.s32 1, %s12
  %s15 = scalar_select 0, %s14, %s12
  $region1: #{tpu_custom_call.1} parent=0
    #allocation2 [shape = 'u8[8192]{0}', space=vmem, size = 0x2000, scoped, tag = 'input window, operand 0, single buffered']
    #allocation3 [shape = 's32[1]{0}', space=sflag, size = 0x4, scoped, tag = 'scoped memory for tpu_custom_call.1']
    #allocation4 [shape = 's32[1]{0}', space=sflag, size = 0x4, scoped, tag = 'scoped memory for tpu_custom_call.1']
    #allocation5 [shape = 'u8[131072]{0}', space=vmem, size = 0x20000, scoped, tag = 'input window, operand 1, single buffered']
    #allocation6 [shape = 's32[1]{0}', space=sflag, size = 0x4, scoped, tag = 'scoped memory for tpu_custom_call.1']
    #allocation7 [shape = 'u8[8192]{0}', space=vmem, size = 0x2000, scoped, tag = 'input window, operand 2, single buffered']
    #allocation8 [shape = 'u8[2097152]{0}', space=vmem, size = 0x200000, scoped, tag = 'input window, operand 3, single buffered']
    #allocation9 [shape = 's32[1]{0}', space=sflag, size = 0x4, scoped, tag = 'scoped memory for tpu_custom_call.1']
    #allocation10 [shape = 'u8[2048]{0}', space=vmem, size = 0x800, scoped, tag = 'input window, operand 4, single buffered']
    #allocation11 [shape = 'u8[262144]{0}', space=vmem, size = 0x40000, scoped, tag = 'input window, operand 5, single buffered']
    #allocation12 [shape = 's32[1]{0}', space=sflag, size = 0x4, scoped, tag = 'scoped memory for tpu_custom_call.1']
    #allocation13 [shape = 'u8[1024]{0}', space=vmem, size = 0x400, scoped, tag = 'input window, operand 6, single buffered']
    #allocation14 [shape = 'u8[65536]{0}', space=vmem, size = 0x10000, scoped, tag = 'input window, operand 7, single buffered']
    #allocation15 [shape = 's32[1]{0}', space=sflag, size = 0x4, scoped, tag = 'scoped memory for tpu_custom_call.1']
    #allocation16 [shape = 'u8[512]{0}', space=vmem, size = 0x400, scoped, tag = 'input window, operand 8, single buffered']
    #allocation17 [shape = 'u8[32768]{0}', space=vmem, size = 0x8000, scoped, tag = 'input window, operand 9, single buffered']
    #allocation18 [shape = 's32[1]{0}', space=sflag, size = 0x4, scoped, tag = 'scoped memory for tpu_custom_call.1']
    #allocation19 [shape = 'u8[512]{0}', space=vmem, size = 0x400, scoped, tag = 'input window, operand 10, single buffered']
    #allocation20 [shape = 'u8[8192]{0}', space=vmem, size = 0x2000, scoped, tag = 'output window, operand 0, single buffered']
    %16 = vsyncpa [#allocation3], 0
    %17 = vsyncpa [#allocation6], 0
    %18 = vsyncpa [#allocation9], 0
    %19 = vsyncpa [#allocation12], 0
    %20 = vsyncpa [#allocation15], 0
    %21 = vsyncpa [#allocation18], 0
    %22 = vsyncpa [#allocation4], 0
    // Predicated region
    $region2: #{tpu_custom_call.1} parent=1 // pred_check
      _
    $region3: #{tpu_custom_call.1} parent=1 // pred_check_branch
      %24 = sbr.rel (0) target = $region5
    $region4: #{tpu_custom_call.1} parent=1 // pred_region
      %s26 = ssub.s32 256, 256
      %27 = vsyncadd [#allocation3], %s26
      %s28 = sshll.u32 [#allocation2], 4
      %s29 = int_to_ptr.vmem [resolvable:$true] %s28
      %34 = dma.hbm_to_vmem [thread:$0]  %s0, 256, %s29, [#allocation3], 128, 128, 8
    $region5: #{tpu_custom_call.1} parent=1 // pred_fallthru
      _
    // Predicated region
    $region6: #{tpu_custom_call.1} parent=1 // pred_check
      _
    $region7: #{tpu_custom_call.1} parent=1 // pred_check_branch
      %36 = sbr.rel (0) target = $region9
    $region8: #{tpu_custom_call.1} parent=1 // pred_region
      %s38 = ssub.s32 4096, 4096
      %39 = vsyncadd [#allocation6], %s38
      %s40 = sshll.u32 [#allocation5], 4
      %s41 = int_to_ptr.vmem [resolvable:$true] %s40
      %46 = dma.hbm_to_vmem [thread:$0]  %s1, 4096, %s41, [#allocation6], 1024, 1024, 64
    $region9: #{tpu_custom_call.1} parent=1 // pred_fallthru
      _
    // Predicated region
    $region10: #{tpu_custom_call.1} parent=1 // pred_check
      _
    $region11: #{tpu_custom_call.1} parent=1 // pred_check_branch
      %48 = sbr.rel (0) target = $region13
    $region12: #{tpu_custom_call.1} parent=1 // pred_region
      %s50 = ssub.s32 256, 256
      %51 = vsyncadd [#allocation6], %s50
      %s53 = sshll.u32 [#allocation7], 4
      %s54 = int_to_ptr.vmem [resolvable:$true] %s53
      %56 = dma.hbm_to_vmem [thread:$0]  %s2, 256, %s54, [#allocation6]
    $region13: #{tpu_custom_call.1} parent=1 // pred_fallthru
      _
    // Predicated region
    $region14: #{tpu_custom_call.1} parent=1 // pred_check
      _
    $region15: #{tpu_custom_call.1} parent=1 // pred_check_branch
      %58 = sbr.rel (0) target = $region17
    $region16: #{tpu_custom_call.1} parent=1 // pred_region
      %s60 = ssub.s32 65536, 65536
      %61 = vsyncadd [#allocation9], %s60
      %s62 = sshll.u32 [#allocation8], 4
      %s63 = int_to_ptr.vmem [resolvable:$true] %s62
      %68 = dma.hbm_to_vmem [thread:$0]  %s3, 65536, %s63, [#allocation9], 256, 256, 16
    $region17: #{tpu_custom_call.1} parent=1 // pred_fallthru
      _
    // Predicated region
    $region18: #{tpu_custom_call.1} parent=1 // pred_check
      _
    $region19: #{tpu_custom_call.1} parent=1 // pred_check_branch
      %70 = sbr.rel (0) target = $region21
    $region20: #{tpu_custom_call.1} parent=1 // pred_region
      %s72 = ssub.s32 64, 64
      %73 = vsyncadd [#allocation9], %s72
      %s75 = sshll.u32 [#allocation10], 4
      %s76 = int_to_ptr.vmem [resolvable:$true] %s75
      %78 = dma.hbm_to_vmem [thread:$0]  %s4, 64, %s76, [#allocation9]
    $region21: #{tpu_custom_call.1} parent=1 // pred_fallthru
      _
    // Predicated region
    $region22: #{tpu_custom_call.1} parent=1 // pred_check
      _
    $region23: #{tpu_custom_call.1} parent=1 // pred_check_branch
      %80 = sbr.rel (0) target = $region25
    $region24: #{tpu_custom_call.1} parent=1 // pred_region
      %s82 = ssub.s32 8192, 8192
      %83 = vsyncadd [#allocation12], %s82
      %s84 = sshll.u32 [#allocation11], 4
      %s85 = int_to_ptr.vmem [resolvable:$true] %s84
      %90 = dma.hbm_to_vmem [thread:$0]  %s5, 8192, %s85, [#allocation12], 128, 128, 8
    $region25: #{tpu_custom_call.1} parent=1 // pred_fallthru
      _
    // Predicated region
    $region26: #{tpu_custom_call.1} parent=1 // pred_check
      _
    $region27: #{tpu_custom_call.1} parent=1 // pred_check_branch
      %92 = sbr.rel (0) target = $region29
    $region28: #{tpu_custom_call.1} parent=1 // pred_region
      %s94 = ssub.s32 32, 32
      %95 = vsyncadd [#allocation12], %s94
      %s97 = sshll.u32 [#allocation13], 4
      %s98 = int_to_ptr.vmem [resolvable:$true] %s97
      %100 = dma.hbm_to_vmem [thread:$0]  %s6, 32, %s98, [#allocation12]
    $region29: #{tpu_custom_call.1} parent=1 // pred_fallthru
      _
    // Predicated region
    $region30: #{tpu_custom_call.1} parent=1 // pred_check
      _
    $region31: #{tpu_custom_call.1} parent=1 // pred_check_branch
      %102 = sbr.rel (0) target = $region33
    $region32: #{tpu_custom_call.1} parent=1 // pred_region
      %s104 = ssub.s32 2048, 2048
      %105 = vsyncadd [#allocation15], %s104
      %s106 = sshll.u32 [#allocation14], 4
      %s107 = int_to_ptr.vmem [resolvable:$true] %s106
      %112 = dma.hbm_to_vmem [thread:$0]  %s7, 2048, %s107, [#allocation15], 64, 64, 4
    $region33: #{tpu_custom_call.1} parent=1 // pred_fallthru
      _
    // Predicated region
    $region34: #{tpu_custom_call.1} parent=1 // pred_check
      _
    $region35: #{tpu_custom_call.1} parent=1 // pred_check_branch
      %114 = sbr.rel (0) target = $region37
    $region36: #{tpu_custom_call.1} parent=1 // pred_region
      %s116 = ssub.s32 16, 16
      %117 = vsyncadd [#allocation15], %s116
      %s119 = sshll.u32 [#allocation16], 4
      %s120 = int_to_ptr.vmem [resolvable:$true] %s119
      %122 = dma.hbm_to_vmem [thread:$0]  %s8, 16, %s120, [#allocation15]
    $region37: #{tpu_custom_call.1} parent=1 // pred_fallthru
      _
    // Predicated region
    $region38: #{tpu_custom_call.1} parent=1 // pred_check
      _
    $region39: #{tpu_custom_call.1} parent=1 // pred_check_branch
      %124 = sbr.rel (0) target = $region41
    $region40: #{tpu_custom_call.1} parent=1 // pred_region
      %s126 = ssub.s32 1024, 1024
      %127 = vsyncadd [#allocation18], %s126
      %s128 = sshll.u32 [#allocation17], 4
      %s129 = int_to_ptr.vmem [resolvable:$true] %s128
      %134 = dma.hbm_to_vmem [thread:$0]  %s9, 1024, %s129, [#allocation18], 64, 64, 4
    $region41: #{tpu_custom_call.1} parent=1 // pred_fallthru
      _
    // Predicated region
    $region42: #{tpu_custom_call.1} parent=1 // pred_check
      _
    $region43: #{tpu_custom_call.1} parent=1 // pred_check_branch
      %136 = sbr.rel (0) target = $region45
    $region44: #{tpu_custom_call.1} parent=1 // pred_region
      %s138 = ssub.s32 16, 16
      %139 = vsyncadd [#allocation18], %s138
      %s141 = sshll.u32 [#allocation19], 4
      %s142 = int_to_ptr.vmem [resolvable:$true] %s141
      %144 = dma.hbm_to_vmem [thread:$0]  %s10, 16, %s142, [#allocation18]
    $region45: #{tpu_custom_call.1} parent=1 // pred_fallthru
      _
    // Predicated region
    $region46: #{tpu_custom_call.1} parent=1 // pred_check
      _
    $region47: #{tpu_custom_call.1} parent=1 // pred_check_branch
      %146 = sbr.rel (0) target = $region49
    $region48: #{tpu_custom_call.1} parent=1 // pred_region
      %147 = dma.done [#allocation3], 256
    $region49: #{tpu_custom_call.1} parent=1 // pred_fallthru
      _
    // Predicated region
    $region50: #{tpu_custom_call.1} parent=1 // pred_check
      _
    $region51: #{tpu_custom_call.1} parent=1 // pred_check_branch
      %149 = sbr.rel (0) target = $region53
    $region52: #{tpu_custom_call.1} parent=1 // pred_region
      %150 = dma.done [#allocation6], 4096
    $region53: #{tpu_custom_call.1} parent=1 // pred_fallthru
      _
    // Predicated region
    $region54: #{tpu_custom_call.1} parent=1 // pred_check
      _
    $region55: #{tpu_custom_call.1} parent=1 // pred_check_branch
      %152 = sbr.rel (0) target = $region57
    $region56: #{tpu_custom_call.1} parent=1 // pred_region
      %153 = dma.done [#allocation6], 256
    $region57: #{tpu_custom_call.1} parent=1 // pred_fallthru
      _
    // Predicated region
    $region58: #{tpu_custom_call.1} parent=1 // pred_check
      _
    $region59: #{tpu_custom_call.1} parent=1 // pred_check_branch
      %155 = sbr.rel (0) target = $region61
    $region60: #{tpu_custom_call.1} parent=1 // pred_region
      %156 = dma.done [#allocation9], 65536
    $region61: #{tpu_custom_call.1} parent=1 // pred_fallthru
      _
    // Predicated region
    $region62: #{tpu_custom_call.1} parent=1 // pred_check
      _
    $region63: #{tpu_custom_call.1} parent=1 // pred_check_branch
      %158 = sbr.rel (0) target = $region65
    $region64: #{tpu_custom_call.1} parent=1 // pred_region
      %159 = dma.done [#allocation9], 64
    $region65: #{tpu_custom_call.1} parent=1 // pred_fallthru
      _
    // Predicated region
    $region66: #{tpu_custom_call.1} parent=1 // pred_check
      _
    $region67: #{tpu_custom_call.1} parent=1 // pred_check_branch
      %161 = sbr.rel (0) target = $region69
    $region68: #{tpu_custom_call.1} parent=1 // pred_region
      %162 = dma.done [#allocation12], 8192
    $region69: #{tpu_custom_call.1} parent=1 // pred_fallthru
      _
    // Predicated region
    $region70: #{tpu_custom_call.1} parent=1 // pred_check
      _
    $region71: #{tpu_custom_call.1} parent=1 // pred_check_branch
      %164 = sbr.rel (0) target = $region73
    $region72: #{tpu_custom_call.1} parent=1 // pred_region
      %165 = dma.done [#allocation12], 32
    $region73: #{tpu_custom_call.1} parent=1 // pred_fallthru
      _
    // Predicated region
    $region74: #{tpu_custom_call.1} parent=1 // pred_check
      _
    $region75: #{tpu_custom_call.1} parent=1 // pred_check_branch
      %167 = sbr.rel (0) target = $region77
    $region76: #{tpu_custom_call.1} parent=1 // pred_region
      %168 = dma.done [#allocation15], 2048
    $region77: #{tpu_custom_call.1} parent=1 // pred_fallthru
      _
    // Predicated region
    $region78: #{tpu_custom_call.1} parent=1 // pred_check
      _
    $region79: #{tpu_custom_call.1} parent=1 // pred_check_branch
      %170 = sbr.rel (0) target = $region81
    $region80: #{tpu_custom_call.1} parent=1 // pred_region
      %171 = dma.done [#allocation15], 16
    $region81: #{tpu_custom_call.1} parent=1 // pred_fallthru
      _
    // Predicated region
    $region82: #{tpu_custom_call.1} parent=1 // pred_check
      _
    $region83: #{tpu_custom_call.1} parent=1 // pred_check_branch
      %173 = sbr.rel (0) target = $region85
    $region84: #{tpu_custom_call.1} parent=1 // pred_region
      %174 = dma.done [#allocation18], 1024
    $region85: #{tpu_custom_call.1} parent=1 // pred_fallthru
      _
    // Predicated region
    $region86: #{tpu_custom_call.1} parent=1 // pred_check
      _
    $region87: #{tpu_custom_call.1} parent=1 // pred_check_branch
      %176 = sbr.rel (0) target = $region89
    $region88: #{tpu_custom_call.1} parent=1 // pred_region
      %177 = dma.done [#allocation18], 16
    $region89: #{tpu_custom_call.1} parent=1 // pred_fallthru
      _
    %v179 = vld [vmem:[#allocation2] sm:$0xff]
    %v180 = vld [vmem:[#allocation2 + $0x8] sm:$0xff]
    %v181 = vpack.c.bf16 %v180, %v179
    %v182 = vld [vmem:[#allocation5] sm:$0xff]
    %v183 = vld [vmem:[#allocation5 + $0x8] sm:$0xff]
    %v184 = vld [vmem:[#allocation5 + $0x10] sm:$0xff]
    %v185 = vld [vmem:[#allocation5 + $0x18] sm:$0xff]
    %v186 = vld [vmem:[#allocation5 + $0x20] sm:$0xff]
    %v187 = vld [vmem:[#allocation5 + $0x28] sm:$0xff]
    %v188 = vld [vmem:[#allocation5 + $0x30] sm:$0xff]
    %v189 = vld [vmem:[#allocation5 + $0x38] sm:$0xff]
    %v190 = vld [vmem:[#allocation5 + $0x40] sm:$0xff]
    %v191 = vld [vmem:[#allocation5 + $0x48] sm:$0xff]
    %v192 = vld [vmem:[#allocation5 + $0x50] sm:$0xff]
    %v193 = vld [vmem:[#allocation5 + $0x58] sm:$0xff]
    %v194 = vld [vmem:[#allocation5 + $0x60] sm:$0xff]
    %v195 = vld [vmem:[#allocation5 + $0x68] sm:$0xff]
    %v196 = vld [vmem:[#allocation5 + $0x70] sm:$0xff]
    %v197 = vld [vmem:[#allocation5 + $0x78] sm:$0xff]
    %v198 = vld [vmem:[#allocation5 + $0x80] sm:$0xff]
    %v199 = vld [vmem:[#allocation5 + $0x88] sm:$0xff]
    %v200 = vld [vmem:[#allocation5 + $0x90] sm:$0xff]
    %v201 = vld [vmem:[#allocation5 + $0x98] sm:$0xff]
    %v202 = vld [vmem:[#allocation5 + $0xa0] sm:$0xff]
    %v203 = vld [vmem:[#allocation5 + $0xa8] sm:$0xff]
    %v204 = vld [vmem:[#allocation5 + $0xb0] sm:$0xff]
    %v205 = vld [vmem:[#allocation5 + $0xb8] sm:$0xff]
    %v206 = vld [vmem:[#allocation5 + $0xc0] sm:$0xff]
    %v207 = vld [vmem:[#allocation5 + $0xc8] sm:$0xff]
    %v208 = vld [vmem:[#allocation5 + $0xd0] sm:$0xff]
    %v209 = vld [vmem:[#allocation5 + $0xd8] sm:$0xff]
    %v210 = vld [vmem:[#allocation5 + $0xe0] sm:$0xff]
    %v211 = vld [vmem:[#allocation5 + $0xe8] sm:$0xff]
    %v212 = vld [vmem:[#allocation5 + $0xf0] sm:$0xff]
    %v213 = vld [vmem:[#allocation5 + $0xf8] sm:$0xff]
    %v214 = vld [vmem:[#allocation7] sm:$0xff]
    %v215 = vld [vmem:[#allocation7 + $0x8] sm:$0xff]
    %v218 = vlaneseq
    %v219 = vshrl.u32 %v218, 7
    %v220 = vsub.s32 0, %v219
    %v221 = vrot.slane %v214, %v220
    %v222 = vlaneseq
    %v223 = vshrl.u32 %v222, 7
    %v224 = vsub.s32 1, %v223
    %v225 = vrot.slane %v214, %v224
    %v226 = vlaneseq
    %v227 = vshrl.u32 %v226, 7
    %v228 = vsub.s32 2, %v227
    %v229 = vrot.slane %v214, %v228
    %v230 = vlaneseq
    %v231 = vshrl.u32 %v230, 7
    %v232 = vsub.s32 3, %v231
    %v233 = vrot.slane %v214, %v232
    %v234 = vlaneseq
    %v235 = vshrl.u32 %v234, 7
    %v236 = vsub.s32 4, %v235
    %v237 = vrot.slane %v214, %v236
    %v238 = vlaneseq
    %v239 = vshrl.u32 %v238, 7
    %v240 = vsub.s32 5, %v239
    %v241 = vrot.slane %v214, %v240
    %v242 = vlaneseq
    %v243 = vshrl.u32 %v242, 7
    %v244 = vsub.s32 6, %v243
    %v245 = vrot.slane %v214, %v244
    %v246 = vlaneseq
    %v247 = vshrl.u32 %v246, 7
    %v248 = vsub.s32 7, %v247
    %v249 = vrot.slane %v214, %v248
    %v250 = vlaneseq
    %v251 = vshrl.u32 %v250, 7
    %v252 = vsub.s32 0, %v251
    %v253 = vrot.slane %v215, %v252
    %v254 = vlaneseq
    %v255 = vshrl.u32 %v254, 7
    %v256 = vsub.s32 1, %v255
    %v257 = vrot.slane %v215, %v256
    %v258 = vlaneseq
    %v259 = vshrl.u32 %v258, 7
    %v260 = vsub.s32 2, %v259
    %v261 = vrot.slane %v215, %v260
    %v262 = vlaneseq
    %v263 = vshrl.u32 %v262, 7
    %v264 = vsub.s32 3, %v263
    %v265 = vrot.slane %v215, %v264
    %v266 = vlaneseq
    %v267 = vshrl.u32 %v266, 7
    %v268 = vsub.s32 4, %v267
    %v269 = vrot.slane %v215, %v268
    %v270 = vlaneseq
    %v271 = vshrl.u32 %v270, 7
    %v272 = vsub.s32 5, %v271
    %v273 = vrot.slane %v215, %v272
    %v274 = vlaneseq
    %v275 = vshrl.u32 %v274, 7
    %v276 = vsub.s32 6, %v275
    %v277 = vrot.slane %v215, %v276
    %v278 = vlaneseq
    %v279 = vshrl.u32 %v278, 7
    %v280 = vsub.s32 7, %v279
    %v281 = vrot.slane %v215, %v280
    %v330 = vunpack.c.l.b16 %v182
    %v331 = vunpack.c.h.b16 %v182
    %v332 = vunpack.c.l.b16 %v183
    %v333 = vunpack.c.h.b16 %v183
    %v334 = vunpack.c.l.b16 %v184
    %v335 = vunpack.c.h.b16 %v184
    %v336 = vunpack.c.l.b16 %v185
    %v337 = vunpack.c.h.b16 %v185
    %v338 = vunpack.c.l.b16 %v186
    %v339 = vunpack.c.h.b16 %v186
    %v340 = vunpack.c.l.b16 %v187
    %v341 = vunpack.c.h.b16 %v187
    %v342 = vunpack.c.l.b16 %v188
    %v343 = vunpack.c.h.b16 %v188
    %v344 = vunpack.c.l.b16 %v189
    %v345 = vunpack.c.h.b16 %v189
    %v346 = vunpack.c.l.b16 %v190
    %v347 = vunpack.c.h.b16 %v190
    %v348 = vunpack.c.l.b16 %v191
    %v349 = vunpack.c.h.b16 %v191
    %v350 = vunpack.c.l.b16 %v192
    %v351 = vunpack.c.h.b16 %v192
    %v352 = vunpack.c.l.b16 %v193
    %v353 = vunpack.c.h.b16 %v193
    %v354 = vunpack.c.l.b16 %v194
    %v355 = vunpack.c.h.b16 %v194
    %v356 = vunpack.c.l.b16 %v195
    %v357 = vunpack.c.h.b16 %v195
    %v358 = vunpack.c.l.b16 %v196
    %v359 = vunpack.c.h.b16 %v196
    %v360 = vunpack.c.l.b16 %v197
    %v361 = vunpack.c.h.b16 %v197
    %v362 = vunpack.c.l.b16 %v198
    %v363 = vunpack.c.h.b16 %v198
    %v364 = vunpack.c.l.b16 %v199
    %v365 = vunpack.c.h.b16 %v199
    %v366 = vunpack.c.l.b16 %v200
    %v367 = vunpack.c.h.b16 %v200
    %v368 = vunpack.c.l.b16 %v201
    %v369 = vunpack.c.h.b16 %v201
    %v370 = vunpack.c.l.b16 %v202
    %v371 = vunpack.c.h.b16 %v202
    %v372 = vunpack.c.l.b16 %v203
    %v373 = vunpack.c.h.b16 %v203
    %v374 = vunpack.c.l.b16 %v204
    %v375 = vunpack.c.h.b16 %v204
    %v376 = vunpack.c.l.b16 %v205
    %v377 = vunpack.c.h.b16 %v205
    %v378 = vunpack.c.l.b16 %v206
    %v379 = vunpack.c.h.b16 %v206
    %v380 = vunpack.c.l.b16 %v207
    %v381 = vunpack.c.h.b16 %v207
    %v382 = vunpack.c.l.b16 %v208
    %v383 = vunpack.c.h.b16 %v208
    %v384 = vunpack.c.l.b16 %v209
    %v385 = vunpack.c.h.b16 %v209
    %v386 = vunpack.c.l.b16 %v210
    %v387 = vunpack.c.h.b16 %v210
    %v388 = vunpack.c.l.b16 %v211
    %v389 = vunpack.c.h.b16 %v211
    %v390 = vunpack.c.l.b16 %v212
    %v391 = vunpack.c.h.b16 %v212
    %v392 = vunpack.c.l.b16 %v213
    %v393 = vunpack.c.h.b16 %v213
    %v394 = vpack.c.b16 %v346, %v330
    %v395 = vpack.c.b16 %v347, %v331
    %v396 = vpack.c.b16 %v348, %v332
    %v397 = vpack.c.b16 %v349, %v333
    %v398 = vpack.c.b16 %v350, %v334
    %v399 = vpack.c.b16 %v351, %v335
    %v400 = vpack.c.b16 %v352, %v336
    %v401 = vpack.c.b16 %v353, %v337
    %v402 = vpack.c.b16 %v354, %v338
    %v403 = vpack.c.b16 %v355, %v339
    %v404 = vpack.c.b16 %v356, %v340
    %v405 = vpack.c.b16 %v357, %v341
    %v406 = vpack.c.b16 %v358, %v342
    %v407 = vpack.c.b16 %v359, %v343
    %v408 = vpack.c.b16 %v360, %v344
    %v409 = vpack.c.b16 %v361, %v345
    %v410 = vpack.c.b16 %v378, %v362
    %v411 = vpack.c.b16 %v379, %v363
    %v412 = vpack.c.b16 %v380, %v364
    %v413 = vpack.c.b16 %v381, %v365
    %v414 = vpack.c.b16 %v382, %v366
    %v415 = vpack.c.b16 %v383, %v367
    %v416 = vpack.c.b16 %v384, %v368
    %v417 = vpack.c.b16 %v385, %v369
    %v418 = vpack.c.b16 %v386, %v370
    %v419 = vpack.c.b16 %v387, %v371
    %v420 = vpack.c.b16 %v388, %v372
    %v421 = vpack.c.b16 %v389, %v373
    %v422 = vpack.c.b16 %v390, %v374
    %v423 = vpack.c.b16 %v391, %v375
    %v424 = vpack.c.b16 %v392, %v376
    %v425 = vpack.c.b16 %v393, %v377
    %vm458 = vcmask 261120
    %v460 = vsel %vm458, %v181, 0
    %462 = vmatprep.subr.bf16.mxu0 %v395
    %463 = vmatpush1.bf16.msra.mxu0 %v394
    %464 = vmatprep.subr.bf16.mxu0 %v411
    %465 = vmatpush1.bf16.msra.mxu0 %v410
    %466 = vmatprep.subr.bf16.mxu0 0
    %467 = vmatpush1.bf16.msra.mxu0 0
    %468 = vmatprep.subr.bf16.mxu0 0
    %469 = vmatpush1.bf16.msra.mxu0 0
    %470 = vmatprep.subr.bf16.mxu0 0
    %471 = vmatpush1.bf16.msra.mxu0 0
    %472 = vmatprep.subr.bf16.mxu0 0
    %473 = vmatpush1.bf16.msra.mxu0 0
    %474 = vmatprep.subr.bf16.mxu0 0
    %475 = vmatpush1.bf16.msra.mxu0 0
    %476 = vmatprep.subr.bf16.mxu0 0
    %477 = vmatpush1.bf16.msra.mxu0 0
    %478 = vmatprep.subr.bf16.mxu0 0
    %479 = vmatpush1.bf16.msra.mxu0 0
    %480 = vmatprep.subr.bf16.mxu0 0
    %481 = vmatpush1.bf16.msra.mxu0 0
    %482 = vmatprep.subr.bf16.mxu0 0
    %483 = vmatpush1.bf16.msra.mxu0 0
    %484 = vmatprep.subr.bf16.mxu0 0
    %485 = vmatpush1.bf16.msra.mxu0 0
    %486 = vmatprep.subr.bf16.mxu0 0
    %487 = vmatpush1.bf16.msra.mxu0 0
    %488 = vmatprep.subr.bf16.mxu0 0
    %489 = vmatpush1.bf16.msra.mxu0 0
    %490 = vmatprep.subr.bf16.mxu0 0
    %491 = vmatpush1.bf16.msra.mxu0 0
    %492 = vmatprep.subr.bf16.mxu0 0
    %493 = vmatpush1.bf16.msra.mxu0 0
    %494 = vmatprep.mubr.bf16.mxu0 0
    %495 = vmatmul.mubr.bf16.gmra.mrb[0].mxu0 %v460
    %v496 = vpop.f32.mrb[0].mxu0
    %v497 = vadd.f32 %v221, %v496
    %v498 = vpop.f32.mrb[0].mxu0
    %v499 = vadd.f32 %v225, %v498
    %v500 = vpop.f32.mrb[0].mxu0
    %v501 = vadd.f32 %v221, %v500
    %v502 = vpop.f32.mrb[0].mxu0
    %v503 = vadd.f32 %v225, %v502
    %504 = vdwg.mxu0
    %505 = vmatprep.subr.bf16.mxu0 %v397
    %506 = vmatpush1.bf16.msra.mxu0 %v396
    %507 = vmatprep.subr.bf16.mxu0 %v413
    %508 = vmatpush1.bf16.msra.mxu0 %v412
    %509 = vmatprep.subr.bf16.mxu0 0
    %510 = vmatpush1.bf16.msra.mxu0 0
    %511 = vmatprep.subr.bf16.mxu0 0
    %512 = vmatpush1.bf16.msra.mxu0 0
    %513 = vmatprep.subr.bf16.mxu0 0
    %514 = vmatpush1.bf16.msra.mxu0 0
    %515 = vmatprep.subr.bf16.mxu0 0
    %516 = vmatpush1.bf16.msra.mxu0 0
    %517 = vmatprep.subr.bf16.mxu0 0
    %518 = vmatpush1.bf16.msra.mxu0 0
    %519 = vmatprep.subr.bf16.mxu0 0
    %520 = vmatpush1.bf16.msra.mxu0 0
    %521 = vmatprep.subr.bf16.mxu0 0
    %522 = vmatpush1.bf16.msra.mxu0 0
    %523 = vmatprep.subr.bf16.mxu0 0
    %524 = vmatpush1.bf16.msra.mxu0 0
    %525 = vmatprep.subr.bf16.mxu0 0
    %526 = vmatpush1.bf16.msra.mxu0 0
    %527 = vmatprep.subr.bf16.mxu0 0
    %528 = vmatpush1.bf16.msra.mxu0 0
    %529 = vmatprep.subr.bf16.mxu0 0
    %530 = vmatpush1.bf16.msra.mxu0 0
    %531 = vmatprep.subr.bf16.mxu0 0
    %532 = vmatpush1.bf16.msra.mxu0 0
    %533 = vmatprep.subr.bf16.mxu0 0
    %534 = vmatpush1.bf16.msra.mxu0 0
    %535 = vmatprep.subr.bf16.mxu0 0
    %536 = vmatpush1.bf16.msra.mxu0 0
    %537 = vmatprep.mubr.bf16.mxu0 0
    %538 = vmatmul.mubr.bf16.gmra.mrb[0].mxu0 %v460
    %v539 = vpop.f32.mrb[0].mxu0
    %v540 = vadd.f32 %v229, %v539
    %v541 = vpop.f32.mrb[0].mxu0
    %v542 = vadd.f32 %v233, %v541
    %v543 = vpop.f32.mrb[0].mxu0
    %v544 = vadd.f32 %v229, %v543
    %v545 = vpop.f32.mrb[0].mxu0
    %v546 = vadd.f32 %v233, %v545
    %547 = vdwg.mxu0
    %548 = vmatprep.subr.bf16.mxu0 %v399
    %549 = vmatpush1.bf16.msra.mxu0 %v398
    %550 = vmatprep.subr.bf16.mxu0 %v415
    %551 = vmatpush1.bf16.msra.mxu0 %v414
    %552 = vmatprep.subr.bf16.mxu0 0
    %553 = vmatpush1.bf16.msra.mxu0 0
    %554 = vmatprep.subr.bf16.mxu0 0
    %555 = vmatpush1.bf16.msra.mxu0 0
    %556 = vmatprep.subr.bf16.mxu0 0
    %557 = vmatpush1.bf16.msra.mxu0 0
    %558 = vmatprep.subr.bf16.mxu0 0
    %559 = vmatpush1.bf16.msra.mxu0 0
    %560 = vmatprep.subr.bf16.mxu0 0
    %561 = vmatpush1.bf16.msra.mxu0 0
    %562 = vmatprep.subr.bf16.mxu0 0
    %563 = vmatpush1.bf16.msra.mxu0 0
    %564 = vmatprep.subr.bf16.mxu0 0
    %565 = vmatpush1.bf16.msra.mxu0 0
    %566 = vmatprep.subr.bf16.mxu0 0
    %567 = vmatpush1.bf16.msra.mxu0 0
    %568 = vmatprep.subr.bf16.mxu0 0
    %569 = vmatpush1.bf16.msra.mxu0 0
    %570 = vmatprep.subr.bf16.mxu0 0
    %571 = vmatpush1.bf16.msra.mxu0 0
    %572 = vmatprep.subr.bf16.mxu0 0
    %573 = vmatpush1.bf16.msra.mxu0 0
    %574 = vmatprep.subr.bf16.mxu0 0
    %575 = vmatpush1.bf16.msra.mxu0 0
    %576 = vmatprep.subr.bf16.mxu0 0
    %577 = vmatpush1.bf16.msra.mxu0 0
    %578 = vmatprep.subr.bf16.mxu0 0
    %579 = vmatpush1.bf16.msra.mxu0 0
    %580 = vmatprep.mubr.bf16.mxu0 0
    %581 = vmatmul.mubr.bf16.gmra.mrb[0].mxu0 %v460
    %v582 = vpop.f32.mrb[0].mxu0
    %v583 = vadd.f32 %v237, %v582
    %v584 = vpop.f32.mrb[0].mxu0
    %v585 = vadd.f32 %v241, %v584
    %v586 = vpop.f32.mrb[0].mxu0
    %v587 = vadd.f32 %v237, %v586
    %v588 = vpop.f32.mrb[0].mxu0
    %v589 = vadd.f32 %v241, %v588
    %590 = vdwg.mxu0
    %591 = vmatprep.subr.bf16.mxu0 %v401
    %592 = vmatpush1.bf16.msra.mxu0 %v400
    %593 = vmatprep.subr.bf16.mxu0 %v417
    %594 = vmatpush1.bf16.msra.mxu0 %v416
    %595 = vmatprep.subr.bf16.mxu0 0
    %596 = vmatpush1.bf16.msra.mxu0 0
    %597 = vmatprep.subr.bf16.mxu0 0
    %598 = vmatpush1.bf16.msra.mxu0 0
    %599 = vmatprep.subr.bf16.mxu0 0
    %600 = vmatpush1.bf16.msra.mxu0 0
    %601 = vmatprep.subr.bf16.mxu0 0
    %602 = vmatpush1.bf16.msra.mxu0 0
    %603 = vmatprep.subr.bf16.mxu0 0
    %604 = vmatpush1.bf16.msra.mxu0 0
    %605 = vmatprep.subr.bf16.mxu0 0
    %606 = vmatpush1.bf16.msra.mxu0 0
    %607 = vmatprep.subr.bf16.mxu0 0
    %608 = vmatpush1.bf16.msra.mxu0 0
    %609 = vmatprep.subr.bf16.mxu0 0
    %610 = vmatpush1.bf16.msra.mxu0 0
    %611 = vmatprep.subr.bf16.mxu0 0
    %612 = vmatpush1.bf16.msra.mxu0 0
    %613 = vmatprep.subr.bf16.mxu0 0
    %614 = vmatpush1.bf16.msra.mxu0 0
    %615 = vmatprep.subr.bf16.mxu0 0
    %616 = vmatpush1.bf16.msra.mxu0 0
    %617 = vmatprep.subr.bf16.mxu0 0
    %618 = vmatpush1.bf16.msra.mxu0 0
    %619 = vmatprep.subr.bf16.mxu0 0
    %620 = vmatpush1.bf16.msra.mxu0 0
    %621 = vmatprep.subr.bf16.mxu0 0
    %622 = vmatpush1.bf16.msra.mxu0 0
    %623 = vmatprep.mubr.bf16.mxu0 0
    %624 = vmatmul.mubr.bf16.gmra.mrb[0].mxu0 %v460
    %v625 = vpop.f32.mrb[0].mxu0
    %v626 = vadd.f32 %v245, %v625
    %v627 = vpop.f32.mrb[0].mxu0
    %v628 = vadd.f32 %v249, %v627
    %v629 = vpop.f32.mrb[0].mxu0
    %v630 = vadd.f32 %v245, %v629
    %v631 = vpop.f32.mrb[0].mxu0
    %v632 = vadd.f32 %v249, %v631
    %633 = vdwg.mxu0
    %634 = vmatprep.subr.bf16.mxu0 %v403
    %635 = vmatpush1.bf16.msra.mxu0 %v402
    %636 = vmatprep.subr.bf16.mxu0 %v419
    %637 = vmatpush1.bf16.msra.mxu0 %v418
    %638 = vmatprep.subr.bf16.mxu0 0
    %639 = vmatpush1.bf16.msra.mxu0 0
    %640 = vmatprep.subr.bf16.mxu0 0
    %641 = vmatpush1.bf16.msra.mxu0 0
    %642 = vmatprep.subr.bf16.mxu0 0
    %643 = vmatpush1.bf16.msra.mxu0 0
    %644 = vmatprep.subr.bf16.mxu0 0
    %645 = vmatpush1.bf16.msra.mxu0 0
    %646 = vmatprep.subr.bf16.mxu0 0
    %647 = vmatpush1.bf16.msra.mxu0 0
    %648 = vmatprep.subr.bf16.mxu0 0
    %649 = vmatpush1.bf16.msra.mxu0 0
    %650 = vmatprep.subr.bf16.mxu0 0
    %651 = vmatpush1.bf16.msra.mxu0 0
    %652 = vmatprep.subr.bf16.mxu0 0
    %653 = vmatpush1.bf16.msra.mxu0 0
    %654 = vmatprep.subr.bf16.mxu0 0
    %655 = vmatpush1.bf16.msra.mxu0 0
    %656 = vmatprep.subr.bf16.mxu0 0
    %657 = vmatpush1.bf16.msra.mxu0 0
    %658 = vmatprep.subr.bf16.mxu0 0
    %659 = vmatpush1.bf16.msra.mxu0 0
    %660 = vmatprep.subr.bf16.mxu0 0
    %661 = vmatpush1.bf16.msra.mxu0 0
    %662 = vmatprep.subr.bf16.mxu0 0
    %663 = vmatpush1.bf16.msra.mxu0 0
    %664 = vmatprep.subr.bf16.mxu0 0
    %665 = vmatpush1.bf16.msra.mxu0 0
    %666 = vmatprep.mubr.bf16.mxu0 0
    %667 = vmatmul.mubr.bf16.gmra.mrb[0].mxu0 %v460
    %v668 = vpop.f32.mrb[0].mxu0
    %v669 = vadd.f32 %v253, %v668
    %v670 = vpop.f32.mrb[0].mxu0
    %v671 = vadd.f32 %v257, %v670
    %v672 = vpop.f32.mrb[0].mxu0
    %v673 = vadd.f32 %v253, %v672
    %v674 = vpop.f32.mrb[0].mxu0
    %v675 = vadd.f32 %v257, %v674
    %676 = vdwg.mxu0
    %677 = vmatprep.subr.bf16.mxu0 %v405
    %678 = vmatpush1.bf16.msra.mxu0 %v404
    %679 = vmatprep.subr.bf16.mxu0 %v421
    %680 = vmatpush1.bf16.msra.mxu0 %v420
    %681 = vmatprep.subr.bf16.mxu0 0
    %682 = vmatpush1.bf16.msra.mxu0 0
    %683 = vmatprep.subr.bf16.mxu0 0
    %684 = vmatpush1.bf16.msra.mxu0 0
    %685 = vmatprep.subr.bf16.mxu0 0
    %686 = vmatpush1.bf16.msra.mxu0 0
    %687 = vmatprep.subr.bf16.mxu0 0
    %688 = vmatpush1.bf16.msra.mxu0 0
    %689 = vmatprep.subr.bf16.mxu0 0
    %690 = vmatpush1.bf16.msra.mxu0 0
    %691 = vmatprep.subr.bf16.mxu0 0
    %692 = vmatpush1.bf16.msra.mxu0 0
    %693 = vmatprep.subr.bf16.mxu0 0
    %694 = vmatpush1.bf16.msra.mxu0 0
    %695 = vmatprep.subr.bf16.mxu0 0
    %696 = vmatpush1.bf16.msra.mxu0 0
    %697 = vmatprep.subr.bf16.mxu0 0
    %698 = vmatpush1.bf16.msra.mxu0 0
    %699 = vmatprep.subr.bf16.mxu0 0
    %700 = vmatpush1.bf16.msra.mxu0 0
    %701 = vmatprep.subr.bf16.mxu0 0
    %702 = vmatpush1.bf16.msra.mxu0 0
    %703 = vmatprep.subr.bf16.mxu0 0
    %704 = vmatpush1.bf16.msra.mxu0 0
    %705 = vmatprep.subr.bf16.mxu0 0
    %706 = vmatpush1.bf16.msra.mxu0 0
    %707 = vmatprep.subr.bf16.mxu0 0
    %708 = vmatpush1.bf16.msra.mxu0 0
    %709 = vmatprep.mubr.bf16.mxu0 0
    %710 = vmatmul.mubr.bf16.gmra.mrb[0].mxu0 %v460
    %v711 = vpop.f32.mrb[0].mxu0
    %v712 = vadd.f32 %v261, %v711
    %v713 = vpop.f32.mrb[0].mxu0
    %v714 = vadd.f32 %v265, %v713
    %v715 = vpop.f32.mrb[0].mxu0
    %v716 = vadd.f32 %v261, %v715
    %v717 = vpop.f32.mrb[0].mxu0
    %v718 = vadd.f32 %v265, %v717
    %719 = vdwg.mxu0
    %720 = vmatprep.subr.bf16.mxu0 %v407
    %721 = vmatpush1.bf16.msra.mxu0 %v406
    %722 = vmatprep.subr.bf16.mxu0 %v423
    %723 = vmatpush1.bf16.msra.mxu0 %v422
    %724 = vmatprep.subr.bf16.mxu0 0
    %725 = vmatpush1.bf16.msra.mxu0 0
    %726 = vmatprep.subr.bf16.mxu0 0
    %727 = vmatpush1.bf16.msra.mxu0 0
    %728 = vmatprep.subr.bf16.mxu0 0
    %729 = vmatpush1.bf16.msra.mxu0 0
    %730 = vmatprep.subr.bf16.mxu0 0
    %731 = vmatpush1.bf16.msra.mxu0 0
    %732 = vmatprep.subr.bf16.mxu0 0
    %733 = vmatpush1.bf16.msra.mxu0 0
    %734 = vmatprep.subr.bf16.mxu0 0
    %735 = vmatpush1.bf16.msra.mxu0 0
    %736 = vmatprep.subr.bf16.mxu0 0
    %737 = vmatpush1.bf16.msra.mxu0 0
    %738 = vmatprep.subr.bf16.mxu0 0
    %739 = vmatpush1.bf16.msra.mxu0 0
    %740 = vmatprep.subr.bf16.mxu0 0
    %741 = vmatpush1.bf16.msra.mxu0 0
    %742 = vmatprep.subr.bf16.mxu0 0
    %743 = vmatpush1.bf16.msra.mxu0 0
    %744 = vmatprep.subr.bf16.mxu0 0
    %745 = vmatpush1.bf16.msra.mxu0 0
    %746 = vmatprep.subr.bf16.mxu0 0
    %747 = vmatpush1.bf16.msra.mxu0 0
    %748 = vmatprep.subr.bf16.mxu0 0
    %749 = vmatpush1.bf16.msra.mxu0 0
    %750 = vmatprep.subr.bf16.mxu0 0
    %751 = vmatpush1.bf16.msra.mxu0 0
    %752 = vmatprep.mubr.bf16.mxu0 0
    %753 = vmatmul.mubr.bf16.gmra.mrb[0].mxu0 %v460
    %v754 = vpop.f32.mrb[0].mxu0
    %v755 = vadd.f32 %v269, %v754
    %v756 = vpop.f32.mrb[0].mxu0
    %v757 = vadd.f32 %v273, %v756
    %v758 = vpop.f32.mrb[0].mxu0
    %v759 = vadd.f32 %v269, %v758
    %v760 = vpop.f32.mrb[0].mxu0
    %v761 = vadd.f32 %v273, %v760
    %762 = vdwg.mxu0
    %763 = vmatprep.subr.bf16.mxu0 %v409
    %764 = vmatpush1.bf16.msra.mxu0 %v408
    %765 = vmatprep.subr.bf16.mxu0 %v425
    %766 = vmatpush1.bf16.msra.mxu0 %v424
    %767 = vmatprep.subr.bf16.mxu0 0
    %768 = vmatpush1.bf16.msra.mxu0 0
    %769 = vmatprep.subr.bf16.mxu0 0
    %770 = vmatpush1.bf16.msra.mxu0 0
    %771 = vmatprep.subr.bf16.mxu0 0
    %772 = vmatpush1.bf16.msra.mxu0 0
    %773 = vmatprep.subr.bf16.mxu0 0
    %774 = vmatpush1.bf16.msra.mxu0 0
    %775 = vmatprep.subr.bf16.mxu0 0
    %776 = vmatpush1.bf16.msra.mxu0 0
    %777 = vmatprep.subr.bf16.mxu0 0
    %778 = vmatpush1.bf16.msra.mxu0 0
    %779 = vmatprep.subr.bf16.mxu0 0
    %780 = vmatpush1.bf16.msra.mxu0 0
    %781 = vmatprep.subr.bf16.mxu0 0
    %782 = vmatpush1.bf16.msra.mxu0 0
    %783 = vmatprep.subr.bf16.mxu0 0
    %784 = vmatpush1.bf16.msra.mxu0 0
    %785 = vmatprep.subr.bf16.mxu0 0
    %786 = vmatpush1.bf16.msra.mxu0 0
    %787 = vmatprep.subr.bf16.mxu0 0
    %788 = vmatpush1.bf16.msra.mxu0 0
    %789 = vmatprep.subr.bf16.mxu0 0
    %790 = vmatpush1.bf16.msra.mxu0 0
    %791 = vmatprep.subr.bf16.mxu0 0
    %792 = vmatpush1.bf16.msra.mxu0 0
    %793 = vmatprep.subr.bf16.mxu0 0
    %794 = vmatpush1.bf16.msra.mxu0 0
    %795 = vmatprep.mubr.bf16.mxu0 0
    %796 = vmatmul.mubr.bf16.gmra.mrb[0].mxu0 %v460
    %v797 = vpop.f32.mrb[0].mxu0
    %v798 = vadd.f32 %v277, %v797
    %v799 = vpop.f32.mrb[0].mxu0
    %v800 = vadd.f32 %v281, %v799
    %v801 = vpop.f32.mrb[0].mxu0
    %v802 = vadd.f32 %v277, %v801
    %v803 = vpop.f32.mrb[0].mxu0
    %v804 = vadd.f32 %v281, %v803
    %805 = vdwg.mxu0
    %v806 = vmax.f32 %v497, 0.0
    %v807 = vmax.f32 %v499, 0.0
    %v808 = vmax.f32 %v540, 0.0
    %v809 = vmax.f32 %v542, 0.0
    %v810 = vmax.f32 %v583, 0.0
    %v811 = vmax.f32 %v585, 0.0
    %v812 = vmax.f32 %v626, 0.0
    %v813 = vmax.f32 %v628, 0.0
    %v814 = vmax.f32 %v669, 0.0
    %v815 = vmax.f32 %v671, 0.0
    %v816 = vmax.f32 %v712, 0.0
    %v817 = vmax.f32 %v714, 0.0
    %v818 = vmax.f32 %v755, 0.0
    %v819 = vmax.f32 %v757, 0.0
    %v820 = vmax.f32 %v798, 0.0
    %v821 = vmax.f32 %v800, 0.0
    %v822 = vmax.f32 %v501, 0.0
    %v823 = vmax.f32 %v503, 0.0
    %v824 = vmax.f32 %v544, 0.0
    %v825 = vmax.f32 %v546, 0.0
    %v826 = vmax.f32 %v587, 0.0
    %v827 = vmax.f32 %v589, 0.0
    %v828 = vmax.f32 %v630, 0.0
    %v829 = vmax.f32 %v632, 0.0
    %v830 = vmax.f32 %v673, 0.0
    %v831 = vmax.f32 %v675, 0.0
    %v832 = vmax.f32 %v716, 0.0
    %v833 = vmax.f32 %v718, 0.0
    %v834 = vmax.f32 %v759, 0.0
    %v835 = vmax.f32 %v761, 0.0
    %v836 = vmax.f32 %v802, 0.0
    %v837 = vmax.f32 %v804, 0.0
    %v838 = vpack.c.bf16 %v822, %v806
    %v839 = vpack.c.bf16 %v823, %v807
    %v840 = vpack.c.bf16 %v824, %v808
    %v841 = vpack.c.bf16 %v825, %v809
    %v842 = vpack.c.bf16 %v826, %v810
    %v843 = vpack.c.bf16 %v827, %v811
    %v844 = vpack.c.bf16 %v828, %v812
    %v845 = vpack.c.bf16 %v829, %v813
    %v846 = vpack.c.bf16 %v830, %v814
    %v847 = vpack.c.bf16 %v831, %v815
    %v848 = vpack.c.bf16 %v832, %v816
    %v849 = vpack.c.bf16 %v833, %v817
    %v850 = vpack.c.bf16 %v834, %v818
    %v851 = vpack.c.bf16 %v835, %v819
    %v852 = vpack.c.bf16 %v836, %v820
    %v853 = vpack.c.bf16 %v837, %v821
    %v854 = vld [vmem:[#allocation8] sm:$0xff]
    %v855 = vld [vmem:[#allocation8 + $0x8] sm:$0xff]
    %v856 = vld [vmem:[#allocation8 + $0x10] sm:$0xff]
    %v857 = vld [vmem:[#allocation8 + $0x18] sm:$0xff]
    %v858 = vld [vmem:[#allocation8 + $0x20] sm:$0xff]
    %v859 = vld [vmem:[#allocation8 + $0x28] sm:$0xff]
    %v860 = vld [vmem:[#allocation8 + $0x30] sm:$0xff]
    %v861 = vld [vmem:[#allocation8 + $0x38] sm:$0xff]
    %v862 = vld [vmem:[#allocation8 + $0x40] sm:$0xff]
    %v863 = vld [vmem:[#allocation8 + $0x48] sm:$0xff]
    %v864 = vld [vmem:[#allocation8 + $0x50] sm:$0xff]
    %v865 = vld [vmem:[#allocation8 + $0x58] sm:$0xff]
    %v866 = vld [vmem:[#allocation8 + $0x60] sm:$0xff]
    %v867 = vld [vmem:[#allocation8 + $0x68] sm:$0xff]
    %v868 = vld [vmem:[#allocation8 + $0x70] sm:$0xff]
    %v869 = vld [vmem:[#allocation8 + $0x78] sm:$0xff]
    %v870 = vld [vmem:[#allocation8 + $0x80] sm:$0xff]
    %v871 = vld [vmem:[#allocation8 + $0x88] sm:$0xff]
    %v872 = vld [vmem:[#allocation8 + $0x90] sm:$0xff]
    %v873 = vld [vmem:[#allocation8 + $0x98] sm:$0xff]
    %v874 = vld [vmem:[#allocation8 + $0xa0] sm:$0xff]
    %v875 = vld [vmem:[#allocation8 + $0xa8] sm:$0xff]
    %v876 = vld [vmem:[#allocation8 + $0xb0] sm:$0xff]
    %v877 = vld [vmem:[#allocation8 + $0xb8] sm:$0xff]
    %v878 = vld [vmem:[#allocation8 + $0xc0] sm:$0xff]
    %v879 = vld [vmem:[#allocation8 + $0xc8] sm:$0xff]
    %v880 = vld [vmem:[#allocation8 + $0xd0] sm:$0xff]
    %v881 = vld [vmem:[#allocation8 + $0xd8] sm:$0xff]
    %v882 = vld [vmem:[#allocation8 + $0xe0] sm:$0xff]
    %v883 = vld [vmem:[#allocation8 + $0xe8] sm:$0xff]
    %v884 = vld [vmem:[#allocation8 + $0xf0] sm:$0xff]
    %v885 = vld [vmem:[#allocation8 + $0xf8] sm:$0xff]
    %v886 = vld [vmem:[#allocation8 + $0x100] sm:$0xff]
    %v887 = vld [vmem:[#allocation8 + $0x108] sm:$0xff]
    %v888 = vld [vmem:[#allocation8 + $0x110] sm:$0xff]
    %v889 = vld [vmem:[#allocation8 + $0x118] sm:$0xff]
    %v890 = vld [vmem:[#allocation8 + $0x120] sm:$0xff]
    %v891 = vld [vmem:[#allocation8 + $0x128] sm:$0xff]
    %v892 = vld [vmem:[#allocation8 + $0x130] sm:$0xff]
    %v893 = vld [vmem:[#allocation8 + $0x138] sm:$0xff]
    %v894 = vld [vmem:[#allocation8 + $0x140] sm:$0xff]
    %v895 = vld [vmem:[#allocation8 + $0x148] sm:$0xff]
    %v896 = vld [vmem:[#allocation8 + $0x150] sm:$0xff]
    %v897 = vld [vmem:[#allocation8 + $0x158] sm:$0xff]
    %v898 = vld [vmem:[#allocation8 + $0x160] sm:$0xff]
    %v899 = vld [vmem:[#allocation8 + $0x168] sm:$0xff]
    %v900 = vld [vmem:[#allocation8 + $0x170] sm:$0xff]
    %v901 = vld [vmem:[#allocation8 + $0x178] sm:$0xff]
    %v902 = vld [vmem:[#allocation8 + $0x180] sm:$0xff]
    %v903 = vld [vmem:[#allocation8 + $0x188] sm:$0xff]
    %v904 = vld [vmem:[#allocation8 + $0x190] sm:$0xff]
    %v905 = vld [vmem:[#allocation8 + $0x198] sm:$0xff]
    %v906 = vld [vmem:[#allocation8 + $0x1a0] sm:$0xff]
    %v907 = vld [vmem:[#allocation8 + $0x1a8] sm:$0xff]
    %v908 = vld [vmem:[#allocation8 + $0x1b0] sm:$0xff]
    %v909 = vld [vmem:[#allocation8 + $0x1b8] sm:$0xff]
    %v910 = vld [vmem:[#allocation8 + $0x1c0] sm:$0xff]
    %v911 = vld [vmem:[#allocation8 + $0x1c8] sm:$0xff]
    %v912 = vld [vmem:[#allocation8 + $0x1d0] sm:$0xff]
    %v913 = vld [vmem:[#allocation8 + $0x1d8] sm:$0xff]
    %v914 = vld [vmem:[#allocation8 + $0x1e0] sm:$0xff]
    %v915 = vld [vmem:[#allocation8 + $0x1e8] sm:$0xff]
    %v916 = vld [vmem:[#allocation8 + $0x1f0] sm:$0xff]
    %v917 = vld [vmem:[#allocation8 + $0x1f8] sm:$0xff]
    %v918 = vld [vmem:[#allocation8 + $0x200] sm:$0xff]
    %v919 = vld [vmem:[#allocation8 + $0x208] sm:$0xff]
    %v920 = vld [vmem:[#allocation8 + $0x210] sm:$0xff]
    %v921 = vld [vmem:[#allocation8 + $0x218] sm:$0xff]
    %v922 = vld [vmem:[#allocation8 + $0x220] sm:$0xff]
    %v923 = vld [vmem:[#allocation8 + $0x228] sm:$0xff]
    %v924 = vld [vmem:[#allocation8 + $0x230] sm:$0xff]
    %v925 = vld [vmem:[#allocation8 + $0x238] sm:$0xff]
    %v926 = vld [vmem:[#allocation8 + $0x240] sm:$0xff]
    %v927 = vld [vmem:[#allocation8 + $0x248] sm:$0xff]
    %v928 = vld [vmem:[#allocation8 + $0x250] sm:$0xff]
    %v929 = vld [vmem:[#allocation8 + $0x258] sm:$0xff]
    %v930 = vld [vmem:[#allocation8 + $0x260] sm:$0xff]
    %v931 = vld [vmem:[#allocation8 + $0x268] sm:$0xff]
    %v932 = vld [vmem:[#allocation8 + $0x270] sm:$0xff]
    %v933 = vld [vmem:[#allocation8 + $0x278] sm:$0xff]
    %v934 = vld [vmem:[#allocation8 + $0x280] sm:$0xff]
    %v935 = vld [vmem:[#allocation8 + $0x288] sm:$0xff]
    %v936 = vld [vmem:[#allocation8 + $0x290] sm:$0xff]
    %v937 = vld [vmem:[#allocation8 + $0x298] sm:$0xff]
    %v938 = vld [vmem:[#allocation8 + $0x2a0] sm:$0xff]
    %v939 = vld [vmem:[#allocation8 + $0x2a8] sm:$0xff]
    %v940 = vld [vmem:[#allocation8 + $0x2b0] sm:$0xff]
    %v941 = vld [vmem:[#allocation8 + $0x2b8] sm:$0xff]
    %v942 = vld [vmem:[#allocation8 + $0x2c0] sm:$0xff]
    %v943 = vld [vmem:[#allocation8 + $0x2c8] sm:$0xff]
    %v944 = vld [vmem:[#allocation8 + $0x2d0] sm:$0xff]
    %v945 = vld [vmem:[#allocation8 + $0x2d8] sm:$0xff]
    %v946 = vld [vmem:[#allocation8 + $0x2e0] sm:$0xff]
    %v947 = vld [vmem:[#allocation8 + $0x2e8] sm:$0xff]
    %v948 = vld [vmem:[#allocation8 + $0x2f0] sm:$0xff]
    %v949 = vld [vmem:[#allocation8 + $0x2f8] sm:$0xff]
    %v950 = vld [vmem:[#allocation8 + $0x300] sm:$0xff]
    %v951 = vld [vmem:[#allocation8 + $0x308] sm:$0xff]
    %v952 = vld [vmem:[#allocation8 + $0x310] sm:$0xff]
    %v953 = vld [vmem:[#allocation8 + $0x318] sm:$0xff]
    %v954 = vld [vmem:[#allocation8 + $0x320] sm:$0xff]
    %v955 = vld [vmem:[#allocation8 + $0x328] sm:$0xff]
    %v956 = vld [vmem:[#allocation8 + $0x330] sm:$0xff]
    %v957 = vld [vmem:[#allocation8 + $0x338] sm:$0xff]
    %v958 = vld [vmem:[#allocation8 + $0x340] sm:$0xff]
    %v959 = vld [vmem:[#allocation8 + $0x348] sm:$0xff]
    %v960 = vld [vmem:[#allocation8 + $0x350] sm:$0xff]
    %v961 = vld [vmem:[#allocation8 + $0x358] sm:$0xff]
    %v962 = vld [vmem:[#allocation8 + $0x360] sm:$0xff]
    %v963 = vld [vmem:[#allocation8 + $0x368] sm:$0xff]
    %v964 = vld [vmem:[#allocation8 + $0x370] sm:$0xff]
    %v965 = vld [vmem:[#allocation8 + $0x378] sm:$0xff]
    %v966 = vld [vmem:[#allocation8 + $0x380] sm:$0xff]
    %v967 = vld [vmem:[#allocation8 + $0x388] sm:$0xff]
    %v968 = vld [vmem:[#allocation8 + $0x390] sm:$0xff]
    %v969 = vld [vmem:[#allocation8 + $0x398] sm:$0xff]
    %v970 = vld [vmem:[#allocation8 + $0x3a0] sm:$0xff]
    %v971 = vld [vmem:[#allocation8 + $0x3a8] sm:$0xff]
    %v972 = vld [vmem:[#allocation8 + $0x3b0] sm:$0xff]
    %v973 = vld [vmem:[#allocation8 + $0x3b8] sm:$0xff]
    %v974 = vld [vmem:[#allocation8 + $0x3c0] sm:$0xff]
    %v975 = vld [vmem:[#allocation8 + $0x3c8] sm:$0xff]
    %v976 = vld [vmem:[#allocation8 + $0x3d0] sm:$0xff]
    %v977 = vld [vmem:[#allocation8 + $0x3d8] sm:$0xff]
    %v978 = vld [vmem:[#allocation8 + $0x3e0] sm:$0xff]
    %v979 = vld [vmem:[#allocation8 + $0x3e8] sm:$0xff]
    %v980 = vld [vmem:[#allocation8 + $0x3f0] sm:$0xff]
    %v981 = vld [vmem:[#allocation8 + $0x3f8] sm:$0xff]
    %v982 = vld [vmem:[#allocation8 + $0x400] sm:$0xff]
    %v983 = vld [vmem:[#allocation8 + $0x408] sm:$0xff]
    %v984 = vld [vmem:[#allocation8 + $0x410] sm:$0xff]
    %v985 = vld [vmem:[#allocation8 + $0x418] sm:$0xff]
    %v986 = vld [vmem:[#allocation8 + $0x420] sm:$0xff]
    %v987 = vld [vmem:[#allocation8 + $0x428] sm:$0xff]
    %v988 = vld [vmem:[#allocation8 + $0x430] sm:$0xff]
    %v989 = vld [vmem:[#allocation8 + $0x438] sm:$0xff]
    %v990 = vld [vmem:[#allocation8 + $0x440] sm:$0xff]
    %v991 = vld [vmem:[#allocation8 + $0x448] sm:$0xff]
    %v992 = vld [vmem:[#allocation8 + $0x450] sm:$0xff]
    %v993 = vld [vmem:[#allocation8 + $0x458] sm:$0xff]
    %v994 = vld [vmem:[#allocation8 + $0x460] sm:$0xff]
    %v995 = vld [vmem:[#allocation8 + $0x468] sm:$0xff]
    %v996 = vld [vmem:[#allocation8 + $0x470] sm:$0xff]
    %v997 = vld [vmem:[#allocation8 + $0x478] sm:$0xff]
    %v998 = vld [vmem:[#allocation8 + $0x480] sm:$0xff]
    %v999 = vld [vmem:[#allocation8 + $0x488] sm:$0xff]
    %v1000 = vld [vmem:[#allocation8 + $0x490] sm:$0xff]
    %v1001 = vld [vmem:[#allocation8 + $0x498] sm:$0xff]
    %v1002 = vld [vmem:[#allocation8 + $0x4a0] sm:$0xff]
    %v1003 = vld [vmem:[#allocation8 + $0x4a8] sm:$0xff]
    %v1004 = vld [vmem:[#allocation8 + $0x4b0] sm:$0xff]
    %v1005 = vld [vmem:[#allocation8 + $0x4b8] sm:$0xff]
    %v1006 = vld [vmem:[#allocation8 + $0x4c0] sm:$0xff]
    %v1007 = vld [vmem:[#allocation8 + $0x4c8] sm:$0xff]
    %v1008 = vld [vmem:[#allocation8 + $0x4d0] sm:$0xff]
    %v1009 = vld [vmem:[#allocation8 + $0x4d8] sm:$0xff]
    %v1010 = vld [vmem:[#allocation8 + $0x4e0] sm:$0xff]
    %v1011 = vld [vmem:[#allocation8 + $0x4e8] sm:$0xff]
    %v1012 = vld [vmem:[#allocation8 + $0x4f0] sm:$0xff]
    %v1013 = vld [vmem:[#allocation8 + $0x4f8] sm:$0xff]
    %v1014 = vld [vmem:[#allocation8 + $0x500] sm:$0xff]
    %v1015 = vld [vmem:[#allocation8 + $0x508] sm:$0xff]
    %v1016 = vld [vmem:[#allocation8 + $0x510] sm:$0xff]
    %v1017 = vld [vmem:[#allocation8 + $0x518] sm:$0xff]
    %v1018 = vld [vmem:[#allocation8 + $0x520] sm:$0xff]
    %v1019 = vld [vmem:[#allocation8 + $0x528] sm:$0xff]
    %v1020 = vld [vmem:[#allocation8 + $0x530] sm:$0xff]
    %v1021 = vld [vmem:[#allocation8 + $0x538] sm:$0xff]
    %v1022 = vld [vmem:[#allocation8 + $0x540] sm:$0xff]
    %v1023 = vld [vmem:[#allocation8 + $0x548] sm:$0xff]
    %v1024 = vld [vmem:[#allocation8 + $0x550] sm:$0xff]
    %v1025 = vld [vmem:[#allocation8 + $0x558] sm:$0xff]
    %v1026 = vld [vmem:[#allocation8 + $0x560] sm:$0xff]
    %v1027 = vld [vmem:[#allocation8 + $0x568] sm:$0xff]
    %v1028 = vld [vmem:[#allocation8 + $0x570] sm:$0xff]
    %v1029 = vld [vmem:[#allocation8 + $0x578] sm:$0xff]
    %v1030 = vld [vmem:[#allocation8 + $0x580] sm:$0xff]
    %v1031 = vld [vmem:[#allocation8 + $0x588] sm:$0xff]
    %v1032 = vld [vmem:[#allocation8 + $0x590] sm:$0xff]
    %v1033 = vld [vmem:[#allocation8 + $0x598] sm:$0xff]
    %v1034 = vld [vmem:[#allocation8 + $0x5a0] sm:$0xff]
    %v1035 = vld [vmem:[#allocation8 + $0x5a8] sm:$0xff]
    %v1036 = vld [vmem:[#allocation8 + $0x5b0] sm:$0xff]
    %v1037 = vld [vmem:[#allocation8 + $0x5b8] sm:$0xff]
    %v1038 = vld [vmem:[#allocation8 + $0x5c0] sm:$0xff]
    %v1039 = vld [vmem:[#allocation8 + $0x5c8] sm:$0xff]
    %v1040 = vld [vmem:[#allocation8 + $0x5d0] sm:$0xff]
    %v1041 = vld [vmem:[#allocation8 + $0x5d8] sm:$0xff]
    %v1042 = vld [vmem:[#allocation8 + $0x5e0] sm:$0xff]
    %v1043 = vld [vmem:[#allocation8 + $0x5e8] sm:$0xff]
    %v1044 = vld [vmem:[#allocation8 + $0x5f0] sm:$0xff]
    %v1045 = vld [vmem:[#allocation8 + $0x5f8] sm:$0xff]
    %v1046 = vld [vmem:[#allocation8 + $0x600] sm:$0xff]
    %v1047 = vld [vmem:[#allocation8 + $0x608] sm:$0xff]
    %v1048 = vld [vmem:[#allocation8 + $0x610] sm:$0xff]
    %v1049 = vld [vmem:[#allocation8 + $0x618] sm:$0xff]
    %v1050 = vld [vmem:[#allocation8 + $0x620] sm:$0xff]
    %v1051 = vld [vmem:[#allocation8 + $0x628] sm:$0xff]
    %v1052 = vld [vmem:[#allocation8 + $0x630] sm:$0xff]
    %v1053 = vld [vmem:[#allocation8 + $0x638] sm:$0xff]
    %v1054 = vld [vmem:[#allocation8 + $0x640] sm:$0xff]
    %v1055 = vld [vmem:[#allocation8 + $0x648] sm:$0xff]
    %v1056 = vld [vmem:[#allocation8 + $0x650] sm:$0xff]
    %v1057 = vld [vmem:[#allocation8 + $0x658] sm:$0xff]
    %v1058 = vld [vmem:[#allocation8 + $0x660] sm:$0xff]
    %v1059 = vld [vmem:[#allocation8 + $0x668] sm:$0xff]
    %v1060 = vld [vmem:[#allocation8 + $0x670] sm:$0xff]
    %v1061 = vld [vmem:[#allocation8 + $0x678] sm:$0xff]
    %v1062 = vld [vmem:[#allocation8 + $0x680] sm:$0xff]
    %v1063 = vld [vmem:[#allocation8 + $0x688] sm:$0xff]
    %v1064 = vld [vmem:[#allocation8 + $0x690] sm:$0xff]
    %v1065 = vld [vmem:[#allocation8 + $0x698] sm:$0xff]
    %v1066 = vld [vmem:[#allocation8 + $0x6a0] sm:$0xff]
    %v1067 = vld [vmem:[#allocation8 + $0x6a8] sm:$0xff]
    %v1068 = vld [vmem:[#allocation8 + $0x6b0] sm:$0xff]
    %v1069 = vld [vmem:[#allocation8 + $0x6b8] sm:$0xff]
    %v1070 = vld [vmem:[#allocation8 + $0x6c0] sm:$0xff]
    %v1071 = vld [vmem:[#allocation8 + $0x6c8] sm:$0xff]
    %v1072 = vld [vmem:[#allocation8 + $0x6d0] sm:$0xff]
    %v1073 = vld [vmem:[#allocation8 + $0x6d8] sm:$0xff]
    %v1074 = vld [vmem:[#allocation8 + $0x6e0] sm:$0xff]
    %v1075 = vld [vmem:[#allocation8 + $0x6e8] sm:$0xff]
    %v1076 = vld [vmem:[#allocation8 + $0x6f0] sm:$0xff]
    %v1077 = vld [vmem:[#allocation8 + $0x6f8] sm:$0xff]
    %v1078 = vld [vmem:[#allocation8 + $0x700] sm:$0xff]
    %v1079 = vld [vmem:[#allocation8 + $0x708] sm:$0xff]
    %v1080 = vld [vmem:[#allocation8 + $0x710] sm:$0xff]
    %v1081 = vld [vmem:[#allocation8 + $0x718] sm:$0xff]
    %v1082 = vld [vmem:[#allocation8 + $0x720] sm:$0xff]
    %v1083 = vld [vmem:[#allocation8 + $0x728] sm:$0xff]
    %v1084 = vld [vmem:[#allocation8 + $0x730] sm:$0xff]
    %v1085 = vld [vmem:[#allocation8 + $0x738] sm:$0xff]
    %v1086 = vld [vmem:[#allocation8 + $0x740] sm:$0xff]
    %v1087 = vld [vmem:[#allocation8 + $0x748] sm:$0xff]
    %v1088 = vld [vmem:[#allocation8 + $0x750] sm:$0xff]
    %v1089 = vld [vmem:[#allocation8 + $0x758] sm:$0xff]
    %v1090 = vld [vmem:[#allocation8 + $0x760] sm:$0xff]
    %v1091 = vld [vmem:[#allocation8 + $0x768] sm:$0xff]
    %v1092 = vld [vmem:[#allocation8 + $0x770] sm:$0xff]
    %v1093 = vld [vmem:[#allocation8 + $0x778] sm:$0xff]
    %v1094 = vld [vmem:[#allocation8 + $0x780] sm:$0xff]
    %v1095 = vld [vmem:[#allocation8 + $0x788] sm:$0xff]
    %v1096 = vld [vmem:[#allocation8 + $0x790] sm:$0xff]
    %v1097 = vld [vmem:[#allocation8 + $0x798] sm:$0xff]
    %v1098 = vld [vmem:[#allocation8 + $0x7a0] sm:$0xff]
    %v1099 = vld [vmem:[#allocation8 + $0x7a8] sm:$0xff]
    %v1100 = vld [vmem:[#allocation8 + $0x7b0] sm:$0xff]
    %v1101 = vld [vmem:[#allocation8 + $0x7b8] sm:$0xff]
    %v1102 = vld [vmem:[#allocation8 + $0x7c0] sm:$0xff]
    %v1103 = vld [vmem:[#allocation8 + $0x7c8] sm:$0xff]
    %v1104 = vld [vmem:[#allocation8 + $0x7d0] sm:$0xff]
    %v1105 = vld [vmem:[#allocation8 + $0x7d8] sm:$0xff]
    %v1106 = vld [vmem:[#allocation8 + $0x7e0] sm:$0xff]
    %v1107 = vld [vmem:[#allocation8 + $0x7e8] sm:$0xff]
    %v1108 = vld [vmem:[#allocation8 + $0x7f0] sm:$0xff]
    %v1109 = vld [vmem:[#allocation8 + $0x7f8] sm:$0xff]
    %v1110 = vld [vmem:[#allocation8 + $0x800] sm:$0xff]
    %v1111 = vld [vmem:[#allocation8 + $0x808] sm:$0xff]
    %v1112 = vld [vmem:[#allocation8 + $0x810] sm:$0xff]
    %v1113 = vld [vmem:[#allocation8 + $0x818] sm:$0xff]
    %v1114 = vld [vmem:[#allocation8 + $0x820] sm:$0xff]
    %v1115 = vld [vmem:[#allocation8 + $0x828] sm:$0xff]
    %v1116 = vld [vmem:[#allocation8 + $0x830] sm:$0xff]
    %v1117 = vld [vmem:[#allocation8 + $0x838] sm:$0xff]
    %v1118 = vld [vmem:[#allocation8 + $0x840] sm:$0xff]
    %v1119 = vld [vmem:[#allocation8 + $0x848] sm:$0xff]
    %v1120 = vld [vmem:[#allocation8 + $0x850] sm:$0xff]
    %v1121 = vld [vmem:[#allocation8 + $0x858] sm:$0xff]
    %v1122 = vld [vmem:[#allocation8 + $0x860] sm:$0xff]
    %v1123 = vld [vmem:[#allocation8 + $0x868] sm:$0xff]
    %v1124 = vld [vmem:[#allocation8 + $0x870] sm:$0xff]
    %v1125 = vld [vmem:[#allocation8 + $0x878] sm:$0xff]
    %v1126 = vld [vmem:[#allocation8 + $0x880] sm:$0xff]
    %v1127 = vld [vmem:[#allocation8 + $0x888] sm:$0xff]
    %v1128 = vld [vmem:[#allocation8 + $0x890] sm:$0xff]
    %v1129 = vld [vmem:[#allocation8 + $0x898] sm:$0xff]
    %v1130 = vld [vmem:[#allocation8 + $0x8a0] sm:$0xff]
    %v1131 = vld [vmem:[#allocation8 + $0x8a8] sm:$0xff]
    %v1132 = vld [vmem:[#allocation8 + $0x8b0] sm:$0xff]
    %v1133 = vld [vmem:[#allocation8 + $0x8b8] sm:$0xff]
    %v1134 = vld [vmem:[#allocation8 + $0x8c0] sm:$0xff]
    %v1135 = vld [vmem:[#allocation8 + $0x8c8] sm:$0xff]
    %v1136 = vld [vmem:[#allocation8 + $0x8d0] sm:$0xff]
    %v1137 = vld [vmem:[#allocation8 + $0x8d8] sm:$0xff]
    %v1138 = vld [vmem:[#allocation8 + $0x8e0] sm:$0xff]
    %v1139 = vld [vmem:[#allocation8 + $0x8e8] sm:$0xff]
    %v1140 = vld [vmem:[#allocation8 + $0x8f0] sm:$0xff]
    %v1141 = vld [vmem:[#allocation8 + $0x8f8] sm:$0xff]
    %v1142 = vld [vmem:[#allocation8 + $0x900] sm:$0xff]
    %v1143 = vld [vmem:[#allocation8 + $0x908] sm:$0xff]
    %v1144 = vld [vmem:[#allocation8 + $0x910] sm:$0xff]
    %v1145 = vld [vmem:[#allocation8 + $0x918] sm:$0xff]
    %v1146 = vld [vmem:[#allocation8 + $0x920] sm:$0xff]
    %v1147 = vld [vmem:[#allocation8 + $0x928] sm:$0xff]
    %v1148 = vld [vmem:[#allocation8 + $0x930] sm:$0xff]
    %v1149 = vld [vmem:[#allocation8 + $0x938] sm:$0xff]
    %v1150 = vld [vmem:[#allocation8 + $0x940] sm:$0xff]
    %v1151 = vld [vmem:[#allocation8 + $0x948] sm:$0xff]
    %v1152 = vld [vmem:[#allocation8 + $0x950] sm:$0xff]
    %v1153 = vld [vmem:[#allocation8 + $0x958] sm:$0xff]
    %v1154 = vld [vmem:[#allocation8 + $0x960] sm:$0xff]
    %v1155 = vld [vmem:[#allocation8 + $0x968] sm:$0xff]
    %v1156 = vld [vmem:[#allocation8 + $0x970] sm:$0xff]
    %v1157 = vld [vmem:[#allocation8 + $0x978] sm:$0xff]
    %v1158 = vld [vmem:[#allocation8 + $0x980] sm:$0xff]
    %v1159 = vld [vmem:[#allocation8 + $0x988] sm:$0xff]
    %v1160 = vld [vmem:[#allocation8 + $0x990] sm:$0xff]
    %v1161 = vld [vmem:[#allocation8 + $0x998] sm:$0xff]
    %v1162 = vld [vmem:[#allocation8 + $0x9a0] sm:$0xff]
    %v1163 = vld [vmem:[#allocation8 + $0x9a8] sm:$0xff]
    %v1164 = vld [vmem:[#allocation8 + $0x9b0] sm:$0xff]
    %v1165 = vld [vmem:[#allocation8 + $0x9b8] sm:$0xff]
    %v1166 = vld [vmem:[#allocation8 + $0x9c0] sm:$0xff]
    %v1167 = vld [vmem:[#allocation8 + $0x9c8] sm:$0xff]
    %v1168 = vld [vmem:[#allocation8 + $0x9d0] sm:$0xff]
    %v1169 = vld [vmem:[#allocation8 + $0x9d8] sm:$0xff]
    %v1170 = vld [vmem:[#allocation8 + $0x9e0] sm:$0xff]
    %v1171 = vld [vmem:[#allocation8 + $0x9e8] sm:$0xff]
    %v1172 = vld [vmem:[#allocation8 + $0x9f0] sm:$0xff]
    %v1173 = vld [vmem:[#allocation8 + $0x9f8] sm:$0xff]
    %v1174 = vld [vmem:[#allocation8 + $0xa00] sm:$0xff]
    %v1175 = vld [vmem:[#allocation8 + $0xa08] sm:$0xff]
    %v1176 = vld [vmem:[#allocation8 + $0xa10] sm:$0xff]
    %v1177 = vld [vmem:[#allocation8 + $0xa18] sm:$0xff]
    %v1178 = vld [vmem:[#allocation8 + $0xa20] sm:$0xff]
    %v1179 = vld [vmem:[#allocation8 + $0xa28] sm:$0xff]
    %v1180 = vld [vmem:[#allocation8 + $0xa30] sm:$0xff]
    %v1181 = vld [vmem:[#allocation8 + $0xa38] sm:$0xff]
    %v1182 = vld [vmem:[#allocation8 + $0xa40] sm:$0xff]
    %v1183 = vld [vmem:[#allocation8 + $0xa48] sm:$0xff]
    %v1184 = vld [vmem:[#allocation8 + $0xa50] sm:$0xff]
    %v1185 = vld [vmem:[#allocation8 + $0xa58] sm:$0xff]
    %v1186 = vld [vmem:[#allocation8 + $0xa60] sm:$0xff]
    %v1187 = vld [vmem:[#allocation8 + $0xa68] sm:$0xff]
    %v1188 = vld [vmem:[#allocation8 + $0xa70] sm:$0xff]
    %v1189 = vld [vmem:[#allocation8 + $0xa78] sm:$0xff]
    %v1190 = vld [vmem:[#allocation8 + $0xa80] sm:$0xff]
    %v1191 = vld [vmem:[#allocation8 + $0xa88] sm:$0xff]
    %v1192 = vld [vmem:[#allocation8 + $0xa90] sm:$0xff]
    %v1193 = vld [vmem:[#allocation8 + $0xa98] sm:$0xff]
    %v1194 = vld [vmem:[#allocation8 + $0xaa0] sm:$0xff]
    %v1195 = vld [vmem:[#allocation8 + $0xaa8] sm:$0xff]
    %v1196 = vld [vmem:[#allocation8 + $0xab0] sm:$0xff]
    %v1197 = vld [vmem:[#allocation8 + $0xab8] sm:$0xff]
    %v1198 = vld [vmem:[#allocation8 + $0xac0] sm:$0xff]
    %v1199 = vld [vmem:[#allocation8 + $0xac8] sm:$0xff]
    %v1200 = vld [vmem:[#allocation8 + $0xad0] sm:$0xff]
    %v1201 = vld [vmem:[#allocation8 + $0xad8] sm:$0xff]
    %v1202 = vld [vmem:[#allocation8 + $0xae0] sm:$0xff]
    %v1203 = vld [vmem:[#allocation8 + $0xae8] sm:$0xff]
    %v1204 = vld [vmem:[#allocation8 + $0xaf0] sm:$0xff]
    %v1205 = vld [vmem:[#allocation8 + $0xaf8] sm:$0xff]
    %v1206 = vld [vmem:[#allocation8 + $0xb00] sm:$0xff]
    %v1207 = vld [vmem:[#allocation8 + $0xb08] sm:$0xff]
    %v1208 = vld [vmem:[#allocation8 + $0xb10] sm:$0xff]
    %v1209 = vld [vmem:[#allocation8 + $0xb18] sm:$0xff]
    %v1210 = vld [vmem:[#allocation8 + $0xb20] sm:$0xff]
    %v1211 = vld [vmem:[#allocation8 + $0xb28] sm:$0xff]
    %v1212 = vld [vmem:[#allocation8 + $0xb30] sm:$0xff]
    %v1213 = vld [vmem:[#allocation8 + $0xb38] sm:$0xff]
    %v1214 = vld [vmem:[#allocation8 + $0xb40] sm:$0xff]
    %v1215 = vld [vmem:[#allocation8 + $0xb48] sm:$0xff]
    %v1216 = vld [vmem:[#allocation8 + $0xb50] sm:$0xff]
    %v1217 = vld [vmem:[#allocation8 + $0xb58] sm:$0xff]
    %v1218 = vld [vmem:[#allocation8 + $0xb60] sm:$0xff]
    %v1219 = vld [vmem:[#allocation8 + $0xb68] sm:$0xff]
    %v1220 = vld [vmem:[#allocation8 + $0xb70] sm:$0xff]
    %v1221 = vld [vmem:[#allocation8 + $0xb78] sm:$0xff]
    %v1222 = vld [vmem:[#allocation8 + $0xb80] sm:$0xff]
    %v1223 = vld [vmem:[#allocation8 + $0xb88] sm:$0xff]
    %v1224 = vld [vmem:[#allocation8 + $0xb90] sm:$0xff]
    %v1225 = vld [vmem:[#allocation8 + $0xb98] sm:$0xff]
    %v1226 = vld [vmem:[#allocation8 + $0xba0] sm:$0xff]
    %v1227 = vld [vmem:[#allocation8 + $0xba8] sm:$0xff]
    %v1228 = vld [vmem:[#allocation8 + $0xbb0] sm:$0xff]
    %v1229 = vld [vmem:[#allocation8 + $0xbb8] sm:$0xff]
    %v1230 = vld [vmem:[#allocation8 + $0xbc0] sm:$0xff]
    %v1231 = vld [vmem:[#allocation8 + $0xbc8] sm:$0xff]
    %v1232 = vld [vmem:[#allocation8 + $0xbd0] sm:$0xff]
    %v1233 = vld [vmem:[#allocation8 + $0xbd8] sm:$0xff]
    %v1234 = vld [vmem:[#allocation8 + $0xbe0] sm:$0xff]
    %v1235 = vld [vmem:[#allocation8 + $0xbe8] sm:$0xff]
    %v1236 = vld [vmem:[#allocation8 + $0xbf0] sm:$0xff]
    %v1237 = vld [vmem:[#allocation8 + $0xbf8] sm:$0xff]
    %v1238 = vld [vmem:[#allocation8 + $0xc00] sm:$0xff]
    %v1239 = vld [vmem:[#allocation8 + $0xc08] sm:$0xff]
    %v1240 = vld [vmem:[#allocation8 + $0xc10] sm:$0xff]
    %v1241 = vld [vmem:[#allocation8 + $0xc18] sm:$0xff]
    %v1242 = vld [vmem:[#allocation8 + $0xc20] sm:$0xff]
    %v1243 = vld [vmem:[#allocation8 + $0xc28] sm:$0xff]
    %v1244 = vld [vmem:[#allocation8 + $0xc30] sm:$0xff]
    %v1245 = vld [vmem:[#allocation8 + $0xc38] sm:$0xff]
    %v1246 = vld [vmem:[#allocation8 + $0xc40] sm:$0xff]
    %v1247 = vld [vmem:[#allocation8 + $0xc48] sm:$0xff]
    %v1248 = vld [vmem:[#allocation8 + $0xc50] sm:$0xff]
    %v1249 = vld [vmem:[#allocation8 + $0xc58] sm:$0xff]
    %v1250 = vld [vmem:[#allocation8 + $0xc60] sm:$0xff]
    %v1251 = vld [vmem:[#allocation8 + $0xc68] sm:$0xff]
    %v1252 = vld [vmem:[#allocation8 + $0xc70] sm:$0xff]
    %v1253 = vld [vmem:[#allocation8 + $0xc78] sm:$0xff]
    %v1254 = vld [vmem:[#allocation8 + $0xc80] sm:$0xff]
    %v1255 = vld [vmem:[#allocation8 + $0xc88] sm:$0xff]
    %v1256 = vld [vmem:[#allocation8 + $0xc90] sm:$0xff]
    %v1257 = vld [vmem:[#allocation8 + $0xc98] sm:$0xff]
    %v1258 = vld [vmem:[#allocation8 + $0xca0] sm:$0xff]
    %v1259 = vld [vmem:[#allocation8 + $0xca8] sm:$0xff]
    %v1260 = vld [vmem:[#allocation8 + $0xcb0] sm:$0xff]
    %v1261 = vld [vmem:[#allocation8 + $0xcb8] sm:$0xff]
    %v1262 = vld [vmem:[#allocation8 + $0xcc0] sm:$0xff]
    %v1263 = vld [vmem:[#allocation8 + $0xcc8] sm:$0xff]
    %v1264 = vld [vmem:[#allocation8 + $0xcd0] sm:$0xff]
    %v1265 = vld [vmem:[#allocation8 + $0xcd8] sm:$0xff]
    %v1266 = vld [vmem:[#allocation8 + $0xce0] sm:$0xff]
    %v1267 = vld [vmem:[#allocation8 + $0xce8] sm:$0xff]
    %v1268 = vld [vmem:[#allocation8 + $0xcf0] sm:$0xff]
    %v1269 = vld [vmem:[#allocation8 + $0xcf8] sm:$0xff]
    %v1270 = vld [vmem:[#allocation8 + $0xd00] sm:$0xff]
    %v1271 = vld [vmem:[#allocation8 + $0xd08] sm:$0xff]
    %v1272 = vld [vmem:[#allocation8 + $0xd10] sm:$0xff]
    %v1273 = vld [vmem:[#allocation8 + $0xd18] sm:$0xff]
    %v1274 = vld [vmem:[#allocation8 + $0xd20] sm:$0xff]
    %v1275 = vld [vmem:[#allocation8 + $0xd28] sm:$0xff]
    %v1276 = vld [vmem:[#allocation8 + $0xd30] sm:$0xff]
    %v1277 = vld [vmem:[#allocation8 + $0xd38] sm:$0xff]
    %v1278 = vld [vmem:[#allocation8 + $0xd40] sm:$0xff]
    %v1279 = vld [vmem:[#allocation8 + $0xd48] sm:$0xff]
    %v1280 = vld [vmem:[#allocation8 + $0xd50] sm:$0xff]
    %v1281 = vld [vmem:[#allocation8 + $0xd58] sm:$0xff]
    %v1282 = vld [vmem:[#allocation8 + $0xd60] sm:$0xff]
    %v1283 = vld [vmem:[#allocation8 + $0xd68] sm:$0xff]
    %v1284 = vld [vmem:[#allocation8 + $0xd70] sm:$0xff]
    %v1285 = vld [vmem:[#allocation8 + $0xd78] sm:$0xff]
    %v1286 = vld [vmem:[#allocation8 + $0xd80] sm:$0xff]
    %v1287 = vld [vmem:[#allocation8 + $0xd88] sm:$0xff]
    %v1288 = vld [vmem:[#allocation8 + $0xd90] sm:$0xff]
    %v1289 = vld [vmem:[#allocation8 + $0xd98] sm:$0xff]
    %v1290 = vld [vmem:[#allocation8 + $0xda0] sm:$0xff]
    %v1291 = vld [vmem:[#allocation8 + $0xda8] sm:$0xff]
    %v1292 = vld [vmem:[#allocation8 + $0xdb0] sm:$0xff]
    %v1293 = vld [vmem:[#allocation8 + $0xdb8] sm:$0xff]
    %v1294 = vld [vmem:[#allocation8 + $0xdc0] sm:$0xff]
    %v1295 = vld [vmem:[#allocation8 + $0xdc8] sm:$0xff]
    %v1296 = vld [vmem:[#allocation8 + $0xdd0] sm:$0xff]
    %v1297 = vld [vmem:[#allocation8 + $0xdd8] sm:$0xff]
    %v1298 = vld [vmem:[#allocation8 + $0xde0] sm:$0xff]
    %v1299 = vld [vmem:[#allocation8 + $0xde8] sm:$0xff]
    %v1300 = vld [vmem:[#allocation8 + $0xdf0] sm:$0xff]
    %v1301 = vld [vmem:[#allocation8 + $0xdf8] sm:$0xff]
    %v1302 = vld [vmem:[#allocation8 + $0xe00] sm:$0xff]
    %v1303 = vld [vmem:[#allocation8 + $0xe08] sm:$0xff]
    %v1304 = vld [vmem:[#allocation8 + $0xe10] sm:$0xff]
    %v1305 = vld [vmem:[#allocation8 + $0xe18] sm:$0xff]
    %v1306 = vld [vmem:[#allocation8 + $0xe20] sm:$0xff]
    %v1307 = vld [vmem:[#allocation8 + $0xe28] sm:$0xff]
    %v1308 = vld [vmem:[#allocation8 + $0xe30] sm:$0xff]
    %v1309 = vld [vmem:[#allocation8 + $0xe38] sm:$0xff]
    %v1310 = vld [vmem:[#allocation8 + $0xe40] sm:$0xff]
    %v1311 = vld [vmem:[#allocation8 + $0xe48] sm:$0xff]
    %v1312 = vld [vmem:[#allocation8 + $0xe50] sm:$0xff]
    %v1313 = vld [vmem:[#allocation8 + $0xe58] sm:$0xff]
    %v1314 = vld [vmem:[#allocation8 + $0xe60] sm:$0xff]
    %v1315 = vld [vmem:[#allocation8 + $0xe68] sm:$0xff]
    %v1316 = vld [vmem:[#allocation8 + $0xe70] sm:$0xff]
    %v1317 = vld [vmem:[#allocation8 + $0xe78] sm:$0xff]
    %v1318 = vld [vmem:[#allocation8 + $0xe80] sm:$0xff]
    %v1319 = vld [vmem:[#allocation8 + $0xe88] sm:$0xff]
    %v1320 = vld [vmem:[#allocation8 + $0xe90] sm:$0xff]
    %v1321 = vld [vmem:[#allocation8 + $0xe98] sm:$0xff]
    %v1322 = vld [vmem:[#allocation8 + $0xea0] sm:$0xff]
    %v1323 = vld [vmem:[#allocation8 + $0xea8] sm:$0xff]
    %v1324 = vld [vmem:[#allocation8 + $0xeb0] sm:$0xff]
    %v1325 = vld [vmem:[#allocation8 + $0xeb8] sm:$0xff]
    %v1326 = vld [vmem:[#allocation8 + $0xec0] sm:$0xff]
    %v1327 = vld [vmem:[#allocation8 + $0xec8] sm:$0xff]
    %v1328 = vld [vmem:[#allocation8 + $0xed0] sm:$0xff]
    %v1329 = vld [vmem:[#allocation8 + $0xed8] sm:$0xff]
    %v1330 = vld [vmem:[#allocation8 + $0xee0] sm:$0xff]
    %v1331 = vld [vmem:[#allocation8 + $0xee8] sm:$0xff]
    %v1332 = vld [vmem:[#allocation8 + $0xef0] sm:$0xff]
    %v1333 = vld [vmem:[#allocation8 + $0xef8] sm:$0xff]
    %v1334 = vld [vmem:[#allocation8 + $0xf00] sm:$0xff]
    %v1335 = vld [vmem:[#allocation8 + $0xf08] sm:$0xff]
    %v1336 = vld [vmem:[#allocation8 + $0xf10] sm:$0xff]
    %v1337 = vld [vmem:[#allocation8 + $0xf18] sm:$0xff]
    %v1338 = vld [vmem:[#allocation8 + $0xf20] sm:$0xff]
    %v1339 = vld [vmem:[#allocation8 + $0xf28] sm:$0xff]
    %v1340 = vld [vmem:[#allocation8 + $0xf30] sm:$0xff]
    %v1341 = vld [vmem:[#allocation8 + $0xf38] sm:$0xff]
    %v1342 = vld [vmem:[#allocation8 + $0xf40] sm:$0xff]
    %v1343 = vld [vmem:[#allocation8 + $0xf48] sm:$0xff]
    %v1344 = vld [vmem:[#allocation8 + $0xf50] sm:$0xff]
    %v1345 = vld [vmem:[#allocation8 + $0xf58] sm:$0xff]
    %v1346 = vld [vmem:[#allocation8 + $0xf60] sm:$0xff]
    %v1347 = vld [vmem:[#allocation8 + $0xf68] sm:$0xff]
    %v1348 = vld [vmem:[#allocation8 + $0xf70] sm:$0xff]
    %v1349 = vld [vmem:[#allocation8 + $0xf78] sm:$0xff]
    %v1350 = vld [vmem:[#allocation8 + $0xf80] sm:$0xff]
    %v1351 = vld [vmem:[#allocation8 + $0xf88] sm:$0xff]
    %v1352 = vld [vmem:[#allocation8 + $0xf90] sm:$0xff]
    %v1353 = vld [vmem:[#allocation8 + $0xf98] sm:$0xff]
    %v1354 = vld [vmem:[#allocation8 + $0xfa0] sm:$0xff]
    %v1355 = vld [vmem:[#allocation8 + $0xfa8] sm:$0xff]
    %v1356 = vld [vmem:[#allocation8 + $0xfb0] sm:$0xff]
    %v1357 = vld [vmem:[#allocation8 + $0xfb8] sm:$0xff]
    %v1358 = vld [vmem:[#allocation8 + $0xfc0] sm:$0xff]
    %v1359 = vld [vmem:[#allocation8 + $0xfc8] sm:$0xff]
    %v1360 = vld [vmem:[#allocation8 + $0xfd0] sm:$0xff]
    %v1361 = vld [vmem:[#allocation8 + $0xfd8] sm:$0xff]
    %v1362 = vld [vmem:[#allocation8 + $0xfe0] sm:$0xff]
    %v1363 = vld [vmem:[#allocation8 + $0xfe8] sm:$0xff]
    %v1364 = vld [vmem:[#allocation8 + $0xff0] sm:$0xff]
    %v1365 = vld [vmem:[#allocation8 + $0xff8] sm:$0xff]
    %v1366 = vld [vmem:[#allocation10] sm:$0xf]
    %v1368 = vlaneseq
    %v1369 = vshrl.u32 %v1368, 7
    %v1370 = vsub.s32 0, %v1369
    %v1371 = vrot.slane %v1366, %v1370
    %v1372 = vlaneseq
    %v1373 = vshrl.u32 %v1372, 7
    %v1374 = vsub.s32 1, %v1373
    %v1375 = vrot.slane %v1366, %v1374
    %v1376 = vlaneseq
    %v1377 = vshrl.u32 %v1376, 7
    %v1378 = vsub.s32 2, %v1377
    %v1379 = vrot.slane %v1366, %v1378
    %v1380 = vlaneseq
    %v1381 = vshrl.u32 %v1380, 7
    %v1382 = vsub.s32 3, %v1381
    %v1383 = vrot.slane %v1366, %v1382
    %v1900 = vunpack.c.l.b16 %v854
    %v1901 = vunpack.c.h.b16 %v854
    %v1902 = vunpack.c.l.b16 %v855
    %v1903 = vunpack.c.h.b16 %v855
    %v1904 = vunpack.c.l.b16 %v856
    %v1905 = vunpack.c.h.b16 %v856
    %v1906 = vunpack.c.l.b16 %v857
    %v1907 = vunpack.c.h.b16 %v857
    %v1908 = vunpack.c.l.b16 %v858
    %v1909 = vunpack.c.h.b16 %v858
    %v1910 = vunpack.c.l.b16 %v859
    %v1911 = vunpack.c.h.b16 %v859
    %v1912 = vunpack.c.l.b16 %v860
    %v1913 = vunpack.c.h.b16 %v860
    %v1914 = vunpack.c.l.b16 %v861
    %v1915 = vunpack.c.h.b16 %v861
    %v1916 = vunpack.c.l.b16 %v862
    %v1917 = vunpack.c.h.b16 %v862
    %v1918 = vunpack.c.l.b16 %v863
    %v1919 = vunpack.c.h.b16 %v863
    %v1920 = vunpack.c.l.b16 %v864
    %v1921 = vunpack.c.h.b16 %v864
    %v1922 = vunpack.c.l.b16 %v865
    %v1923 = vunpack.c.h.b16 %v865
    %v1924 = vunpack.c.l.b16 %v866
    %v1925 = vunpack.c.h.b16 %v866
    %v1926 = vunpack.c.l.b16 %v867
    %v1927 = vunpack.c.h.b16 %v867
    %v1928 = vunpack.c.l.b16 %v868
    %v1929 = vunpack.c.h.b16 %v868
    %v1930 = vunpack.c.l.b16 %v869
    %v1931 = vunpack.c.h.b16 %v869
    %v1932 = vunpack.c.l.b16 %v870
    %v1933 = vunpack.c.h.b16 %v870
    %v1934 = vunpack.c.l.b16 %v871
    %v1935 = vunpack.c.h.b16 %v871
    %v1936 = vunpack.c.l.b16 %v872
    %v1937 = vunpack.c.h.b16 %v872
    %v1938 = vunpack.c.l.b16 %v873
    %v1939 = vunpack.c.h.b16 %v873
    %v1940 = vunpack.c.l.b16 %v874
    %v1941 = vunpack.c.h.b16 %v874
    %v1942 = vunpack.c.l.b16 %v875
    %v1943 = vunpack.c.h.b16 %v875
    %v1944 = vunpack.c.l.b16 %v876
    %v1945 = vunpack.c.h.b16 %v876
    %v1946 = vunpack.c.l.b16 %v877
    %v1947 = vunpack.c.h.b16 %v877
    %v1948 = vunpack.c.l.b16 %v878
    %v1949 = vunpack.c.h.b16 %v878
    %v1950 = vunpack.c.l.b16 %v879
    %v1951 = vunpack.c.h.b16 %v879
    %v1952 = vunpack.c.l.b16 %v880
    %v1953 = vunpack.c.h.b16 %v880
    %v1954 = vunpack.c.l.b16 %v881
    %v1955 = vunpack.c.h.b16 %v881
    %v1956 = vunpack.c.l.b16 %v882
    %v1957 = vunpack.c.h.b16 %v882
    %v1958 = vunpack.c.l.b16 %v883
    %v1959 = vunpack.c.h.b16 %v883
    %v1960 = vunpack.c.l.b16 %v884
    %v1961 = vunpack.c.h.b16 %v884
    %v1962 = vunpack.c.l.b16 %v885
    %v1963 = vunpack.c.h.b16 %v885
    %v1964 = vunpack.c.l.b16 %v886
    %v1965 = vunpack.c.h.b16 %v886
    %v1966 = vunpack.c.l.b16 %v887
    %v1967 = vunpack.c.h.b16 %v887
    %v1968 = vunpack.c.l.b16 %v888
    %v1969 = vunpack.c.h.b16 %v888
    %v1970 = vunpack.c.l.b16 %v889
    %v1971 = vunpack.c.h.b16 %v889
    %v1972 = vunpack.c.l.b16 %v890
    %v1973 = vunpack.c.h.b16 %v890
    %v1974 = vunpack.c.l.b16 %v891
    %v1975 = vunpack.c.h.b16 %v891
    %v1976 = vunpack.c.l.b16 %v892
    %v1977 = vunpack.c.h.b16 %v892
    %v1978 = vunpack.c.l.b16 %v893
    %v1979 = vunpack.c.h.b16 %v893
    %v1980 = vunpack.c.l.b16 %v894
    %v1981 = vunpack.c.h.b16 %v894
    %v1982 = vunpack.c.l.b16 %v895
    %v1983 = vunpack.c.h.b16 %v895
    %v1984 = vunpack.c.l.b16 %v896
    %v1985 = vunpack.c.h.b16 %v896
    %v1986 = vunpack.c.l.b16 %v897
    %v1987 = vunpack.c.h.b16 %v897
    %v1988 = vunpack.c.l.b16 %v898
    %v1989 = vunpack.c.h.b16 %v898
    %v1990 = vunpack.c.l.b16 %v899
    %v1991 = vunpack.c.h.b16 %v899
    %v1992 = vunpack.c.l.b16 %v900
    %v1993 = vunpack.c.h.b16 %v900
    %v1994 = vunpack.c.l.b16 %v901
    %v1995 = vunpack.c.h.b16 %v901
    %v1996 = vunpack.c.l.b16 %v902
    %v1997 = vunpack.c.h.b16 %v902
    %v1998 = vunpack.c.l.b16 %v903
    %v1999 = vunpack.c.h.b16 %v903
    %v2000 = vunpack.c.l.b16 %v904
    %v2001 = vunpack.c.h.b16 %v904
    %v2002 = vunpack.c.l.b16 %v905
    %v2003 = vunpack.c.h.b16 %v905
    %v2004 = vunpack.c.l.b16 %v906
    %v2005 = vunpack.c.h.b16 %v906
    %v2006 = vunpack.c.l.b16 %v907
    %v2007 = vunpack.c.h.b16 %v907
    %v2008 = vunpack.c.l.b16 %v908
    %v2009 = vunpack.c.h.b16 %v908
    %v2010 = vunpack.c.l.b16 %v909
    %v2011 = vunpack.c.h.b16 %v909
    %v2012 = vunpack.c.l.b16 %v910
    %v2013 = vunpack.c.h.b16 %v910
    %v2014 = vunpack.c.l.b16 %v911
    %v2015 = vunpack.c.h.b16 %v911
    %v2016 = vunpack.c.l.b16 %v912
    %v2017 = vunpack.c.h.b16 %v912
    %v2018 = vunpack.c.l.b16 %v913
    %v2019 = vunpack.c.h.b16 %v913
    %v2020 = vunpack.c.l.b16 %v914
    %v2021 = vunpack.c.h.b16 %v914
    %v2022 = vunpack.c.l.b16 %v915
    %v2023 = vunpack.c.h.b16 %v915
    %v2024 = vunpack.c.l.b16 %v916
    %v2025 = vunpack.c.h.b16 %v916
    %v2026 = vunpack.c.l.b16 %v917
    %v2027 = vunpack.c.h.b16 %v917
    %v2028 = vunpack.c.l.b16 %v918
    %v2029 = vunpack.c.h.b16 %v918
    %v2030 = vunpack.c.l.b16 %v919
    %v2031 = vunpack.c.h.b16 %v919
    %v2032 = vunpack.c.l.b16 %v920
    %v2033 = vunpack.c.h.b16 %v920
    %v2034 = vunpack.c.l.b16 %v921
    %v2035 = vunpack.c.h.b16 %v921
    %v2036 = vunpack.c.l.b16 %v922
    %v2037 = vunpack.c.h.b16 %v922
    %v2038 = vunpack.c.l.b16 %v923
    %v2039 = vunpack.c.h.b16 %v923
    %v2040 = vunpack.c.l.b16 %v924
    %v2041 = vunpack.c.h.b16 %v924
    %v2042 = vunpack.c.l.b16 %v925
    %v2043 = vunpack.c.h.b16 %v925
    %v2044 = vunpack.c.l.b16 %v926
    %v2045 = vunpack.c.h.b16 %v926
    %v2046 = vunpack.c.l.b16 %v927
    %v2047 = vunpack.c.h.b16 %v927
    %v2048 = vunpack.c.l.b16 %v928
    %v2049 = vunpack.c.h.b16 %v928
    %v2050 = vunpack.c.l.b16 %v929
    %v2051 = vunpack.c.h.b16 %v929
    %v2052 = vunpack.c.l.b16 %v930
    %v2053 = vunpack.c.h.b16 %v930
    %v2054 = vunpack.c.l.b16 %v931
    %v2055 = vunpack.c.h.b16 %v931
    %v2056 = vunpack.c.l.b16 %v932
    %v2057 = vunpack.c.h.b16 %v932
    %v2058 = vunpack.c.l.b16 %v933
    %v2059 = vunpack.c.h.b16 %v933
    %v2060 = vunpack.c.l.b16 %v934
    %v2061 = vunpack.c.h.b16 %v934
    %v2062 = vunpack.c.l.b16 %v935
    %v2063 = vunpack.c.h.b16 %v935
    %v2064 = vunpack.c.l.b16 %v936
    %v2065 = vunpack.c.h.b16 %v936
    %v2066 = vunpack.c.l.b16 %v937
    %v2067 = vunpack.c.h.b16 %v937
    %v2068 = vunpack.c.l.b16 %v938
    %v2069 = vunpack.c.h.b16 %v938
    %v2070 = vunpack.c.l.b16 %v939
    %v2071 = vunpack.c.h.b16 %v939
    %v2072 = vunpack.c.l.b16 %v940
    %v2073 = vunpack.c.h.b16 %v940
    %v2074 = vunpack.c.l.b16 %v941
    %v2075 = vunpack.c.h.b16 %v941
    %v2076 = vunpack.c.l.b16 %v942
    %v2077 = vunpack.c.h.b16 %v942
    %v2078 = vunpack.c.l.b16 %v943
    %v2079 = vunpack.c.h.b16 %v943
    %v2080 = vunpack.c.l.b16 %v944
    %v2081 = vunpack.c.h.b16 %v944
    %v2082 = vunpack.c.l.b16 %v945
    %v2083 = vunpack.c.h.b16 %v945
    %v2084 = vunpack.c.l.b16 %v946
    %v2085 = vunpack.c.h.b16 %v946
    %v2086 = vunpack.c.l.b16 %v947
    %v2087 = vunpack.c.h.b16 %v947
    %v2088 = vunpack.c.l.b16 %v948
    %v2089 = vunpack.c.h.b16 %v948
    %v2090 = vunpack.c.l.b16 %v949
    %v2091 = vunpack.c.h.b16 %v949
    %v2092 = vunpack.c.l.b16 %v950
    %v2093 = vunpack.c.h.b16 %v950
    %v2094 = vunpack.c.l.b16 %v951
    %v2095 = vunpack.c.h.b16 %v951
    %v2096 = vunpack.c.l.b16 %v952
    %v2097 = vunpack.c.h.b16 %v952
    %v2098 = vunpack.c.l.b16 %v953
    %v2099 = vunpack.c.h.b16 %v953
    %v2100 = vunpack.c.l.b16 %v954
    %v2101 = vunpack.c.h.b16 %v954
    %v2102 = vunpack.c.l.b16 %v955
    %v2103 = vunpack.c.h.b16 %v955
    %v2104 = vunpack.c.l.b16 %v956
    %v2105 = vunpack.c.h.b16 %v956
    %v2106 = vunpack.c.l.b16 %v957
    %v2107 = vunpack.c.h.b16 %v957
    %v2108 = vunpack.c.l.b16 %v958
    %v2109 = vunpack.c.h.b16 %v958
    %v2110 = vunpack.c.l.b16 %v959
    %v2111 = vunpack.c.h.b16 %v959
    %v2112 = vunpack.c.l.b16 %v960
    %v2113 = vunpack.c.h.b16 %v960
    %v2114 = vunpack.c.l.b16 %v961
    %v2115 = vunpack.c.h.b16 %v961
    %v2116 = vunpack.c.l.b16 %v962
    %v2117 = vunpack.c.h.b16 %v962
    %v2118 = vunpack.c.l.b16 %v963
    %v2119 = vunpack.c.h.b16 %v963
    %v2120 = vunpack.c.l.b16 %v964
    %v2121 = vunpack.c.h.b16 %v964
    %v2122 = vunpack.c.l.b16 %v965
    %v2123 = vunpack.c.h.b16 %v965
    %v2124 = vunpack.c.l.b16 %v966
    %v2125 = vunpack.c.h.b16 %v966
    %v2126 = vunpack.c.l.b16 %v967
    %v2127 = vunpack.c.h.b16 %v967
    %v2128 = vunpack.c.l.b16 %v968
    %v2129 = vunpack.c.h.b16 %v968
    %v2130 = vunpack.c.l.b16 %v969
    %v2131 = vunpack.c.h.b16 %v969
    %v2132 = vunpack.c.l.b16 %v970
    %v2133 = vunpack.c.h.b16 %v970
    %v2134 = vunpack.c.l.b16 %v971
    %v2135 = vunpack.c.h.b16 %v971
    %v2136 = vunpack.c.l.b16 %v972
    %v2137 = vunpack.c.h.b16 %v972
    %v2138 = vunpack.c.l.b16 %v973
    %v2139 = vunpack.c.h.b16 %v973
    %v2140 = vunpack.c.l.b16 %v974
    %v2141 = vunpack.c.h.b16 %v974
    %v2142 = vunpack.c.l.b16 %v975
    %v2143 = vunpack.c.h.b16 %v975
    %v2144 = vunpack.c.l.b16 %v976
    %v2145 = vunpack.c.h.b16 %v976
    %v2146 = vunpack.c.l.b16 %v977
    %v2147 = vunpack.c.h.b16 %v977
    %v2148 = vunpack.c.l.b16 %v978
    %v2149 = vunpack.c.h.b16 %v978
    %v2150 = vunpack.c.l.b16 %v979
    %v2151 = vunpack.c.h.b16 %v979
    %v2152 = vunpack.c.l.b16 %v980
    %v2153 = vunpack.c.h.b16 %v980
    %v2154 = vunpack.c.l.b16 %v981
    %v2155 = vunpack.c.h.b16 %v981
    %v2156 = vunpack.c.l.b16 %v982
    %v2157 = vunpack.c.h.b16 %v982
    %v2158 = vunpack.c.l.b16 %v983
    %v2159 = vunpack.c.h.b16 %v983
    %v2160 = vunpack.c.l.b16 %v984
    %v2161 = vunpack.c.h.b16 %v984
    %v2162 = vunpack.c.l.b16 %v985
    %v2163 = vunpack.c.h.b16 %v985
    %v2164 = vunpack.c.l.b16 %v986
    %v2165 = vunpack.c.h.b16 %v986
    %v2166 = vunpack.c.l.b16 %v987
    %v2167 = vunpack.c.h.b16 %v987
    %v2168 = vunpack.c.l.b16 %v988
    %v2169 = vunpack.c.h.b16 %v988
    %v2170 = vunpack.c.l.b16 %v989
    %v2171 = vunpack.c.h.b16 %v989
    %v2172 = vunpack.c.l.b16 %v990
    %v2173 = vunpack.c.h.b16 %v990
    %v2174 = vunpack.c.l.b16 %v991
    %v2175 = vunpack.c.h.b16 %v991
    %v2176 = vunpack.c.l.b16 %v992
    %v2177 = vunpack.c.h.b16 %v992
    %v2178 = vunpack.c.l.b16 %v993
    %v2179 = vunpack.c.h.b16 %v993
    %v2180 = vunpack.c.l.b16 %v994
    %v2181 = vunpack.c.h.b16 %v994
    %v2182 = vunpack.c.l.b16 %v995
    %v2183 = vunpack.c.h.b16 %v995
    %v2184 = vunpack.c.l.b16 %v996
    %v2185 = vunpack.c.h.b16 %v996
    %v2186 = vunpack.c.l.b16 %v997
    %v2187 = vunpack.c.h.b16 %v997
    %v2188 = vunpack.c.l.b16 %v998
    %v2189 = vunpack.c.h.b16 %v998
    %v2190 = vunpack.c.l.b16 %v999
    %v2191 = vunpack.c.h.b16 %v999
    %v2192 = vunpack.c.l.b16 %v1000
    %v2193 = vunpack.c.h.b16 %v1000
    %v2194 = vunpack.c.l.b16 %v1001
    %v2195 = vunpack.c.h.b16 %v1001
    %v2196 = vunpack.c.l.b16 %v1002
    %v2197 = vunpack.c.h.b16 %v1002
    %v2198 = vunpack.c.l.b16 %v1003
    %v2199 = vunpack.c.h.b16 %v1003
    %v2200 = vunpack.c.l.b16 %v1004
    %v2201 = vunpack.c.h.b16 %v1004
    %v2202 = vunpack.c.l.b16 %v1005
    %v2203 = vunpack.c.h.b16 %v1005
    %v2204 = vunpack.c.l.b16 %v1006
    %v2205 = vunpack.c.h.b16 %v1006
    %v2206 = vunpack.c.l.b16 %v1007
    %v2207 = vunpack.c.h.b16 %v1007
    %v2208 = vunpack.c.l.b16 %v1008
    %v2209 = vunpack.c.h.b16 %v1008
    %v2210 = vunpack.c.l.b16 %v1009
    %v2211 = vunpack.c.h.b16 %v1009
    %v2212 = vunpack.c.l.b16 %v1010
    %v2213 = vunpack.c.h.b16 %v1010
    %v2214 = vunpack.c.l.b16 %v1011
    %v2215 = vunpack.c.h.b16 %v1011
    %v2216 = vunpack.c.l.b16 %v1012
    %v2217 = vunpack.c.h.b16 %v1012
    %v2218 = vunpack.c.l.b16 %v1013
    %v2219 = vunpack.c.h.b16 %v1013
    %v2220 = vunpack.c.l.b16 %v1014
    %v2221 = vunpack.c.h.b16 %v1014
    %v2222 = vunpack.c.l.b16 %v1015
    %v2223 = vunpack.c.h.b16 %v1015
    %v2224 = vunpack.c.l.b16 %v1016
    %v2225 = vunpack.c.h.b16 %v1016
    %v2226 = vunpack.c.l.b16 %v1017
    %v2227 = vunpack.c.h.b16 %v1017
    %v2228 = vunpack.c.l.b16 %v1018
    %v2229 = vunpack.c.h.b16 %v1018
    %v2230 = vunpack.c.l.b16 %v1019
    %v2231 = vunpack.c.h.b16 %v1019
    %v2232 = vunpack.c.l.b16 %v1020
    %v2233 = vunpack.c.h.b16 %v1020
    %v2234 = vunpack.c.l.b16 %v1021
    %v2235 = vunpack.c.h.b16 %v1021
    %v2236 = vunpack.c.l.b16 %v1022
    %v2237 = vunpack.c.h.b16 %v1022
    %v2238 = vunpack.c.l.b16 %v1023
    %v2239 = vunpack.c.h.b16 %v1023
    %v2240 = vunpack.c.l.b16 %v1024
    %v2241 = vunpack.c.h.b16 %v1024
    %v2242 = vunpack.c.l.b16 %v1025
    %v2243 = vunpack.c.h.b16 %v1025
    %v2244 = vunpack.c.l.b16 %v1026
    %v2245 = vunpack.c.h.b16 %v1026
    %v2246 = vunpack.c.l.b16 %v1027
    %v2247 = vunpack.c.h.b16 %v1027
    %v2248 = vunpack.c.l.b16 %v1028
    %v2249 = vunpack.c.h.b16 %v1028
    %v2250 = vunpack.c.l.b16 %v1029
    %v2251 = vunpack.c.h.b16 %v1029
    %v2252 = vunpack.c.l.b16 %v1030
    %v2253 = vunpack.c.h.b16 %v1030
    %v2254 = vunpack.c.l.b16 %v1031
    %v2255 = vunpack.c.h.b16 %v1031
    %v2256 = vunpack.c.l.b16 %v1032
    %v2257 = vunpack.c.h.b16 %v1032
    %v2258 = vunpack.c.l.b16 %v1033
    %v2259 = vunpack.c.h.b16 %v1033
    %v2260 = vunpack.c.l.b16 %v1034
    %v2261 = vunpack.c.h.b16 %v1034
    %v2262 = vunpack.c.l.b16 %v1035
    %v2263 = vunpack.c.h.b16 %v1035
    %v2264 = vunpack.c.l.b16 %v1036
    %v2265 = vunpack.c.h.b16 %v1036
    %v2266 = vunpack.c.l.b16 %v1037
    %v2267 = vunpack.c.h.b16 %v1037
    %v2268 = vunpack.c.l.b16 %v1038
    %v2269 = vunpack.c.h.b16 %v1038
    %v2270 = vunpack.c.l.b16 %v1039
    %v2271 = vunpack.c.h.b16 %v1039
    %v2272 = vunpack.c.l.b16 %v1040
    %v2273 = vunpack.c.h.b16 %v1040
    %v2274 = vunpack.c.l.b16 %v1041
    %v2275 = vunpack.c.h.b16 %v1041
    %v2276 = vunpack.c.l.b16 %v1042
    %v2277 = vunpack.c.h.b16 %v1042
    %v2278 = vunpack.c.l.b16 %v1043
    %v2279 = vunpack.c.h.b16 %v1043
    %v2280 = vunpack.c.l.b16 %v1044
    %v2281 = vunpack.c.h.b16 %v1044
    %v2282 = vunpack.c.l.b16 %v1045
    %v2283 = vunpack.c.h.b16 %v1045
    %v2284 = vunpack.c.l.b16 %v1046
    %v2285 = vunpack.c.h.b16 %v1046
    %v2286 = vunpack.c.l.b16 %v1047
    %v2287 = vunpack.c.h.b16 %v1047
    %v2288 = vunpack.c.l.b16 %v1048
    %v2289 = vunpack.c.h.b16 %v1048
    %v2290 = vunpack.c.l.b16 %v1049
    %v2291 = vunpack.c.h.b16 %v1049
    %v2292 = vunpack.c.l.b16 %v1050
    %v2293 = vunpack.c.h.b16 %v1050
    %v2294 = vunpack.c.l.b16 %v1051
    %v2295 = vunpack.c.h.b16 %v1051
    %v2296 = vunpack.c.l.b16 %v1052
    %v2297 = vunpack.c.h.b16 %v1052
    %v2298 = vunpack.c.l.b16 %v1053
    %v2299 = vunpack.c.h.b16 %v1053
    %v2300 = vunpack.c.l.b16 %v1054
    %v2301 = vunpack.c.h.b16 %v1054
    %v2302 = vunpack.c.l.b16 %v1055
    %v2303 = vunpack.c.h.b16 %v1055
    %v2304 = vunpack.c.l.b16 %v1056
    %v2305 = vunpack.c.h.b16 %v1056
    %v2306 = vunpack.c.l.b16 %v1057
    %v2307 = vunpack.c.h.b16 %v1057
    %v2308 = vunpack.c.l.b16 %v1058
    %v2309 = vunpack.c.h.b16 %v1058
    %v2310 = vunpack.c.l.b16 %v1059
    %v2311 = vunpack.c.h.b16 %v1059
    %v2312 = vunpack.c.l.b16 %v1060
    %v2313 = vunpack.c.h.b16 %v1060
    %v2314 = vunpack.c.l.b16 %v1061
    %v2315 = vunpack.c.h.b16 %v1061
    %v2316 = vunpack.c.l.b16 %v1062
    %v2317 = vunpack.c.h.b16 %v1062
    %v2318 = vunpack.c.l.b16 %v1063
    %v2319 = vunpack.c.h.b16 %v1063
    %v2320 = vunpack.c.l.b16 %v1064
    %v2321 = vunpack.c.h.b16 %v1064
    %v2322 = vunpack.c.l.b16 %v1065
    %v2323 = vunpack.c.h.b16 %v1065
    %v2324 = vunpack.c.l.b16 %v1066
    %v2325 = vunpack.c.h.b16 %v1066
    %v2326 = vunpack.c.l.b16 %v1067
    %v2327 = vunpack.c.h.b16 %v1067
    %v2328 = vunpack.c.l.b16 %v1068
    %v2329 = vunpack.c.h.b16 %v1068
    %v2330 = vunpack.c.l.b16 %v1069
    %v2331 = vunpack.c.h.b16 %v1069
    %v2332 = vunpack.c.l.b16 %v1070
    %v2333 = vunpack.c.h.b16 %v1070
    %v2334 = vunpack.c.l.b16 %v1071
    %v2335 = vunpack.c.h.b16 %v1071
    %v2336 = vunpack.c.l.b16 %v1072
    %v2337 = vunpack.c.h.b16 %v1072
    %v2338 = vunpack.c.l.b16 %v1073
    %v2339 = vunpack.c.h.b16 %v1073
    %v2340 = vunpack.c.l.b16 %v1074
    %v2341 = vunpack.c.h.b16 %v1074
    %v2342 = vunpack.c.l.b16 %v1075
    %v2343 = vunpack.c.h.b16 %v1075
    %v2344 = vunpack.c.l.b16 %v1076
    %v2345 = vunpack.c.h.b16 %v1076
    %v2346 = vunpack.c.l.b16 %v1077
    %v2347 = vunpack.c.h.b16 %v1077
    %v2348 = vunpack.c.l.b16 %v1078
    %v2349 = vunpack.c.h.b16 %v1078
    %v2350 = vunpack.c.l.b16 %v1079
    %v2351 = vunpack.c.h.b16 %v1079
    %v2352 = vunpack.c.l.b16 %v1080
    %v2353 = vunpack.c.h.b16 %v1080
    %v2354 = vunpack.c.l.b16 %v1081
    %v2355 = vunpack.c.h.b16 %v1081
    %v2356 = vunpack.c.l.b16 %v1082
    %v2357 = vunpack.c.h.b16 %v1082
    %v2358 = vunpack.c.l.b16 %v1083
    %v2359 = vunpack.c.h.b16 %v1083
    %v2360 = vunpack.c.l.b16 %v1084
    %v2361 = vunpack.c.h.b16 %v1084
    %v2362 = vunpack.c.l.b16 %v1085
    %v2363 = vunpack.c.h.b16 %v1085
    %v2364 = vunpack.c.l.b16 %v1086
    %v2365 = vunpack.c.h.b16 %v1086
    %v2366 = vunpack.c.l.b16 %v1087
    %v2367 = vunpack.c.h.b16 %v1087
    %v2368 = vunpack.c.l.b16 %v1088
    %v2369 = vunpack.c.h.b16 %v1088
    %v2370 = vunpack.c.l.b16 %v1089
    %v2371 = vunpack.c.h.b16 %v1089
    %v2372 = vunpack.c.l.b16 %v1090
    %v2373 = vunpack.c.h.b16 %v1090
    %v2374 = vunpack.c.l.b16 %v1091
    %v2375 = vunpack.c.h.b16 %v1091
    %v2376 = vunpack.c.l.b16 %v1092
    %v2377 = vunpack.c.h.b16 %v1092
    %v2378 = vunpack.c.l.b16 %v1093
    %v2379 = vunpack.c.h.b16 %v1093
    %v2380 = vunpack.c.l.b16 %v1094
    %v2381 = vunpack.c.h.b16 %v1094
    %v2382 = vunpack.c.l.b16 %v1095
    %v2383 = vunpack.c.h.b16 %v1095
    %v2384 = vunpack.c.l.b16 %v1096
    %v2385 = vunpack.c.h.b16 %v1096
    %v2386 = vunpack.c.l.b16 %v1097
    %v2387 = vunpack.c.h.b16 %v1097
    %v2388 = vunpack.c.l.b16 %v1098
    %v2389 = vunpack.c.h.b16 %v1098
    %v2390 = vunpack.c.l.b16 %v1099
    %v2391 = vunpack.c.h.b16 %v1099
    %v2392 = vunpack.c.l.b16 %v1100
    %v2393 = vunpack.c.h.b16 %v1100
    %v2394 = vunpack.c.l.b16 %v1101
    %v2395 = vunpack.c.h.b16 %v1101
    %v2396 = vunpack.c.l.b16 %v1102
    %v2397 = vunpack.c.h.b16 %v1102
    %v2398 = vunpack.c.l.b16 %v1103
    %v2399 = vunpack.c.h.b16 %v1103
    %v2400 = vunpack.c.l.b16 %v1104
    %v2401 = vunpack.c.h.b16 %v1104
    %v2402 = vunpack.c.l.b16 %v1105
    %v2403 = vunpack.c.h.b16 %v1105
    %v2404 = vunpack.c.l.b16 %v1106
    %v2405 = vunpack.c.h.b16 %v1106
    %v2406 = vunpack.c.l.b16 %v1107
    %v2407 = vunpack.c.h.b16 %v1107
    %v2408 = vunpack.c.l.b16 %v1108
    %v2409 = vunpack.c.h.b16 %v1108
    %v2410 = vunpack.c.l.b16 %v1109
    %v2411 = vunpack.c.h.b16 %v1109
    %v2412 = vunpack.c.l.b16 %v1110
    %v2413 = vunpack.c.h.b16 %v1110
    %v2414 = vunpack.c.l.b16 %v1111
    %v2415 = vunpack.c.h.b16 %v1111
    %v2416 = vunpack.c.l.b16 %v1112
    %v2417 = vunpack.c.h.b16 %v1112
    %v2418 = vunpack.c.l.b16 %v1113
    %v2419 = vunpack.c.h.b16 %v1113
    %v2420 = vunpack.c.l.b16 %v1114
    %v2421 = vunpack.c.h.b16 %v1114
    %v2422 = vunpack.c.l.b16 %v1115
    %v2423 = vunpack.c.h.b16 %v1115
    %v2424 = vunpack.c.l.b16 %v1116
    %v2425 = vunpack.c.h.b16 %v1116
    %v2426 = vunpack.c.l.b16 %v1117
    %v2427 = vunpack.c.h.b16 %v1117
    %v2428 = vunpack.c.l.b16 %v1118
    %v2429 = vunpack.c.h.b16 %v1118
    %v2430 = vunpack.c.l.b16 %v1119
    %v2431 = vunpack.c.h.b16 %v1119
    %v2432 = vunpack.c.l.b16 %v1120
    %v2433 = vunpack.c.h.b16 %v1120
    %v2434 = vunpack.c.l.b16 %v1121
    %v2435 = vunpack.c.h.b16 %v1121
    %v2436 = vunpack.c.l.b16 %v1122
    %v2437 = vunpack.c.h.b16 %v1122
    %v2438 = vunpack.c.l.b16 %v1123
    %v2439 = vunpack.c.h.b16 %v1123
    %v2440 = vunpack.c.l.b16 %v1124
    %v2441 = vunpack.c.h.b16 %v1124
    %v2442 = vunpack.c.l.b16 %v1125
    %v2443 = vunpack.c.h.b16 %v1125
    %v2444 = vunpack.c.l.b16 %v1126
    %v2445 = vunpack.c.h.b16 %v1126
    %v2446 = vunpack.c.l.b16 %v1127
    %v2447 = vunpack.c.h.b16 %v1127
    %v2448 = vunpack.c.l.b16 %v1128
    %v2449 = vunpack.c.h.b16 %v1128
    %v2450 = vunpack.c.l.b16 %v1129
    %v2451 = vunpack.c.h.b16 %v1129
    %v2452 = vunpack.c.l.b16 %v1130
    %v2453 = vunpack.c.h.b16 %v1130
    %v2454 = vunpack.c.l.b16 %v1131
    %v2455 = vunpack.c.h.b16 %v1131
    %v2456 = vunpack.c.l.b16 %v1132
    %v2457 = vunpack.c.h.b16 %v1132
    %v2458 = vunpack.c.l.b16 %v1133
    %v2459 = vunpack.c.h.b16 %v1133
    %v2460 = vunpack.c.l.b16 %v1134
    %v2461 = vunpack.c.h.b16 %v1134
    %v2462 = vunpack.c.l.b16 %v1135
    %v2463 = vunpack.c.h.b16 %v1135
    %v2464 = vunpack.c.l.b16 %v1136
    %v2465 = vunpack.c.h.b16 %v1136
    %v2466 = vunpack.c.l.b16 %v1137
    %v2467 = vunpack.c.h.b16 %v1137
    %v2468 = vunpack.c.l.b16 %v1138
    %v2469 = vunpack.c.h.b16 %v1138
    %v2470 = vunpack.c.l.b16 %v1139
    %v2471 = vunpack.c.h.b16 %v1139
    %v2472 = vunpack.c.l.b16 %v1140
    %v2473 = vunpack.c.h.b16 %v1140
    %v2474 = vunpack.c.l.b16 %v1141
    %v2475 = vunpack.c.h.b16 %v1141
    %v2476 = vunpack.c.l.b16 %v1142
    %v2477 = vunpack.c.h.b16 %v1142
    %v2478 = vunpack.c.l.b16 %v1143
    %v2479 = vunpack.c.h.b16 %v1143
    %v2480 = vunpack.c.l.b16 %v1144
    %v2481 = vunpack.c.h.b16 %v1144
    %v2482 = vunpack.c.l.b16 %v1145
    %v2483 = vunpack.c.h.b16 %v1145
    %v2484 = vunpack.c.l.b16 %v1146
    %v2485 = vunpack.c.h.b16 %v1146
    %v2486 = vunpack.c.l.b16 %v1147
    %v2487 = vunpack.c.h.b16 %v1147
    %v2488 = vunpack.c.l.b16 %v1148
    %v2489 = vunpack.c.h.b16 %v1148
    %v2490 = vunpack.c.l.b16 %v1149
    %v2491 = vunpack.c.h.b16 %v1149
    %v2492 = vunpack.c.l.b16 %v1150
    %v2493 = vunpack.c.h.b16 %v1150
    %v2494 = vunpack.c.l.b16 %v1151
    %v2495 = vunpack.c.h.b16 %v1151
    %v2496 = vunpack.c.l.b16 %v1152
    %v2497 = vunpack.c.h.b16 %v1152
    %v2498 = vunpack.c.l.b16 %v1153
    %v2499 = vunpack.c.h.b16 %v1153
    %v2500 = vunpack.c.l.b16 %v1154
    %v2501 = vunpack.c.h.b16 %v1154
    %v2502 = vunpack.c.l.b16 %v1155
    %v2503 = vunpack.c.h.b16 %v1155
    %v2504 = vunpack.c.l.b16 %v1156
    %v2505 = vunpack.c.h.b16 %v1156
    %v2506 = vunpack.c.l.b16 %v1157
    %v2507 = vunpack.c.h.b16 %v1157
    %v2508 = vunpack.c.l.b16 %v1158
    %v2509 = vunpack.c.h.b16 %v1158
    %v2510 = vunpack.c.l.b16 %v1159
    %v2511 = vunpack.c.h.b16 %v1159
    %v2512 = vunpack.c.l.b16 %v1160
    %v2513 = vunpack.c.h.b16 %v1160
    %v2514 = vunpack.c.l.b16 %v1161
    %v2515 = vunpack.c.h.b16 %v1161
    %v2516 = vunpack.c.l.b16 %v1162
    %v2517 = vunpack.c.h.b16 %v1162
    %v2518 = vunpack.c.l.b16 %v1163
    %v2519 = vunpack.c.h.b16 %v1163
    %v2520 = vunpack.c.l.b16 %v1164
    %v2521 = vunpack.c.h.b16 %v1164
    %v2522 = vunpack.c.l.b16 %v1165
    %v2523 = vunpack.c.h.b16 %v1165
    %v2524 = vunpack.c.l.b16 %v1166
    %v2525 = vunpack.c.h.b16 %v1166
    %v2526 = vunpack.c.l.b16 %v1167
    %v2527 = vunpack.c.h.b16 %v1167
    %v2528 = vunpack.c.l.b16 %v1168
    %v2529 = vunpack.c.h.b16 %v1168
    %v2530 = vunpack.c.l.b16 %v1169
    %v2531 = vunpack.c.h.b16 %v1169
    %v2532 = vunpack.c.l.b16 %v1170
    %v2533 = vunpack.c.h.b16 %v1170
    %v2534 = vunpack.c.l.b16 %v1171
    %v2535 = vunpack.c.h.b16 %v1171
    %v2536 = vunpack.c.l.b16 %v1172
    %v2537 = vunpack.c.h.b16 %v1172
    %v2538 = vunpack.c.l.b16 %v1173
    %v2539 = vunpack.c.h.b16 %v1173
    %v2540 = vunpack.c.l.b16 %v1174
    %v2541 = vunpack.c.h.b16 %v1174
    %v2542 = vunpack.c.l.b16 %v1175
    %v2543 = vunpack.c.h.b16 %v1175
    %v2544 = vunpack.c.l.b16 %v1176
    %v2545 = vunpack.c.h.b16 %v1176
    %v2546 = vunpack.c.l.b16 %v1177
    %v2547 = vunpack.c.h.b16 %v1177
    %v2548 = vunpack.c.l.b16 %v1178
    %v2549 = vunpack.c.h.b16 %v1178
    %v2550 = vunpack.c.l.b16 %v1179
    %v2551 = vunpack.c.h.b16 %v1179
    %v2552 = vunpack.c.l.b16 %v1180
    %v2553 = vunpack.c.h.b16 %v1180
    %v2554 = vunpack.c.l.b16 %v1181
    %v2555 = vunpack.c.h.b16 %v1181
    %v2556 = vunpack.c.l.b16 %v1182
    %v2557 = vunpack.c.h.b16 %v1182
    %v2558 = vunpack.c.l.b16 %v1183
    %v2559 = vunpack.c.h.b16 %v1183
    %v2560 = vunpack.c.l.b16 %v1184
    %v2561 = vunpack.c.h.b16 %v1184
    %v2562 = vunpack.c.l.b16 %v1185
    %v2563 = vunpack.c.h.b16 %v1185
    %v2564 = vunpack.c.l.b16 %v1186
    %v2565 = vunpack.c.h.b16 %v1186
    %v2566 = vunpack.c.l.b16 %v1187
    %v2567 = vunpack.c.h.b16 %v1187
    %v2568 = vunpack.c.l.b16 %v1188
    %v2569 = vunpack.c.h.b16 %v1188
    %v2570 = vunpack.c.l.b16 %v1189
    %v2571 = vunpack.c.h.b16 %v1189
    %v2572 = vunpack.c.l.b16 %v1190
    %v2573 = vunpack.c.h.b16 %v1190
    %v2574 = vunpack.c.l.b16 %v1191
    %v2575 = vunpack.c.h.b16 %v1191
    %v2576 = vunpack.c.l.b16 %v1192
    %v2577 = vunpack.c.h.b16 %v1192
    %v2578 = vunpack.c.l.b16 %v1193
    %v2579 = vunpack.c.h.b16 %v1193
    %v2580 = vunpack.c.l.b16 %v1194
    %v2581 = vunpack.c.h.b16 %v1194
    %v2582 = vunpack.c.l.b16 %v1195
    %v2583 = vunpack.c.h.b16 %v1195
    %v2584 = vunpack.c.l.b16 %v1196
    %v2585 = vunpack.c.h.b16 %v1196
    %v2586 = vunpack.c.l.b16 %v1197
    %v2587 = vunpack.c.h.b16 %v1197
    %v2588 = vunpack.c.l.b16 %v1198
    %v2589 = vunpack.c.h.b16 %v1198
    %v2590 = vunpack.c.l.b16 %v1199
    %v2591 = vunpack.c.h.b16 %v1199
    %v2592 = vunpack.c.l.b16 %v1200
    %v2593 = vunpack.c.h.b16 %v1200
    %v2594 = vunpack.c.l.b16 %v1201
    %v2595 = vunpack.c.h.b16 %v1201
    %v2596 = vunpack.c.l.b16 %v1202
    %v2597 = vunpack.c.h.b16 %v1202
    %v2598 = vunpack.c.l.b16 %v1203
    %v2599 = vunpack.c.h.b16 %v1203
    %v2600 = vunpack.c.l.b16 %v1204
    %v2601 = vunpack.c.h.b16 %v1204
    %v2602 = vunpack.c.l.b16 %v1205
    %v2603 = vunpack.c.h.b16 %v1205
    %v2604 = vunpack.c.l.b16 %v1206
    %v2605 = vunpack.c.h.b16 %v1206
    %v2606 = vunpack.c.l.b16 %v1207
    %v2607 = vunpack.c.h.b16 %v1207
    %v2608 = vunpack.c.l.b16 %v1208
    %v2609 = vunpack.c.h.b16 %v1208
    %v2610 = vunpack.c.l.b16 %v1209
    %v2611 = vunpack.c.h.b16 %v1209
    %v2612 = vunpack.c.l.b16 %v1210
    %v2613 = vunpack.c.h.b16 %v1210
    %v2614 = vunpack.c.l.b16 %v1211
    %v2615 = vunpack.c.h.b16 %v1211
    %v2616 = vunpack.c.l.b16 %v1212
    %v2617 = vunpack.c.h.b16 %v1212
    %v2618 = vunpack.c.l.b16 %v1213
    %v2619 = vunpack.c.h.b16 %v1213
    %v2620 = vunpack.c.l.b16 %v1214
    %v2621 = vunpack.c.h.b16 %v1214
    %v2622 = vunpack.c.l.b16 %v1215
    %v2623 = vunpack.c.h.b16 %v1215
    %v2624 = vunpack.c.l.b16 %v1216
    %v2625 = vunpack.c.h.b16 %v1216
    %v2626 = vunpack.c.l.b16 %v1217
    %v2627 = vunpack.c.h.b16 %v1217
    %v2628 = vunpack.c.l.b16 %v1218
    %v2629 = vunpack.c.h.b16 %v1218
    %v2630 = vunpack.c.l.b16 %v1219
    %v2631 = vunpack.c.h.b16 %v1219
    %v2632 = vunpack.c.l.b16 %v1220
    %v2633 = vunpack.c.h.b16 %v1220
    %v2634 = vunpack.c.l.b16 %v1221
    %v2635 = vunpack.c.h.b16 %v1221
    %v2636 = vunpack.c.l.b16 %v1222
    %v2637 = vunpack.c.h.b16 %v1222
    %v2638 = vunpack.c.l.b16 %v1223
    %v2639 = vunpack.c.h.b16 %v1223
    %v2640 = vunpack.c.l.b16 %v1224
    %v2641 = vunpack.c.h.b16 %v1224
    %v2642 = vunpack.c.l.b16 %v1225
    %v2643 = vunpack.c.h.b16 %v1225
    %v2644 = vunpack.c.l.b16 %v1226
    %v2645 = vunpack.c.h.b16 %v1226
    %v2646 = vunpack.c.l.b16 %v1227
    %v2647 = vunpack.c.h.b16 %v1227
    %v2648 = vunpack.c.l.b16 %v1228
    %v2649 = vunpack.c.h.b16 %v1228
    %v2650 = vunpack.c.l.b16 %v1229
    %v2651 = vunpack.c.h.b16 %v1229
    %v2652 = vunpack.c.l.b16 %v1230
    %v2653 = vunpack.c.h.b16 %v1230
    %v2654 = vunpack.c.l.b16 %v1231
    %v2655 = vunpack.c.h.b16 %v1231
    %v2656 = vunpack.c.l.b16 %v1232
    %v2657 = vunpack.c.h.b16 %v1232
    %v2658 = vunpack.c.l.b16 %v1233
    %v2659 = vunpack.c.h.b16 %v1233
    %v2660 = vunpack.c.l.b16 %v1234
    %v2661 = vunpack.c.h.b16 %v1234
    %v2662 = vunpack.c.l.b16 %v1235
    %v2663 = vunpack.c.h.b16 %v1235
    %v2664 = vunpack.c.l.b16 %v1236
    %v2665 = vunpack.c.h.b16 %v1236
    %v2666 = vunpack.c.l.b16 %v1237
    %v2667 = vunpack.c.h.b16 %v1237
    %v2668 = vunpack.c.l.b16 %v1238
    %v2669 = vunpack.c.h.b16 %v1238
    %v2670 = vunpack.c.l.b16 %v1239
    %v2671 = vunpack.c.h.b16 %v1239
    %v2672 = vunpack.c.l.b16 %v1240
    %v2673 = vunpack.c.h.b16 %v1240
    %v2674 = vunpack.c.l.b16 %v1241
    %v2675 = vunpack.c.h.b16 %v1241
    %v2676 = vunpack.c.l.b16 %v1242
    %v2677 = vunpack.c.h.b16 %v1242
    %v2678 = vunpack.c.l.b16 %v1243
    %v2679 = vunpack.c.h.b16 %v1243
    %v2680 = vunpack.c.l.b16 %v1244
    %v2681 = vunpack.c.h.b16 %v1244
    %v2682 = vunpack.c.l.b16 %v1245
    %v2683 = vunpack.c.h.b16 %v1245
    %v2684 = vunpack.c.l.b16 %v1246
    %v2685 = vunpack.c.h.b16 %v1246
    %v2686 = vunpack.c.l.b16 %v1247
    %v2687 = vunpack.c.h.b16 %v1247
    %v2688 = vunpack.c.l.b16 %v1248
    %v2689 = vunpack.c.h.b16 %v1248
    %v2690 = vunpack.c.l.b16 %v1249
    %v2691 = vunpack.c.h.b16 %v1249
    %v2692 = vunpack.c.l.b16 %v1250
    %v2693 = vunpack.c.h.b16 %v1250
    %v2694 = vunpack.c.l.b16 %v1251
    %v2695 = vunpack.c.h.b16 %v1251
    %v2696 = vunpack.c.l.b16 %v1252
    %v2697 = vunpack.c.h.b16 %v1252
    %v2698 = vunpack.c.l.b16 %v1253
    %v2699 = vunpack.c.h.b16 %v1253
    %v2700 = vunpack.c.l.b16 %v1254
    %v2701 = vunpack.c.h.b16 %v1254
    %v2702 = vunpack.c.l.b16 %v1255
    %v2703 = vunpack.c.h.b16 %v1255
    %v2704 = vunpack.c.l.b16 %v1256
    %v2705 = vunpack.c.h.b16 %v1256
    %v2706 = vunpack.c.l.b16 %v1257
    %v2707 = vunpack.c.h.b16 %v1257
    %v2708 = vunpack.c.l.b16 %v1258
    %v2709 = vunpack.c.h.b16 %v1258
    %v2710 = vunpack.c.l.b16 %v1259
    %v2711 = vunpack.c.h.b16 %v1259
    %v2712 = vunpack.c.l.b16 %v1260
    %v2713 = vunpack.c.h.b16 %v1260
    %v2714 = vunpack.c.l.b16 %v1261
    %v2715 = vunpack.c.h.b16 %v1261
    %v2716 = vunpack.c.l.b16 %v1262
    %v2717 = vunpack.c.h.b16 %v1262
    %v2718 = vunpack.c.l.b16 %v1263
    %v2719 = vunpack.c.h.b16 %v1263
    %v2720 = vunpack.c.l.b16 %v1264
    %v2721 = vunpack.c.h.b16 %v1264
    %v2722 = vunpack.c.l.b16 %v1265
    %v2723 = vunpack.c.h.b16 %v1265
    %v2724 = vunpack.c.l.b16 %v1266
    %v2725 = vunpack.c.h.b16 %v1266
    %v2726 = vunpack.c.l.b16 %v1267
    %v2727 = vunpack.c.h.b16 %v1267
    %v2728 = vunpack.c.l.b16 %v1268
    %v2729 = vunpack.c.h.b16 %v1268
    %v2730 = vunpack.c.l.b16 %v1269
    %v2731 = vunpack.c.h.b16 %v1269
    %v2732 = vunpack.c.l.b16 %v1270
    %v2733 = vunpack.c.h.b16 %v1270
    %v2734 = vunpack.c.l.b16 %v1271
    %v2735 = vunpack.c.h.b16 %v1271
    %v2736 = vunpack.c.l.b16 %v1272
    %v2737 = vunpack.c.h.b16 %v1272
    %v2738 = vunpack.c.l.b16 %v1273
    %v2739 = vunpack.c.h.b16 %v1273
    %v2740 = vunpack.c.l.b16 %v1274
    %v2741 = vunpack.c.h.b16 %v1274
    %v2742 = vunpack.c.l.b16 %v1275
    %v2743 = vunpack.c.h.b16 %v1275
    %v2744 = vunpack.c.l.b16 %v1276
    %v2745 = vunpack.c.h.b16 %v1276
    %v2746 = vunpack.c.l.b16 %v1277
    %v2747 = vunpack.c.h.b16 %v1277
    %v2748 = vunpack.c.l.b16 %v1278
    %v2749 = vunpack.c.h.b16 %v1278
    %v2750 = vunpack.c.l.b16 %v1279
    %v2751 = vunpack.c.h.b16 %v1279
    %v2752 = vunpack.c.l.b16 %v1280
    %v2753 = vunpack.c.h.b16 %v1280
    %v2754 = vunpack.c.l.b16 %v1281
    %v2755 = vunpack.c.h.b16 %v1281
    %v2756 = vunpack.c.l.b16 %v1282
    %v2757 = vunpack.c.h.b16 %v1282
    %v2758 = vunpack.c.l.b16 %v1283
    %v2759 = vunpack.c.h.b16 %v1283
    %v2760 = vunpack.c.l.b16 %v1284
    %v2761 = vunpack.c.h.b16 %v1284
    %v2762 = vunpack.c.l.b16 %v1285
    %v2763 = vunpack.c.h.b16 %v1285
    %v2764 = vunpack.c.l.b16 %v1286
    %v2765 = vunpack.c.h.b16 %v1286
    %v2766 = vunpack.c.l.b16 %v1287
    %v2767 = vunpack.c.h.b16 %v1287
    %v2768 = vunpack.c.l.b16 %v1288
    %v2769 = vunpack.c.h.b16 %v1288
    %v2770 = vunpack.c.l.b16 %v1289
    %v2771 = vunpack.c.h.b16 %v1289
    %v2772 = vunpack.c.l.b16 %v1290
    %v2773 = vunpack.c.h.b16 %v1290
    %v2774 = vunpack.c.l.b16 %v1291
    %v2775 = vunpack.c.h.b16 %v1291
    %v2776 = vunpack.c.l.b16 %v1292
    %v2777 = vunpack.c.h.b16 %v1292
    %v2778 = vunpack.c.l.b16 %v1293
    %v2779 = vunpack.c.h.b16 %v1293
    %v2780 = vunpack.c.l.b16 %v1294
    %v2781 = vunpack.c.h.b16 %v1294
    %v2782 = vunpack.c.l.b16 %v1295
    %v2783 = vunpack.c.h.b16 %v1295
    %v2784 = vunpack.c.l.b16 %v1296
    %v2785 = vunpack.c.h.b16 %v1296
    %v2786 = vunpack.c.l.b16 %v1297
    %v2787 = vunpack.c.h.b16 %v1297
    %v2788 = vunpack.c.l.b16 %v1298
    %v2789 = vunpack.c.h.b16 %v1298
    %v2790 = vunpack.c.l.b16 %v1299
    %v2791 = vunpack.c.h.b16 %v1299
    %v2792 = vunpack.c.l.b16 %v1300
    %v2793 = vunpack.c.h.b16 %v1300
    %v2794 = vunpack.c.l.b16 %v1301
    %v2795 = vunpack.c.h.b16 %v1301
    %v2796 = vunpack.c.l.b16 %v1302
    %v2797 = vunpack.c.h.b16 %v1302
    %v2798 = vunpack.c.l.b16 %v1303
    %v2799 = vunpack.c.h.b16 %v1303
    %v2800 = vunpack.c.l.b16 %v1304
    %v2801 = vunpack.c.h.b16 %v1304
    %v2802 = vunpack.c.l.b16 %v1305
    %v2803 = vunpack.c.h.b16 %v1305
    %v2804 = vunpack.c.l.b16 %v1306
    %v2805 = vunpack.c.h.b16 %v1306
    %v2806 = vunpack.c.l.b16 %v1307
    %v2807 = vunpack.c.h.b16 %v1307
    %v2808 = vunpack.c.l.b16 %v1308
    %v2809 = vunpack.c.h.b16 %v1308
    %v2810 = vunpack.c.l.b16 %v1309
    %v2811 = vunpack.c.h.b16 %v1309
    %v2812 = vunpack.c.l.b16 %v1310
    %v2813 = vunpack.c.h.b16 %v1310
    %v2814 = vunpack.c.l.b16 %v1311
    %v2815 = vunpack.c.h.b16 %v1311
    %v2816 = vunpack.c.l.b16 %v1312
    %v2817 = vunpack.c.h.b16 %v1312
    %v2818 = vunpack.c.l.b16 %v1313
    %v2819 = vunpack.c.h.b16 %v1313
    %v2820 = vunpack.c.l.b16 %v1314
    %v2821 = vunpack.c.h.b16 %v1314
    %v2822 = vunpack.c.l.b16 %v1315
    %v2823 = vunpack.c.h.b16 %v1315
    %v2824 = vunpack.c.l.b16 %v1316
    %v2825 = vunpack.c.h.b16 %v1316
    %v2826 = vunpack.c.l.b16 %v1317
    %v2827 = vunpack.c.h.b16 %v1317
    %v2828 = vunpack.c.l.b16 %v1318
    %v2829 = vunpack.c.h.b16 %v1318
    %v2830 = vunpack.c.l.b16 %v1319
    %v2831 = vunpack.c.h.b16 %v1319
    %v2832 = vunpack.c.l.b16 %v1320
    %v2833 = vunpack.c.h.b16 %v1320
    %v2834 = vunpack.c.l.b16 %v1321
    %v2835 = vunpack.c.h.b16 %v1321
    %v2836 = vunpack.c.l.b16 %v1322
    %v2837 = vunpack.c.h.b16 %v1322
    %v2838 = vunpack.c.l.b16 %v1323
    %v2839 = vunpack.c.h.b16 %v1323
    %v2840 = vunpack.c.l.b16 %v1324
    %v2841 = vunpack.c.h.b16 %v1324
    %v2842 = vunpack.c.l.b16 %v1325
    %v2843 = vunpack.c.h.b16 %v1325
    %v2844 = vunpack.c.l.b16 %v1326
    %v2845 = vunpack.c.h.b16 %v1326
    %v2846 = vunpack.c.l.b16 %v1327
    %v2847 = vunpack.c.h.b16 %v1327
    %v2848 = vunpack.c.l.b16 %v1328
    %v2849 = vunpack.c.h.b16 %v1328
    %v2850 = vunpack.c.l.b16 %v1329
    %v2851 = vunpack.c.h.b16 %v1329
    %v2852 = vunpack.c.l.b16 %v1330
    %v2853 = vunpack.c.h.b16 %v1330
    %v2854 = vunpack.c.l.b16 %v1331
    %v2855 = vunpack.c.h.b16 %v1331
    %v2856 = vunpack.c.l.b16 %v1332
    %v2857 = vunpack.c.h.b16 %v1332
    %v2858 = vunpack.c.l.b16 %v1333
    %v2859 = vunpack.c.h.b16 %v1333
    %v2860 = vunpack.c.l.b16 %v1334
    %v2861 = vunpack.c.h.b16 %v1334
    %v2862 = vunpack.c.l.b16 %v1335
    %v2863 = vunpack.c.h.b16 %v1335
    %v2864 = vunpack.c.l.b16 %v1336
    %v2865 = vunpack.c.h.b16 %v1336
    %v2866 = vunpack.c.l.b16 %v1337
    %v2867 = vunpack.c.h.b16 %v1337
    %v2868 = vunpack.c.l.b16 %v1338
    %v2869 = vunpack.c.h.b16 %v1338
    %v2870 = vunpack.c.l.b16 %v1339
    %v2871 = vunpack.c.h.b16 %v1339
    %v2872 = vunpack.c.l.b16 %v1340
    %v2873 = vunpack.c.h.b16 %v1340
    %v2874 = vunpack.c.l.b16 %v1341
    %v2875 = vunpack.c.h.b16 %v1341
    %v2876 = vunpack.c.l.b16 %v1342
    %v2877 = vunpack.c.h.b16 %v1342
    %v2878 = vunpack.c.l.b16 %v1343
    %v2879 = vunpack.c.h.b16 %v1343
    %v2880 = vunpack.c.l.b16 %v1344
    %v2881 = vunpack.c.h.b16 %v1344
    %v2882 = vunpack.c.l.b16 %v1345
    %v2883 = vunpack.c.h.b16 %v1345
    %v2884 = vunpack.c.l.b16 %v1346
    %v2885 = vunpack.c.h.b16 %v1346
    %v2886 = vunpack.c.l.b16 %v1347
    %v2887 = vunpack.c.h.b16 %v1347
    %v2888 = vunpack.c.l.b16 %v1348
    %v2889 = vunpack.c.h.b16 %v1348
    %v2890 = vunpack.c.l.b16 %v1349
    %v2891 = vunpack.c.h.b16 %v1349
    %v2892 = vunpack.c.l.b16 %v1350
    %v2893 = vunpack.c.h.b16 %v1350
    %v2894 = vunpack.c.l.b16 %v1351
    %v2895 = vunpack.c.h.b16 %v1351
    %v2896 = vunpack.c.l.b16 %v1352
    %v2897 = vunpack.c.h.b16 %v1352
    %v2898 = vunpack.c.l.b16 %v1353
    %v2899 = vunpack.c.h.b16 %v1353
    %v2900 = vunpack.c.l.b16 %v1354
    %v2901 = vunpack.c.h.b16 %v1354
    %v2902 = vunpack.c.l.b16 %v1355
    %v2903 = vunpack.c.h.b16 %v1355
    %v2904 = vunpack.c.l.b16 %v1356
    %v2905 = vunpack.c.h.b16 %v1356
    %v2906 = vunpack.c.l.b16 %v1357
    %v2907 = vunpack.c.h.b16 %v1357
    %v2908 = vunpack.c.l.b16 %v1358
    %v2909 = vunpack.c.h.b16 %v1358
    %v2910 = vunpack.c.l.b16 %v1359
    %v2911 = vunpack.c.h.b16 %v1359
    %v2912 = vunpack.c.l.b16 %v1360
    %v2913 = vunpack.c.h.b16 %v1360
    %v2914 = vunpack.c.l.b16 %v1361
    %v2915 = vunpack.c.h.b16 %v1361
    %v2916 = vunpack.c.l.b16 %v1362
    %v2917 = vunpack.c.h.b16 %v1362
    %v2918 = vunpack.c.l.b16 %v1363
    %v2919 = vunpack.c.h.b16 %v1363
    %v2920 = vunpack.c.l.b16 %v1364
    %v2921 = vunpack.c.h.b16 %v1364
    %v2922 = vunpack.c.l.b16 %v1365
    %v2923 = vunpack.c.h.b16 %v1365
    %v2924 = vpack.c.b16 %v1904, %v1900
    %v2925 = vpack.c.b16 %v1905, %v1901
    %v2926 = vpack.c.b16 %v1906, %v1902
    %v2927 = vpack.c.b16 %v1907, %v1903
    %v2928 = vpack.c.b16 %v1912, %v1908
    %v2929 = vpack.c.b16 %v1913, %v1909
    %v2930 = vpack.c.b16 %v1914, %v1910
    %v2931 = vpack.c.b16 %v1915, %v1911
    %v2932 = vpack.c.b16 %v1920, %v1916
    %v2933 = vpack.c.b16 %v1921, %v1917
    %v2934 = vpack.c.b16 %v1922, %v1918
    %v2935 = vpack.c.b16 %v1923, %v1919
    %v2936 = vpack.c.b16 %v1928, %v1924
    %v2937 = vpack.c.b16 %v1929, %v1925
    %v2938 = vpack.c.b16 %v1930, %v1926
    %v2939 = vpack.c.b16 %v1931, %v1927
    %v2940 = vpack.c.b16 %v1936, %v1932
    %v2941 = vpack.c.b16 %v1937, %v1933
    %v2942 = vpack.c.b16 %v1938, %v1934
    %v2943 = vpack.c.b16 %v1939, %v1935
    %v2944 = vpack.c.b16 %v1944, %v1940
    %v2945 = vpack.c.b16 %v1945, %v1941
    %v2946 = vpack.c.b16 %v1946, %v1942
    %v2947 = vpack.c.b16 %v1947, %v1943
    %v2948 = vpack.c.b16 %v1952, %v1948
    %v2949 = vpack.c.b16 %v1953, %v1949
    %v2950 = vpack.c.b16 %v1954, %v1950
    %v2951 = vpack.c.b16 %v1955, %v1951
    %v2952 = vpack.c.b16 %v1960, %v1956
    %v2953 = vpack.c.b16 %v1961, %v1957
    %v2954 = vpack.c.b16 %v1962, %v1958
    %v2955 = vpack.c.b16 %v1963, %v1959
    %v2956 = vpack.c.b16 %v1968, %v1964
    %v2957 = vpack.c.b16 %v1969, %v1965
    %v2958 = vpack.c.b16 %v1970, %v1966
    %v2959 = vpack.c.b16 %v1971, %v1967
    %v2960 = vpack.c.b16 %v1976, %v1972
    %v2961 = vpack.c.b16 %v1977, %v1973
    %v2962 = vpack.c.b16 %v1978, %v1974
    %v2963 = vpack.c.b16 %v1979, %v1975
    %v2964 = vpack.c.b16 %v1984, %v1980
    %v2965 = vpack.c.b16 %v1985, %v1981
    %v2966 = vpack.c.b16 %v1986, %v1982
    %v2967 = vpack.c.b16 %v1987, %v1983
    %v2968 = vpack.c.b16 %v1992, %v1988
    %v2969 = vpack.c.b16 %v1993, %v1989
    %v2970 = vpack.c.b16 %v1994, %v1990
    %v2971 = vpack.c.b16 %v1995, %v1991
    %v2972 = vpack.c.b16 %v2000, %v1996
    %v2973 = vpack.c.b16 %v2001, %v1997
    %v2974 = vpack.c.b16 %v2002, %v1998
    %v2975 = vpack.c.b16 %v2003, %v1999
    %v2976 = vpack.c.b16 %v2008, %v2004
    %v2977 = vpack.c.b16 %v2009, %v2005
    %v2978 = vpack.c.b16 %v2010, %v2006
    %v2979 = vpack.c.b16 %v2011, %v2007
    %v2980 = vpack.c.b16 %v2016, %v2012
    %v2981 = vpack.c.b16 %v2017, %v2013
    %v2982 = vpack.c.b16 %v2018, %v2014
    %v2983 = vpack.c.b16 %v2019, %v2015
    %v2984 = vpack.c.b16 %v2024, %v2020
    %v2985 = vpack.c.b16 %v2025, %v2021
    %v2986 = vpack.c.b16 %v2026, %v2022
    %v2987 = vpack.c.b16 %v2027, %v2023
    %v2988 = vpack.c.b16 %v2032, %v2028
    %v2989 = vpack.c.b16 %v2033, %v2029
    %v2990 = vpack.c.b16 %v2034, %v2030
    %v2991 = vpack.c.b16 %v2035, %v2031
    %v2992 = vpack.c.b16 %v2040, %v2036
    %v2993 = vpack.c.b16 %v2041, %v2037
    %v2994 = vpack.c.b16 %v2042, %v2038
    %v2995 = vpack.c.b16 %v2043, %v2039
    %v2996 = vpack.c.b16 %v2048, %v2044
    %v2997 = vpack.c.b16 %v2049, %v2045
    %v2998 = vpack.c.b16 %v2050, %v2046
    %v2999 = vpack.c.b16 %v2051, %v2047
    %v3000 = vpack.c.b16 %v2056, %v2052
    %v3001 = vpack.c.b16 %v2057, %v2053
    %v3002 = vpack.c.b16 %v2058, %v2054
    %v3003 = vpack.c.b16 %v2059, %v2055
    %v3004 = vpack.c.b16 %v2064, %v2060
    %v3005 = vpack.c.b16 %v2065, %v2061
    %v3006 = vpack.c.b16 %v2066, %v2062
    %v3007 = vpack.c.b16 %v2067, %v2063
    %v3008 = vpack.c.b16 %v2072, %v2068
    %v3009 = vpack.c.b16 %v2073, %v2069
    %v3010 = vpack.c.b16 %v2074, %v2070
    %v3011 = vpack.c.b16 %v2075, %v2071
    %v3012 = vpack.c.b16 %v2080, %v2076
    %v3013 = vpack.c.b16 %v2081, %v2077
    %v3014 = vpack.c.b16 %v2082, %v2078
    %v3015 = vpack.c.b16 %v2083, %v2079
    %v3016 = vpack.c.b16 %v2088, %v2084
    %v3017 = vpack.c.b16 %v2089, %v2085
    %v3018 = vpack.c.b16 %v2090, %v2086
    %v3019 = vpack.c.b16 %v2091, %v2087
    %v3020 = vpack.c.b16 %v2096, %v2092
    %v3021 = vpack.c.b16 %v2097, %v2093
    %v3022 = vpack.c.b16 %v2098, %v2094
    %v3023 = vpack.c.b16 %v2099, %v2095
    %v3024 = vpack.c.b16 %v2104, %v2100
    %v3025 = vpack.c.b16 %v2105, %v2101
    %v3026 = vpack.c.b16 %v2106, %v2102
    %v3027 = vpack.c.b16 %v2107, %v2103
    %v3028 = vpack.c.b16 %v2112, %v2108
    %v3029 = vpack.c.b16 %v2113, %v2109
    %v3030 = vpack.c.b16 %v2114, %v2110
    %v3031 = vpack.c.b16 %v2115, %v2111
    %v3032 = vpack.c.b16 %v2120, %v2116
    %v3033 = vpack.c.b16 %v2121, %v2117
    %v3034 = vpack.c.b16 %v2122, %v2118
    %v3035 = vpack.c.b16 %v2123, %v2119
    %v3036 = vpack.c.b16 %v2128, %v2124
    %v3037 = vpack.c.b16 %v2129, %v2125
    %v3038 = vpack.c.b16 %v2130, %v2126
    %v3039 = vpack.c.b16 %v2131, %v2127
    %v3040 = vpack.c.b16 %v2136, %v2132
    %v3041 = vpack.c.b16 %v2137, %v2133
    %v3042 = vpack.c.b16 %v2138, %v2134
    %v3043 = vpack.c.b16 %v2139, %v2135
    %v3044 = vpack.c.b16 %v2144, %v2140
    %v3045 = vpack.c.b16 %v2145, %v2141
    %v3046 = vpack.c.b16 %v2146, %v2142
    %v3047 = vpack.c.b16 %v2147, %v2143
    %v3048 = vpack.c.b16 %v2152, %v2148
    %v3049 = vpack.c.b16 %v2153, %v2149
    %v3050 = vpack.c.b16 %v2154, %v2150
    %v3051 = vpack.c.b16 %v2155, %v2151
    %v3052 = vpack.c.b16 %v2160, %v2156
    %v3053 = vpack.c.b16 %v2161, %v2157
    %v3054 = vpack.c.b16 %v2162, %v2158
    %v3055 = vpack.c.b16 %v2163, %v2159
    %v3056 = vpack.c.b16 %v2168, %v2164
    %v3057 = vpack.c.b16 %v2169, %v2165
    %v3058 = vpack.c.b16 %v2170, %v2166
    %v3059 = vpack.c.b16 %v2171, %v2167
    %v3060 = vpack.c.b16 %v2176, %v2172
    %v3061 = vpack.c.b16 %v2177, %v2173
    %v3062 = vpack.c.b16 %v2178, %v2174
    %v3063 = vpack.c.b16 %v2179, %v2175
    %v3064 = vpack.c.b16 %v2184, %v2180
    %v3065 = vpack.c.b16 %v2185, %v2181
    %v3066 = vpack.c.b16 %v2186, %v2182
    %v3067 = vpack.c.b16 %v2187, %v2183
    %v3068 = vpack.c.b16 %v2192, %v2188
    %v3069 = vpack.c.b16 %v2193, %v2189
    %v3070 = vpack.c.b16 %v2194, %v2190
    %v3071 = vpack.c.b16 %v2195, %v2191
    %v3072 = vpack.c.b16 %v2200, %v2196
    %v3073 = vpack.c.b16 %v2201, %v2197
    %v3074 = vpack.c.b16 %v2202, %v2198
    %v3075 = vpack.c.b16 %v2203, %v2199
    %v3076 = vpack.c.b16 %v2208, %v2204
    %v3077 = vpack.c.b16 %v2209, %v2205
    %v3078 = vpack.c.b16 %v2210, %v2206
    %v3079 = vpack.c.b16 %v2211, %v2207
    %v3080 = vpack.c.b16 %v2216, %v2212
    %v3081 = vpack.c.b16 %v2217, %v2213
    %v3082 = vpack.c.b16 %v2218, %v2214
    %v3083 = vpack.c.b16 %v2219, %v2215
    %v3084 = vpack.c.b16 %v2224, %v2220
    %v3085 = vpack.c.b16 %v2225, %v2221
    %v3086 = vpack.c.b16 %v2226, %v2222
    %v3087 = vpack.c.b16 %v2227, %v2223
    %v3088 = vpack.c.b16 %v2232, %v2228
    %v3089 = vpack.c.b16 %v2233, %v2229
    %v3090 = vpack.c.b16 %v2234, %v2230
    %v3091 = vpack.c.b16 %v2235, %v2231
    %v3092 = vpack.c.b16 %v2240, %v2236
    %v3093 = vpack.c.b16 %v2241, %v2237
    %v3094 = vpack.c.b16 %v2242, %v2238
    %v3095 = vpack.c.b16 %v2243, %v2239
    %v3096 = vpack.c.b16 %v2248, %v2244
    %v3097 = vpack.c.b16 %v2249, %v2245
    %v3098 = vpack.c.b16 %v2250, %v2246
    %v3099 = vpack.c.b16 %v2251, %v2247
    %v3100 = vpack.c.b16 %v2256, %v2252
    %v3101 = vpack.c.b16 %v2257, %v2253
    %v3102 = vpack.c.b16 %v2258, %v2254
    %v3103 = vpack.c.b16 %v2259, %v2255
    %v3104 = vpack.c.b16 %v2264, %v2260
    %v3105 = vpack.c.b16 %v2265, %v2261
    %v3106 = vpack.c.b16 %v2266, %v2262
    %v3107 = vpack.c.b16 %v2267, %v2263
    %v3108 = vpack.c.b16 %v2272, %v2268
    %v3109 = vpack.c.b16 %v2273, %v2269
    %v3110 = vpack.c.b16 %v2274, %v2270
    %v3111 = vpack.c.b16 %v2275, %v2271
    %v3112 = vpack.c.b16 %v2280, %v2276
    %v3113 = vpack.c.b16 %v2281, %v2277
    %v3114 = vpack.c.b16 %v2282, %v2278
    %v3115 = vpack.c.b16 %v2283, %v2279
    %v3116 = vpack.c.b16 %v2288, %v2284
    %v3117 = vpack.c.b16 %v2289, %v2285
    %v3118 = vpack.c.b16 %v2290, %v2286
    %v3119 = vpack.c.b16 %v2291, %v2287
    %v3120 = vpack.c.b16 %v2296, %v2292
    %v3121 = vpack.c.b16 %v2297, %v2293
    %v3122 = vpack.c.b16 %v2298, %v2294
    %v3123 = vpack.c.b16 %v2299, %v2295
    %v3124 = vpack.c.b16 %v2304, %v2300
    %v3125 = vpack.c.b16 %v2305, %v2301
    %v3126 = vpack.c.b16 %v2306, %v2302
    %v3127 = vpack.c.b16 %v2307, %v2303
    %v3128 = vpack.c.b16 %v2312, %v2308
    %v3129 = vpack.c.b16 %v2313, %v2309
    %v3130 = vpack.c.b16 %v2314, %v2310
    %v3131 = vpack.c.b16 %v2315, %v2311
    %v3132 = vpack.c.b16 %v2320, %v2316
    %v3133 = vpack.c.b16 %v2321, %v2317
    %v3134 = vpack.c.b16 %v2322, %v2318
    %v3135 = vpack.c.b16 %v2323, %v2319
    %v3136 = vpack.c.b16 %v2328, %v2324
    %v3137 = vpack.c.b16 %v2329, %v2325
    %v3138 = vpack.c.b16 %v2330, %v2326
    %v3139 = vpack.c.b16 %v2331, %v2327
    %v3140 = vpack.c.b16 %v2336, %v2332
    %v3141 = vpack.c.b16 %v2337, %v2333
    %v3142 = vpack.c.b16 %v2338, %v2334
    %v3143 = vpack.c.b16 %v2339, %v2335
    %v3144 = vpack.c.b16 %v2344, %v2340
    %v3145 = vpack.c.b16 %v2345, %v2341
    %v3146 = vpack.c.b16 %v2346, %v2342
    %v3147 = vpack.c.b16 %v2347, %v2343
    %v3148 = vpack.c.b16 %v2352, %v2348
    %v3149 = vpack.c.b16 %v2353, %v2349
    %v3150 = vpack.c.b16 %v2354, %v2350
    %v3151 = vpack.c.b16 %v2355, %v2351
    %v3152 = vpack.c.b16 %v2360, %v2356
    %v3153 = vpack.c.b16 %v2361, %v2357
    %v3154 = vpack.c.b16 %v2362, %v2358
    %v3155 = vpack.c.b16 %v2363, %v2359
    %v3156 = vpack.c.b16 %v2368, %v2364
    %v3157 = vpack.c.b16 %v2369, %v2365
    %v3158 = vpack.c.b16 %v2370, %v2366
    %v3159 = vpack.c.b16 %v2371, %v2367
    %v3160 = vpack.c.b16 %v2376, %v2372
    %v3161 = vpack.c.b16 %v2377, %v2373
    %v3162 = vpack.c.b16 %v2378, %v2374
    %v3163 = vpack.c.b16 %v2379, %v2375
    %v3164 = vpack.c.b16 %v2384, %v2380
    %v3165 = vpack.c.b16 %v2385, %v2381
    %v3166 = vpack.c.b16 %v2386, %v2382
    %v3167 = vpack.c.b16 %v2387, %v2383
    %v3168 = vpack.c.b16 %v2392, %v2388
    %v3169 = vpack.c.b16 %v2393, %v2389
    %v3170 = vpack.c.b16 %v2394, %v2390
    %v3171 = vpack.c.b16 %v2395, %v2391
    %v3172 = vpack.c.b16 %v2400, %v2396
    %v3173 = vpack.c.b16 %v2401, %v2397
    %v3174 = vpack.c.b16 %v2402, %v2398
    %v3175 = vpack.c.b16 %v2403, %v2399
    %v3176 = vpack.c.b16 %v2408, %v2404
    %v3177 = vpack.c.b16 %v2409, %v2405
    %v3178 = vpack.c.b16 %v2410, %v2406
    %v3179 = vpack.c.b16 %v2411, %v2407
    %v3180 = vpack.c.b16 %v2416, %v2412
    %v3181 = vpack.c.b16 %v2417, %v2413
    %v3182 = vpack.c.b16 %v2418, %v2414
    %v3183 = vpack.c.b16 %v2419, %v2415
    %v3184 = vpack.c.b16 %v2424, %v2420
    %v3185 = vpack.c.b16 %v2425, %v2421
    %v3186 = vpack.c.b16 %v2426, %v2422
    %v3187 = vpack.c.b16 %v2427, %v2423
    %v3188 = vpack.c.b16 %v2432, %v2428
    %v3189 = vpack.c.b16 %v2433, %v2429
    %v3190 = vpack.c.b16 %v2434, %v2430
    %v3191 = vpack.c.b16 %v2435, %v2431
    %v3192 = vpack.c.b16 %v2440, %v2436
    %v3193 = vpack.c.b16 %v2441, %v2437
    %v3194 = vpack.c.b16 %v2442, %v2438
    %v3195 = vpack.c.b16 %v2443, %v2439
    %v3196 = vpack.c.b16 %v2448, %v2444
    %v3197 = vpack.c.b16 %v2449, %v2445
    %v3198 = vpack.c.b16 %v2450, %v2446
    %v3199 = vpack.c.b16 %v2451, %v2447
    %v3200 = vpack.c.b16 %v2456, %v2452
    %v3201 = vpack.c.b16 %v2457, %v2453
    %v3202 = vpack.c.b16 %v2458, %v2454
    %v3203 = vpack.c.b16 %v2459, %v2455
    %v3204 = vpack.c.b16 %v2464, %v2460
    %v3205 = vpack.c.b16 %v2465, %v2461
    %v3206 = vpack.c.b16 %v2466, %v2462
    %v3207 = vpack.c.b16 %v2467, %v2463
    %v3208 = vpack.c.b16 %v2472, %v2468
    %v3209 = vpack.c.b16 %v2473, %v2469
    %v3210 = vpack.c.b16 %v2474, %v2470
    %v3211 = vpack.c.b16 %v2475, %v2471
    %v3212 = vpack.c.b16 %v2480, %v2476
    %v3213 = vpack.c.b16 %v2481, %v2477
    %v3214 = vpack.c.b16 %v2482, %v2478
    %v3215 = vpack.c.b16 %v2483, %v2479
    %v3216 = vpack.c.b16 %v2488, %v2484
    %v3217 = vpack.c.b16 %v2489, %v2485
    %v3218 = vpack.c.b16 %v2490, %v2486
    %v3219 = vpack.c.b16 %v2491, %v2487
    %v3220 = vpack.c.b16 %v2496, %v2492
    %v3221 = vpack.c.b16 %v2497, %v2493
    %v3222 = vpack.c.b16 %v2498, %v2494
    %v3223 = vpack.c.b16 %v2499, %v2495
    %v3224 = vpack.c.b16 %v2504, %v2500
    %v3225 = vpack.c.b16 %v2505, %v2501
    %v3226 = vpack.c.b16 %v2506, %v2502
    %v3227 = vpack.c.b16 %v2507, %v2503
    %v3228 = vpack.c.b16 %v2512, %v2508
    %v3229 = vpack.c.b16 %v2513, %v2509
    %v3230 = vpack.c.b16 %v2514, %v2510
    %v3231 = vpack.c.b16 %v2515, %v2511
    %v3232 = vpack.c.b16 %v2520, %v2516
    %v3233 = vpack.c.b16 %v2521, %v2517
    %v3234 = vpack.c.b16 %v2522, %v2518
    %v3235 = vpack.c.b16 %v2523, %v2519
    %v3236 = vpack.c.b16 %v2528, %v2524
    %v3237 = vpack.c.b16 %v2529, %v2525
    %v3238 = vpack.c.b16 %v2530, %v2526
    %v3239 = vpack.c.b16 %v2531, %v2527
    %v3240 = vpack.c.b16 %v2536, %v2532
    %v3241 = vpack.c.b16 %v2537, %v2533
    %v3242 = vpack.c.b16 %v2538, %v2534
    %v3243 = vpack.c.b16 %v2539, %v2535
    %v3244 = vpack.c.b16 %v2544, %v2540
    %v3245 = vpack.c.b16 %v2545, %v2541
    %v3246 = vpack.c.b16 %v2546, %v2542
    %v3247 = vpack.c.b16 %v2547, %v2543
    %v3248 = vpack.c.b16 %v2552, %v2548
    %v3249 = vpack.c.b16 %v2553, %v2549
    %v3250 = vpack.c.b16 %v2554, %v2550
    %v3251 = vpack.c.b16 %v2555, %v2551
    %v3252 = vpack.c.b16 %v2560, %v2556
    %v3253 = vpack.c.b16 %v2561, %v2557
    %v3254 = vpack.c.b16 %v2562, %v2558
    %v3255 = vpack.c.b16 %v2563, %v2559
    %v3256 = vpack.c.b16 %v2568, %v2564
    %v3257 = vpack.c.b16 %v2569, %v2565
    %v3258 = vpack.c.b16 %v2570, %v2566
    %v3259 = vpack.c.b16 %v2571, %v2567
    %v3260 = vpack.c.b16 %v2576, %v2572
    %v3261 = vpack.c.b16 %v2577, %v2573
    %v3262 = vpack.c.b16 %v2578, %v2574
    %v3263 = vpack.c.b16 %v2579, %v2575
    %v3264 = vpack.c.b16 %v2584, %v2580
    %v3265 = vpack.c.b16 %v2585, %v2581
    %v3266 = vpack.c.b16 %v2586, %v2582
    %v3267 = vpack.c.b16 %v2587, %v2583
    %v3268 = vpack.c.b16 %v2592, %v2588
    %v3269 = vpack.c.b16 %v2593, %v2589
    %v3270 = vpack.c.b16 %v2594, %v2590
    %v3271 = vpack.c.b16 %v2595, %v2591
    %v3272 = vpack.c.b16 %v2600, %v2596
    %v3273 = vpack.c.b16 %v2601, %v2597
    %v3274 = vpack.c.b16 %v2602, %v2598
    %v3275 = vpack.c.b16 %v2603, %v2599
    %v3276 = vpack.c.b16 %v2608, %v2604
    %v3277 = vpack.c.b16 %v2609, %v2605
    %v3278 = vpack.c.b16 %v2610, %v2606
    %v3279 = vpack.c.b16 %v2611, %v2607
    %v3280 = vpack.c.b16 %v2616, %v2612
    %v3281 = vpack.c.b16 %v2617, %v2613
    %v3282 = vpack.c.b16 %v2618, %v2614
    %v3283 = vpack.c.b16 %v2619, %v2615
    %v3284 = vpack.c.b16 %v2624, %v2620
    %v3285 = vpack.c.b16 %v2625, %v2621
    %v3286 = vpack.c.b16 %v2626, %v2622
    %v3287 = vpack.c.b16 %v2627, %v2623
    %v3288 = vpack.c.b16 %v2632, %v2628
    %v3289 = vpack.c.b16 %v2633, %v2629
    %v3290 = vpack.c.b16 %v2634, %v2630
    %v3291 = vpack.c.b16 %v2635, %v2631
    %v3292 = vpack.c.b16 %v2640, %v2636
    %v3293 = vpack.c.b16 %v2641, %v2637
    %v3294 = vpack.c.b16 %v2642, %v2638
    %v3295 = vpack.c.b16 %v2643, %v2639
    %v3296 = vpack.c.b16 %v2648, %v2644
    %v3297 = vpack.c.b16 %v2649, %v2645
    %v3298 = vpack.c.b16 %v2650, %v2646
    %v3299 = vpack.c.b16 %v2651, %v2647
    %v3300 = vpack.c.b16 %v2656, %v2652
    %v3301 = vpack.c.b16 %v2657, %v2653
    %v3302 = vpack.c.b16 %v2658, %v2654
    %v3303 = vpack.c.b16 %v2659, %v2655
    %v3304 = vpack.c.b16 %v2664, %v2660
    %v3305 = vpack.c.b16 %v2665, %v2661
    %v3306 = vpack.c.b16 %v2666, %v2662
    %v3307 = vpack.c.b16 %v2667, %v2663
    %v3308 = vpack.c.b16 %v2672, %v2668
    %v3309 = vpack.c.b16 %v2673, %v2669
    %v3310 = vpack.c.b16 %v2674, %v2670
    %v3311 = vpack.c.b16 %v2675, %v2671
    %v3312 = vpack.c.b16 %v2680, %v2676
    %v3313 = vpack.c.b16 %v2681, %v2677
    %v3314 = vpack.c.b16 %v2682, %v2678
    %v3315 = vpack.c.b16 %v2683, %v2679
    %v3316 = vpack.c.b16 %v2688, %v2684
    %v3317 = vpack.c.b16 %v2689, %v2685
    %v3318 = vpack.c.b16 %v2690, %v2686
    %v3319 = vpack.c.b16 %v2691, %v2687
    %v3320 = vpack.c.b16 %v2696, %v2692
    %v3321 = vpack.c.b16 %v2697, %v2693
    %v3322 = vpack.c.b16 %v2698, %v2694
    %v3323 = vpack.c.b16 %v2699, %v2695
    %v3324 = vpack.c.b16 %v2704, %v2700
    %v3325 = vpack.c.b16 %v2705, %v2701
    %v3326 = vpack.c.b16 %v2706, %v2702
    %v3327 = vpack.c.b16 %v2707, %v2703
    %v3328 = vpack.c.b16 %v2712, %v2708
    %v3329 = vpack.c.b16 %v2713, %v2709
    %v3330 = vpack.c.b16 %v2714, %v2710
    %v3331 = vpack.c.b16 %v2715, %v2711
    %v3332 = vpack.c.b16 %v2720, %v2716
    %v3333 = vpack.c.b16 %v2721, %v2717
    %v3334 = vpack.c.b16 %v2722, %v2718
    %v3335 = vpack.c.b16 %v2723, %v2719
    %v3336 = vpack.c.b16 %v2728, %v2724
    %v3337 = vpack.c.b16 %v2729, %v2725
    %v3338 = vpack.c.b16 %v2730, %v2726
    %v3339 = vpack.c.b16 %v2731, %v2727
    %v3340 = vpack.c.b16 %v2736, %v2732
    %v3341 = vpack.c.b16 %v2737, %v2733
    %v3342 = vpack.c.b16 %v2738, %v2734
    %v3343 = vpack.c.b16 %v2739, %v2735
    %v3344 = vpack.c.b16 %v2744, %v2740
    %v3345 = vpack.c.b16 %v2745, %v2741
    %v3346 = vpack.c.b16 %v2746, %v2742
    %v3347 = vpack.c.b16 %v2747, %v2743
    %v3348 = vpack.c.b16 %v2752, %v2748
    %v3349 = vpack.c.b16 %v2753, %v2749
    %v3350 = vpack.c.b16 %v2754, %v2750
    %v3351 = vpack.c.b16 %v2755, %v2751
    %v3352 = vpack.c.b16 %v2760, %v2756
    %v3353 = vpack.c.b16 %v2761, %v2757
    %v3354 = vpack.c.b16 %v2762, %v2758
    %v3355 = vpack.c.b16 %v2763, %v2759
    %v3356 = vpack.c.b16 %v2768, %v2764
    %v3357 = vpack.c.b16 %v2769, %v2765
    %v3358 = vpack.c.b16 %v2770, %v2766
    %v3359 = vpack.c.b16 %v2771, %v2767
    %v3360 = vpack.c.b16 %v2776, %v2772
    %v3361 = vpack.c.b16 %v2777, %v2773
    %v3362 = vpack.c.b16 %v2778, %v2774
    %v3363 = vpack.c.b16 %v2779, %v2775
    %v3364 = vpack.c.b16 %v2784, %v2780
    %v3365 = vpack.c.b16 %v2785, %v2781
    %v3366 = vpack.c.b16 %v2786, %v2782
    %v3367 = vpack.c.b16 %v2787, %v2783
    %v3368 = vpack.c.b16 %v2792, %v2788
    %v3369 = vpack.c.b16 %v2793, %v2789
    %v3370 = vpack.c.b16 %v2794, %v2790
    %v3371 = vpack.c.b16 %v2795, %v2791
    %v3372 = vpack.c.b16 %v2800, %v2796
    %v3373 = vpack.c.b16 %v2801, %v2797
    %v3374 = vpack.c.b16 %v2802, %v2798
    %v3375 = vpack.c.b16 %v2803, %v2799
    %v3376 = vpack.c.b16 %v2808, %v2804
    %v3377 = vpack.c.b16 %v2809, %v2805
    %v3378 = vpack.c.b16 %v2810, %v2806
    %v3379 = vpack.c.b16 %v2811, %v2807
    %v3380 = vpack.c.b16 %v2816, %v2812
    %v3381 = vpack.c.b16 %v2817, %v2813
    %v3382 = vpack.c.b16 %v2818, %v2814
    %v3383 = vpack.c.b16 %v2819, %v2815
    %v3384 = vpack.c.b16 %v2824, %v2820
    %v3385 = vpack.c.b16 %v2825, %v2821
    %v3386 = vpack.c.b16 %v2826, %v2822
    %v3387 = vpack.c.b16 %v2827, %v2823
    %v3388 = vpack.c.b16 %v2832, %v2828
    %v3389 = vpack.c.b16 %v2833, %v2829
    %v3390 = vpack.c.b16 %v2834, %v2830
    %v3391 = vpack.c.b16 %v2835, %v2831
    %v3392 = vpack.c.b16 %v2840, %v2836
    %v3393 = vpack.c.b16 %v2841, %v2837
    %v3394 = vpack.c.b16 %v2842, %v2838
    %v3395 = vpack.c.b16 %v2843, %v2839
    %v3396 = vpack.c.b16 %v2848, %v2844
    %v3397 = vpack.c.b16 %v2849, %v2845
    %v3398 = vpack.c.b16 %v2850, %v2846
    %v3399 = vpack.c.b16 %v2851, %v2847
    %v3400 = vpack.c.b16 %v2856, %v2852
    %v3401 = vpack.c.b16 %v2857, %v2853
    %v3402 = vpack.c.b16 %v2858, %v2854
    %v3403 = vpack.c.b16 %v2859, %v2855
    %v3404 = vpack.c.b16 %v2864, %v2860
    %v3405 = vpack.c.b16 %v2865, %v2861
    %v3406 = vpack.c.b16 %v2866, %v2862
    %v3407 = vpack.c.b16 %v2867, %v2863
    %v3408 = vpack.c.b16 %v2872, %v2868
    %v3409 = vpack.c.b16 %v2873, %v2869
    %v3410 = vpack.c.b16 %v2874, %v2870
    %v3411 = vpack.c.b16 %v2875, %v2871
    %v3412 = vpack.c.b16 %v2880, %v2876
    %v3413 = vpack.c.b16 %v2881, %v2877
    %v3414 = vpack.c.b16 %v2882, %v2878
    %v3415 = vpack.c.b16 %v2883, %v2879
    %v3416 = vpack.c.b16 %v2888, %v2884
    %v3417 = vpack.c.b16 %v2889, %v2885
    %v3418 = vpack.c.b16 %v2890, %v2886
    %v3419 = vpack.c.b16 %v2891, %v2887
    %v3420 = vpack.c.b16 %v2896, %v2892
    %v3421 = vpack.c.b16 %v2897, %v2893
    %v3422 = vpack.c.b16 %v2898, %v2894
    %v3423 = vpack.c.b16 %v2899, %v2895
    %v3424 = vpack.c.b16 %v2904, %v2900
    %v3425 = vpack.c.b16 %v2905, %v2901
    %v3426 = vpack.c.b16 %v2906, %v2902
    %v3427 = vpack.c.b16 %v2907, %v2903
    %v3428 = vpack.c.b16 %v2912, %v2908
    %v3429 = vpack.c.b16 %v2913, %v2909
    %v3430 = vpack.c.b16 %v2914, %v2910
    %v3431 = vpack.c.b16 %v2915, %v2911
    %v3432 = vpack.c.b16 %v2920, %v2916
    %v3433 = vpack.c.b16 %v2921, %v2917
    %v3434 = vpack.c.b16 %v2922, %v2918
    %v3435 = vpack.c.b16 %v2923, %v2919
    %3948 = vmatprep.subr.bf16.mxu0 %v2925
    %3949 = vmatpush1.bf16.msra.mxu0 %v2924
    %3950 = vmatprep.subr.bf16.mxu0 %v2929
    %3951 = vmatpush1.bf16.msra.mxu0 %v2928
    %3952 = vmatprep.subr.bf16.mxu0 %v2933
    %3953 = vmatpush1.bf16.msra.mxu0 %v2932
    %3954 = vmatprep.subr.bf16.mxu0 %v2937
    %3955 = vmatpush1.bf16.msra.mxu0 %v2936
    %3956 = vmatprep.subr.bf16.mxu0 %v2941
    %3957 = vmatpush1.bf16.msra.mxu0 %v2940
    %3958 = vmatprep.subr.bf16.mxu0 %v2945
    %3959 = vmatpush1.bf16.msra.mxu0 %v2944
    %3960 = vmatprep.subr.bf16.mxu0 %v2949
    %3961 = vmatpush1.bf16.msra.mxu0 %v2948
    %3962 = vmatprep.subr.bf16.mxu0 %v2953
    %3963 = vmatpush1.bf16.msra.mxu0 %v2952
    %3964 = vmatprep.subr.bf16.mxu0 %v2957
    %3965 = vmatpush1.bf16.msra.mxu0 %v2956
    %3966 = vmatprep.subr.bf16.mxu0 %v2961
    %3967 = vmatpush1.bf16.msra.mxu0 %v2960
    %3968 = vmatprep.subr.bf16.mxu0 %v2965
    %3969 = vmatpush1.bf16.msra.mxu0 %v2964
    %3970 = vmatprep.subr.bf16.mxu0 %v2969
    %3971 = vmatpush1.bf16.msra.mxu0 %v2968
    %3972 = vmatprep.subr.bf16.mxu0 %v2973
    %3973 = vmatpush1.bf16.msra.mxu0 %v2972
    %3974 = vmatprep.subr.bf16.mxu0 %v2977
    %3975 = vmatpush1.bf16.msra.mxu0 %v2976
    %3976 = vmatprep.subr.bf16.mxu0 %v2981
    %3977 = vmatpush1.bf16.msra.mxu0 %v2980
    %3978 = vmatprep.subr.bf16.mxu0 %v2985
    %3979 = vmatpush1.bf16.msra.mxu0 %v2984
    %3980 = vmatprep.mubr.bf16.mxu0 %v839
    %3981 = vmatmul.mubr.bf16.gmra.mrb[0].mxu0 %v838
    %v3982 = vpop.f32.mrb[0].mxu0
    %v3983 = vadd.f32 %v1371, %v3982
    %v3984 = vpop.f32.mrb[0].mxu0
    %v3985 = vadd.f32 %v1375, %v3984
    %v3986 = vpop.f32.mrb[0].mxu0
    %v3987 = vadd.f32 %v1371, %v3986
    %v3988 = vpop.f32.mrb[0].mxu0
    %v3989 = vadd.f32 %v1375, %v3988
    %3990 = vdwg.mxu0
    %3991 = vmatprep.subr.bf16.mxu0 %v2989
    %3992 = vmatpush1.bf16.msra.mxu0 %v2988
    %3993 = vmatprep.subr.bf16.mxu0 %v2993
    %3994 = vmatpush1.bf16.msra.mxu0 %v2992
    %3995 = vmatprep.subr.bf16.mxu0 %v2997
    %3996 = vmatpush1.bf16.msra.mxu0 %v2996
    %3997 = vmatprep.subr.bf16.mxu0 %v3001
    %3998 = vmatpush1.bf16.msra.mxu0 %v3000
    %3999 = vmatprep.subr.bf16.mxu0 %v3005
    %4000 = vmatpush1.bf16.msra.mxu0 %v3004
    %4001 = vmatprep.subr.bf16.mxu0 %v3009
    %4002 = vmatpush1.bf16.msra.mxu0 %v3008
    %4003 = vmatprep.subr.bf16.mxu0 %v3013
    %4004 = vmatpush1.bf16.msra.mxu0 %v3012
    %4005 = vmatprep.subr.bf16.mxu0 %v3017
    %4006 = vmatpush1.bf16.msra.mxu0 %v3016
    %4007 = vmatprep.subr.bf16.mxu0 %v3021
    %4008 = vmatpush1.bf16.msra.mxu0 %v3020
    %4009 = vmatprep.subr.bf16.mxu0 %v3025
    %4010 = vmatpush1.bf16.msra.mxu0 %v3024
    %4011 = vmatprep.subr.bf16.mxu0 %v3029
    %4012 = vmatpush1.bf16.msra.mxu0 %v3028
    %4013 = vmatprep.subr.bf16.mxu0 %v3033
    %4014 = vmatpush1.bf16.msra.mxu0 %v3032
    %4015 = vmatprep.subr.bf16.mxu0 %v3037
    %4016 = vmatpush1.bf16.msra.mxu0 %v3036
    %4017 = vmatprep.subr.bf16.mxu0 %v3041
    %4018 = vmatpush1.bf16.msra.mxu0 %v3040
    %4019 = vmatprep.subr.bf16.mxu0 %v3045
    %4020 = vmatpush1.bf16.msra.mxu0 %v3044
    %4021 = vmatprep.subr.bf16.mxu0 %v3049
    %4022 = vmatpush1.bf16.msra.mxu0 %v3048
    %4023 = vmatprep.mubr.bf16.mxu0 %v841
    %4024 = vmatmul.mubr.bf16.gmra.mrb[0].mxu0 %v840
    %v4025 = vpop.f32.mrb[0].mxu0
    %v4026 = vadd.f32 %v3983, %v4025
    %v4027 = vpop.f32.mrb[0].mxu0
    %v4028 = vadd.f32 %v3985, %v4027
    %v4029 = vpop.f32.mrb[0].mxu0
    %v4030 = vadd.f32 %v3987, %v4029
    %v4031 = vpop.f32.mrb[0].mxu0
    %v4032 = vadd.f32 %v3989, %v4031
    %4033 = vdwg.mxu0
    %4034 = vmatprep.subr.bf16.mxu0 %v3053
    %4035 = vmatpush1.bf16.msra.mxu0 %v3052
    %4036 = vmatprep.subr.bf16.mxu0 %v3057
    %4037 = vmatpush1.bf16.msra.mxu0 %v3056
    %4038 = vmatprep.subr.bf16.mxu0 %v3061
    %4039 = vmatpush1.bf16.msra.mxu0 %v3060
    %4040 = vmatprep.subr.bf16.mxu0 %v3065
    %4041 = vmatpush1.bf16.msra.mxu0 %v3064
    %4042 = vmatprep.subr.bf16.mxu0 %v3069
    %4043 = vmatpush1.bf16.msra.mxu0 %v3068
    %4044 = vmatprep.subr.bf16.mxu0 %v3073
    %4045 = vmatpush1.bf16.msra.mxu0 %v3072
    %4046 = vmatprep.subr.bf16.mxu0 %v3077
    %4047 = vmatpush1.bf16.msra.mxu0 %v3076
    %4048 = vmatprep.subr.bf16.mxu0 %v3081
    %4049 = vmatpush1.bf16.msra.mxu0 %v3080
    %4050 = vmatprep.subr.bf16.mxu0 %v3085
    %4051 = vmatpush1.bf16.msra.mxu0 %v3084
    %4052 = vmatprep.subr.bf16.mxu0 %v3089
    %4053 = vmatpush1.bf16.msra.mxu0 %v3088
    %4054 = vmatprep.subr.bf16.mxu0 %v3093
    %4055 = vmatpush1.bf16.msra.mxu0 %v3092
    %4056 = vmatprep.subr.bf16.mxu0 %v3097
    %4057 = vmatpush1.bf16.msra.mxu0 %v3096
    %4058 = vmatprep.subr.bf16.mxu0 %v3101
    %4059 = vmatpush1.bf16.msra.mxu0 %v3100
    %4060 = vmatprep.subr.bf16.mxu0 %v3105
    %4061 = vmatpush1.bf16.msra.mxu0 %v3104
    %4062 = vmatprep.subr.bf16.mxu0 %v3109
    %4063 = vmatpush1.bf16.msra.mxu0 %v3108
    %4064 = vmatprep.subr.bf16.mxu0 %v3113
    %4065 = vmatpush1.bf16.msra.mxu0 %v3112
    %4066 = vmatprep.mubr.bf16.mxu0 %v843
    %4067 = vmatmul.mubr.bf16.gmra.mrb[0].mxu0 %v842
    %v4068 = vpop.f32.mrb[0].mxu0
    %v4069 = vadd.f32 %v4026, %v4068
    %v4070 = vpop.f32.mrb[0].mxu0
    %v4071 = vadd.f32 %v4028, %v4070
    %v4072 = vpop.f32.mrb[0].mxu0
    %v4073 = vadd.f32 %v4030, %v4072
    %v4074 = vpop.f32.mrb[0].mxu0
    %v4075 = vadd.f32 %v4032, %v4074
    %4076 = vdwg.mxu0
    %4077 = vmatprep.subr.bf16.mxu0 %v3117
    %4078 = vmatpush1.bf16.msra.mxu0 %v3116
    %4079 = vmatprep.subr.bf16.mxu0 %v3121
    %4080 = vmatpush1.bf16.msra.mxu0 %v3120
    %4081 = vmatprep.subr.bf16.mxu0 %v3125
    %4082 = vmatpush1.bf16.msra.mxu0 %v3124
    %4083 = vmatprep.subr.bf16.mxu0 %v3129
    %4084 = vmatpush1.bf16.msra.mxu0 %v3128
    %4085 = vmatprep.subr.bf16.mxu0 %v3133
    %4086 = vmatpush1.bf16.msra.mxu0 %v3132
    %4087 = vmatprep.subr.bf16.mxu0 %v3137
    %4088 = vmatpush1.bf16.msra.mxu0 %v3136
    %4089 = vmatprep.subr.bf16.mxu0 %v3141
    %4090 = vmatpush1.bf16.msra.mxu0 %v3140
    %4091 = vmatprep.subr.bf16.mxu0 %v3145
    %4092 = vmatpush1.bf16.msra.mxu0 %v3144
    %4093 = vmatprep.subr.bf16.mxu0 %v3149
    %4094 = vmatpush1.bf16.msra.mxu0 %v3148
    %4095 = vmatprep.subr.bf16.mxu0 %v3153
    %4096 = vmatpush1.bf16.msra.mxu0 %v3152
    %4097 = vmatprep.subr.bf16.mxu0 %v3157
    %4098 = vmatpush1.bf16.msra.mxu0 %v3156
    %4099 = vmatprep.subr.bf16.mxu0 %v3161
    %4100 = vmatpush1.bf16.msra.mxu0 %v3160
    %4101 = vmatprep.subr.bf16.mxu0 %v3165
    %4102 = vmatpush1.bf16.msra.mxu0 %v3164
    %4103 = vmatprep.subr.bf16.mxu0 %v3169
    %4104 = vmatpush1.bf16.msra.mxu0 %v3168
    %4105 = vmatprep.subr.bf16.mxu0 %v3173
    %4106 = vmatpush1.bf16.msra.mxu0 %v3172
    %4107 = vmatprep.subr.bf16.mxu0 %v3177
    %4108 = vmatpush1.bf16.msra.mxu0 %v3176
    %4109 = vmatprep.mubr.bf16.mxu0 %v845
    %4110 = vmatmul.mubr.bf16.gmra.mrb[0].mxu0 %v844
    %v4111 = vpop.f32.mrb[0].mxu0
    %v4112 = vadd.f32 %v4069, %v4111
    %v4113 = vpop.f32.mrb[0].mxu0
    %v4114 = vadd.f32 %v4071, %v4113
    %v4115 = vpop.f32.mrb[0].mxu0
    %v4116 = vadd.f32 %v4073, %v4115
    %v4117 = vpop.f32.mrb[0].mxu0
    %v4118 = vadd.f32 %v4075, %v4117
    %4119 = vdwg.mxu0
    %4120 = vmatprep.subr.bf16.mxu0 %v3181
    %4121 = vmatpush1.bf16.msra.mxu0 %v3180
    %4122 = vmatprep.subr.bf16.mxu0 %v3185
    %4123 = vmatpush1.bf16.msra.mxu0 %v3184
    %4124 = vmatprep.subr.bf16.mxu0 %v3189
    %4125 = vmatpush1.bf16.msra.mxu0 %v3188
    %4126 = vmatprep.subr.bf16.mxu0 %v3193
    %4127 = vmatpush1.bf16.msra.mxu0 %v3192
    %4128 = vmatprep.subr.bf16.mxu0 %v3197
    %4129 = vmatpush1.bf16.msra.mxu0 %v3196
    %4130 = vmatprep.subr.bf16.mxu0 %v3201
    %4131 = vmatpush1.bf16.msra.mxu0 %v3200
    %4132 = vmatprep.subr.bf16.mxu0 %v3205
    %4133 = vmatpush1.bf16.msra.mxu0 %v3204
    %4134 = vmatprep.subr.bf16.mxu0 %v3209
    %4135 = vmatpush1.bf16.msra.mxu0 %v3208
    %4136 = vmatprep.subr.bf16.mxu0 %v3213
    %4137 = vmatpush1.bf16.msra.mxu0 %v3212
    %4138 = vmatprep.subr.bf16.mxu0 %v3217
    %4139 = vmatpush1.bf16.msra.mxu0 %v3216
    %4140 = vmatprep.subr.bf16.mxu0 %v3221
    %4141 = vmatpush1.bf16.msra.mxu0 %v3220
    %4142 = vmatprep.subr.bf16.mxu0 %v3225
    %4143 = vmatpush1.bf16.msra.mxu0 %v3224
    %4144 = vmatprep.subr.bf16.mxu0 %v3229
    %4145 = vmatpush1.bf16.msra.mxu0 %v3228
    %4146 = vmatprep.subr.bf16.mxu0 %v3233
    %4147 = vmatpush1.bf16.msra.mxu0 %v3232
    %4148 = vmatprep.subr.bf16.mxu0 %v3237
    %4149 = vmatpush1.bf16.msra.mxu0 %v3236
    %4150 = vmatprep.subr.bf16.mxu0 %v3241
    %4151 = vmatpush1.bf16.msra.mxu0 %v3240
    %4152 = vmatprep.mubr.bf16.mxu0 %v847
    %4153 = vmatmul.mubr.bf16.gmra.mrb[0].mxu0 %v846
    %v4154 = vpop.f32.mrb[0].mxu0
    %v4155 = vadd.f32 %v4112, %v4154
    %v4156 = vpop.f32.mrb[0].mxu0
    %v4157 = vadd.f32 %v4114, %v4156
    %v4158 = vpop.f32.mrb[0].mxu0
    %v4159 = vadd.f32 %v4116, %v4158
    %v4160 = vpop.f32.mrb[0].mxu0
    %v4161 = vadd.f32 %v4118, %v4160
    %4162 = vdwg.mxu0
    %4163 = vmatprep.subr.bf16.mxu0 %v3245
    %4164 = vmatpush1.bf16.msra.mxu0 %v3244
    %4165 = vmatprep.subr.bf16.mxu0 %v3249
    %4166 = vmatpush1.bf16.msra.mxu0 %v3248
    %4167 = vmatprep.subr.bf16.mxu0 %v3253
    %4168 = vmatpush1.bf16.msra.mxu0 %v3252
    %4169 = vmatprep.subr.bf16.mxu0 %v3257
    %4170 = vmatpush1.bf16.msra.mxu0 %v3256
    %4171 = vmatprep.subr.bf16.mxu0 %v3261
    %4172 = vmatpush1.bf16.msra.mxu0 %v3260
    %4173 = vmatprep.subr.bf16.mxu0 %v3265
    %4174 = vmatpush1.bf16.msra.mxu0 %v3264
    %4175 = vmatprep.subr.bf16.mxu0 %v3269
    %4176 = vmatpush1.bf16.msra.mxu0 %v3268
    %4177 = vmatprep.subr.bf16.mxu0 %v3273
    %4178 = vmatpush1.bf16.msra.mxu0 %v3272
    %4179 = vmatprep.subr.bf16.mxu0 %v3277
    %4180 = vmatpush1.bf16.msra.mxu0 %v3276
    %4181 = vmatprep.subr.bf16.mxu0 %v3281
    %4182 = vmatpush1.bf16.msra.mxu0 %v3280
    %4183 = vmatprep.subr.bf16.mxu0 %v3285
    %4184 = vmatpush1.bf16.msra.mxu0 %v3284
    %4185 = vmatprep.subr.bf16.mxu0 %v3289
    %4186 = vmatpush1.bf16.msra.mxu0 %v3288
    %4187 = vmatprep.subr.bf16.mxu0 %v3293
    %4188 = vmatpush1.bf16.msra.mxu0 %v3292
    %4189 = vmatprep.subr.bf16.mxu0 %v3297
    %4190 = vmatpush1.bf16.msra.mxu0 %v3296
    %4191 = vmatprep.subr.bf16.mxu0 %v3301
    %4192 = vmatpush1.bf16.msra.mxu0 %v3300
    %4193 = vmatprep.subr.bf16.mxu0 %v3305
    %4194 = vmatpush1.bf16.msra.mxu0 %v3304
    %4195 = vmatprep.mubr.bf16.mxu0 %v849
    %4196 = vmatmul.mubr.bf16.gmra.mrb[0].mxu0 %v848
    %v4197 = vpop.f32.mrb[0].mxu0
    %v4198 = vadd.f32 %v4155, %v4197
    %v4199 = vpop.f32.mrb[0].mxu0
    %v4200 = vadd.f32 %v4157, %v4199
    %v4201 = vpop.f32.mrb[0].mxu0
    %v4202 = vadd.f32 %v4159, %v4201
    %v4203 = vpop.f32.mrb[0].mxu0
    %v4204 = vadd.f32 %v4161, %v4203
    %4205 = vdwg.mxu0
    %4206 = vmatprep.subr.bf16.mxu0 %v3309
    %4207 = vmatpush1.bf16.msra.mxu0 %v3308
    %4208 = vmatprep.subr.bf16.mxu0 %v3313
    %4209 = vmatpush1.bf16.msra.mxu0 %v3312
    %4210 = vmatprep.subr.bf16.mxu0 %v3317
    %4211 = vmatpush1.bf16.msra.mxu0 %v3316
    %4212 = vmatprep.subr.bf16.mxu0 %v3321
    %4213 = vmatpush1.bf16.msra.mxu0 %v3320
    %4214 = vmatprep.subr.bf16.mxu0 %v3325
    %4215 = vmatpush1.bf16.msra.mxu0 %v3324
    %4216 = vmatprep.subr.bf16.mxu0 %v3329
    %4217 = vmatpush1.bf16.msra.mxu0 %v3328
    %4218 = vmatprep.subr.bf16.mxu0 %v3333
    %4219 = vmatpush1.bf16.msra.mxu0 %v3332
    %4220 = vmatprep.subr.bf16.mxu0 %v3337
    %4221 = vmatpush1.bf16.msra.mxu0 %v3336
    %4222 = vmatprep.subr.bf16.mxu0 %v3341
    %4223 = vmatpush1.bf16.msra.mxu0 %v3340
    %4224 = vmatprep.subr.bf16.mxu0 %v3345
    %4225 = vmatpush1.bf16.msra.mxu0 %v3344
    %4226 = vmatprep.subr.bf16.mxu0 %v3349
    %4227 = vmatpush1.bf16.msra.mxu0 %v3348
    %4228 = vmatprep.subr.bf16.mxu0 %v3353
    %4229 = vmatpush1.bf16.msra.mxu0 %v3352
    %4230 = vmatprep.subr.bf16.mxu0 %v3357
    %4231 = vmatpush1.bf16.msra.mxu0 %v3356
    %4232 = vmatprep.subr.bf16.mxu0 %v3361
    %4233 = vmatpush1.bf16.msra.mxu0 %v3360
    %4234 = vmatprep.subr.bf16.mxu0 %v3365
    %4235 = vmatpush1.bf16.msra.mxu0 %v3364
    %4236 = vmatprep.subr.bf16.mxu0 %v3369
    %4237 = vmatpush1.bf16.msra.mxu0 %v3368
    %4238 = vmatprep.mubr.bf16.mxu0 %v851
    %4239 = vmatmul.mubr.bf16.gmra.mrb[0].mxu0 %v850
    %v4240 = vpop.f32.mrb[0].mxu0
    %v4241 = vadd.f32 %v4198, %v4240
    %v4242 = vpop.f32.mrb[0].mxu0
    %v4243 = vadd.f32 %v4200, %v4242
    %v4244 = vpop.f32.mrb[0].mxu0
    %v4245 = vadd.f32 %v4202, %v4244
    %v4246 = vpop.f32.mrb[0].mxu0
    %v4247 = vadd.f32 %v4204, %v4246
    %4248 = vdwg.mxu0
    %4249 = vmatprep.subr.bf16.mxu0 %v3373
    %4250 = vmatpush1.bf16.msra.mxu0 %v3372
    %4251 = vmatprep.subr.bf16.mxu0 %v3377
    %4252 = vmatpush1.bf16.msra.mxu0 %v3376
    %4253 = vmatprep.subr.bf16.mxu0 %v3381
    %4254 = vmatpush1.bf16.msra.mxu0 %v3380
    %4255 = vmatprep.subr.bf16.mxu0 %v3385
    %4256 = vmatpush1.bf16.msra.mxu0 %v3384
    %4257 = vmatprep.subr.bf16.mxu0 %v3389
    %4258 = vmatpush1.bf16.msra.mxu0 %v3388
    %4259 = vmatprep.subr.bf16.mxu0 %v3393
    %4260 = vmatpush1.bf16.msra.mxu0 %v3392
    %4261 = vmatprep.subr.bf16.mxu0 %v3397
    %4262 = vmatpush1.bf16.msra.mxu0 %v3396
    %4263 = vmatprep.subr.bf16.mxu0 %v3401
    %4264 = vmatpush1.bf16.msra.mxu0 %v3400
    %4265 = vmatprep.subr.bf16.mxu0 %v3405
    %4266 = vmatpush1.bf16.msra.mxu0 %v3404
    %4267 = vmatprep.subr.bf16.mxu0 %v3409
    %4268 = vmatpush1.bf16.msra.mxu0 %v3408
    %4269 = vmatprep.subr.bf16.mxu0 %v3413
    %4270 = vmatpush1.bf16.msra.mxu0 %v3412
    %4271 = vmatprep.subr.bf16.mxu0 %v3417
    %4272 = vmatpush1.bf16.msra.mxu0 %v3416
    %4273 = vmatprep.subr.bf16.mxu0 %v3421
    %4274 = vmatpush1.bf16.msra.mxu0 %v3420
    %4275 = vmatprep.subr.bf16.mxu0 %v3425
    %4276 = vmatpush1.bf16.msra.mxu0 %v3424
    %4277 = vmatprep.subr.bf16.mxu0 %v3429
    %4278 = vmatpush1.bf16.msra.mxu0 %v3428
    %4279 = vmatprep.subr.bf16.mxu0 %v3433
    %4280 = vmatpush1.bf16.msra.mxu0 %v3432
    %4281 = vmatprep.mubr.bf16.mxu0 %v853
    %4282 = vmatmul.mubr.bf16.gmra.mrb[0].mxu0 %v852
    %v4283 = vpop.f32.mrb[0].mxu0
    %v4284 = vadd.f32 %v4241, %v4283
    %v4285 = vpop.f32.mrb[0].mxu0
    %v4286 = vadd.f32 %v4243, %v4285
    %v4287 = vpop.f32.mrb[0].mxu0
    %v4288 = vadd.f32 %v4245, %v4287
    %v4289 = vpop.f32.mrb[0].mxu0
    %v4290 = vadd.f32 %v4247, %v4289
    %4291 = vdwg.mxu0
    %4292 = vmatprep.subr.bf16.mxu0 %v2927
    %4293 = vmatpush1.bf16.msra.mxu0 %v2926
    %4294 = vmatprep.subr.bf16.mxu0 %v2931
    %4295 = vmatpush1.bf16.msra.mxu0 %v2930
    %4296 = vmatprep.subr.bf16.mxu0 %v2935
    %4297 = vmatpush1.bf16.msra.mxu0 %v2934
    %4298 = vmatprep.subr.bf16.mxu0 %v2939
    %4299 = vmatpush1.bf16.msra.mxu0 %v2938
    %4300 = vmatprep.subr.bf16.mxu0 %v2943
    %4301 = vmatpush1.bf16.msra.mxu0 %v2942
    %4302 = vmatprep.subr.bf16.mxu0 %v2947
    %4303 = vmatpush1.bf16.msra.mxu0 %v2946
    %4304 = vmatprep.subr.bf16.mxu0 %v2951
    %4305 = vmatpush1.bf16.msra.mxu0 %v2950
    %4306 = vmatprep.subr.bf16.mxu0 %v2955
    %4307 = vmatpush1.bf16.msra.mxu0 %v2954
    %4308 = vmatprep.subr.bf16.mxu0 %v2959
    %4309 = vmatpush1.bf16.msra.mxu0 %v2958
    %4310 = vmatprep.subr.bf16.mxu0 %v2963
    %4311 = vmatpush1.bf16.msra.mxu0 %v2962
    %4312 = vmatprep.subr.bf16.mxu0 %v2967
    %4313 = vmatpush1.bf16.msra.mxu0 %v2966
    %4314 = vmatprep.subr.bf16.mxu0 %v2971
    %4315 = vmatpush1.bf16.msra.mxu0 %v2970
    %4316 = vmatprep.subr.bf16.mxu0 %v2975
    %4317 = vmatpush1.bf16.msra.mxu0 %v2974
    %4318 = vmatprep.subr.bf16.mxu0 %v2979
    %4319 = vmatpush1.bf16.msra.mxu0 %v2978
    %4320 = vmatprep.subr.bf16.mxu0 %v2983
    %4321 = vmatpush1.bf16.msra.mxu0 %v2982
    %4322 = vmatprep.subr.bf16.mxu0 %v2987
    %4323 = vmatpush1.bf16.msra.mxu0 %v2986
    %4324 = vmatprep.mubr.bf16.mxu0 %v839
    %4325 = vmatmul.mubr.bf16.gmra.mrb[0].mxu0 %v838
    %v4326 = vpop.f32.mrb[0].mxu0
    %v4327 = vadd.f32 %v1379, %v4326
    %v4328 = vpop.f32.mrb[0].mxu0
    %v4329 = vadd.f32 %v1383, %v4328
    %v4330 = vpop.f32.mrb[0].mxu0
    %v4331 = vadd.f32 %v1379, %v4330
    %v4332 = vpop.f32.mrb[0].mxu0
    %v4333 = vadd.f32 %v1383, %v4332
    %4334 = vdwg.mxu0
    %4335 = vmatprep.subr.bf16.mxu0 %v2991
    %4336 = vmatpush1.bf16.msra.mxu0 %v2990
    %4337 = vmatprep.subr.bf16.mxu0 %v2995
    %4338 = vmatpush1.bf16.msra.mxu0 %v2994
    %4339 = vmatprep.subr.bf16.mxu0 %v2999
    %4340 = vmatpush1.bf16.msra.mxu0 %v2998
    %4341 = vmatprep.subr.bf16.mxu0 %v3003
    %4342 = vmatpush1.bf16.msra.mxu0 %v3002
    %4343 = vmatprep.subr.bf16.mxu0 %v3007
    %4344 = vmatpush1.bf16.msra.mxu0 %v3006
    %4345 = vmatprep.subr.bf16.mxu0 %v3011
    %4346 = vmatpush1.bf16.msra.mxu0 %v3010
    %4347 = vmatprep.subr.bf16.mxu0 %v3015
    %4348 = vmatpush1.bf16.msra.mxu0 %v3014
    %4349 = vmatprep.subr.bf16.mxu0 %v3019
    %4350 = vmatpush1.bf16.msra.mxu0 %v3018
    %4351 = vmatprep.subr.bf16.mxu0 %v3023
    %4352 = vmatpush1.bf16.msra.mxu0 %v3022
    %4353 = vmatprep.subr.bf16.mxu0 %v3027
    %4354 = vmatpush1.bf16.msra.mxu0 %v3026
    %4355 = vmatprep.subr.bf16.mxu0 %v3031
    %4356 = vmatpush1.bf16.msra.mxu0 %v3030
    %4357 = vmatprep.subr.bf16.mxu0 %v3035
    %4358 = vmatpush1.bf16.msra.mxu0 %v3034
    %4359 = vmatprep.subr.bf16.mxu0 %v3039
    %4360 = vmatpush1.bf16.msra.mxu0 %v3038
    %4361 = vmatprep.subr.bf16.mxu0 %v3043
    %4362 = vmatpush1.bf16.msra.mxu0 %v3042
    %4363 = vmatprep.subr.bf16.mxu0 %v3047
    %4364 = vmatpush1.bf16.msra.mxu0 %v3046
    %4365 = vmatprep.subr.bf16.mxu0 %v3051
    %4366 = vmatpush1.bf16.msra.mxu0 %v3050
    %4367 = vmatprep.mubr.bf16.mxu0 %v841
    %4368 = vmatmul.mubr.bf16.gmra.mrb[0].mxu0 %v840
    %v4369 = vpop.f32.mrb[0].mxu0
    %v4370 = vadd.f32 %v4327, %v4369
    %v4371 = vpop.f32.mrb[0].mxu0
    %v4372 = vadd.f32 %v4329, %v4371
    %v4373 = vpop.f32.mrb[0].mxu0
    %v4374 = vadd.f32 %v4331, %v4373
    %v4375 = vpop.f32.mrb[0].mxu0
    %v4376 = vadd.f32 %v4333, %v4375
    %4377 = vdwg.mxu0
    %4378 = vmatprep.subr.bf16.mxu0 %v3055
    %4379 = vmatpush1.bf16.msra.mxu0 %v3054
    %4380 = vmatprep.subr.bf16.mxu0 %v3059
    %4381 = vmatpush1.bf16.msra.mxu0 %v3058
    %4382 = vmatprep.subr.bf16.mxu0 %v3063
    %4383 = vmatpush1.bf16.msra.mxu0 %v3062
    %4384 = vmatprep.subr.bf16.mxu0 %v3067
    %4385 = vmatpush1.bf16.msra.mxu0 %v3066
    %4386 = vmatprep.subr.bf16.mxu0 %v3071
    %4387 = vmatpush1.bf16.msra.mxu0 %v3070
    %4388 = vmatprep.subr.bf16.mxu0 %v3075
    %4389 = vmatpush1.bf16.msra.mxu0 %v3074
    %4390 = vmatprep.subr.bf16.mxu0 %v3079
    %4391 = vmatpush1.bf16.msra.mxu0 %v3078
    %4392 = vmatprep.subr.bf16.mxu0 %v3083
    %4393 = vmatpush1.bf16.msra.mxu0 %v3082
    %4394 = vmatprep.subr.bf16.mxu0 %v3087
    %4395 = vmatpush1.bf16.msra.mxu0 %v3086
    %4396 = vmatprep.subr.bf16.mxu0 %v3091
    %4397 = vmatpush1.bf16.msra.mxu0 %v3090
    %4398 = vmatprep.subr.bf16.mxu0 %v3095
    %4399 = vmatpush1.bf16.msra.mxu0 %v3094
    %4400 = vmatprep.subr.bf16.mxu0 %v3099
    %4401 = vmatpush1.bf16.msra.mxu0 %v3098
    %4402 = vmatprep.subr.bf16.mxu0 %v3103
    %4403 = vmatpush1.bf16.msra.mxu0 %v3102
    %4404 = vmatprep.subr.bf16.mxu0 %v3107
    %4405 = vmatpush1.bf16.msra.mxu0 %v3106
    %4406 = vmatprep.subr.bf16.mxu0 %v3111
    %4407 = vmatpush1.bf16.msra.mxu0 %v3110
    %4408 = vmatprep.subr.bf16.mxu0 %v3115
    %4409 = vmatpush1.bf16.msra.mxu0 %v3114
    %4410 = vmatprep.mubr.bf16.mxu0 %v843
    %4411 = vmatmul.mubr.bf16.gmra.mrb[0].mxu0 %v842
    %v4412 = vpop.f32.mrb[0].mxu0
    %v4413 = vadd.f32 %v4370, %v4412
    %v4414 = vpop.f32.mrb[0].mxu0
    %v4415 = vadd.f32 %v4372, %v4414
    %v4416 = vpop.f32.mrb[0].mxu0
    %v4417 = vadd.f32 %v4374, %v4416
    %v4418 = vpop.f32.mrb[0].mxu0
    %v4419 = vadd.f32 %v4376, %v4418
    %4420 = vdwg.mxu0
    %4421 = vmatprep.subr.bf16.mxu0 %v3119
    %4422 = vmatpush1.bf16.msra.mxu0 %v3118
    %4423 = vmatprep.subr.bf16.mxu0 %v3123
    %4424 = vmatpush1.bf16.msra.mxu0 %v3122
    %4425 = vmatprep.subr.bf16.mxu0 %v3127
    %4426 = vmatpush1.bf16.msra.mxu0 %v3126
    %4427 = vmatprep.subr.bf16.mxu0 %v3131
    %4428 = vmatpush1.bf16.msra.mxu0 %v3130
    %4429 = vmatprep.subr.bf16.mxu0 %v3135
    %4430 = vmatpush1.bf16.msra.mxu0 %v3134
    %4431 = vmatprep.subr.bf16.mxu0 %v3139
    %4432 = vmatpush1.bf16.msra.mxu0 %v3138
    %4433 = vmatprep.subr.bf16.mxu0 %v3143
    %4434 = vmatpush1.bf16.msra.mxu0 %v3142
    %4435 = vmatprep.subr.bf16.mxu0 %v3147
    %4436 = vmatpush1.bf16.msra.mxu0 %v3146
    %4437 = vmatprep.subr.bf16.mxu0 %v3151
    %4438 = vmatpush1.bf16.msra.mxu0 %v3150
    %4439 = vmatprep.subr.bf16.mxu0 %v3155
    %4440 = vmatpush1.bf16.msra.mxu0 %v3154
    %4441 = vmatprep.subr.bf16.mxu0 %v3159
    %4442 = vmatpush1.bf16.msra.mxu0 %v3158
    %4443 = vmatprep.subr.bf16.mxu0 %v3163
    %4444 = vmatpush1.bf16.msra.mxu0 %v3162
    %4445 = vmatprep.subr.bf16.mxu0 %v3167
    %4446 = vmatpush1.bf16.msra.mxu0 %v3166
    %4447 = vmatprep.subr.bf16.mxu0 %v3171
    %4448 = vmatpush1.bf16.msra.mxu0 %v3170
    %4449 = vmatprep.subr.bf16.mxu0 %v3175
    %4450 = vmatpush1.bf16.msra.mxu0 %v3174
    %4451 = vmatprep.subr.bf16.mxu0 %v3179
    %4452 = vmatpush1.bf16.msra.mxu0 %v3178
    %4453 = vmatprep.mubr.bf16.mxu0 %v845
    %4454 = vmatmul.mubr.bf16.gmra.mrb[0].mxu0 %v844
    %v4455 = vpop.f32.mrb[0].mxu0
    %v4456 = vadd.f32 %v4413, %v4455
    %v4457 = vpop.f32.mrb[0].mxu0
    %v4458 = vadd.f32 %v4415, %v4457
    %v4459 = vpop.f32.mrb[0].mxu0
    %v4460 = vadd.f32 %v4417, %v4459
    %v4461 = vpop.f32.mrb[0].mxu0
    %v4462 = vadd.f32 %v4419, %v4461
    %4463 = vdwg.mxu0
    %4464 = vmatprep.subr.bf16.mxu0 %v3183
    %4465 = vmatpush1.bf16.msra.mxu0 %v3182
    %4466 = vmatprep.subr.bf16.mxu0 %v3187
    %4467 = vmatpush1.bf16.msra.mxu0 %v3186
    %4468 = vmatprep.subr.bf16.mxu0 %v3191
    %4469 = vmatpush1.bf16.msra.mxu0 %v3190
    %4470 = vmatprep.subr.bf16.mxu0 %v3195
    %4471 = vmatpush1.bf16.msra.mxu0 %v3194
    %4472 = vmatprep.subr.bf16.mxu0 %v3199
    %4473 = vmatpush1.bf16.msra.mxu0 %v3198
    %4474 = vmatprep.subr.bf16.mxu0 %v3203
    %4475 = vmatpush1.bf16.msra.mxu0 %v3202
    %4476 = vmatprep.subr.bf16.mxu0 %v3207
    %4477 = vmatpush1.bf16.msra.mxu0 %v3206
    %4478 = vmatprep.subr.bf16.mxu0 %v3211
    %4479 = vmatpush1.bf16.msra.mxu0 %v3210
    %4480 = vmatprep.subr.bf16.mxu0 %v3215
    %4481 = vmatpush1.bf16.msra.mxu0 %v3214
    %4482 = vmatprep.subr.bf16.mxu0 %v3219
    %4483 = vmatpush1.bf16.msra.mxu0 %v3218
    %4484 = vmatprep.subr.bf16.mxu0 %v3223
    %4485 = vmatpush1.bf16.msra.mxu0 %v3222
    %4486 = vmatprep.subr.bf16.mxu0 %v3227
    %4487 = vmatpush1.bf16.msra.mxu0 %v3226
    %4488 = vmatprep.subr.bf16.mxu0 %v3231
    %4489 = vmatpush1.bf16.msra.mxu0 %v3230
    %4490 = vmatprep.subr.bf16.mxu0 %v3235
    %4491 = vmatpush1.bf16.msra.mxu0 %v3234
    %4492 = vmatprep.subr.bf16.mxu0 %v3239
    %4493 = vmatpush1.bf16.msra.mxu0 %v3238
    %4494 = vmatprep.subr.bf16.mxu0 %v3243
    %4495 = vmatpush1.bf16.msra.mxu0 %v3242
    %4496 = vmatprep.mubr.bf16.mxu0 %v847
    %4497 = vmatmul.mubr.bf16.gmra.mrb[0].mxu0 %v846
    %v4498 = vpop.f32.mrb[0].mxu0
    %v4499 = vadd.f32 %v4456, %v4498
    %v4500 = vpop.f32.mrb[0].mxu0
    %v4501 = vadd.f32 %v4458, %v4500
    %v4502 = vpop.f32.mrb[0].mxu0
    %v4503 = vadd.f32 %v4460, %v4502
    %v4504 = vpop.f32.mrb[0].mxu0
    %v4505 = vadd.f32 %v4462, %v4504
    %4506 = vdwg.mxu0
    %4507 = vmatprep.subr.bf16.mxu0 %v3247
    %4508 = vmatpush1.bf16.msra.mxu0 %v3246
    %4509 = vmatprep.subr.bf16.mxu0 %v3251
    %4510 = vmatpush1.bf16.msra.mxu0 %v3250
    %4511 = vmatprep.subr.bf16.mxu0 %v3255
    %4512 = vmatpush1.bf16.msra.mxu0 %v3254
    %4513 = vmatprep.subr.bf16.mxu0 %v3259
    %4514 = vmatpush1.bf16.msra.mxu0 %v3258
    %4515 = vmatprep.subr.bf16.mxu0 %v3263
    %4516 = vmatpush1.bf16.msra.mxu0 %v3262
    %4517 = vmatprep.subr.bf16.mxu0 %v3267
    %4518 = vmatpush1.bf16.msra.mxu0 %v3266
    %4519 = vmatprep.subr.bf16.mxu0 %v3271
    %4520 = vmatpush1.bf16.msra.mxu0 %v3270
    %4521 = vmatprep.subr.bf16.mxu0 %v3275
    %4522 = vmatpush1.bf16.msra.mxu0 %v3274
    %4523 = vmatprep.subr.bf16.mxu0 %v3279
    %4524 = vmatpush1.bf16.msra.mxu0 %v3278
    %4525 = vmatprep.subr.bf16.mxu0 %v3283
    %4526 = vmatpush1.bf16.msra.mxu0 %v3282
    %4527 = vmatprep.subr.bf16.mxu0 %v3287
    %4528 = vmatpush1.bf16.msra.mxu0 %v3286
    %4529 = vmatprep.subr.bf16.mxu0 %v3291
    %4530 = vmatpush1.bf16.msra.mxu0 %v3290
    %4531 = vmatprep.subr.bf16.mxu0 %v3295
    %4532 = vmatpush1.bf16.msra.mxu0 %v3294
    %4533 = vmatprep.subr.bf16.mxu0 %v3299
    %4534 = vmatpush1.bf16.msra.mxu0 %v3298
    %4535 = vmatprep.subr.bf16.mxu0 %v3303
    %4536 = vmatpush1.bf16.msra.mxu0 %v3302
    %4537 = vmatprep.subr.bf16.mxu0 %v3307
    %4538 = vmatpush1.bf16.msra.mxu0 %v3306
    %4539 = vmatprep.mubr.bf16.mxu0 %v849
    %4540 = vmatmul.mubr.bf16.gmra.mrb[0].mxu0 %v848
    %v4541 = vpop.f32.mrb[0].mxu0
    %v4542 = vadd.f32 %v4499, %v4541
    %v4543 = vpop.f32.mrb[0].mxu0
    %v4544 = vadd.f32 %v4501, %v4543
    %v4545 = vpop.f32.mrb[0].mxu0
    %v4546 = vadd.f32 %v4503, %v4545
    %v4547 = vpop.f32.mrb[0].mxu0
    %v4548 = vadd.f32 %v4505, %v4547
    %4549 = vdwg.mxu0
    %4550 = vmatprep.subr.bf16.mxu0 %v3311
    %4551 = vmatpush1.bf16.msra.mxu0 %v3310
    %4552 = vmatprep.subr.bf16.mxu0 %v3315
    %4553 = vmatpush1.bf16.msra.mxu0 %v3314
    %4554 = vmatprep.subr.bf16.mxu0 %v3319
    %4555 = vmatpush1.bf16.msra.mxu0 %v3318
    %4556 = vmatprep.subr.bf16.mxu0 %v3323
    %4557 = vmatpush1.bf16.msra.mxu0 %v3322
    %4558 = vmatprep.subr.bf16.mxu0 %v3327
    %4559 = vmatpush1.bf16.msra.mxu0 %v3326
    %4560 = vmatprep.subr.bf16.mxu0 %v3331
    %4561 = vmatpush1.bf16.msra.mxu0 %v3330
    %4562 = vmatprep.subr.bf16.mxu0 %v3335
    %4563 = vmatpush1.bf16.msra.mxu0 %v3334
    %4564 = vmatprep.subr.bf16.mxu0 %v3339
    %4565 = vmatpush1.bf16.msra.mxu0 %v3338
    %4566 = vmatprep.subr.bf16.mxu0 %v3343
    %4567 = vmatpush1.bf16.msra.mxu0 %v3342
    %4568 = vmatprep.subr.bf16.mxu0 %v3347
    %4569 = vmatpush1.bf16.msra.mxu0 %v3346
    %4570 = vmatprep.subr.bf16.mxu0 %v3351
    %4571 = vmatpush1.bf16.msra.mxu0 %v3350
    %4572 = vmatprep.subr.bf16.mxu0 %v3355
    %4573 = vmatpush1.bf16.msra.mxu0 %v3354
    %4574 = vmatprep.subr.bf16.mxu0 %v3359
    %4575 = vmatpush1.bf16.msra.mxu0 %v3358
    %4576 = vmatprep.subr.bf16.mxu0 %v3363
    %4577 = vmatpush1.bf16.msra.mxu0 %v3362
    %4578 = vmatprep.subr.bf16.mxu0 %v3367
    %4579 = vmatpush1.bf16.msra.mxu0 %v3366
    %4580 = vmatprep.subr.bf16.mxu0 %v3371
    %4581 = vmatpush1.bf16.msra.mxu0 %v3370
    %4582 = vmatprep.mubr.bf16.mxu0 %v851
    %4583 = vmatmul.mubr.bf16.gmra.mrb[0].mxu0 %v850
    %v4584 = vpop.f32.mrb[0].mxu0
    %v4585 = vadd.f32 %v4542, %v4584
    %v4586 = vpop.f32.mrb[0].mxu0
    %v4587 = vadd.f32 %v4544, %v4586
    %v4588 = vpop.f32.mrb[0].mxu0
    %v4589 = vadd.f32 %v4546, %v4588
    %v4590 = vpop.f32.mrb[0].mxu0
    %v4591 = vadd.f32 %v4548, %v4590
    %4592 = vdwg.mxu0
    %4593 = vmatprep.subr.bf16.mxu0 %v3375
    %4594 = vmatpush1.bf16.msra.mxu0 %v3374
    %4595 = vmatprep.subr.bf16.mxu0 %v3379
    %4596 = vmatpush1.bf16.msra.mxu0 %v3378
    %4597 = vmatprep.subr.bf16.mxu0 %v3383
    %4598 = vmatpush1.bf16.msra.mxu0 %v3382
    %4599 = vmatprep.subr.bf16.mxu0 %v3387
    %4600 = vmatpush1.bf16.msra.mxu0 %v3386
    %4601 = vmatprep.subr.bf16.mxu0 %v3391
    %4602 = vmatpush1.bf16.msra.mxu0 %v3390
    %4603 = vmatprep.subr.bf16.mxu0 %v3395
    %4604 = vmatpush1.bf16.msra.mxu0 %v3394
    %4605 = vmatprep.subr.bf16.mxu0 %v3399
    %4606 = vmatpush1.bf16.msra.mxu0 %v3398
    %4607 = vmatprep.subr.bf16.mxu0 %v3403
    %4608 = vmatpush1.bf16.msra.mxu0 %v3402
    %4609 = vmatprep.subr.bf16.mxu0 %v3407
    %4610 = vmatpush1.bf16.msra.mxu0 %v3406
    %4611 = vmatprep.subr.bf16.mxu0 %v3411
    %4612 = vmatpush1.bf16.msra.mxu0 %v3410
    %4613 = vmatprep.subr.bf16.mxu0 %v3415
    %4614 = vmatpush1.bf16.msra.mxu0 %v3414
    %4615 = vmatprep.subr.bf16.mxu0 %v3419
    %4616 = vmatpush1.bf16.msra.mxu0 %v3418
    %4617 = vmatprep.subr.bf16.mxu0 %v3423
    %4618 = vmatpush1.bf16.msra.mxu0 %v3422
    %4619 = vmatprep.subr.bf16.mxu0 %v3427
    %4620 = vmatpush1.bf16.msra.mxu0 %v3426
    %4621 = vmatprep.subr.bf16.mxu0 %v3431
    %4622 = vmatpush1.bf16.msra.mxu0 %v3430
    %4623 = vmatprep.subr.bf16.mxu0 %v3435
    %4624 = vmatpush1.bf16.msra.mxu0 %v3434
    %4625 = vmatprep.mubr.bf16.mxu0 %v853
    %4626 = vmatmul.mubr.bf16.gmra.mrb[0].mxu0 %v852
    %v4627 = vpop.f32.mrb[0].mxu0
    %v4628 = vadd.f32 %v4585, %v4627
    %v4629 = vpop.f32.mrb[0].mxu0
    %v4630 = vadd.f32 %v4587, %v4629
    %v4631 = vpop.f32.mrb[0].mxu0
    %v4632 = vadd.f32 %v4589, %v4631
    %v4633 = vpop.f32.mrb[0].mxu0
    %v4634 = vadd.f32 %v4591, %v4633
    %4635 = vdwg.mxu0
    %v4636 = vmax.f32 %v4284, 0.0
    %v4637 = vmax.f32 %v4286, 0.0
    %v4638 = vmax.f32 %v4628, 0.0
    %v4639 = vmax.f32 %v4630, 0.0
    %v4640 = vmax.f32 %v4288, 0.0
    %v4641 = vmax.f32 %v4290, 0.0
    %v4642 = vmax.f32 %v4632, 0.0
    %v4643 = vmax.f32 %v4634, 0.0
    %v4644 = vpack.c.bf16 %v4640, %v4636
    %v4645 = vpack.c.bf16 %v4641, %v4637
    %v4646 = vpack.c.bf16 %v4642, %v4638
    %v4647 = vpack.c.bf16 %v4643, %v4639
    %v4648 = vld [vmem:[#allocation11] sm:$0xff]
    %v4649 = vld [vmem:[#allocation11 + $0x8] sm:$0xff]
    %v4650 = vld [vmem:[#allocation11 + $0x10] sm:$0xff]
    %v4651 = vld [vmem:[#allocation11 + $0x18] sm:$0xff]
    %v4652 = vld [vmem:[#allocation11 + $0x20] sm:$0xff]
    %v4653 = vld [vmem:[#allocation11 + $0x28] sm:$0xff]
    %v4654 = vld [vmem:[#allocation11 + $0x30] sm:$0xff]
    %v4655 = vld [vmem:[#allocation11 + $0x38] sm:$0xff]
    %v4656 = vld [vmem:[#allocation11 + $0x40] sm:$0xff]
    %v4657 = vld [vmem:[#allocation11 + $0x48] sm:$0xff]
    %v4658 = vld [vmem:[#allocation11 + $0x50] sm:$0xff]
    %v4659 = vld [vmem:[#allocation11 + $0x58] sm:$0xff]
    %v4660 = vld [vmem:[#allocation11 + $0x60] sm:$0xff]
    %v4661 = vld [vmem:[#allocation11 + $0x68] sm:$0xff]
    %v4662 = vld [vmem:[#allocation11 + $0x70] sm:$0xff]
    %v4663 = vld [vmem:[#allocation11 + $0x78] sm:$0xff]
    %v4664 = vld [vmem:[#allocation11 + $0x80] sm:$0xff]
    %v4665 = vld [vmem:[#allocation11 + $0x88] sm:$0xff]
    %v4666 = vld [vmem:[#allocation11 + $0x90] sm:$0xff]
    %v4667 = vld [vmem:[#allocation11 + $0x98] sm:$0xff]
    %v4668 = vld [vmem:[#allocation11 + $0xa0] sm:$0xff]
    %v4669 = vld [vmem:[#allocation11 + $0xa8] sm:$0xff]
    %v4670 = vld [vmem:[#allocation11 + $0xb0] sm:$0xff]
    %v4671 = vld [vmem:[#allocation11 + $0xb8] sm:$0xff]
    %v4672 = vld [vmem:[#allocation11 + $0xc0] sm:$0xff]
    %v4673 = vld [vmem:[#allocation11 + $0xc8] sm:$0xff]
    %v4674 = vld [vmem:[#allocation11 + $0xd0] sm:$0xff]
    %v4675 = vld [vmem:[#allocation11 + $0xd8] sm:$0xff]
    %v4676 = vld [vmem:[#allocation11 + $0xe0] sm:$0xff]
    %v4677 = vld [vmem:[#allocation11 + $0xe8] sm:$0xff]
    %v4678 = vld [vmem:[#allocation11 + $0xf0] sm:$0xff]
    %v4679 = vld [vmem:[#allocation11 + $0xf8] sm:$0xff]
    %v4680 = vld [vmem:[#allocation11 + $0x100] sm:$0xff]
    %v4681 = vld [vmem:[#allocation11 + $0x108] sm:$0xff]
    %v4682 = vld [vmem:[#allocation11 + $0x110] sm:$0xff]
    %v4683 = vld [vmem:[#allocation11 + $0x118] sm:$0xff]
    %v4684 = vld [vmem:[#allocation11 + $0x120] sm:$0xff]
    %v4685 = vld [vmem:[#allocation11 + $0x128] sm:$0xff]
    %v4686 = vld [vmem:[#allocation11 + $0x130] sm:$0xff]
    %v4687 = vld [vmem:[#allocation11 + $0x138] sm:$0xff]
    %v4688 = vld [vmem:[#allocation11 + $0x140] sm:$0xff]
    %v4689 = vld [vmem:[#allocation11 + $0x148] sm:$0xff]
    %v4690 = vld [vmem:[#allocation11 + $0x150] sm:$0xff]
    %v4691 = vld [vmem:[#allocation11 + $0x158] sm:$0xff]
    %v4692 = vld [vmem:[#allocation11 + $0x160] sm:$0xff]
    %v4693 = vld [vmem:[#allocation11 + $0x168] sm:$0xff]
    %v4694 = vld [vmem:[#allocation11 + $0x170] sm:$0xff]
    %v4695 = vld [vmem:[#allocation11 + $0x178] sm:$0xff]
    %v4696 = vld [vmem:[#allocation11 + $0x180] sm:$0xff]
    %v4697 = vld [vmem:[#allocation11 + $0x188] sm:$0xff]
    %v4698 = vld [vmem:[#allocation11 + $0x190] sm:$0xff]
    %v4699 = vld [vmem:[#allocation11 + $0x198] sm:$0xff]
    %v4700 = vld [vmem:[#allocation11 + $0x1a0] sm:$0xff]
    %v4701 = vld [vmem:[#allocation11 + $0x1a8] sm:$0xff]
    %v4702 = vld [vmem:[#allocation11 + $0x1b0] sm:$0xff]
    %v4703 = vld [vmem:[#allocation11 + $0x1b8] sm:$0xff]
    %v4704 = vld [vmem:[#allocation11 + $0x1c0] sm:$0xff]
    %v4705 = vld [vmem:[#allocation11 + $0x1c8] sm:$0xff]
    %v4706 = vld [vmem:[#allocation11 + $0x1d0] sm:$0xff]
    %v4707 = vld [vmem:[#allocation11 + $0x1d8] sm:$0xff]
    %v4708 = vld [vmem:[#allocation11 + $0x1e0] sm:$0xff]
    %v4709 = vld [vmem:[#allocation11 + $0x1e8] sm:$0xff]
    %v4710 = vld [vmem:[#allocation11 + $0x1f0] sm:$0xff]
    %v4711 = vld [vmem:[#allocation11 + $0x1f8] sm:$0xff]
    %v4712 = vld [vmem:[#allocation13] sm:$0x3]
    %v4714 = vlaneseq
    %v4715 = vshrl.u32 %v4714, 7
    %v4716 = vsub.s32 0, %v4715
    %v4717 = vrot.slane %v4712, %v4716
    %v4718 = vlaneseq
    %v4719 = vshrl.u32 %v4718, 7
    %v4720 = vsub.s32 1, %v4719
    %v4721 = vrot.slane %v4712, %v4720
    %v4788 = vunpack.c.l.b16 %v4648
    %v4789 = vunpack.c.h.b16 %v4648
    %v4790 = vunpack.c.l.b16 %v4649
    %v4791 = vunpack.c.h.b16 %v4649
    %v4792 = vunpack.c.l.b16 %v4650
    %v4793 = vunpack.c.h.b16 %v4650
    %v4794 = vunpack.c.l.b16 %v4651
    %v4795 = vunpack.c.h.b16 %v4651
    %v4796 = vunpack.c.l.b16 %v4652
    %v4797 = vunpack.c.h.b16 %v4652
    %v4798 = vunpack.c.l.b16 %v4653
    %v4799 = vunpack.c.h.b16 %v4653
    %v4800 = vunpack.c.l.b16 %v4654
    %v4801 = vunpack.c.h.b16 %v4654
    %v4802 = vunpack.c.l.b16 %v4655
    %v4803 = vunpack.c.h.b16 %v4655
    %v4804 = vunpack.c.l.b16 %v4656
    %v4805 = vunpack.c.h.b16 %v4656
    %v4806 = vunpack.c.l.b16 %v4657
    %v4807 = vunpack.c.h.b16 %v4657
    %v4808 = vunpack.c.l.b16 %v4658
    %v4809 = vunpack.c.h.b16 %v4658
    %v4810 = vunpack.c.l.b16 %v4659
    %v4811 = vunpack.c.h.b16 %v4659
    %v4812 = vunpack.c.l.b16 %v4660
    %v4813 = vunpack.c.h.b16 %v4660
    %v4814 = vunpack.c.l.b16 %v4661
    %v4815 = vunpack.c.h.b16 %v4661
    %v4816 = vunpack.c.l.b16 %v4662
    %v4817 = vunpack.c.h.b16 %v4662
    %v4818 = vunpack.c.l.b16 %v4663
    %v4819 = vunpack.c.h.b16 %v4663
    %v4820 = vunpack.c.l.b16 %v4664
    %v4821 = vunpack.c.h.b16 %v4664
    %v4822 = vunpack.c.l.b16 %v4665
    %v4823 = vunpack.c.h.b16 %v4665
    %v4824 = vunpack.c.l.b16 %v4666
    %v4825 = vunpack.c.h.b16 %v4666
    %v4826 = vunpack.c.l.b16 %v4667
    %v4827 = vunpack.c.h.b16 %v4667
    %v4828 = vunpack.c.l.b16 %v4668
    %v4829 = vunpack.c.h.b16 %v4668
    %v4830 = vunpack.c.l.b16 %v4669
    %v4831 = vunpack.c.h.b16 %v4669
    %v4832 = vunpack.c.l.b16 %v4670
    %v4833 = vunpack.c.h.b16 %v4670
    %v4834 = vunpack.c.l.b16 %v4671
    %v4835 = vunpack.c.h.b16 %v4671
    %v4836 = vunpack.c.l.b16 %v4672
    %v4837 = vunpack.c.h.b16 %v4672
    %v4838 = vunpack.c.l.b16 %v4673
    %v4839 = vunpack.c.h.b16 %v4673
    %v4840 = vunpack.c.l.b16 %v4674
    %v4841 = vunpack.c.h.b16 %v4674
    %v4842 = vunpack.c.l.b16 %v4675
    %v4843 = vunpack.c.h.b16 %v4675
    %v4844 = vunpack.c.l.b16 %v4676
    %v4845 = vunpack.c.h.b16 %v4676
    %v4846 = vunpack.c.l.b16 %v4677
    %v4847 = vunpack.c.h.b16 %v4677
    %v4848 = vunpack.c.l.b16 %v4678
    %v4849 = vunpack.c.h.b16 %v4678
    %v4850 = vunpack.c.l.b16 %v4679
    %v4851 = vunpack.c.h.b16 %v4679
    %v4852 = vunpack.c.l.b16 %v4680
    %v4853 = vunpack.c.h.b16 %v4680
    %v4854 = vunpack.c.l.b16 %v4681
    %v4855 = vunpack.c.h.b16 %v4681
    %v4856 = vunpack.c.l.b16 %v4682
    %v4857 = vunpack.c.h.b16 %v4682
    %v4858 = vunpack.c.l.b16 %v4683
    %v4859 = vunpack.c.h.b16 %v4683
    %v4860 = vunpack.c.l.b16 %v4684
    %v4861 = vunpack.c.h.b16 %v4684
    %v4862 = vunpack.c.l.b16 %v4685
    %v4863 = vunpack.c.h.b16 %v4685
    %v4864 = vunpack.c.l.b16 %v4686
    %v4865 = vunpack.c.h.b16 %v4686
    %v4866 = vunpack.c.l.b16 %v4687
    %v4867 = vunpack.c.h.b16 %v4687
    %v4868 = vunpack.c.l.b16 %v4688
    %v4869 = vunpack.c.h.b16 %v4688
    %v4870 = vunpack.c.l.b16 %v4689
    %v4871 = vunpack.c.h.b16 %v4689
    %v4872 = vunpack.c.l.b16 %v4690
    %v4873 = vunpack.c.h.b16 %v4690
    %v4874 = vunpack.c.l.b16 %v4691
    %v4875 = vunpack.c.h.b16 %v4691
    %v4876 = vunpack.c.l.b16 %v4692
    %v4877 = vunpack.c.h.b16 %v4692
    %v4878 = vunpack.c.l.b16 %v4693
    %v4879 = vunpack.c.h.b16 %v4693
    %v4880 = vunpack.c.l.b16 %v4694
    %v4881 = vunpack.c.h.b16 %v4694
    %v4882 = vunpack.c.l.b16 %v4695
    %v4883 = vunpack.c.h.b16 %v4695
    %v4884 = vunpack.c.l.b16 %v4696
    %v4885 = vunpack.c.h.b16 %v4696
    %v4886 = vunpack.c.l.b16 %v4697
    %v4887 = vunpack.c.h.b16 %v4697
    %v4888 = vunpack.c.l.b16 %v4698
    %v4889 = vunpack.c.h.b16 %v4698
    %v4890 = vunpack.c.l.b16 %v4699
    %v4891 = vunpack.c.h.b16 %v4699
    %v4892 = vunpack.c.l.b16 %v4700
    %v4893 = vunpack.c.h.b16 %v4700
    %v4894 = vunpack.c.l.b16 %v4701
    %v4895 = vunpack.c.h.b16 %v4701
    %v4896 = vunpack.c.l.b16 %v4702
    %v4897 = vunpack.c.h.b16 %v4702
    %v4898 = vunpack.c.l.b16 %v4703
    %v4899 = vunpack.c.h.b16 %v4703
    %v4900 = vunpack.c.l.b16 %v4704
    %v4901 = vunpack.c.h.b16 %v4704
    %v4902 = vunpack.c.l.b16 %v4705
    %v4903 = vunpack.c.h.b16 %v4705
    %v4904 = vunpack.c.l.b16 %v4706
    %v4905 = vunpack.c.h.b16 %v4706
    %v4906 = vunpack.c.l.b16 %v4707
    %v4907 = vunpack.c.h.b16 %v4707
    %v4908 = vunpack.c.l.b16 %v4708
    %v4909 = vunpack.c.h.b16 %v4708
    %v4910 = vunpack.c.l.b16 %v4709
    %v4911 = vunpack.c.h.b16 %v4709
    %v4912 = vunpack.c.l.b16 %v4710
    %v4913 = vunpack.c.h.b16 %v4710
    %v4914 = vunpack.c.l.b16 %v4711
    %v4915 = vunpack.c.h.b16 %v4711
    %v4916 = vpack.c.b16 %v4790, %v4788
    %v4917 = vpack.c.b16 %v4791, %v4789
    %v4918 = vpack.c.b16 %v4794, %v4792
    %v4919 = vpack.c.b16 %v4795, %v4793
    %v4920 = vpack.c.b16 %v4798, %v4796
    %v4921 = vpack.c.b16 %v4799, %v4797
    %v4922 = vpack.c.b16 %v4802, %v4800
    %v4923 = vpack.c.b16 %v4803, %v4801
    %v4924 = vpack.c.b16 %v4806, %v4804
    %v4925 = vpack.c.b16 %v4807, %v4805
    %v4926 = vpack.c.b16 %v4810, %v4808
    %v4927 = vpack.c.b16 %v4811, %v4809
    %v4928 = vpack.c.b16 %v4814, %v4812
    %v4929 = vpack.c.b16 %v4815, %v4813
    %v4930 = vpack.c.b16 %v4818, %v4816
    %v4931 = vpack.c.b16 %v4819, %v4817
    %v4932 = vpack.c.b16 %v4822, %v4820
    %v4933 = vpack.c.b16 %v4823, %v4821
    %v4934 = vpack.c.b16 %v4826, %v4824
    %v4935 = vpack.c.b16 %v4827, %v4825
    %v4936 = vpack.c.b16 %v4830, %v4828
    %v4937 = vpack.c.b16 %v4831, %v4829
    %v4938 = vpack.c.b16 %v4834, %v4832
    %v4939 = vpack.c.b16 %v4835, %v4833
    %v4940 = vpack.c.b16 %v4838, %v4836
    %v4941 = vpack.c.b16 %v4839, %v4837
    %v4942 = vpack.c.b16 %v4842, %v4840
    %v4943 = vpack.c.b16 %v4843, %v4841
    %v4944 = vpack.c.b16 %v4846, %v4844
    %v4945 = vpack.c.b16 %v4847, %v4845
    %v4946 = vpack.c.b16 %v4850, %v4848
    %v4947 = vpack.c.b16 %v4851, %v4849
    %v4948 = vpack.c.b16 %v4854, %v4852
    %v4949 = vpack.c.b16 %v4855, %v4853
    %v4950 = vpack.c.b16 %v4858, %v4856
    %v4951 = vpack.c.b16 %v4859, %v4857
    %v4952 = vpack.c.b16 %v4862, %v4860
    %v4953 = vpack.c.b16 %v4863, %v4861
    %v4954 = vpack.c.b16 %v4866, %v4864
    %v4955 = vpack.c.b16 %v4867, %v4865
    %v4956 = vpack.c.b16 %v4870, %v4868
    %v4957 = vpack.c.b16 %v4871, %v4869
    %v4958 = vpack.c.b16 %v4874, %v4872
    %v4959 = vpack.c.b16 %v4875, %v4873
    %v4960 = vpack.c.b16 %v4878, %v4876
    %v4961 = vpack.c.b16 %v4879, %v4877
    %v4962 = vpack.c.b16 %v4882, %v4880
    %v4963 = vpack.c.b16 %v4883, %v4881
    %v4964 = vpack.c.b16 %v4886, %v4884
    %v4965 = vpack.c.b16 %v4887, %v4885
    %v4966 = vpack.c.b16 %v4890, %v4888
    %v4967 = vpack.c.b16 %v4891, %v4889
    %v4968 = vpack.c.b16 %v4894, %v4892
    %v4969 = vpack.c.b16 %v4895, %v4893
    %v4970 = vpack.c.b16 %v4898, %v4896
    %v4971 = vpack.c.b16 %v4899, %v4897
    %v4972 = vpack.c.b16 %v4902, %v4900
    %v4973 = vpack.c.b16 %v4903, %v4901
    %v4974 = vpack.c.b16 %v4906, %v4904
    %v4975 = vpack.c.b16 %v4907, %v4905
    %v4976 = vpack.c.b16 %v4910, %v4908
    %v4977 = vpack.c.b16 %v4911, %v4909
    %v4978 = vpack.c.b16 %v4914, %v4912
    %v4979 = vpack.c.b16 %v4915, %v4913
    %5044 = vmatprep.subr.bf16.mxu0 %v4917
    %5045 = vmatpush1.bf16.msra.mxu0 %v4916
    %5046 = vmatprep.subr.bf16.mxu0 %v4919
    %5047 = vmatpush1.bf16.msra.mxu0 %v4918
    %5048 = vmatprep.subr.bf16.mxu0 %v4921
    %5049 = vmatpush1.bf16.msra.mxu0 %v4920
    %5050 = vmatprep.subr.bf16.mxu0 %v4923
    %5051 = vmatpush1.bf16.msra.mxu0 %v4922
    %5052 = vmatprep.subr.bf16.mxu0 %v4925
    %5053 = vmatpush1.bf16.msra.mxu0 %v4924
    %5054 = vmatprep.subr.bf16.mxu0 %v4927
    %5055 = vmatpush1.bf16.msra.mxu0 %v4926
    %5056 = vmatprep.subr.bf16.mxu0 %v4929
    %5057 = vmatpush1.bf16.msra.mxu0 %v4928
    %5058 = vmatprep.subr.bf16.mxu0 %v4931
    %5059 = vmatpush1.bf16.msra.mxu0 %v4930
    %5060 = vmatprep.subr.bf16.mxu0 %v4933
    %5061 = vmatpush1.bf16.msra.mxu0 %v4932
    %5062 = vmatprep.subr.bf16.mxu0 %v4935
    %5063 = vmatpush1.bf16.msra.mxu0 %v4934
    %5064 = vmatprep.subr.bf16.mxu0 %v4937
    %5065 = vmatpush1.bf16.msra.mxu0 %v4936
    %5066 = vmatprep.subr.bf16.mxu0 %v4939
    %5067 = vmatpush1.bf16.msra.mxu0 %v4938
    %5068 = vmatprep.subr.bf16.mxu0 %v4941
    %5069 = vmatpush1.bf16.msra.mxu0 %v4940
    %5070 = vmatprep.subr.bf16.mxu0 %v4943
    %5071 = vmatpush1.bf16.msra.mxu0 %v4942
    %5072 = vmatprep.subr.bf16.mxu0 %v4945
    %5073 = vmatpush1.bf16.msra.mxu0 %v4944
    %5074 = vmatprep.subr.bf16.mxu0 %v4947
    %5075 = vmatpush1.bf16.msra.mxu0 %v4946
    %5076 = vmatprep.mubr.bf16.mxu0 %v4645
    %5077 = vmatmul.mubr.bf16.gmra.mrb[0].mxu0 %v4644
    %v5078 = vpop.f32.mrb[0].mxu0
    %v5079 = vadd.f32 %v4717, %v5078
    %v5080 = vpop.f32.mrb[0].mxu0
    %v5081 = vadd.f32 %v4721, %v5080
    %v5082 = vpop.f32.mrb[0].mxu0
    %v5083 = vadd.f32 %v4717, %v5082
    %v5084 = vpop.f32.mrb[0].mxu0
    %v5085 = vadd.f32 %v4721, %v5084
    %5086 = vdwg.mxu0
    %5087 = vmatprep.subr.bf16.mxu0 %v4949
    %5088 = vmatpush1.bf16.msra.mxu0 %v4948
    %5089 = vmatprep.subr.bf16.mxu0 %v4951
    %5090 = vmatpush1.bf16.msra.mxu0 %v4950
    %5091 = vmatprep.subr.bf16.mxu0 %v4953
    %5092 = vmatpush1.bf16.msra.mxu0 %v4952
    %5093 = vmatprep.subr.bf16.mxu0 %v4955
    %5094 = vmatpush1.bf16.msra.mxu0 %v4954
    %5095 = vmatprep.subr.bf16.mxu0 %v4957
    %5096 = vmatpush1.bf16.msra.mxu0 %v4956
    %5097 = vmatprep.subr.bf16.mxu0 %v4959
    %5098 = vmatpush1.bf16.msra.mxu0 %v4958
    %5099 = vmatprep.subr.bf16.mxu0 %v4961
    %5100 = vmatpush1.bf16.msra.mxu0 %v4960
    %5101 = vmatprep.subr.bf16.mxu0 %v4963
    %5102 = vmatpush1.bf16.msra.mxu0 %v4962
    %5103 = vmatprep.subr.bf16.mxu0 %v4965
    %5104 = vmatpush1.bf16.msra.mxu0 %v4964
    %5105 = vmatprep.subr.bf16.mxu0 %v4967
    %5106 = vmatpush1.bf16.msra.mxu0 %v4966
    %5107 = vmatprep.subr.bf16.mxu0 %v4969
    %5108 = vmatpush1.bf16.msra.mxu0 %v4968
    %5109 = vmatprep.subr.bf16.mxu0 %v4971
    %5110 = vmatpush1.bf16.msra.mxu0 %v4970
    %5111 = vmatprep.subr.bf16.mxu0 %v4973
    %5112 = vmatpush1.bf16.msra.mxu0 %v4972
    %5113 = vmatprep.subr.bf16.mxu0 %v4975
    %5114 = vmatpush1.bf16.msra.mxu0 %v4974
    %5115 = vmatprep.subr.bf16.mxu0 %v4977
    %5116 = vmatpush1.bf16.msra.mxu0 %v4976
    %5117 = vmatprep.subr.bf16.mxu0 %v4979
    %5118 = vmatpush1.bf16.msra.mxu0 %v4978
    %5119 = vmatprep.mubr.bf16.mxu0 %v4647
    %5120 = vmatmul.mubr.bf16.gmra.mrb[0].mxu0 %v4646
    %v5121 = vpop.f32.mrb[0].mxu0
    %v5122 = vadd.f32 %v5079, %v5121
    %v5123 = vpop.f32.mrb[0].mxu0
    %v5124 = vadd.f32 %v5081, %v5123
    %v5125 = vpop.f32.mrb[0].mxu0
    %v5126 = vadd.f32 %v5083, %v5125
    %v5127 = vpop.f32.mrb[0].mxu0
    %v5128 = vadd.f32 %v5085, %v5127
    %5129 = vdwg.mxu0
    %v5130 = vmax.f32 %v5122, 0.0
    %v5131 = vmax.f32 %v5124, 0.0
    %v5132 = vmax.f32 %v5126, 0.0
    %v5133 = vmax.f32 %v5128, 0.0
    %v5134 = vpack.c.bf16 %v5132, %v5130
    %v5135 = vpack.c.bf16 %v5133, %v5131
    %v5136 = vld [vmem:[#allocation14] sm:$0xf]
    %v5137 = vld [vmem:[#allocation14 + $0x4] sm:$0xf]
    %v5138 = vld [vmem:[#allocation14 + $0x8] sm:$0xf]
    %v5139 = vld [vmem:[#allocation14 + $0xc] sm:$0xf]
    %v5140 = vld [vmem:[#allocation14 + $0x10] sm:$0xf]
    %v5141 = vld [vmem:[#allocation14 + $0x14] sm:$0xf]
    %v5142 = vld [vmem:[#allocation14 + $0x18] sm:$0xf]
    %v5143 = vld [vmem:[#allocation14 + $0x1c] sm:$0xf]
    %v5144 = vld [vmem:[#allocation14 + $0x20] sm:$0xf]
    %v5145 = vld [vmem:[#allocation14 + $0x24] sm:$0xf]
    %v5146 = vld [vmem:[#allocation14 + $0x28] sm:$0xf]
    %v5147 = vld [vmem:[#allocation14 + $0x2c] sm:$0xf]
    %v5148 = vld [vmem:[#allocation14 + $0x30] sm:$0xf]
    %v5149 = vld [vmem:[#allocation14 + $0x34] sm:$0xf]
    %v5150 = vld [vmem:[#allocation14 + $0x38] sm:$0xf]
    %v5151 = vld [vmem:[#allocation14 + $0x3c] sm:$0xf]
    %v5152 = vld [vmem:[#allocation14 + $0x40] sm:$0xf]
    %v5153 = vld [vmem:[#allocation14 + $0x44] sm:$0xf]
    %v5154 = vld [vmem:[#allocation14 + $0x48] sm:$0xf]
    %v5155 = vld [vmem:[#allocation14 + $0x4c] sm:$0xf]
    %v5156 = vld [vmem:[#allocation14 + $0x50] sm:$0xf]
    %v5157 = vld [vmem:[#allocation14 + $0x54] sm:$0xf]
    %v5158 = vld [vmem:[#allocation14 + $0x58] sm:$0xf]
    %v5159 = vld [vmem:[#allocation14 + $0x5c] sm:$0xf]
    %v5160 = vld [vmem:[#allocation14 + $0x60] sm:$0xf]
    %v5161 = vld [vmem:[#allocation14 + $0x64] sm:$0xf]
    %v5162 = vld [vmem:[#allocation14 + $0x68] sm:$0xf]
    %v5163 = vld [vmem:[#allocation14 + $0x6c] sm:$0xf]
    %v5164 = vld [vmem:[#allocation14 + $0x70] sm:$0xf]
    %v5165 = vld [vmem:[#allocation14 + $0x74] sm:$0xf]
    %v5166 = vld [vmem:[#allocation14 + $0x78] sm:$0xf]
    %v5167 = vld [vmem:[#allocation14 + $0x7c] sm:$0xf]
    %v5168 = vld [vmem:[#allocation16] sm:$0x1]
    %v5170 = vlaneseq
    %v5171 = vshrl.u32 %v5170, 7
    %v5172 = vsub.s32 0, %v5171
    %v5173 = vrot.slane %v5168, %v5172
    %v5207 = vunpack.c.l.b16 %v5136
    %v5208 = vunpack.c.l.b16 %v5137
    %v5209 = vunpack.c.l.b16 %v5138
    %v5210 = vunpack.c.l.b16 %v5139
    %v5211 = vunpack.c.l.b16 %v5140
    %v5212 = vunpack.c.l.b16 %v5141
    %v5213 = vunpack.c.l.b16 %v5142
    %v5214 = vunpack.c.l.b16 %v5143
    %v5215 = vunpack.c.l.b16 %v5144
    %v5216 = vunpack.c.l.b16 %v5145
    %v5217 = vunpack.c.l.b16 %v5146
    %v5218 = vunpack.c.l.b16 %v5147
    %v5219 = vunpack.c.l.b16 %v5148
    %v5220 = vunpack.c.l.b16 %v5149
    %v5221 = vunpack.c.l.b16 %v5150
    %v5222 = vunpack.c.l.b16 %v5151
    %v5223 = vunpack.c.l.b16 %v5152
    %v5224 = vunpack.c.l.b16 %v5153
    %v5225 = vunpack.c.l.b16 %v5154
    %v5226 = vunpack.c.l.b16 %v5155
    %v5227 = vunpack.c.l.b16 %v5156
    %v5228 = vunpack.c.l.b16 %v5157
    %v5229 = vunpack.c.l.b16 %v5158
    %v5230 = vunpack.c.l.b16 %v5159
    %v5231 = vunpack.c.l.b16 %v5160
    %v5232 = vunpack.c.l.b16 %v5161
    %v5233 = vunpack.c.l.b16 %v5162
    %v5234 = vunpack.c.l.b16 %v5163
    %v5235 = vunpack.c.l.b16 %v5164
    %v5236 = vunpack.c.l.b16 %v5165
    %v5237 = vunpack.c.l.b16 %v5166
    %v5238 = vunpack.c.l.b16 %v5167
    %v5239 = vpack.c.b16 %v5208, %v5207
    %v5240 = vpack.c.b16 %v5210, %v5209
    %v5241 = vpack.c.b16 %v5212, %v5211
    %v5242 = vpack.c.b16 %v5214, %v5213
    %v5243 = vpack.c.b16 %v5216, %v5215
    %v5244 = vpack.c.b16 %v5218, %v5217
    %v5245 = vpack.c.b16 %v5220, %v5219
    %v5246 = vpack.c.b16 %v5222, %v5221
    %v5247 = vpack.c.b16 %v5224, %v5223
    %v5248 = vpack.c.b16 %v5226, %v5225
    %v5249 = vpack.c.b16 %v5228, %v5227
    %v5250 = vpack.c.b16 %v5230, %v5229
    %v5251 = vpack.c.b16 %v5232, %v5231
    %v5252 = vpack.c.b16 %v5234, %v5233
    %v5253 = vpack.c.b16 %v5236, %v5235
    %v5254 = vpack.c.b16 %v5238, %v5237
    %5271 = vmatprep.subr.bf16.mxu0 0
    %5272 = vmatpush1.bf16.msra.mxu0 %v5239
    %5273 = vmatprep.subr.bf16.mxu0 0
    %5274 = vmatpush1.bf16.msra.mxu0 %v5240
    %5275 = vmatprep.subr.bf16.mxu0 0
    %5276 = vmatpush1.bf16.msra.mxu0 %v5241
    %5277 = vmatprep.subr.bf16.mxu0 0
    %5278 = vmatpush1.bf16.msra.mxu0 %v5242
    %5279 = vmatprep.subr.bf16.mxu0 0
    %5280 = vmatpush1.bf16.msra.mxu0 %v5243
    %5281 = vmatprep.subr.bf16.mxu0 0
    %5282 = vmatpush1.bf16.msra.mxu0 %v5244
    %5283 = vmatprep.subr.bf16.mxu0 0
    %5284 = vmatpush1.bf16.msra.mxu0 %v5245
    %5285 = vmatprep.subr.bf16.mxu0 0
    %5286 = vmatpush1.bf16.msra.mxu0 %v5246
    %5287 = vmatprep.subr.bf16.mxu0 0
    %5288 = vmatpush1.bf16.msra.mxu0 %v5247
    %5289 = vmatprep.subr.bf16.mxu0 0
    %5290 = vmatpush1.bf16.msra.mxu0 %v5248
    %5291 = vmatprep.subr.bf16.mxu0 0
    %5292 = vmatpush1.bf16.msra.mxu0 %v5249
    %5293 = vmatprep.subr.bf16.mxu0 0
    %5294 = vmatpush1.bf16.msra.mxu0 %v5250
    %5295 = vmatprep.subr.bf16.mxu0 0
    %5296 = vmatpush1.bf16.msra.mxu0 %v5251
    %5297 = vmatprep.subr.bf16.mxu0 0
    %5298 = vmatpush1.bf16.msra.mxu0 %v5252
    %5299 = vmatprep.subr.bf16.mxu0 0
    %5300 = vmatpush1.bf16.msra.mxu0 %v5253
    %5301 = vmatprep.subr.bf16.mxu0 0
    %5302 = vmatpush1.bf16.msra.mxu0 %v5254
    %5303 = vmatprep.mubr.bf16.mxu0 %v5135
    %5304 = vmatmul.mubr.bf16.gmra.mrb[0].mxu0 %v5134
    %v5305 = vpop.f32.mrb[0].mxu0
    %v5306 = vadd.f32 %v5173, %v5305
    %v5307 = vpop.f32.mrb[0].mxu0
    %v5308 = vpop.f32.mrb[0].mxu0
    %v5309 = vadd.f32 %v5173, %v5308
    %v5310 = vpop.f32.mrb[0].mxu0
    %5311 = vdwg.mxu0
    %v5312 = vmax.f32 %v5306, 0.0
    %v5313 = vmax.f32 %v5309, 0.0
    %v5314 = vpack.c.bf16 %v5313, %v5312
    %v5315 = vld [vmem:[#allocation17] sm:$0xf]
    %v5316 = vld [vmem:[#allocation17 + $0x4] sm:$0xf]
    %v5317 = vld [vmem:[#allocation17 + $0x8] sm:$0xf]
    %v5318 = vld [vmem:[#allocation17 + $0xc] sm:$0xf]
    %v5319 = vld [vmem:[#allocation17 + $0x10] sm:$0xf]
    %v5320 = vld [vmem:[#allocation17 + $0x14] sm:$0xf]
    %v5321 = vld [vmem:[#allocation17 + $0x18] sm:$0xf]
    %v5322 = vld [vmem:[#allocation17 + $0x1c] sm:$0xf]
    %v5323 = vld [vmem:[#allocation17 + $0x20] sm:$0xf]
    %v5324 = vld [vmem:[#allocation17 + $0x24] sm:$0xf]
    %v5325 = vld [vmem:[#allocation17 + $0x28] sm:$0xf]
    %v5326 = vld [vmem:[#allocation17 + $0x2c] sm:$0xf]
    %v5327 = vld [vmem:[#allocation17 + $0x30] sm:$0xf]
    %v5328 = vld [vmem:[#allocation17 + $0x34] sm:$0xf]
    %v5329 = vld [vmem:[#allocation17 + $0x38] sm:$0xf]
    %v5330 = vld [vmem:[#allocation17 + $0x3c] sm:$0xf]
    %v5331 = vld [vmem:[#allocation19] sm:$0x1]
    %v5333 = vlaneseq
    %v5334 = vshrl.u32 %v5333, 7
    %v5335 = vsub.s32 0, %v5334
    %v5336 = vrot.slane %v5331, %v5335
    %v5354 = vunpack.c.l.b16 %v5315
    %v5355 = vunpack.c.l.b16 %v5316
    %v5356 = vunpack.c.l.b16 %v5317
    %v5357 = vunpack.c.l.b16 %v5318
    %v5358 = vunpack.c.l.b16 %v5319
    %v5359 = vunpack.c.l.b16 %v5320
    %v5360 = vunpack.c.l.b16 %v5321
    %v5361 = vunpack.c.l.b16 %v5322
    %v5362 = vunpack.c.l.b16 %v5323
    %v5363 = vunpack.c.l.b16 %v5324
    %v5364 = vunpack.c.l.b16 %v5325
    %v5365 = vunpack.c.l.b16 %v5326
    %v5366 = vunpack.c.l.b16 %v5327
    %v5367 = vunpack.c.l.b16 %v5328
    %v5368 = vunpack.c.l.b16 %v5329
    %v5369 = vunpack.c.l.b16 %v5330
    %v5370 = vpack.c.b16 %v5355, %v5354
    %v5371 = vpack.c.b16 %v5357, %v5356
    %v5372 = vpack.c.b16 %v5359, %v5358
    %v5373 = vpack.c.b16 %v5361, %v5360
    %v5374 = vpack.c.b16 %v5363, %v5362
    %v5375 = vpack.c.b16 %v5365, %v5364
    %v5376 = vpack.c.b16 %v5367, %v5366
    %v5377 = vpack.c.b16 %v5369, %v5368
    %5386 = vmatprep.subr.bf16.mxu0 0
    %5387 = vmatpush1.bf16.msra.mxu0 %v5370
    %5388 = vmatprep.subr.bf16.mxu0 0
    %5389 = vmatpush1.bf16.msra.mxu0 %v5371
    %5390 = vmatprep.subr.bf16.mxu0 0
    %5391 = vmatpush1.bf16.msra.mxu0 %v5372
    %5392 = vmatprep.subr.bf16.mxu0 0
    %5393 = vmatpush1.bf16.msra.mxu0 %v5373
    %5394 = vmatprep.subr.bf16.mxu0 0
    %5395 = vmatpush1.bf16.msra.mxu0 %v5374
    %5396 = vmatprep.subr.bf16.mxu0 0
    %5397 = vmatpush1.bf16.msra.mxu0 %v5375
    %5398 = vmatprep.subr.bf16.mxu0 0
    %5399 = vmatpush1.bf16.msra.mxu0 %v5376
    %5400 = vmatprep.subr.bf16.mxu0 0
    %5401 = vmatpush1.bf16.msra.mxu0 %v5377
    %5402 = vmatprep.subr.bf16.mxu0 0
    %5403 = vmatpush1.bf16.msra.mxu0 0
    %5404 = vmatprep.subr.bf16.mxu0 0
    %5405 = vmatpush1.bf16.msra.mxu0 0
    %5406 = vmatprep.subr.bf16.mxu0 0
    %5407 = vmatpush1.bf16.msra.mxu0 0
    %5408 = vmatprep.subr.bf16.mxu0 0
    %5409 = vmatpush1.bf16.msra.mxu0 0
    %5410 = vmatprep.subr.bf16.mxu0 0
    %5411 = vmatpush1.bf16.msra.mxu0 0
    %5412 = vmatprep.subr.bf16.mxu0 0
    %5413 = vmatpush1.bf16.msra.mxu0 0
    %5414 = vmatprep.subr.bf16.mxu0 0
    %5415 = vmatpush1.bf16.msra.mxu0 0
    %5416 = vmatprep.subr.bf16.mxu0 0
    %5417 = vmatpush1.bf16.msra.mxu0 0
    %5418 = vmatprep.mubr.bf16.mxu0 0
    %5419 = vmatmul.mubr.bf16.gmra.mrb[0].mxu0 %v5314
    %v5420 = vpop.f32.mrb[0].mxu0
    %v5421 = vadd.f32 %v5336, %v5420
    %v5422 = vpop.f32.mrb[0].mxu0
    %v5423 = vpop.f32.mrb[0].mxu0
    %v5424 = vadd.f32 %v5336, %v5423
    %v5425 = vpop.f32.mrb[0].mxu0
    %5426 = vdwg.mxu0
    %5427 = vst [vmem:[#allocation20] sm:$0xff] %v5421
    %5428 = vst [vmem:[#allocation20 + $0x8] sm:$0xff] %v5424
    // Predicated region
    $region90: #{tpu_custom_call.1} parent=1 // pred_check
      _
    $region91: #{tpu_custom_call.1} parent=1 // pred_check_branch
      %5430 = sbr.rel (0) target = $region93
    $region92: #{tpu_custom_call.1} parent=1 // pred_region
      %s5432 = ssub.s32 256, 256
      %5433 = vsyncadd [#allocation4], %s5432
      %s5434 = sshll.u32 [#allocation20], 4
      %s5435 = int_to_ptr.vmem [resolvable:$true] %s5434
      %5440 = dma.vmem_to_hbm [thread:$0]  %s5435, 256, %s11, [#allocation4], 128, 128, 8
    $region93: #{tpu_custom_call.1} parent=1 // pred_fallthru
      _
    // Predicated region
    $region94: #{tpu_custom_call.1} parent=1 // pred_check
      _
    $region95: #{tpu_custom_call.1} parent=1 // pred_check_branch
      %5442 = sbr.rel (0) target = $region97
    $region96: #{tpu_custom_call.1} parent=1 // pred_region
      %5443 = dma.done [#allocation4], 256
    $region97: #{tpu_custom_call.1} parent=1 // pred_fallthru
      _
    %5444 = vsyncpa [#allocation3], 1
    %5445 = vsyncpa [#allocation6], 1
    %5446 = vsyncpa [#allocation9], 1
    %5447 = vsyncpa [#allocation12], 1
    %5448 = vsyncpa [#allocation15], 1
    %5449 = vsyncpa [#allocation18], 1
    %5450 = vsyncpa [#allocation4], 1

// kernel: tpu_custom_call.1
$region0: #{tpu_custom_call.1}
  #allocation0 [shape = 'u32[]', space=smem, size = 0x4, offset = 0x4, fixed_abs, tag = 'smem constant byte address 0x4 - core index']
  #allocation1 [shape = 'u32[144,128]{1,0:T(1,128)}', space=vmem, size = 0x12000, scoped, tag = 'internal scratch']
  %s0 = inlined_call_operand.hbm [shape: f32[16,32], index: 0, kind: input, shape index: {}]
  %s1 = inlined_call_operand.hbm [shape: bf16[32,2048], index: 1, kind: input, shape index: {}]
  %s2 = inlined_call_operand.hbm [shape: f32[1,2048], index: 2, kind: input, shape index: {}]
  %s3 = inlined_call_operand.hbm [shape: bf16[2048,512], index: 3, kind: input, shape index: {}]
  %s4 = inlined_call_operand.hbm [shape: f32[1,512], index: 4, kind: input, shape index: {}]
  %s5 = inlined_call_operand.hbm [shape: bf16[512,256], index: 5, kind: input, shape index: {}]
  %s6 = inlined_call_operand.hbm [shape: f32[1,256], index: 6, kind: input, shape index: {}]
  %s7 = inlined_call_operand.hbm [shape: bf16[256,128], index: 7, kind: input, shape index: {}]
  %s8 = inlined_call_operand.hbm [shape: f32[1,128], index: 8, kind: input, shape index: {}]
  %s9 = inlined_call_operand.hbm [shape: bf16[128,128], index: 9, kind: input, shape index: {}]
  %s10 = inlined_call_operand.hbm [shape: f32[1,128], index: 10, kind: input, shape index: {}]
  %s11 = inlined_call_operand.hbm [shape: f32[16,128], index: 11, kind: output, shape index: {}]
  %s12 = sld [smem:[#allocation0]]
  $region98: #{tpu_custom_call.1} parent=0
    _
  %s14 = ssub.s32 1, %s12
  %s15 = scalar_select 0, %s14, %s12
  $region1: #{tpu_custom_call.1} parent=0
    #allocation2 [shape = 'u8[8192]{0}', space=vmem, size = 0x2000, scoped, tag = 'input window, operand 0, single buffered']
    #allocation3 [shape = 's32[1]{0}', space=sflag, size = 0x4, scoped, tag = 'scoped memory for tpu_custom_call.1']
    #allocation4 [shape = 's32[1]{0}', space=sflag, size = 0x4, scoped, tag = 'scoped memory for tpu_custom_call.1']
    #allocation5 [shape = 'u8[131072]{0}', space=vmem, size = 0x20000, scoped, tag = 'input window, operand 1, single buffered']
    #allocation6 [shape = 's32[1]{0}', space=sflag, size = 0x4, scoped, tag = 'scoped memory for tpu_custom_call.1']
    #allocation7 [shape = 'u8[8192]{0}', space=vmem, size = 0x2000, scoped, tag = 'input window, operand 2, single buffered']
    #allocation8 [shape = 'u8[2097152]{0}', space=vmem, size = 0x200000, scoped, tag = 'input window, operand 3, single buffered']
    #allocation9 [shape = 's32[1]{0}', space=sflag, size = 0x4, scoped, tag = 'scoped memory for tpu_custom_call.1']
    #allocation10 [shape = 'u8[2048]{0}', space=vmem, size = 0x800, scoped, tag = 'input window, operand 4, single buffered']
    #allocation11 [shape = 'u8[262144]{0}', space=vmem, size = 0x40000, scoped, tag = 'input window, operand 5, single buffered']
    #allocation12 [shape = 's32[1]{0}', space=sflag, size = 0x4, scoped, tag = 'scoped memory for tpu_custom_call.1']
    #allocation13 [shape = 'u8[1024]{0}', space=vmem, size = 0x400, scoped, tag = 'input window, operand 6, single buffered']
    #allocation14 [shape = 'u8[65536]{0}', space=vmem, size = 0x10000, scoped, tag = 'input window, operand 7, single buffered']
    #allocation15 [shape = 's32[1]{0}', space=sflag, size = 0x4, scoped, tag = 'scoped memory for tpu_custom_call.1']
    #allocation16 [shape = 'u8[512]{0}', space=vmem, size = 0x400, scoped, tag = 'input window, operand 8, single buffered']
    #allocation17 [shape = 'u8[32768]{0}', space=vmem, size = 0x8000, scoped, tag = 'input window, operand 9, single buffered']
    #allocation18 [shape = 's32[1]{0}', space=sflag, size = 0x4, scoped, tag = 'scoped memory for tpu_custom_call.1']
    #allocation19 [shape = 'u8[512]{0}', space=vmem, size = 0x400, scoped, tag = 'input window, operand 10, single buffered']
    #allocation20 [shape = 'u8[8192]{0}', space=vmem, size = 0x2000, scoped, tag = 'output window, operand 0, single buffered']
    %16 = vsyncpa [#allocation3], 0
    %17 = vsyncpa [#allocation6], 0
    %18 = vsyncpa [#allocation9], 0
    %19 = vsyncpa [#allocation12], 0
    %20 = vsyncpa [#allocation15], 0
    %21 = vsyncpa [#allocation18], 0
    %22 = vsyncpa [#allocation4], 0
    // Predicated region
    $region2: #{tpu_custom_call.1} parent=1 // pred_check
      _
    $region3: #{tpu_custom_call.1} parent=1 // pred_check_branch
      %24 = sbr.rel (0) target = $region5
    $region4: #{tpu_custom_call.1} parent=1 // pred_region
      %s26 = ssub.s32 256, 256
      %27 = vsyncadd [#allocation3], %s26
      %s28 = sshll.u32 [#allocation2], 4
      %s29 = int_to_ptr.vmem [resolvable:$true] %s28
      %34 = dma.hbm_to_vmem [thread:$0]  %s0, 256, %s29, [#allocation3], 128, 128, 8
    $region5: #{tpu_custom_call.1} parent=1 // pred_fallthru
      _
    // Predicated region
    $region6: #{tpu_custom_call.1} parent=1 // pred_check
      _
    $region7: #{tpu_custom_call.1} parent=1 // pred_check_branch
      %36 = sbr.rel (0) target = $region9
    $region8: #{tpu_custom_call.1} parent=1 // pred_region
      %s38 = ssub.s32 4096, 4096
      %39 = vsyncadd [#allocation6], %s38
      %s40 = sshll.u32 [#allocation5], 4
      %s41 = int_to_ptr.vmem [resolvable:$true] %s40
      %46 = dma.hbm_to_vmem [thread:$0]  %s1, 4096, %s41, [#allocation6], 1024, 1024, 64
    $region9: #{tpu_custom_call.1} parent=1 // pred_fallthru
      _
    // Predicated region
    $region10: #{tpu_custom_call.1} parent=1 // pred_check
      _
    $region11: #{tpu_custom_call.1} parent=1 // pred_check_branch
      %48 = sbr.rel (0) target = $region13
    $region12: #{tpu_custom_call.1} parent=1 // pred_region
      %s50 = ssub.s32 256, 256
      %51 = vsyncadd [#allocation6], %s50
      %s53 = sshll.u32 [#allocation7], 4
      %s54 = int_to_ptr.vmem [resolvable:$true] %s53
      %56 = dma.hbm_to_vmem [thread:$0]  %s2, 256, %s54, [#allocation6]
    $region13: #{tpu_custom_call.1} parent=1 // pred_fallthru
      _
    // Predicated region
    $region14: #{tpu_custom_call.1} parent=1 // pred_check
      _
    $region15: #{tpu_custom_call.1} parent=1 // pred_check_branch
      %58 = sbr.rel (0) target = $region17
    $region16: #{tpu_custom_call.1} parent=1 // pred_region
      %s60 = ssub.s32 65536, 65536
      %61 = vsyncadd [#allocation9], %s60
      %s62 = sshll.u32 [#allocation8], 4
      %s63 = int_to_ptr.vmem [resolvable:$true] %s62
      %68 = dma.hbm_to_vmem [thread:$0]  %s3, 65536, %s63, [#allocation9], 256, 256, 16
    $region17: #{tpu_custom_call.1} parent=1 // pred_fallthru
      _
    // Predicated region
    $region18: #{tpu_custom_call.1} parent=1 // pred_check
      _
    $region19: #{tpu_custom_call.1} parent=1 // pred_check_branch
      %70 = sbr.rel (0) target = $region21
    $region20: #{tpu_custom_call.1} parent=1 // pred_region
      %s72 = ssub.s32 64, 64
      %73 = vsyncadd [#allocation9], %s72
      %s75 = sshll.u32 [#allocation10], 4
      %s76 = int_to_ptr.vmem [resolvable:$true] %s75
      %78 = dma.hbm_to_vmem [thread:$0]  %s4, 64, %s76, [#allocation9]
    $region21: #{tpu_custom_call.1} parent=1 // pred_fallthru
      _
    // Predicated region
    $region22: #{tpu_custom_call.1} parent=1 // pred_check
      _
    $region23: #{tpu_custom_call.1} parent=1 // pred_check_branch
      %80 = sbr.rel (0) target = $region25
    $region24: #{tpu_custom_call.1} parent=1 // pred_region
      %s82 = ssub.s32 8192, 8192
      %83 = vsyncadd [#allocation12], %s82
      %s84 = sshll.u32 [#allocation11], 4
      %s85 = int_to_ptr.vmem [resolvable:$true] %s84
      %90 = dma.hbm_to_vmem [thread:$0]  %s5, 8192, %s85, [#allocation12], 128, 128, 8
    $region25: #{tpu_custom_call.1} parent=1 // pred_fallthru
      _
    // Predicated region
    $region26: #{tpu_custom_call.1} parent=1 // pred_check
      _
    $region27: #{tpu_custom_call.1} parent=1 // pred_check_branch
      %92 = sbr.rel (0) target = $region29
    $region28: #{tpu_custom_call.1} parent=1 // pred_region
      %s94 = ssub.s32 32, 32
      %95 = vsyncadd [#allocation12], %s94
      %s97 = sshll.u32 [#allocation13], 4
      %s98 = int_to_ptr.vmem [resolvable:$true] %s97
      %100 = dma.hbm_to_vmem [thread:$0]  %s6, 32, %s98, [#allocation12]
    $region29: #{tpu_custom_call.1} parent=1 // pred_fallthru
      _
    // Predicated region
    $region30: #{tpu_custom_call.1} parent=1 // pred_check
      _
    $region31: #{tpu_custom_call.1} parent=1 // pred_check_branch
      %102 = sbr.rel (0) target = $region33
    $region32: #{tpu_custom_call.1} parent=1 // pred_region
      %s104 = ssub.s32 2048, 2048
      %105 = vsyncadd [#allocation15], %s104
      %s106 = sshll.u32 [#allocation14], 4
      %s107 = int_to_ptr.vmem [resolvable:$true] %s106
      %112 = dma.hbm_to_vmem [thread:$0]  %s7, 2048, %s107, [#allocation15], 64, 64, 4
    $region33: #{tpu_custom_call.1} parent=1 // pred_fallthru
      _
    // Predicated region
    $region34: #{tpu_custom_call.1} parent=1 // pred_check
      _
    $region35: #{tpu_custom_call.1} parent=1 // pred_check_branch
      %114 = sbr.rel (0) target = $region37
    $region36: #{tpu_custom_call.1} parent=1 // pred_region
      %s116 = ssub.s32 16, 16
      %117 = vsyncadd [#allocation15], %s116
      %s119 = sshll.u32 [#allocation16], 4
      %s120 = int_to_ptr.vmem [resolvable:$true] %s119
      %122 = dma.hbm_to_vmem [thread:$0]  %s8, 16, %s120, [#allocation15]
    $region37: #{tpu_custom_call.1} parent=1 // pred_fallthru
      _
    // Predicated region
    $region38: #{tpu_custom_call.1} parent=1 // pred_check
      _
    $region39: #{tpu_custom_call.1} parent=1 // pred_check_branch
      %124 = sbr.rel (0) target = $region41
    $region40: #{tpu_custom_call.1} parent=1 // pred_region
      %s126 = ssub.s32 1024, 1024
      %127 = vsyncadd [#allocation18], %s126
      %s128 = sshll.u32 [#allocation17], 4
      %s129 = int_to_ptr.vmem [resolvable:$true] %s128
      %134 = dma.hbm_to_vmem [thread:$0]  %s9, 1024, %s129, [#allocation18], 64, 64, 4
    $region41: #{tpu_custom_call.1} parent=1 // pred_fallthru
      _
    // Predicated region
    $region42: #{tpu_custom_call.1} parent=1 // pred_check
      _
    $region43: #{tpu_custom_call.1} parent=1 // pred_check_branch
      %136 = sbr.rel (0) target = $region45
    $region44: #{tpu_custom_call.1} parent=1 // pred_region
      %s138 = ssub.s32 16, 16
      %139 = vsyncadd [#allocation18], %s138
      %s141 = sshll.u32 [#allocation19], 4
      %s142 = int_to_ptr.vmem [resolvable:$true] %s141
      %144 = dma.hbm_to_vmem [thread:$0]  %s10, 16, %s142, [#allocation18]
    $region45: #{tpu_custom_call.1} parent=1 // pred_fallthru
      _
    // Predicated region
    $region46: #{tpu_custom_call.1} parent=1 // pred_check
      _
    $region47: #{tpu_custom_call.1} parent=1 // pred_check_branch
      %146 = sbr.rel (0) target = $region49
    $region48: #{tpu_custom_call.1} parent=1 // pred_region
      %147 = dma.done [#allocation3], 256
    $region49: #{tpu_custom_call.1} parent=1 // pred_fallthru
      _
    // Predicated region
    $region50: #{tpu_custom_call.1} parent=1 // pred_check
      _
    $region51: #{tpu_custom_call.1} parent=1 // pred_check_branch
      %149 = sbr.rel (0) target = $region53
    $region52: #{tpu_custom_call.1} parent=1 // pred_region
      %150 = dma.done [#allocation6], 4096
    $region53: #{tpu_custom_call.1} parent=1 // pred_fallthru
      _
    // Predicated region
    $region54: #{tpu_custom_call.1} parent=1 // pred_check
      _
    $region55: #{tpu_custom_call.1} parent=1 // pred_check_branch
      %152 = sbr.rel (0) target = $region57
    $region56: #{tpu_custom_call.1} parent=1 // pred_region
      %153 = dma.done [#allocation6], 256
    $region57: #{tpu_custom_call.1} parent=1 // pred_fallthru
      _
    // Predicated region
    $region58: #{tpu_custom_call.1} parent=1 // pred_check
      _
    $region59: #{tpu_custom_call.1} parent=1 // pred_check_branch
      %155 = sbr.rel (0) target = $region61
    $region60: #{tpu_custom_call.1} parent=1 // pred_region
      %156 = dma.done [#allocation9], 65536
    $region61: #{tpu_custom_call.1} parent=1 // pred_fallthru
      _
    // Predicated region
    $region62: #{tpu_custom_call.1} parent=1 // pred_check
      _
    $region63: #{tpu_custom_call.1} parent=1 // pred_check_branch
      %158 = sbr.rel (0) target = $region65
    $region64: #{tpu_custom_call.1} parent=1 // pred_region
      %159 = dma.done [#allocation9], 64
    $region65: #{tpu_custom_call.1} parent=1 // pred_fallthru
      _
    // Predicated region
    $region66: #{tpu_custom_call.1} parent=1 // pred_check
      _
    $region67: #{tpu_custom_call.1} parent=1 // pred_check_branch
      %161 = sbr.rel (0) target = $region69
    $region68: #{tpu_custom_call.1} parent=1 // pred_region
      %162 = dma.done [#allocation12], 8192
    $region69: #{tpu_custom_call.1} parent=1 // pred_fallthru
      _
    // Predicated region
    $region70: #{tpu_custom_call.1} parent=1 // pred_check
      _
    $region71: #{tpu_custom_call.1} parent=1 // pred_check_branch
      %164 = sbr.rel (0) target = $region73
    $region72: #{tpu_custom_call.1} parent=1 // pred_region
      %165 = dma.done [#allocation12], 32
    $region73: #{tpu_custom_call.1} parent=1 // pred_fallthru
      _
    // Predicated region
    $region74: #{tpu_custom_call.1} parent=1 // pred_check
      _
    $region75: #{tpu_custom_call.1} parent=1 // pred_check_branch
      %167 = sbr.rel (0) target = $region77
    $region76: #{tpu_custom_call.1} parent=1 // pred_region
      %168 = dma.done [#allocation15], 2048
    $region77: #{tpu_custom_call.1} parent=1 // pred_fallthru
      _
    // Predicated region
    $region78: #{tpu_custom_call.1} parent=1 // pred_check
      _
    $region79: #{tpu_custom_call.1} parent=1 // pred_check_branch
      %170 = sbr.rel (0) target = $region81
    $region80: #{tpu_custom_call.1} parent=1 // pred_region
      %171 = dma.done [#allocation15], 16
    $region81: #{tpu_custom_call.1} parent=1 // pred_fallthru
      _
    // Predicated region
    $region82: #{tpu_custom_call.1} parent=1 // pred_check
      _
    $region83: #{tpu_custom_call.1} parent=1 // pred_check_branch
      %173 = sbr.rel (0) target = $region85
    $region84: #{tpu_custom_call.1} parent=1 // pred_region
      %174 = dma.done [#allocation18], 1024
    $region85: #{tpu_custom_call.1} parent=1 // pred_fallthru
      _
    // Predicated region
    $region86: #{tpu_custom_call.1} parent=1 // pred_check
      _
    $region87: #{tpu_custom_call.1} parent=1 // pred_check_branch
      %176 = sbr.rel (0) target = $region89
    $region88: #{tpu_custom_call.1} parent=1 // pred_region
      %177 = dma.done [#allocation18], 16
    $region89: #{tpu_custom_call.1} parent=1 // pred_fallthru
      _
    %v179 = vld [vmem:[#allocation2] sm:$0xff]
    %v180 = vld [vmem:[#allocation2 + $0x8] sm:$0xff]
    %v181 = vpack.c.bf16 %v180, %v179
    %v182 = vld [vmem:[#allocation5] sm:$0xff]
    %v183 = vld [vmem:[#allocation5 + $0x8] sm:$0xff]
    %v184 = vld [vmem:[#allocation5 + $0x10] sm:$0xff]
    %v185 = vld [vmem:[#allocation5 + $0x18] sm:$0xff]
    %v186 = vld [vmem:[#allocation5 + $0x20] sm:$0xff]
    %v187 = vld [vmem:[#allocation5 + $0x28] sm:$0xff]
    %v188 = vld [vmem:[#allocation5 + $0x30] sm:$0xff]
    %v189 = vld [vmem:[#allocation5 + $0x38] sm:$0xff]
    %v190 = vld [vmem:[#allocation5 + $0x40] sm:$0xff]
    %v191 = vld [vmem:[#allocation5 + $0x48] sm:$0xff]
    %v192 = vld [vmem:[#allocation5 + $0x50] sm:$0xff]
    %v193 = vld [vmem:[#allocation5 + $0x58] sm:$0xff]
    %v194 = vld [vmem:[#allocation5 + $0x60] sm:$0xff]
    %v195 = vld [vmem:[#allocation5 + $0x68] sm:$0xff]
    %v196 = vld [vmem:[#allocation5 + $0x70] sm:$0xff]
    %v197 = vld [vmem:[#allocation5 + $0x78] sm:$0xff]
    %v198 = vld [vmem:[#allocation5 + $0x80] sm:$0xff]
    %v199 = vld [vmem:[#allocation5 + $0x88] sm:$0xff]
    %v200 = vld [vmem:[#allocation5 + $0x90] sm:$0xff]
    %v201 = vld [vmem:[#allocation5 + $0x98] sm:$0xff]
    %v202 = vld [vmem:[#allocation5 + $0xa0] sm:$0xff]
    %v203 = vld [vmem:[#allocation5 + $0xa8] sm:$0xff]
    %v204 = vld [vmem:[#allocation5 + $0xb0] sm:$0xff]
    %v205 = vld [vmem:[#allocation5 + $0xb8] sm:$0xff]
    %v206 = vld [vmem:[#allocation5 + $0xc0] sm:$0xff]
    %v207 = vld [vmem:[#allocation5 + $0xc8] sm:$0xff]
    %v208 = vld [vmem:[#allocation5 + $0xd0] sm:$0xff]
    %v209 = vld [vmem:[#allocation5 + $0xd8] sm:$0xff]
    %v210 = vld [vmem:[#allocation5 + $0xe0] sm:$0xff]
    %v211 = vld [vmem:[#allocation5 + $0xe8] sm:$0xff]
    %v212 = vld [vmem:[#allocation5 + $0xf0] sm:$0xff]
    %v213 = vld [vmem:[#allocation5 + $0xf8] sm:$0xff]
    %v214 = vld [vmem:[#allocation7] sm:$0xff]
    %v215 = vld [vmem:[#allocation7 + $0x8] sm:$0xff]
    %v218 = vlaneseq
    %v219 = vshrl.u32 %v218, 7
    %v220 = vsub.s32 0, %v219
    %v221 = vrot.slane %v214, %v220
    %v222 = vlaneseq
    %v223 = vshrl.u32 %v222, 7
    %v224 = vsub.s32 1, %v223
    %v225 = vrot.slane %v214, %v224
    %v226 = vlaneseq
    %v227 = vshrl.u32 %v226, 7
    %v228 = vsub.s32 2, %v227
    %v229 = vrot.slane %v214, %v228
    %v230 = vlaneseq
    %v231 = vshrl.u32 %v230, 7
    %v232 = vsub.s32 3, %v231
    %v233 = vrot.slane %v214, %v232
    %v234 = vlaneseq
    %v235 = vshrl.u32 %v234, 7
    %v236 = vsub.s32 4, %v235
    %v237 = vrot.slane %v214, %v236
    %v238 = vlaneseq
    %v239 = vshrl.u32 %v238, 7
    %v240 = vsub.s32 5, %v239
    %v241 = vrot.slane %v214, %v240
    %v242 = vlaneseq
    %v243 = vshrl.u32 %v242, 7
    %v244 = vsub.s32 6, %v243
    %v245 = vrot.slane %v214, %v244
    %v246 = vlaneseq
    %v247 = vshrl.u32 %v246, 7
    %v248 = vsub.s32 7, %v247
    %v249 = vrot.slane %v214, %v248
    %v250 = vlaneseq
    %v251 = vshrl.u32 %v250, 7
    %v252 = vsub.s32 0, %v251
    %v253 = vrot.slane %v215, %v252
    %v254 = vlaneseq
    %v255 = vshrl.u32 %v254, 7
    %v256 = vsub.s32 1, %v255
    %v257 = vrot.slane %v215, %v256
    %v258 = vlaneseq
    %v259 = vshrl.u32 %v258, 7
    %v260 = vsub.s32 2, %v259
    %v261 = vrot.slane %v215, %v260
    %v262 = vlaneseq
    %v263 = vshrl.u32 %v262, 7
    %v264 = vsub.s32 3, %v263
    %v265 = vrot.slane %v215, %v264
    %v266 = vlaneseq
    %v267 = vshrl.u32 %v266, 7
    %v268 = vsub.s32 4, %v267
    %v269 = vrot.slane %v215, %v268
    %v270 = vlaneseq
    %v271 = vshrl.u32 %v270, 7
    %v272 = vsub.s32 5, %v271
    %v273 = vrot.slane %v215, %v272
    %v274 = vlaneseq
    %v275 = vshrl.u32 %v274, 7
    %v276 = vsub.s32 6, %v275
    %v277 = vrot.slane %v215, %v276
    %v278 = vlaneseq
    %v279 = vshrl.u32 %v278, 7
    %v280 = vsub.s32 7, %v279
    %v281 = vrot.slane %v215, %v280
    %v330 = vunpack.c.l.b16 %v182
    %v331 = vunpack.c.h.b16 %v182
    %v332 = vunpack.c.l.b16 %v183
    %v333 = vunpack.c.h.b16 %v183
    %v334 = vunpack.c.l.b16 %v184
    %v335 = vunpack.c.h.b16 %v184
    %v336 = vunpack.c.l.b16 %v185
    %v337 = vunpack.c.h.b16 %v185
    %v338 = vunpack.c.l.b16 %v186
    %v339 = vunpack.c.h.b16 %v186
    %v340 = vunpack.c.l.b16 %v187
    %v341 = vunpack.c.h.b16 %v187
    %v342 = vunpack.c.l.b16 %v188
    %v343 = vunpack.c.h.b16 %v188
    %v344 = vunpack.c.l.b16 %v189
    %v345 = vunpack.c.h.b16 %v189
    %v346 = vunpack.c.l.b16 %v190
    %v347 = vunpack.c.h.b16 %v190
    %v348 = vunpack.c.l.b16 %v191
    %v349 = vunpack.c.h.b16 %v191
    %v350 = vunpack.c.l.b16 %v192
    %v351 = vunpack.c.h.b16 %v192
    %v352 = vunpack.c.l.b16 %v193
    %v353 = vunpack.c.h.b16 %v193
    %v354 = vunpack.c.l.b16 %v194
    %v355 = vunpack.c.h.b16 %v194
    %v356 = vunpack.c.l.b16 %v195
    %v357 = vunpack.c.h.b16 %v195
    %v358 = vunpack.c.l.b16 %v196
    %v359 = vunpack.c.h.b16 %v196
    %v360 = vunpack.c.l.b16 %v197
    %v361 = vunpack.c.h.b16 %v197
    %v362 = vunpack.c.l.b16 %v198
    %v363 = vunpack.c.h.b16 %v198
    %v364 = vunpack.c.l.b16 %v199
    %v365 = vunpack.c.h.b16 %v199
    %v366 = vunpack.c.l.b16 %v200
    %v367 = vunpack.c.h.b16 %v200
    %v368 = vunpack.c.l.b16 %v201
    %v369 = vunpack.c.h.b16 %v201
    %v370 = vunpack.c.l.b16 %v202
    %v371 = vunpack.c.h.b16 %v202
    %v372 = vunpack.c.l.b16 %v203
    %v373 = vunpack.c.h.b16 %v203
    %v374 = vunpack.c.l.b16 %v204
    %v375 = vunpack.c.h.b16 %v204
    %v376 = vunpack.c.l.b16 %v205
    %v377 = vunpack.c.h.b16 %v205
    %v378 = vunpack.c.l.b16 %v206
    %v379 = vunpack.c.h.b16 %v206
    %v380 = vunpack.c.l.b16 %v207
    %v381 = vunpack.c.h.b16 %v207
    %v382 = vunpack.c.l.b16 %v208
    %v383 = vunpack.c.h.b16 %v208
    %v384 = vunpack.c.l.b16 %v209
    %v385 = vunpack.c.h.b16 %v209
    %v386 = vunpack.c.l.b16 %v210
    %v387 = vunpack.c.h.b16 %v210
    %v388 = vunpack.c.l.b16 %v211
    %v389 = vunpack.c.h.b16 %v211
    %v390 = vunpack.c.l.b16 %v212
    %v391 = vunpack.c.h.b16 %v212
    %v392 = vunpack.c.l.b16 %v213
    %v393 = vunpack.c.h.b16 %v213
    %v394 = vpack.c.b16 %v346, %v330
    %v395 = vpack.c.b16 %v347, %v331
    %v396 = vpack.c.b16 %v348, %v332
    %v397 = vpack.c.b16 %v349, %v333
    %v398 = vpack.c.b16 %v350, %v334
    %v399 = vpack.c.b16 %v351, %v335
    %v400 = vpack.c.b16 %v352, %v336
    %v401 = vpack.c.b16 %v353, %v337
    %v402 = vpack.c.b16 %v354, %v338
    %v403 = vpack.c.b16 %v355, %v339
    %v404 = vpack.c.b16 %v356, %v340
    %v405 = vpack.c.b16 %v357, %v341
    %v406 = vpack.c.b16 %v358, %v342
    %v407 = vpack.c.b16 %v359, %v343
    %v408 = vpack.c.b16 %v360, %v344
    %v409 = vpack.c.b16 %v361, %v345
    %v410 = vpack.c.b16 %v378, %v362
    %v411 = vpack.c.b16 %v379, %v363
    %v412 = vpack.c.b16 %v380, %v364
    %v413 = vpack.c.b16 %v381, %v365
    %v414 = vpack.c.b16 %v382, %v366
    %v415 = vpack.c.b16 %v383, %v367
    %v416 = vpack.c.b16 %v384, %v368
    %v417 = vpack.c.b16 %v385, %v369
    %v418 = vpack.c.b16 %v386, %v370
    %v419 = vpack.c.b16 %v387, %v371
    %v420 = vpack.c.b16 %v388, %v372
    %v421 = vpack.c.b16 %v389, %v373
    %v422 = vpack.c.b16 %v390, %v374
    %v423 = vpack.c.b16 %v391, %v375
    %v424 = vpack.c.b16 %v392, %v376
    %v425 = vpack.c.b16 %v393, %v377
    %vm458 = vcmask 261120
    %v460 = vsel %vm458, %v181, 0
    %462 = vmatprep.subr.bf16.mxu0 %v395
    %463 = vmatpush1.bf16.msra.mxu0 %v394
    %464 = vmatprep.subr.bf16.mxu0 %v411
    %465 = vmatpush1.bf16.msra.mxu0 %v410
    %466 = vmatprep.subr.bf16.mxu0 0
    %467 = vmatpush1.bf16.msra.mxu0 0
    %468 = vmatprep.subr.bf16.mxu0 0
    %469 = vmatpush1.bf16.msra.mxu0 0
    %470 = vmatprep.subr.bf16.mxu0 0
    %471 = vmatpush1.bf16.msra.mxu0 0
    %472 = vmatprep.subr.bf16.mxu0 0
    %473 = vmatpush1.bf16.msra.mxu0 0
    %474 = vmatprep.subr.bf16.mxu0 0
    %475 = vmatpush1.bf16.msra.mxu0 0
    %476 = vmatprep.subr.bf16.mxu0 0
    %477 = vmatpush1.bf16.msra.mxu0 0
    %478 = vmatprep.subr.bf16.mxu0 0
    %479 = vmatpush1.bf16.msra.mxu0 0
    %480 = vmatprep.subr.bf16.mxu0 0
    %481 = vmatpush1.bf16.msra.mxu0 0
    %482 = vmatprep.subr.bf16.mxu0 0
    %483 = vmatpush1.bf16.msra.mxu0 0
    %484 = vmatprep.subr.bf16.mxu0 0
    %485 = vmatpush1.bf16.msra.mxu0 0
    %486 = vmatprep.subr.bf16.mxu0 0
    %487 = vmatpush1.bf16.msra.mxu0 0
    %488 = vmatprep.subr.bf16.mxu0 0
    %489 = vmatpush1.bf16.msra.mxu0 0
    %490 = vmatprep.subr.bf16.mxu0 0
    %491 = vmatpush1.bf16.msra.mxu0 0
    %492 = vmatprep.subr.bf16.mxu0 0
    %493 = vmatpush1.bf16.msra.mxu0 0
    %494 = vmatprep.mubr.bf16.mxu0 0
    %495 = vmatmul.mubr.bf16.gmra.mrb[0].mxu0 %v460
    %v496 = vpop.f32.mrb[0].mxu0
    %v497 = vadd.f32 %v221, %v496
    %v498 = vpop.f32.mrb[0].mxu0
    %v499 = vadd.f32 %v225, %v498
    %v500 = vpop.f32.mrb[0].mxu0
    %v501 = vadd.f32 %v221, %v500
    %v502 = vpop.f32.mrb[0].mxu0
    %v503 = vadd.f32 %v225, %v502
    %504 = vdwg.mxu0
    %505 = vmatprep.subr.bf16.mxu0 %v397
    %506 = vmatpush1.bf16.msra.mxu0 %v396
    %507 = vmatprep.subr.bf16.mxu0 %v413
    %508 = vmatpush1.bf16.msra.mxu0 %v412
    %509 = vmatprep.subr.bf16.mxu0 0
    %510 = vmatpush1.bf16.msra.mxu0 0
    %511 = vmatprep.subr.bf16.mxu0 0
    %512 = vmatpush1.bf16.msra.mxu0 0
    %513 = vmatprep.subr.bf16.mxu0 0
    %514 = vmatpush1.bf16.msra.mxu0 0
    %515 = vmatprep.subr.bf16.mxu0 0
    %516 = vmatpush1.bf16.msra.mxu0 0
    %517 = vmatprep.subr.bf16.mxu0 0
    %518 = vmatpush1.bf16.msra.mxu0 0
    %519 = vmatprep.subr.bf16.mxu0 0
    %520 = vmatpush1.bf16.msra.mxu0 0
    %521 = vmatprep.subr.bf16.mxu0 0
    %522 = vmatpush1.bf16.msra.mxu0 0
    %523 = vmatprep.subr.bf16.mxu0 0
    %524 = vmatpush1.bf16.msra.mxu0 0
    %525 = vmatprep.subr.bf16.mxu0 0
    %526 = vmatpush1.bf16.msra.mxu0 0
    %527 = vmatprep.subr.bf16.mxu0 0
    %528 = vmatpush1.bf16.msra.mxu0 0
    %529 = vmatprep.subr.bf16.mxu0 0
    %530 = vmatpush1.bf16.msra.mxu0 0
    %531 = vmatprep.subr.bf16.mxu0 0
    %532 = vmatpush1.bf16.msra.mxu0 0
    %533 = vmatprep.subr.bf16.mxu0 0
    %534 = vmatpush1.bf16.msra.mxu0 0
    %535 = vmatprep.subr.bf16.mxu0 0
    %536 = vmatpush1.bf16.msra.mxu0 0
    %537 = vmatprep.mubr.bf16.mxu0 0
    %538 = vmatmul.mubr.bf16.gmra.mrb[0].mxu0 %v460
    %v539 = vpop.f32.mrb[0].mxu0
    %v540 = vadd.f32 %v229, %v539
    %v541 = vpop.f32.mrb[0].mxu0
    %v542 = vadd.f32 %v233, %v541
    %v543 = vpop.f32.mrb[0].mxu0
    %v544 = vadd.f32 %v229, %v543
    %v545 = vpop.f32.mrb[0].mxu0
    %v546 = vadd.f32 %v233, %v545
    %547 = vdwg.mxu0
    %548 = vmatprep.subr.bf16.mxu0 %v399
    %549 = vmatpush1.bf16.msra.mxu0 %v398
    %550 = vmatprep.subr.bf16.mxu0 %v415
    %551 = vmatpush1.bf16.msra.mxu0 %v414
    %552 = vmatprep.subr.bf16.mxu0 0
    %553 = vmatpush1.bf16.msra.mxu0 0
    %554 = vmatprep.subr.bf16.mxu0 0
    %555 = vmatpush1.bf16.msra.mxu0 0
    %556 = vmatprep.subr.bf16.mxu0 0
    %557 = vmatpush1.bf16.msra.mxu0 0
    %558 = vmatprep.subr.bf16.mxu0 0
    %559 = vmatpush1.bf16.msra.mxu0 0
    %560 = vmatprep.subr.bf16.mxu0 0
    %561 = vmatpush1.bf16.msra.mxu0 0
    %562 = vmatprep.subr.bf16.mxu0 0
    %563 = vmatpush1.bf16.msra.mxu0 0
    %564 = vmatprep.subr.bf16.mxu0 0
    %565 = vmatpush1.bf16.msra.mxu0 0
    %566 = vmatprep.subr.bf16.mxu0 0
    %567 = vmatpush1.bf16.msra.mxu0 0
    %568 = vmatprep.subr.bf16.mxu0 0
    %569 = vmatpush1.bf16.msra.mxu0 0
    %570 = vmatprep.subr.bf16.mxu0 0
    %571 = vmatpush1.bf16.msra.mxu0 0
    %572 = vmatprep.subr.bf16.mxu0 0
    %573 = vmatpush1.bf16.msra.mxu0 0
    %574 = vmatprep.subr.bf16.mxu0 0
    %575 = vmatpush1.bf16.msra.mxu0 0
    %576 = vmatprep.subr.bf16.mxu0 0
    %577 = vmatpush1.bf16.msra.mxu0 0
    %578 = vmatprep.subr.bf16.mxu0 0
    %579 = vmatpush1.bf16.msra.mxu0 0
    %580 = vmatprep.mubr.bf16.mxu0 0
    %581 = vmatmul.mubr.bf16.gmra.mrb[0].mxu0 %v460
    %v582 = vpop.f32.mrb[0].mxu0
    %v583 = vadd.f32 %v237, %v582
    %v584 = vpop.f32.mrb[0].mxu0
    %v585 = vadd.f32 %v241, %v584
    %v586 = vpop.f32.mrb[0].mxu0
    %v587 = vadd.f32 %v237, %v586
    %v588 = vpop.f32.mrb[0].mxu0
    %v589 = vadd.f32 %v241, %v588
    %590 = vdwg.mxu0
    %591 = vmatprep.subr.bf16.mxu0 %v401
    %592 = vmatpush1.bf16.msra.mxu0 %v400
    %593 = vmatprep.subr.bf16.mxu0 %v417
    %594 = vmatpush1.bf16.msra.mxu0 %v416
    %595 = vmatprep.subr.bf16.mxu0 0
    %596 = vmatpush1.bf16.msra.mxu0 0
    %597 = vmatprep.subr.bf16.mxu0 0
    %598 = vmatpush1.bf16.msra.mxu0 0
    %599 = vmatprep.subr.bf16.mxu0 0
    %600 = vmatpush1.bf16.msra.mxu0 0
    %601 = vmatprep.subr.bf16.mxu0 0
    %602 = vmatpush1.bf16.msra.mxu0 0
    %603 = vmatprep.subr.bf16.mxu0 0
    %604 = vmatpush1.bf16.msra.mxu0 0
    %605 = vmatprep.subr.bf16.mxu0 0
    %606 = vmatpush1.bf16.msra.mxu0 0
    %607 = vmatprep.subr.bf16.mxu0 0
    %608 = vmatpush1.bf16.msra.mxu0 0
    %609 = vmatprep.subr.bf16.mxu0 0
    %610 = vmatpush1.bf16.msra.mxu0 0
    %611 = vmatprep.subr.bf16.mxu0 0
    %612 = vmatpush1.bf16.msra.mxu0 0
    %613 = vmatprep.subr.bf16.mxu0 0
    %614 = vmatpush1.bf16.msra.mxu0 0
    %615 = vmatprep.subr.bf16.mxu0 0
    %616 = vmatpush1.bf16.msra.mxu0 0
    %617 = vmatprep.subr.bf16.mxu0 0
    %618 = vmatpush1.bf16.msra.mxu0 0
    %619 = vmatprep.subr.bf16.mxu0 0
    %620 = vmatpush1.bf16.msra.mxu0 0
    %621 = vmatprep.subr.bf16.mxu0 0
    %622 = vmatpush1.bf16.msra.mxu0 0
    %623 = vmatprep.mubr.bf16.mxu0 0
    %624 = vmatmul.mubr.bf16.gmra.mrb[0].mxu0 %v460
    %v625 = vpop.f32.mrb[0].mxu0
    %v626 = vadd.f32 %v245, %v625
    %v627 = vpop.f32.mrb[0].mxu0
    %v628 = vadd.f32 %v249, %v627
    %v629 = vpop.f32.mrb[0].mxu0
    %v630 = vadd.f32 %v245, %v629
    %v631 = vpop.f32.mrb[0].mxu0
    %v632 = vadd.f32 %v249, %v631
    %633 = vdwg.mxu0
    %634 = vmatprep.subr.bf16.mxu0 %v403
    %635 = vmatpush1.bf16.msra.mxu0 %v402
    %636 = vmatprep.subr.bf16.mxu0 %v419
    %637 = vmatpush1.bf16.msra.mxu0 %v418
    %638 = vmatprep.subr.bf16.mxu0 0
    %639 = vmatpush1.bf16.msra.mxu0 0
    %640 = vmatprep.subr.bf16.mxu0 0
    %641 = vmatpush1.bf16.msra.mxu0 0
    %642 = vmatprep.subr.bf16.mxu0 0
    %643 = vmatpush1.bf16.msra.mxu0 0
    %644 = vmatprep.subr.bf16.mxu0 0
    %645 = vmatpush1.bf16.msra.mxu0 0
    %646 = vmatprep.subr.bf16.mxu0 0
    %647 = vmatpush1.bf16.msra.mxu0 0
    %648 = vmatprep.subr.bf16.mxu0 0
    %649 = vmatpush1.bf16.msra.mxu0 0
    %650 = vmatprep.subr.bf16.mxu0 0
    %651 = vmatpush1.bf16.msra.mxu0 0
    %652 = vmatprep.subr.bf16.mxu0 0
    %653 = vmatpush1.bf16.msra.mxu0 0
    %654 = vmatprep.subr.bf16.mxu0 0
    %655 = vmatpush1.bf16.msra.mxu0 0
    %656 = vmatprep.subr.bf16.mxu0 0
    %657 = vmatpush1.bf16.msra.mxu0 0
    %658 = vmatprep.subr.bf16.mxu0 0
    %659 = vmatpush1.bf16.msra.mxu0 0
    %660 = vmatprep.subr.bf16.mxu0 0
    %661 = vmatpush1.bf16.msra.mxu0 0
    %662 = vmatprep.subr.bf16.mxu0 0
    %663 = vmatpush1.bf16.msra.mxu0 0
    %664 = vmatprep.subr.bf16.mxu0 0
    %665 = vmatpush1.bf16.msra.mxu0 0
    %666 = vmatprep.mubr.bf16.mxu0 0
    %667 = vmatmul.mubr.bf16.gmra.mrb[0].mxu0 %v460
    %v668 = vpop.f32.mrb[0].mxu0
    %v669 = vadd.f32 %v253, %v668
    %v670 = vpop.f32.mrb[0].mxu0
    %v671 = vadd.f32 %v257, %v670
    %v672 = vpop.f32.mrb[0].mxu0
    %v673 = vadd.f32 %v253, %v672
    %v674 = vpop.f32.mrb[0].mxu0
    %v675 = vadd.f32 %v257, %v674
    %676 = vdwg.mxu0
    %677 = vmatprep.subr.bf16.mxu0 %v405
    %678 = vmatpush1.bf16.msra.mxu0 %v404
    %679 = vmatprep.subr.bf16.mxu0 %v421
    %680 = vmatpush1.bf16.msra.mxu0 %v420
    %681 = vmatprep.subr.bf16.mxu0 0
    %682 = vmatpush1.bf16.msra.mxu0 0
    %683 = vmatprep.subr.bf16.mxu0 0
    %684 = vmatpush1.bf16.msra.mxu0 0
    %685 = vmatprep.subr.bf16.mxu0 0
    %686 = vmatpush1.bf16.msra.mxu0 0
    %687 = vmatprep.subr.bf16.mxu0 0
    %688 = vmatpush1.bf16.msra.mxu0 0
    %689 = vmatprep.subr.bf16.mxu0 0
    %690 = vmatpush1.bf16.msra.mxu0 0
    %691 = vmatprep.subr.bf16.mxu0 0
    %692 = vmatpush1.bf16.msra.mxu0 0
    %693 = vmatprep.subr.bf16.mxu0 0
    %694 = vmatpush1.bf16.msra.mxu0 0
    %695 = vmatprep.subr.bf16.mxu0 0
    %696 = vmatpush1.bf16.msra.mxu0 0
    %697 = vmatprep.subr.bf16.mxu0 0
    %698 = vmatpush1.bf16.msra.mxu0 0
    %699 = vmatprep.subr.bf16.mxu0 0
    %700 = vmatpush1.bf16.msra.mxu0 0
    %701 = vmatprep.subr.bf16.mxu0 0
    %702 = vmatpush1.bf16.msra.mxu0 0
    %703 = vmatprep.subr.bf16.mxu0 0
    %704 = vmatpush1.bf16.msra.mxu0 0
    %705 = vmatprep.subr.bf16.mxu0 0
    %706 = vmatpush1.bf16.msra.mxu0 0
    %707 = vmatprep.subr.bf16.mxu0 0
    %708 = vmatpush1.bf16.msra.mxu0 0
    %709 = vmatprep.mubr.bf16.mxu0 0
    %710 = vmatmul.mubr.bf16.gmra.mrb[0].mxu0 %v460
    %v711 = vpop.f32.mrb[0].mxu0
    %v712 = vadd.f32 %v261, %v711
    %v713 = vpop.f32.mrb[0].mxu0
    %v714 = vadd.f32 %v265, %v713
    %v715 = vpop.f32.mrb[0].mxu0
    %v716 = vadd.f32 %v261, %v715
    %v717 = vpop.f32.mrb[0].mxu0
    %v718 = vadd.f32 %v265, %v717
    %719 = vdwg.mxu0
    %720 = vmatprep.subr.bf16.mxu0 %v407
    %721 = vmatpush1.bf16.msra.mxu0 %v406
    %722 = vmatprep.subr.bf16.mxu0 %v423
    %723 = vmatpush1.bf16.msra.mxu0 %v422
    %724 = vmatprep.subr.bf16.mxu0 0
    %725 = vmatpush1.bf16.msra.mxu0 0
    %726 = vmatprep.subr.bf16.mxu0 0
    %727 = vmatpush1.bf16.msra.mxu0 0
    %728 = vmatprep.subr.bf16.mxu0 0
    %729 = vmatpush1.bf16.msra.mxu0 0
    %730 = vmatprep.subr.bf16.mxu0 0
    %731 = vmatpush1.bf16.msra.mxu0 0
    %732 = vmatprep.subr.bf16.mxu0 0
    %733 = vmatpush1.bf16.msra.mxu0 0
    %734 = vmatprep.subr.bf16.mxu0 0
    %735 = vmatpush1.bf16.msra.mxu0 0
    %736 = vmatprep.subr.bf16.mxu0 0
    %737 = vmatpush1.bf16.msra.mxu0 0
    %738 = vmatprep.subr.bf16.mxu0 0
    %739 = vmatpush1.bf16.msra.mxu0 0
    %740 = vmatprep.subr.bf16.mxu0 0
    %741 = vmatpush1.bf16.msra.mxu0 0
    %742 = vmatprep.subr.bf16.mxu0 0
    %743 = vmatpush1.bf16.msra.mxu0 0
    %744 = vmatprep.subr.bf16.mxu0 0
    %745 = vmatpush1.bf16.msra.mxu0 0
    %746 = vmatprep.subr.bf16.mxu0 0
    %747 = vmatpush1.bf16.msra.mxu0 0
    %748 = vmatprep.subr.bf16.mxu0 0
    %749 = vmatpush1.bf16.msra.mxu0 0
    %750 = vmatprep.subr.bf16.mxu0 0
    %751 = vmatpush1.bf16.msra.mxu0 0
    %752 = vmatprep.mubr.bf16.mxu0 0
    %753 = vmatmul.mubr.bf16.gmra.mrb[0].mxu0 %v460
    %v754 = vpop.f32.mrb[0].mxu0
    %v755 = vadd.f32 %v269, %v754
    %v756 = vpop.f32.mrb[0].mxu0
    %v757 = vadd.f32 %v273, %v756
    %v758 = vpop.f32.mrb[0].mxu0
    %v759 = vadd.f32 %v269, %v758
    %v760 = vpop.f32.mrb[0].mxu0
    %v761 = vadd.f32 %v273, %v760
    %762 = vdwg.mxu0
    %763 = vmatprep.subr.bf16.mxu0 %v409
    %764 = vmatpush1.bf16.msra.mxu0 %v408
    %765 = vmatprep.subr.bf16.mxu0 %v425
    %766 = vmatpush1.bf16.msra.mxu0 %v424
    %767 = vmatprep.subr.bf16.mxu0 0
    %768 = vmatpush1.bf16.msra.mxu0 0
    %769 = vmatprep.subr.bf16.mxu0 0
    %770 = vmatpush1.bf16.msra.mxu0 0
    %771 = vmatprep.subr.bf16.mxu0 0
    %772 = vmatpush1.bf16.msra.mxu0 0
    %773 = vmatprep.subr.bf16.mxu0 0
    %774 = vmatpush1.bf16.msra.mxu0 0
    %775 = vmatprep.subr.bf16.mxu0 0
    %776 = vmatpush1.bf16.msra.mxu0 0
    %777 = vmatprep.subr.bf16.mxu0 0
    %778 = vmatpush1.bf16.msra.mxu0 0
    %779 = vmatprep.subr.bf16.mxu0 0
    %780 = vmatpush1.bf16.msra.mxu0 0
    %781 = vmatprep.subr.bf16.mxu0 0
    %782 = vmatpush1.bf16.msra.mxu0 0
    %783 = vmatprep.subr.bf16.mxu0 0
    %784 = vmatpush1.bf16.msra.mxu0 0
    %785 = vmatprep.subr.bf16.mxu0 0
    %786 = vmatpush1.bf16.msra.mxu0 0
    %787 = vmatprep.subr.bf16.mxu0 0
    %788 = vmatpush1.bf16.msra.mxu0 0
    %789 = vmatprep.subr.bf16.mxu0 0
    %790 = vmatpush1.bf16.msra.mxu0 0
    %791 = vmatprep.subr.bf16.mxu0 0
    %792 = vmatpush1.bf16.msra.mxu0 0
    %793 = vmatprep.subr.bf16.mxu0 0
    %794 = vmatpush1.bf16.msra.mxu0 0
    %795 = vmatprep.mubr.bf16.mxu0 0
    %796 = vmatmul.mubr.bf16.gmra.mrb[0].mxu0 %v460
    %v797 = vpop.f32.mrb[0].mxu0
    %v798 = vadd.f32 %v277, %v797
    %v799 = vpop.f32.mrb[0].mxu0
    %v800 = vadd.f32 %v281, %v799
    %v801 = vpop.f32.mrb[0].mxu0
    %v802 = vadd.f32 %v277, %v801
    %v803 = vpop.f32.mrb[0].mxu0
    %v804 = vadd.f32 %v281, %v803
    %805 = vdwg.mxu0
    %v806 = vmax.f32 %v497, 0.0
    %v807 = vmax.f32 %v499, 0.0
    %v808 = vmax.f32 %v540, 0.0
    %v809 = vmax.f32 %v542, 0.0
    %v810 = vmax.f32 %v583, 0.0
    %v811 = vmax.f32 %v585, 0.0
    %v812 = vmax.f32 %v626, 0.0
    %v813 = vmax.f32 %v628, 0.0
    %v814 = vmax.f32 %v669, 0.0
    %v815 = vmax.f32 %v671, 0.0
    %v816 = vmax.f32 %v712, 0.0
    %v817 = vmax.f32 %v714, 0.0
    %v818 = vmax.f32 %v755, 0.0
    %v819 = vmax.f32 %v757, 0.0
    %v820 = vmax.f32 %v798, 0.0
    %v821 = vmax.f32 %v800, 0.0
    %v822 = vmax.f32 %v501, 0.0
    %v823 = vmax.f32 %v503, 0.0
    %v824 = vmax.f32 %v544, 0.0
    %v825 = vmax.f32 %v546, 0.0
    %v826 = vmax.f32 %v587, 0.0
    %v827 = vmax.f32 %v589, 0.0
    %v828 = vmax.f32 %v630, 0.0
    %v829 = vmax.f32 %v632, 0.0
    %v830 = vmax.f32 %v673, 0.0
    %v831 = vmax.f32 %v675, 0.0
    %v832 = vmax.f32 %v716, 0.0
    %v833 = vmax.f32 %v718, 0.0
    %v834 = vmax.f32 %v759, 0.0
    %v835 = vmax.f32 %v761, 0.0
    %v836 = vmax.f32 %v802, 0.0
    %v837 = vmax.f32 %v804, 0.0
    %v838 = vpack.c.bf16 %v822, %v806
    %v839 = vpack.c.bf16 %v823, %v807
    %v840 = vpack.c.bf16 %v824, %v808
    %v841 = vpack.c.bf16 %v825, %v809
    %v842 = vpack.c.bf16 %v826, %v810
    %v843 = vpack.c.bf16 %v827, %v811
    %v844 = vpack.c.bf16 %v828, %v812
    %v845 = vpack.c.bf16 %v829, %v813
    %v846 = vpack.c.bf16 %v830, %v814
    %v847 = vpack.c.bf16 %v831, %v815
    %v848 = vpack.c.bf16 %v832, %v816
    %v849 = vpack.c.bf16 %v833, %v817
    %v850 = vpack.c.bf16 %v834, %v818
    %v851 = vpack.c.bf16 %v835, %v819
    %v852 = vpack.c.bf16 %v836, %v820
    %v853 = vpack.c.bf16 %v837, %v821
    %v854 = vld [vmem:[#allocation8] sm:$0xff]
    %v855 = vld [vmem:[#allocation8 + $0x8] sm:$0xff]
    %v856 = vld [vmem:[#allocation8 + $0x10] sm:$0xff]
    %v857 = vld [vmem:[#allocation8 + $0x18] sm:$0xff]
    %v858 = vld [vmem:[#allocation8 + $0x20] sm:$0xff]
    %v859 = vld [vmem:[#allocation8 + $0x28] sm:$0xff]
    %v860 = vld [vmem:[#allocation8 + $0x30] sm:$0xff]
    %v861 = vld [vmem:[#allocation8 + $0x38] sm:$0xff]
    %v862 = vld [vmem:[#allocation8 + $0x40] sm:$0xff]
    %v863 = vld [vmem:[#allocation8 + $0x48] sm:$0xff]
    %v864 = vld [vmem:[#allocation8 + $0x50] sm:$0xff]
    %v865 = vld [vmem:[#allocation8 + $0x58] sm:$0xff]
    %v866 = vld [vmem:[#allocation8 + $0x60] sm:$0xff]
    %v867 = vld [vmem:[#allocation8 + $0x68] sm:$0xff]
    %v868 = vld [vmem:[#allocation8 + $0x70] sm:$0xff]
    %v869 = vld [vmem:[#allocation8 + $0x78] sm:$0xff]
    %v870 = vld [vmem:[#allocation8 + $0x80] sm:$0xff]
    %v871 = vld [vmem:[#allocation8 + $0x88] sm:$0xff]
    %v872 = vld [vmem:[#allocation8 + $0x90] sm:$0xff]
    %v873 = vld [vmem:[#allocation8 + $0x98] sm:$0xff]
    %v874 = vld [vmem:[#allocation8 + $0xa0] sm:$0xff]
    %v875 = vld [vmem:[#allocation8 + $0xa8] sm:$0xff]
    %v876 = vld [vmem:[#allocation8 + $0xb0] sm:$0xff]
    %v877 = vld [vmem:[#allocation8 + $0xb8] sm:$0xff]
    %v878 = vld [vmem:[#allocation8 + $0xc0] sm:$0xff]
    %v879 = vld [vmem:[#allocation8 + $0xc8] sm:$0xff]
    %v880 = vld [vmem:[#allocation8 + $0xd0] sm:$0xff]
    %v881 = vld [vmem:[#allocation8 + $0xd8] sm:$0xff]
    %v882 = vld [vmem:[#allocation8 + $0xe0] sm:$0xff]
    %v883 = vld [vmem:[#allocation8 + $0xe8] sm:$0xff]
    %v884 = vld [vmem:[#allocation8 + $0xf0] sm:$0xff]
    %v885 = vld [vmem:[#allocation8 + $0xf8] sm:$0xff]
    %v886 = vld [vmem:[#allocation8 + $0x100] sm:$0xff]
    %v887 = vld [vmem:[#allocation8 + $0x108] sm:$0xff]
    %v888 = vld [vmem:[#allocation8 + $0x110] sm:$0xff]
    %v889 = vld [vmem:[#allocation8 + $0x118] sm:$0xff]
    %v890 = vld [vmem:[#allocation8 + $0x120] sm:$0xff]
    %v891 = vld [vmem:[#allocation8 + $0x128] sm:$0xff]
    %v892 = vld [vmem:[#allocation8 + $0x130] sm:$0xff]
    %v893 = vld [vmem:[#allocation8 + $0x138] sm:$0xff]
    %v894 = vld [vmem:[#allocation8 + $0x140] sm:$0xff]
    %v895 = vld [vmem:[#allocation8 + $0x148] sm:$0xff]
    %v896 = vld [vmem:[#allocation8 + $0x150] sm:$0xff]
    %v897 = vld [vmem:[#allocation8 + $0x158] sm:$0xff]
    %v898 = vld [vmem:[#allocation8 + $0x160] sm:$0xff]
    %v899 = vld [vmem:[#allocation8 + $0x168] sm:$0xff]
    %v900 = vld [vmem:[#allocation8 + $0x170] sm:$0xff]
    %v901 = vld [vmem:[#allocation8 + $0x178] sm:$0xff]
    %v902 = vld [vmem:[#allocation8 + $0x180] sm:$0xff]
    %v903 = vld [vmem:[#allocation8 + $0x188] sm:$0xff]
    %v904 = vld [vmem:[#allocation8 + $0x190] sm:$0xff]
    %v905 = vld [vmem:[#allocation8 + $0x198] sm:$0xff]
    %v906 = vld [vmem:[#allocation8 + $0x1a0] sm:$0xff]
    %v907 = vld [vmem:[#allocation8 + $0x1a8] sm:$0xff]
    %v908 = vld [vmem:[#allocation8 + $0x1b0] sm:$0xff]
    %v909 = vld [vmem:[#allocation8 + $0x1b8] sm:$0xff]
    %v910 = vld [vmem:[#allocation8 + $0x1c0] sm:$0xff]
    %v911 = vld [vmem:[#allocation8 + $0x1c8] sm:$0xff]
    %v912 = vld [vmem:[#allocation8 + $0x1d0] sm:$0xff]
    %v913 = vld [vmem:[#allocation8 + $0x1d8] sm:$0xff]
    %v914 = vld [vmem:[#allocation8 + $0x1e0] sm:$0xff]
    %v915 = vld [vmem:[#allocation8 + $0x1e8] sm:$0xff]
    %v916 = vld [vmem:[#allocation8 + $0x1f0] sm:$0xff]
    %v917 = vld [vmem:[#allocation8 + $0x1f8] sm:$0xff]
    %v918 = vld [vmem:[#allocation8 + $0x200] sm:$0xff]
    %v919 = vld [vmem:[#allocation8 + $0x208] sm:$0xff]
    %v920 = vld [vmem:[#allocation8 + $0x210] sm:$0xff]
    %v921 = vld [vmem:[#allocation8 + $0x218] sm:$0xff]
    %v922 = vld [vmem:[#allocation8 + $0x220] sm:$0xff]
    %v923 = vld [vmem:[#allocation8 + $0x228] sm:$0xff]
    %v924 = vld [vmem:[#allocation8 + $0x230] sm:$0xff]
    %v925 = vld [vmem:[#allocation8 + $0x238] sm:$0xff]
    %v926 = vld [vmem:[#allocation8 + $0x240] sm:$0xff]
    %v927 = vld [vmem:[#allocation8 + $0x248] sm:$0xff]
    %v928 = vld [vmem:[#allocation8 + $0x250] sm:$0xff]
    %v929 = vld [vmem:[#allocation8 + $0x258] sm:$0xff]
    %v930 = vld [vmem:[#allocation8 + $0x260] sm:$0xff]
    %v931 = vld [vmem:[#allocation8 + $0x268] sm:$0xff]
    %v932 = vld [vmem:[#allocation8 + $0x270] sm:$0xff]
    %v933 = vld [vmem:[#allocation8 + $0x278] sm:$0xff]
    %v934 = vld [vmem:[#allocation8 + $0x280] sm:$0xff]
    %v935 = vld [vmem:[#allocation8 + $0x288] sm:$0xff]
    %v936 = vld [vmem:[#allocation8 + $0x290] sm:$0xff]
    %v937 = vld [vmem:[#allocation8 + $0x298] sm:$0xff]
    %v938 = vld [vmem:[#allocation8 + $0x2a0] sm:$0xff]
    %v939 = vld [vmem:[#allocation8 + $0x2a8] sm:$0xff]
    %v940 = vld [vmem:[#allocation8 + $0x2b0] sm:$0xff]
    %v941 = vld [vmem:[#allocation8 + $0x2b8] sm:$0xff]
    %v942 = vld [vmem:[#allocation8 + $0x2c0] sm:$0xff]
    %v943 = vld [vmem:[#allocation8 + $0x2c8] sm:$0xff]
    %v944 = vld [vmem:[#allocation8 + $0x2d0] sm:$0xff]
    %v945 = vld [vmem:[#allocation8 + $0x2d8] sm:$0xff]
    %v946 = vld [vmem:[#allocation8 + $0x2e0] sm:$0xff]
    %v947 = vld [vmem:[#allocation8 + $0x2e8] sm:$0xff]
    %v948 = vld [vmem:[#allocation8 + $0x2f0] sm:$0xff]
    %v949 = vld [vmem:[#allocation8 + $0x2f8] sm:$0xff]
    %v950 = vld [vmem:[#allocation8 + $0x300] sm:$0xff]
    %v951 = vld [vmem:[#allocation8 + $0x308] sm:$0xff]
    %v952 = vld [vmem:[#allocation8 + $0x310] sm:$0xff]
    %v953 = vld [vmem:[#allocation8 + $0x318] sm:$0xff]
    %v954 = vld [vmem:[#allocation8 + $0x320] sm:$0xff]
    %v955 = vld [vmem:[#allocation8 + $0x328] sm:$0xff]
    %v956 = vld [vmem:[#allocation8 + $0x330] sm:$0xff]
    %v957 = vld [vmem:[#allocation8 + $0x338] sm:$0xff]
    %v958 = vld [vmem:[#allocation8 + $0x340] sm:$0xff]
    %v959 = vld [vmem:[#allocation8 + $0x348] sm:$0xff]
    %v960 = vld [vmem:[#allocation8 + $0x350] sm:$0xff]
    %v961 = vld [vmem:[#allocation8 + $0x358] sm:$0xff]
    %v962 = vld [vmem:[#allocation8 + $0x360] sm:$0xff]
    %v963 = vld [vmem:[#allocation8 + $0x368] sm:$0xff]
    %v964 = vld [vmem:[#allocation8 + $0x370] sm:$0xff]
    %v965 = vld [vmem:[#allocation8 + $0x378] sm:$0xff]
    %v966 = vld [vmem:[#allocation8 + $0x380] sm:$0xff]
    %v967 = vld [vmem:[#allocation8 + $0x388] sm:$0xff]
    %v968 = vld [vmem:[#allocation8 + $0x390] sm:$0xff]
    %v969 = vld [vmem:[#allocation8 + $0x398] sm:$0xff]
    %v970 = vld [vmem:[#allocation8 + $0x3a0] sm:$0xff]
    %v971 = vld [vmem:[#allocation8 + $0x3a8] sm:$0xff]
    %v972 = vld [vmem:[#allocation8 + $0x3b0] sm:$0xff]
    %v973 = vld [vmem:[#allocation8 + $0x3b8] sm:$0xff]
    %v974 = vld [vmem:[#allocation8 + $0x3c0] sm:$0xff]
    %v975 = vld [vmem:[#allocation8 + $0x3c8] sm:$0xff]
    %v976 = vld [vmem:[#allocation8 + $0x3d0] sm:$0xff]
    %v977 = vld [vmem:[#allocation8 + $0x3d8] sm:$0xff]
    %v978 = vld [vmem:[#allocation8 + $0x3e0] sm:$0xff]
    %v979 = vld [vmem:[#allocation8 + $0x3e8] sm:$0xff]
    %v980 = vld [vmem:[#allocation8 + $0x3f0] sm:$0xff]
    %v981 = vld [vmem:[#allocation8 + $0x3f8] sm:$0xff]
    %v982 = vld [vmem:[#allocation8 + $0x400] sm:$0xff]
    %v983 = vld [vmem:[#allocation8 + $0x408] sm:$0xff]
    %v984 = vld [vmem:[#allocation8 + $0x410] sm:$0xff]
    %v985 = vld [vmem:[#allocation8 + $0x418] sm:$0xff]
    %v986 = vld [vmem:[#allocation8 + $0x420] sm:$0xff]
    %v987 = vld [vmem:[#allocation8 + $0x428] sm:$0xff]
    %v988 = vld [vmem:[#allocation8 + $0x430] sm:$0xff]
    %v989 = vld [vmem:[#allocation8 + $0x438] sm:$0xff]
    %v990 = vld [vmem:[#allocation8 + $0x440] sm:$0xff]
    %v991 = vld [vmem:[#allocation8 + $0x448] sm:$0xff]
    %v992 = vld [vmem:[#allocation8 + $0x450] sm:$0xff]
    %v993 = vld [vmem:[#allocation8 + $0x458] sm:$0xff]
    %v994 = vld [vmem:[#allocation8 + $0x460] sm:$0xff]
    %v995 = vld [vmem:[#allocation8 + $0x468] sm:$0xff]
    %v996 = vld [vmem:[#allocation8 + $0x470] sm:$0xff]
    %v997 = vld [vmem:[#allocation8 + $0x478] sm:$0xff]
    %v998 = vld [vmem:[#allocation8 + $0x480] sm:$0xff]
    %v999 = vld [vmem:[#allocation8 + $0x488] sm:$0xff]
    %v1000 = vld [vmem:[#allocation8 + $0x490] sm:$0xff]
    %v1001 = vld [vmem:[#allocation8 + $0x498] sm:$0xff]
    %v1002 = vld [vmem:[#allocation8 + $0x4a0] sm:$0xff]
    %v1003 = vld [vmem:[#allocation8 + $0x4a8] sm:$0xff]
    %v1004 = vld [vmem:[#allocation8 + $0x4b0] sm:$0xff]
    %v1005 = vld [vmem:[#allocation8 + $0x4b8] sm:$0xff]
    %v1006 = vld [vmem:[#allocation8 + $0x4c0] sm:$0xff]
    %v1007 = vld [vmem:[#allocation8 + $0x4c8] sm:$0xff]
    %v1008 = vld [vmem:[#allocation8 + $0x4d0] sm:$0xff]
    %v1009 = vld [vmem:[#allocation8 + $0x4d8] sm:$0xff]
    %v1010 = vld [vmem:[#allocation8 + $0x4e0] sm:$0xff]
    %v1011 = vld [vmem:[#allocation8 + $0x4e8] sm:$0xff]
    %v1012 = vld [vmem:[#allocation8 + $0x4f0] sm:$0xff]
    %v1013 = vld [vmem:[#allocation8 + $0x4f8] sm:$0xff]
    %v1014 = vld [vmem:[#allocation8 + $0x500] sm:$0xff]
    %v1015 = vld [vmem:[#allocation8 + $0x508] sm:$0xff]
    %v1016 = vld [vmem:[#allocation8 + $0x510] sm:$0xff]
    %v1017 = vld [vmem:[#allocation8 + $0x518] sm:$0xff]
    %v1018 = vld [vmem:[#allocation8 + $0x520] sm:$0xff]
    %v1019 = vld [vmem:[#allocation8 + $0x528] sm:$0xff]
    %v1020 = vld [vmem:[#allocation8 + $0x530] sm:$0xff]
    %v1021 = vld [vmem:[#allocation8 + $0x538] sm:$0xff]
    %v1022 = vld [vmem:[#allocation8 + $0x540] sm:$0xff]
    %v1023 = vld [vmem:[#allocation8 + $0x548] sm:$0xff]
    %v1024 = vld [vmem:[#allocation8 + $0x550] sm:$0xff]
    %v1025 = vld [vmem:[#allocation8 + $0x558] sm:$0xff]
    %v1026 = vld [vmem:[#allocation8 + $0x560] sm:$0xff]
    %v1027 = vld [vmem:[#allocation8 + $0x568] sm:$0xff]
    %v1028 = vld [vmem:[#allocation8 + $0x570] sm:$0xff]
    %v1029 = vld [vmem:[#allocation8 + $0x578] sm:$0xff]
    %v1030 = vld [vmem:[#allocation8 + $0x580] sm:$0xff]
    %v1031 = vld [vmem:[#allocation8 + $0x588] sm:$0xff]
    %v1032 = vld [vmem:[#allocation8 + $0x590] sm:$0xff]
    %v1033 = vld [vmem:[#allocation8 + $0x598] sm:$0xff]
    %v1034 = vld [vmem:[#allocation8 + $0x5a0] sm:$0xff]
    %v1035 = vld [vmem:[#allocation8 + $0x5a8] sm:$0xff]
    %v1036 = vld [vmem:[#allocation8 + $0x5b0] sm:$0xff]
    %v1037 = vld [vmem:[#allocation8 + $0x5b8] sm:$0xff]
    %v1038 = vld [vmem:[#allocation8 + $0x5c0] sm:$0xff]
    %v1039 = vld [vmem:[#allocation8 + $0x5c8] sm:$0xff]
    %v1040 = vld [vmem:[#allocation8 + $0x5d0] sm:$0xff]
    %v1041 = vld [vmem:[#allocation8 + $0x5d8] sm:$0xff]
    %v1042 = vld [vmem:[#allocation8 + $0x5e0] sm:$0xff]
    %v1043 = vld [vmem:[#allocation8 + $0x5e8] sm:$0xff]
    %v1044 = vld [vmem:[#allocation8 + $0x5f0] sm:$0xff]
    %v1045 = vld [vmem:[#allocation8 + $0x5f8] sm:$0xff]
    %v1046 = vld [vmem:[#allocation8 + $0x600] sm:$0xff]
    %v1047 = vld [vmem:[#allocation8 + $0x608] sm:$0xff]
    %v1048 = vld [vmem:[#allocation8 + $0x610] sm:$0xff]
    %v1049 = vld [vmem:[#allocation8 + $0x618] sm:$0xff]
    %v1050 = vld [vmem:[#allocation8 + $0x620] sm:$0xff]
    %v1051 = vld [vmem:[#allocation8 + $0x628] sm:$0xff]
    %v1052 = vld [vmem:[#allocation8 + $0x630] sm:$0xff]
    %v1053 = vld [vmem:[#allocation8 + $0x638] sm:$0xff]
    %v1054 = vld [vmem:[#allocation8 + $0x640] sm:$0xff]
    %v1055 = vld [vmem:[#allocation8 + $0x648] sm:$0xff]
    %v1056 = vld [vmem:[#allocation8 + $0x650] sm:$0xff]
    %v1057 = vld [vmem:[#allocation8 + $0x658] sm:$0xff]
    %v1058 = vld [vmem:[#allocation8 + $0x660] sm:$0xff]
    %v1059 = vld [vmem:[#allocation8 + $0x668] sm:$0xff]
    %v1060 = vld [vmem:[#allocation8 + $0x670] sm:$0xff]
    %v1061 = vld [vmem:[#allocation8 + $0x678] sm:$0xff]
    %v1062 = vld [vmem:[#allocation8 + $0x680] sm:$0xff]
    %v1063 = vld [vmem:[#allocation8 + $0x688] sm:$0xff]
    %v1064 = vld [vmem:[#allocation8 + $0x690] sm:$0xff]
    %v1065 = vld [vmem:[#allocation8 + $0x698] sm:$0xff]
    %v1066 = vld [vmem:[#allocation8 + $0x6a0] sm:$0xff]
    %v1067 = vld [vmem:[#allocation8 + $0x6a8] sm:$0xff]
    %v1068 = vld [vmem:[#allocation8 + $0x6b0] sm:$0xff]
    %v1069 = vld [vmem:[#allocation8 + $0x6b8] sm:$0xff]
    %v1070 = vld [vmem:[#allocation8 + $0x6c0] sm:$0xff]
    %v1071 = vld [vmem:[#allocation8 + $0x6c8] sm:$0xff]
    %v1072 = vld [vmem:[#allocation8 + $0x6d0] sm:$0xff]
    %v1073 = vld [vmem:[#allocation8 + $0x6d8] sm:$0xff]
    %v1074 = vld [vmem:[#allocation8 + $0x6e0] sm:$0xff]
    %v1075 = vld [vmem:[#allocation8 + $0x6e8] sm:$0xff]
    %v1076 = vld [vmem:[#allocation8 + $0x6f0] sm:$0xff]
    %v1077 = vld [vmem:[#allocation8 + $0x6f8] sm:$0xff]
    %v1078 = vld [vmem:[#allocation8 + $0x700] sm:$0xff]
    %v1079 = vld [vmem:[#allocation8 + $0x708] sm:$0xff]
    %v1080 = vld [vmem:[#allocation8 + $0x710] sm:$0xff]
    %v1081 = vld [vmem:[#allocation8 + $0x718] sm:$0xff]
    %v1082 = vld [vmem:[#allocation8 + $0x720] sm:$0xff]
    %v1083 = vld [vmem:[#allocation8 + $0x728] sm:$0xff]
    %v1084 = vld [vmem:[#allocation8 + $0x730] sm:$0xff]
    %v1085 = vld [vmem:[#allocation8 + $0x738] sm:$0xff]
    %v1086 = vld [vmem:[#allocation8 + $0x740] sm:$0xff]
    %v1087 = vld [vmem:[#allocation8 + $0x748] sm:$0xff]
    %v1088 = vld [vmem:[#allocation8 + $0x750] sm:$0xff]
    %v1089 = vld [vmem:[#allocation8 + $0x758] sm:$0xff]
    %v1090 = vld [vmem:[#allocation8 + $0x760] sm:$0xff]
    %v1091 = vld [vmem:[#allocation8 + $0x768] sm:$0xff]
    %v1092 = vld [vmem:[#allocation8 + $0x770] sm:$0xff]
    %v1093 = vld [vmem:[#allocation8 + $0x778] sm:$0xff]
    %v1094 = vld [vmem:[#allocation8 + $0x780] sm:$0xff]
    %v1095 = vld [vmem:[#allocation8 + $0x788] sm:$0xff]
    %v1096 = vld [vmem:[#allocation8 + $0x790] sm:$0xff]
    %v1097 = vld [vmem:[#allocation8 + $0x798] sm:$0xff]
    %v1098 = vld [vmem:[#allocation8 + $0x7a0] sm:$0xff]
    %v1099 = vld [vmem:[#allocation8 + $0x7a8] sm:$0xff]
    %v1100 = vld [vmem:[#allocation8 + $0x7b0] sm:$0xff]
    %v1101 = vld [vmem:[#allocation8 + $0x7b8] sm:$0xff]
    %v1102 = vld [vmem:[#allocation8 + $0x7c0] sm:$0xff]
    %v1103 = vld [vmem:[#allocation8 + $0x7c8] sm:$0xff]
    %v1104 = vld [vmem:[#allocation8 + $0x7d0] sm:$0xff]
    %v1105 = vld [vmem:[#allocation8 + $0x7d8] sm:$0xff]
    %v1106 = vld [vmem:[#allocation8 + $0x7e0] sm:$0xff]
    %v1107 = vld [vmem:[#allocation8 + $0x7e8] sm:$0xff]
    %v1108 = vld [vmem:[#allocation8 + $0x7f0] sm:$0xff]
    %v1109 = vld [vmem:[#allocation8 + $0x7f8] sm:$0xff]
    %v1110 = vld [vmem:[#allocation8 + $0x800] sm:$0xff]
    %v1111 = vld [vmem:[#allocation8 + $0x808] sm:$0xff]
    %v1112 = vld [vmem:[#allocation8 + $0x810] sm:$0xff]
    %v1113 = vld [vmem:[#allocation8 + $0x818] sm:$0xff]
    %v1114 = vld [vmem:[#allocation8 + $0x820] sm:$0xff]
    %v1115 = vld [vmem:[#allocation8 + $0x828] sm:$0xff]
    %v1116 = vld [vmem:[#allocation8 + $0x830] sm:$0xff]
    %v1117 = vld [vmem:[#allocation8 + $0x838] sm:$0xff]
    %v1118 = vld [vmem:[#allocation8 + $0x840] sm:$0xff]
    %v1119 = vld [vmem:[#allocation8 + $0x848] sm:$0xff]
    %v1120 = vld [vmem:[#allocation8 + $0x850] sm:$0xff]
    %v1121 = vld [vmem:[#allocation8 + $0x858] sm:$0xff]
    %v1122 = vld [vmem:[#allocation8 + $0x860] sm:$0xff]
    %v1123 = vld [vmem:[#allocation8 + $0x868] sm:$0xff]
    %v1124 = vld [vmem:[#allocation8 + $0x870] sm:$0xff]
    %v1125 = vld [vmem:[#allocation8 + $0x878] sm:$0xff]
    %v1126 = vld [vmem:[#allocation8 + $0x880] sm:$0xff]
    %v1127 = vld [vmem:[#allocation8 + $0x888] sm:$0xff]
    %v1128 = vld [vmem:[#allocation8 + $0x890] sm:$0xff]
    %v1129 = vld [vmem:[#allocation8 + $0x898] sm:$0xff]
    %v1130 = vld [vmem:[#allocation8 + $0x8a0] sm:$0xff]
    %v1131 = vld [vmem:[#allocation8 + $0x8a8] sm:$0xff]
    %v1132 = vld [vmem:[#allocation8 + $0x8b0] sm:$0xff]
    %v1133 = vld [vmem:[#allocation8 + $0x8b8] sm:$0xff]
    %v1134 = vld [vmem:[#allocation8 + $0x8c0] sm:$0xff]
    %v1135 = vld [vmem:[#allocation8 + $0x8c8] sm:$0xff]
    %v1136 = vld [vmem:[#allocation8 + $0x8d0] sm:$0xff]
    %v1137 = vld [vmem:[#allocation8 + $0x8d8] sm:$0xff]
    %v1138 = vld [vmem:[#allocation8 + $0x8e0] sm:$0xff]
    %v1139 = vld [vmem:[#allocation8 + $0x8e8] sm:$0xff]
    %v1140 = vld [vmem:[#allocation8 + $0x8f0] sm:$0xff]
    %v1141 = vld [vmem:[#allocation8 + $0x8f8] sm:$0xff]
    %v1142 = vld [vmem:[#allocation8 + $0x900] sm:$0xff]
    %v1143 = vld [vmem:[#allocation8 + $0x908] sm:$0xff]
    %v1144 = vld [vmem:[#allocation8 + $0x910] sm:$0xff]
    %v1145 = vld [vmem:[#allocation8 + $0x918] sm:$0xff]
    %v1146 = vld [vmem:[#allocation8 + $0x920] sm:$0xff]
    %v1147 = vld [vmem:[#allocation8 + $0x928] sm:$0xff]
    %v1148 = vld [vmem:[#allocation8 + $0x930] sm:$0xff]
    %v1149 = vld [vmem:[#allocation8 + $0x938] sm:$0xff]
    %v1150 = vld [vmem:[#allocation8 + $0x940] sm:$0xff]
    %v1151 = vld [vmem:[#allocation8 + $0x948] sm:$0xff]
    %v1152 = vld [vmem:[#allocation8 + $0x950] sm:$0xff]
    %v1153 = vld [vmem:[#allocation8 + $0x958] sm:$0xff]
    %v1154 = vld [vmem:[#allocation8 + $0x960] sm:$0xff]
    %v1155 = vld [vmem:[#allocation8 + $0x968] sm:$0xff]
    %v1156 = vld [vmem:[#allocation8 + $0x970] sm:$0xff]
    %v1157 = vld [vmem:[#allocation8 + $0x978] sm:$0xff]
    %v1158 = vld [vmem:[#allocation8 + $0x980] sm:$0xff]
    %v1159 = vld [vmem:[#allocation8 + $0x988] sm:$0xff]
    %v1160 = vld [vmem:[#allocation8 + $0x990] sm:$0xff]
    %v1161 = vld [vmem:[#allocation8 + $0x998] sm:$0xff]
    %v1162 = vld [vmem:[#allocation8 + $0x9a0] sm:$0xff]
    %v1163 = vld [vmem:[#allocation8 + $0x9a8] sm:$0xff]
    %v1164 = vld [vmem:[#allocation8 + $0x9b0] sm:$0xff]
    %v1165 = vld [vmem:[#allocation8 + $0x9b8] sm:$0xff]
    %v1166 = vld [vmem:[#allocation8 + $0x9c0] sm:$0xff]
    %v1167 = vld [vmem:[#allocation8 + $0x9c8] sm:$0xff]
    %v1168 = vld [vmem:[#allocation8 + $0x9d0] sm:$0xff]
    %v1169 = vld [vmem:[#allocation8 + $0x9d8] sm:$0xff]
    %v1170 = vld [vmem:[#allocation8 + $0x9e0] sm:$0xff]
    %v1171 = vld [vmem:[#allocation8 + $0x9e8] sm:$0xff]
    %v1172 = vld [vmem:[#allocation8 + $0x9f0] sm:$0xff]
    %v1173 = vld [vmem:[#allocation8 + $0x9f8] sm:$0xff]
    %v1174 = vld [vmem:[#allocation8 + $0xa00] sm:$0xff]
    %v1175 = vld [vmem:[#allocation8 + $0xa08] sm:$0xff]
    %v1176 = vld [vmem:[#allocation8 + $0xa10] sm:$0xff]
    %v1177 = vld [vmem:[#allocation8 + $0xa18] sm:$0xff]
    %v1178 = vld [vmem:[#allocation8 + $0xa20] sm:$0xff]
    %v1179 = vld [vmem:[#allocation8 + $0xa28] sm:$0xff]
    %v1180 = vld [vmem:[#allocation8 + $0xa30] sm:$0xff]
    %v1181 = vld [vmem:[#allocation8 + $0xa38] sm:$0xff]
    %v1182 = vld [vmem:[#allocation8 + $0xa40] sm:$0xff]
    %v1183 = vld [vmem:[#allocation8 + $0xa48] sm:$0xff]
    %v1184 = vld [vmem:[#allocation8 + $0xa50] sm:$0xff]
    %v1185 = vld [vmem:[#allocation8 + $0xa58] sm:$0xff]
    %v1186 = vld [vmem:[#allocation8 + $0xa60] sm:$0xff]
    %v1187 = vld [vmem:[#allocation8 + $0xa68] sm:$0xff]
    %v1188 = vld [vmem:[#allocation8 + $0xa70] sm:$0xff]
    %v1189 = vld [vmem:[#allocation8 + $0xa78] sm:$0xff]
    %v1190 = vld [vmem:[#allocation8 + $0xa80] sm:$0xff]
    %v1191 = vld [vmem:[#allocation8 + $0xa88] sm:$0xff]
    %v1192 = vld [vmem:[#allocation8 + $0xa90] sm:$0xff]
    %v1193 = vld [vmem:[#allocation8 + $0xa98] sm:$0xff]
    %v1194 = vld [vmem:[#allocation8 + $0xaa0] sm:$0xff]
    %v1195 = vld [vmem:[#allocation8 + $0xaa8] sm:$0xff]
    %v1196 = vld [vmem:[#allocation8 + $0xab0] sm:$0xff]
    %v1197 = vld [vmem:[#allocation8 + $0xab8] sm:$0xff]
    %v1198 = vld [vmem:[#allocation8 + $0xac0] sm:$0xff]
    %v1199 = vld [vmem:[#allocation8 + $0xac8] sm:$0xff]
    %v1200 = vld [vmem:[#allocation8 + $0xad0] sm:$0xff]
    %v1201 = vld [vmem:[#allocation8 + $0xad8] sm:$0xff]
    %v1202 = vld [vmem:[#allocation8 + $0xae0] sm:$0xff]
    %v1203 = vld [vmem:[#allocation8 + $0xae8] sm:$0xff]
    %v1204 = vld [vmem:[#allocation8 + $0xaf0] sm:$0xff]
    %v1205 = vld [vmem:[#allocation8 + $0xaf8] sm:$0xff]
    %v1206 = vld [vmem:[#allocation8 + $0xb00] sm:$0xff]
    %v1207 = vld [vmem:[#allocation8 + $0xb08] sm:$0xff]
    %v1208 = vld [vmem:[#allocation8 + $0xb10] sm:$0xff]
    %v1209 = vld [vmem:[#allocation8 + $0xb18] sm:$0xff]
    %v1210 = vld [vmem:[#allocation8 + $0xb20] sm:$0xff]
    %v1211 = vld [vmem:[#allocation8 + $0xb28] sm:$0xff]
    %v1212 = vld [vmem:[#allocation8 + $0xb30] sm:$0xff]
    %v1213 = vld [vmem:[#allocation8 + $0xb38] sm:$0xff]
    %v1214 = vld [vmem:[#allocation8 + $0xb40] sm:$0xff]
    %v1215 = vld [vmem:[#allocation8 + $0xb48] sm:$0xff]
    %v1216 = vld [vmem:[#allocation8 + $0xb50] sm:$0xff]
    %v1217 = vld [vmem:[#allocation8 + $0xb58] sm:$0xff]
    %v1218 = vld [vmem:[#allocation8 + $0xb60] sm:$0xff]
    %v1219 = vld [vmem:[#allocation8 + $0xb68] sm:$0xff]
    %v1220 = vld [vmem:[#allocation8 + $0xb70] sm:$0xff]
    %v1221 = vld [vmem:[#allocation8 + $0xb78] sm:$0xff]
    %v1222 = vld [vmem:[#allocation8 + $0xb80] sm:$0xff]
    %v1223 = vld [vmem:[#allocation8 + $0xb88] sm:$0xff]
    %v1224 = vld [vmem:[#allocation8 + $0xb90] sm:$0xff]
    %v1225 = vld [vmem:[#allocation8 + $0xb98] sm:$0xff]
    %v1226 = vld [vmem:[#allocation8 + $0xba0] sm:$0xff]
    %v1227 = vld [vmem:[#allocation8 + $0xba8] sm:$0xff]
    %v1228 = vld [vmem:[#allocation8 + $0xbb0] sm:$0xff]
    %v1229 = vld [vmem:[#allocation8 + $0xbb8] sm:$0xff]
    %v1230 = vld [vmem:[#allocation8 + $0xbc0] sm:$0xff]
    %v1231 = vld [vmem:[#allocation8 + $0xbc8] sm:$0xff]
    %v1232 = vld [vmem:[#allocation8 + $0xbd0] sm:$0xff]
    %v1233 = vld [vmem:[#allocation8 + $0xbd8] sm:$0xff]
    %v1234 = vld [vmem:[#allocation8 + $0xbe0] sm:$0xff]
    %v1235 = vld [vmem:[#allocation8 + $0xbe8] sm:$0xff]
    %v1236 = vld [vmem:[#allocation8 + $0xbf0] sm:$0xff]
    %v1237 = vld [vmem:[#allocation8 + $0xbf8] sm:$0xff]
    %v1238 = vld [vmem:[#allocation8 + $0xc00] sm:$0xff]
    %v1239 = vld [vmem:[#allocation8 + $0xc08] sm:$0xff]
    %v1240 = vld [vmem:[#allocation8 + $0xc10] sm:$0xff]
    %v1241 = vld [vmem:[#allocation8 + $0xc18] sm:$0xff]
    %v1242 = vld [vmem:[#allocation8 + $0xc20] sm:$0xff]
    %v1243 = vld [vmem:[#allocation8 + $0xc28] sm:$0xff]
    %v1244 = vld [vmem:[#allocation8 + $0xc30] sm:$0xff]
    %v1245 = vld [vmem:[#allocation8 + $0xc38] sm:$0xff]
    %v1246 = vld [vmem:[#allocation8 + $0xc40] sm:$0xff]
    %v1247 = vld [vmem:[#allocation8 + $0xc48] sm:$0xff]
    %v1248 = vld [vmem:[#allocation8 + $0xc50] sm:$0xff]
    %v1249 = vld [vmem:[#allocation8 + $0xc58] sm:$0xff]
    %v1250 = vld [vmem:[#allocation8 + $0xc60] sm:$0xff]
    %v1251 = vld [vmem:[#allocation8 + $0xc68] sm:$0xff]
    %v1252 = vld [vmem:[#allocation8 + $0xc70] sm:$0xff]
    %v1253 = vld [vmem:[#allocation8 + $0xc78] sm:$0xff]
    %v1254 = vld [vmem:[#allocation8 + $0xc80] sm:$0xff]
    %v1255 = vld [vmem:[#allocation8 + $0xc88] sm:$0xff]
    %v1256 = vld [vmem:[#allocation8 + $0xc90] sm:$0xff]
    %v1257 = vld [vmem:[#allocation8 + $0xc98] sm:$0xff]
    %v1258 = vld [vmem:[#allocation8 + $0xca0] sm:$0xff]
    %v1259 = vld [vmem:[#allocation8 + $0xca8] sm:$0xff]
    %v1260 = vld [vmem:[#allocation8 + $0xcb0] sm:$0xff]
    %v1261 = vld [vmem:[#allocation8 + $0xcb8] sm:$0xff]
    %v1262 = vld [vmem:[#allocation8 + $0xcc0] sm:$0xff]
    %v1263 = vld [vmem:[#allocation8 + $0xcc8] sm:$0xff]
    %v1264 = vld [vmem:[#allocation8 + $0xcd0] sm:$0xff]
    %v1265 = vld [vmem:[#allocation8 + $0xcd8] sm:$0xff]
    %v1266 = vld [vmem:[#allocation8 + $0xce0] sm:$0xff]
    %v1267 = vld [vmem:[#allocation8 + $0xce8] sm:$0xff]
    %v1268 = vld [vmem:[#allocation8 + $0xcf0] sm:$0xff]
    %v1269 = vld [vmem:[#allocation8 + $0xcf8] sm:$0xff]
    %v1270 = vld [vmem:[#allocation8 + $0xd00] sm:$0xff]
    %v1271 = vld [vmem:[#allocation8 + $0xd08] sm:$0xff]
    %v1272 = vld [vmem:[#allocation8 + $0xd10] sm:$0xff]
    %v1273 = vld [vmem:[#allocation8 + $0xd18] sm:$0xff]
    %v1274 = vld [vmem:[#allocation8 + $0xd20] sm:$0xff]
    %v1275 = vld [vmem:[#allocation8 + $0xd28] sm:$0xff]
    %v1276 = vld [vmem:[#allocation8 + $0xd30] sm:$0xff]
    %v1277 = vld [vmem:[#allocation8 + $0xd38] sm:$0xff]
    %v1278 = vld [vmem:[#allocation8 + $0xd40] sm:$0xff]
    %v1279 = vld [vmem:[#allocation8 + $0xd48] sm:$0xff]
    %v1280 = vld [vmem:[#allocation8 + $0xd50] sm:$0xff]
    %v1281 = vld [vmem:[#allocation8 + $0xd58] sm:$0xff]
    %v1282 = vld [vmem:[#allocation8 + $0xd60] sm:$0xff]
    %v1283 = vld [vmem:[#allocation8 + $0xd68] sm:$0xff]
    %v1284 = vld [vmem:[#allocation8 + $0xd70] sm:$0xff]
    %v1285 = vld [vmem:[#allocation8 + $0xd78] sm:$0xff]
    %v1286 = vld [vmem:[#allocation8 + $0xd80] sm:$0xff]
    %v1287 = vld [vmem:[#allocation8 + $0xd88] sm:$0xff]
    %v1288 = vld [vmem:[#allocation8 + $0xd90] sm:$0xff]
    %v1289 = vld [vmem:[#allocation8 + $0xd98] sm:$0xff]
    %v1290 = vld [vmem:[#allocation8 + $0xda0] sm:$0xff]
    %v1291 = vld [vmem:[#allocation8 + $0xda8] sm:$0xff]
    %v1292 = vld [vmem:[#allocation8 + $0xdb0] sm:$0xff]
    %v1293 = vld [vmem:[#allocation8 + $0xdb8] sm:$0xff]
    %v1294 = vld [vmem:[#allocation8 + $0xdc0] sm:$0xff]
    %v1295 = vld [vmem:[#allocation8 + $0xdc8] sm:$0xff]
    %v1296 = vld [vmem:[#allocation8 + $0xdd0] sm:$0xff]
    %v1297 = vld [vmem:[#allocation8 + $0xdd8] sm:$0xff]
    %v1298 = vld [vmem:[#allocation8 + $0xde0] sm:$0xff]
    %v1299 = vld [vmem:[#allocation8 + $0xde8] sm:$0xff]
    %v1300 = vld [vmem:[#allocation8 + $0xdf0] sm:$0xff]
    %v1301 = vld [vmem:[#allocation8 + $0xdf8] sm:$0xff]
    %v1302 = vld [vmem:[#allocation8 + $0xe00] sm:$0xff]
    %v1303 = vld [vmem:[#allocation8 + $0xe08] sm:$0xff]
    %v1304 = vld [vmem:[#allocation8 + $0xe10] sm:$0xff]
    %v1305 = vld [vmem:[#allocation8 + $0xe18] sm:$0xff]
    %v1306 = vld [vmem:[#allocation8 + $0xe20] sm:$0xff]
    %v1307 = vld [vmem:[#allocation8 + $0xe28] sm:$0xff]
    %v1308 = vld [vmem:[#allocation8 + $0xe30] sm:$0xff]
    %v1309 = vld [vmem:[#allocation8 + $0xe38] sm:$0xff]
    %v1310 = vld [vmem:[#allocation8 + $0xe40] sm:$0xff]
    %v1311 = vld [vmem:[#allocation8 + $0xe48] sm:$0xff]
    %v1312 = vld [vmem:[#allocation8 + $0xe50] sm:$0xff]
    %v1313 = vld [vmem:[#allocation8 + $0xe58] sm:$0xff]
    %v1314 = vld [vmem:[#allocation8 + $0xe60] sm:$0xff]
    %v1315 = vld [vmem:[#allocation8 + $0xe68] sm:$0xff]
    %v1316 = vld [vmem:[#allocation8 + $0xe70] sm:$0xff]
    %v1317 = vld [vmem:[#allocation8 + $0xe78] sm:$0xff]
    %v1318 = vld [vmem:[#allocation8 + $0xe80] sm:$0xff]
    %v1319 = vld [vmem:[#allocation8 + $0xe88] sm:$0xff]
    %v1320 = vld [vmem:[#allocation8 + $0xe90] sm:$0xff]
    %v1321 = vld [vmem:[#allocation8 + $0xe98] sm:$0xff]
    %v1322 = vld [vmem:[#allocation8 + $0xea0] sm:$0xff]
    %v1323 = vld [vmem:[#allocation8 + $0xea8] sm:$0xff]
    %v1324 = vld [vmem:[#allocation8 + $0xeb0] sm:$0xff]
    %v1325 = vld [vmem:[#allocation8 + $0xeb8] sm:$0xff]
    %v1326 = vld [vmem:[#allocation8 + $0xec0] sm:$0xff]
    %v1327 = vld [vmem:[#allocation8 + $0xec8] sm:$0xff]
    %v1328 = vld [vmem:[#allocation8 + $0xed0] sm:$0xff]
    %v1329 = vld [vmem:[#allocation8 + $0xed8] sm:$0xff]
    %v1330 = vld [vmem:[#allocation8 + $0xee0] sm:$0xff]
    %v1331 = vld [vmem:[#allocation8 + $0xee8] sm:$0xff]
    %v1332 = vld [vmem:[#allocation8 + $0xef0] sm:$0xff]
    %v1333 = vld [vmem:[#allocation8 + $0xef8] sm:$0xff]
    %v1334 = vld [vmem:[#allocation8 + $0xf00] sm:$0xff]
    %v1335 = vld [vmem:[#allocation8 + $0xf08] sm:$0xff]
    %v1336 = vld [vmem:[#allocation8 + $0xf10] sm:$0xff]
    %v1337 = vld [vmem:[#allocation8 + $0xf18] sm:$0xff]
    %v1338 = vld [vmem:[#allocation8 + $0xf20] sm:$0xff]
    %v1339 = vld [vmem:[#allocation8 + $0xf28] sm:$0xff]
    %v1340 = vld [vmem:[#allocation8 + $0xf30] sm:$0xff]
    %v1341 = vld [vmem:[#allocation8 + $0xf38] sm:$0xff]
    %v1342 = vld [vmem:[#allocation8 + $0xf40] sm:$0xff]
    %v1343 = vld [vmem:[#allocation8 + $0xf48] sm:$0xff]
    %v1344 = vld [vmem:[#allocation8 + $0xf50] sm:$0xff]
    %v1345 = vld [vmem:[#allocation8 + $0xf58] sm:$0xff]
    %v1346 = vld [vmem:[#allocation8 + $0xf60] sm:$0xff]
    %v1347 = vld [vmem:[#allocation8 + $0xf68] sm:$0xff]
    %v1348 = vld [vmem:[#allocation8 + $0xf70] sm:$0xff]
    %v1349 = vld [vmem:[#allocation8 + $0xf78] sm:$0xff]
    %v1350 = vld [vmem:[#allocation8 + $0xf80] sm:$0xff]
    %v1351 = vld [vmem:[#allocation8 + $0xf88] sm:$0xff]
    %v1352 = vld [vmem:[#allocation8 + $0xf90] sm:$0xff]
    %v1353 = vld [vmem:[#allocation8 + $0xf98] sm:$0xff]
    %v1354 = vld [vmem:[#allocation8 + $0xfa0] sm:$0xff]
    %v1355 = vld [vmem:[#allocation8 + $0xfa8] sm:$0xff]
    %v1356 = vld [vmem:[#allocation8 + $0xfb0] sm:$0xff]
    %v1357 = vld [vmem:[#allocation8 + $0xfb8] sm:$0xff]
    %v1358 = vld [vmem:[#allocation8 + $0xfc0] sm:$0xff]
    %v1359 = vld [vmem:[#allocation8 + $0xfc8] sm:$0xff]
    %v1360 = vld [vmem:[#allocation8 + $0xfd0] sm:$0xff]
    %v1361 = vld [vmem:[#allocation8 + $0xfd8] sm:$0xff]
    %v1362 = vld [vmem:[#allocation8 + $0xfe0] sm:$0xff]
    %v1363 = vld [vmem:[#allocation8 + $0xfe8] sm:$0xff]
    %v1364 = vld [vmem:[#allocation8 + $0xff0] sm:$0xff]
    %v1365 = vld [vmem:[#allocation8 + $0xff8] sm:$0xff]
    %v1366 = vld [vmem:[#allocation10] sm:$0xf]
    %v1368 = vlaneseq
    %v1369 = vshrl.u32 %v1368, 7
    %v1370 = vsub.s32 0, %v1369
    %v1371 = vrot.slane %v1366, %v1370
    %v1372 = vlaneseq
    %v1373 = vshrl.u32 %v1372, 7
    %v1374 = vsub.s32 1, %v1373
    %v1375 = vrot.slane %v1366, %v1374
    %v1376 = vlaneseq
    %v1377 = vshrl.u32 %v1376, 7
    %v1378 = vsub.s32 2, %v1377
    %v1379 = vrot.slane %v1366, %v1378
    %v1380 = vlaneseq
    %v1381 = vshrl.u32 %v1380, 7
    %v1382 = vsub.s32 3, %v1381
    %v1383 = vrot.slane %v1366, %v1382
    %v1900 = vunpack.c.l.b16 %v854
    %v1901 = vunpack.c.h.b16 %v854
    %v1902 = vunpack.c.l.b16 %v855
    %v1903 = vunpack.c.h.b16 %v855
    %v1904 = vunpack.c.l.b16 %v856
    %v1905 = vunpack.c.h.b16 %v856
    %v1906 = vunpack.c.l.b16 %v857
    %v1907 = vunpack.c.h.b16 %v857
    %v1908 = vunpack.c.l.b16 %v858
    %v1909 = vunpack.c.h.b16 %v858
    %v1910 = vunpack.c.l.b16 %v859
    %v1911 = vunpack.c.h.b16 %v859
    %v1912 = vunpack.c.l.b16 %v860
    %v1913 = vunpack.c.h.b16 %v860
    %v1914 = vunpack.c.l.b16 %v861
    %v1915 = vunpack.c.h.b16 %v861
    %v1916 = vunpack.c.l.b16 %v862
    %v1917 = vunpack.c.h.b16 %v862
    %v1918 = vunpack.c.l.b16 %v863
    %v1919 = vunpack.c.h.b16 %v863
    %v1920 = vunpack.c.l.b16 %v864
    %v1921 = vunpack.c.h.b16 %v864
    %v1922 = vunpack.c.l.b16 %v865
    %v1923 = vunpack.c.h.b16 %v865
    %v1924 = vunpack.c.l.b16 %v866
    %v1925 = vunpack.c.h.b16 %v866
    %v1926 = vunpack.c.l.b16 %v867
    %v1927 = vunpack.c.h.b16 %v867
    %v1928 = vunpack.c.l.b16 %v868
    %v1929 = vunpack.c.h.b16 %v868
    %v1930 = vunpack.c.l.b16 %v869
    %v1931 = vunpack.c.h.b16 %v869
    %v1932 = vunpack.c.l.b16 %v870
    %v1933 = vunpack.c.h.b16 %v870
    %v1934 = vunpack.c.l.b16 %v871
    %v1935 = vunpack.c.h.b16 %v871
    %v1936 = vunpack.c.l.b16 %v872
    %v1937 = vunpack.c.h.b16 %v872
    %v1938 = vunpack.c.l.b16 %v873
    %v1939 = vunpack.c.h.b16 %v873
    %v1940 = vunpack.c.l.b16 %v874
    %v1941 = vunpack.c.h.b16 %v874
    %v1942 = vunpack.c.l.b16 %v875
    %v1943 = vunpack.c.h.b16 %v875
    %v1944 = vunpack.c.l.b16 %v876
    %v1945 = vunpack.c.h.b16 %v876
    %v1946 = vunpack.c.l.b16 %v877
    %v1947 = vunpack.c.h.b16 %v877
    %v1948 = vunpack.c.l.b16 %v878
    %v1949 = vunpack.c.h.b16 %v878
    %v1950 = vunpack.c.l.b16 %v879
    %v1951 = vunpack.c.h.b16 %v879
    %v1952 = vunpack.c.l.b16 %v880
    %v1953 = vunpack.c.h.b16 %v880
    %v1954 = vunpack.c.l.b16 %v881
    %v1955 = vunpack.c.h.b16 %v881
    %v1956 = vunpack.c.l.b16 %v882
    %v1957 = vunpack.c.h.b16 %v882
    %v1958 = vunpack.c.l.b16 %v883
    %v1959 = vunpack.c.h.b16 %v883
    %v1960 = vunpack.c.l.b16 %v884
    %v1961 = vunpack.c.h.b16 %v884
    %v1962 = vunpack.c.l.b16 %v885
    %v1963 = vunpack.c.h.b16 %v885
    %v1964 = vunpack.c.l.b16 %v886
    %v1965 = vunpack.c.h.b16 %v886
    %v1966 = vunpack.c.l.b16 %v887
    %v1967 = vunpack.c.h.b16 %v887
    %v1968 = vunpack.c.l.b16 %v888
    %v1969 = vunpack.c.h.b16 %v888
    %v1970 = vunpack.c.l.b16 %v889
    %v1971 = vunpack.c.h.b16 %v889
    %v1972 = vunpack.c.l.b16 %v890
    %v1973 = vunpack.c.h.b16 %v890
    %v1974 = vunpack.c.l.b16 %v891
    %v1975 = vunpack.c.h.b16 %v891
    %v1976 = vunpack.c.l.b16 %v892
    %v1977 = vunpack.c.h.b16 %v892
    %v1978 = vunpack.c.l.b16 %v893
    %v1979 = vunpack.c.h.b16 %v893
    %v1980 = vunpack.c.l.b16 %v894
    %v1981 = vunpack.c.h.b16 %v894
    %v1982 = vunpack.c.l.b16 %v895
    %v1983 = vunpack.c.h.b16 %v895
    %v1984 = vunpack.c.l.b16 %v896
    %v1985 = vunpack.c.h.b16 %v896
    %v1986 = vunpack.c.l.b16 %v897
    %v1987 = vunpack.c.h.b16 %v897
    %v1988 = vunpack.c.l.b16 %v898
    %v1989 = vunpack.c.h.b16 %v898
    %v1990 = vunpack.c.l.b16 %v899
    %v1991 = vunpack.c.h.b16 %v899
    %v1992 = vunpack.c.l.b16 %v900
    %v1993 = vunpack.c.h.b16 %v900
    %v1994 = vunpack.c.l.b16 %v901
    %v1995 = vunpack.c.h.b16 %v901
    %v1996 = vunpack.c.l.b16 %v902
    %v1997 = vunpack.c.h.b16 %v902
    %v1998 = vunpack.c.l.b16 %v903
    %v1999 = vunpack.c.h.b16 %v903
    %v2000 = vunpack.c.l.b16 %v904
    %v2001 = vunpack.c.h.b16 %v904
    %v2002 = vunpack.c.l.b16 %v905
    %v2003 = vunpack.c.h.b16 %v905
    %v2004 = vunpack.c.l.b16 %v906
    %v2005 = vunpack.c.h.b16 %v906
    %v2006 = vunpack.c.l.b16 %v907
    %v2007 = vunpack.c.h.b16 %v907
    %v2008 = vunpack.c.l.b16 %v908
    %v2009 = vunpack.c.h.b16 %v908
    %v2010 = vunpack.c.l.b16 %v909
    %v2011 = vunpack.c.h.b16 %v909
    %v2012 = vunpack.c.l.b16 %v910
    %v2013 = vunpack.c.h.b16 %v910
    %v2014 = vunpack.c.l.b16 %v911
    %v2015 = vunpack.c.h.b16 %v911
    %v2016 = vunpack.c.l.b16 %v912
    %v2017 = vunpack.c.h.b16 %v912
    %v2018 = vunpack.c.l.b16 %v913
    %v2019 = vunpack.c.h.b16 %v913
    %v2020 = vunpack.c.l.b16 %v914
    %v2021 = vunpack.c.h.b16 %v914
    %v2022 = vunpack.c.l.b16 %v915
    %v2023 = vunpack.c.h.b16 %v915
    %v2024 = vunpack.c.l.b16 %v916
    %v2025 = vunpack.c.h.b16 %v916
    %v2026 = vunpack.c.l.b16 %v917
    %v2027 = vunpack.c.h.b16 %v917
    %v2028 = vunpack.c.l.b16 %v918
    %v2029 = vunpack.c.h.b16 %v918
    %v2030 = vunpack.c.l.b16 %v919
    %v2031 = vunpack.c.h.b16 %v919
    %v2032 = vunpack.c.l.b16 %v920
    %v2033 = vunpack.c.h.b16 %v920
    %v2034 = vunpack.c.l.b16 %v921
    %v2035 = vunpack.c.h.b16 %v921
    %v2036 = vunpack.c.l.b16 %v922
    %v2037 = vunpack.c.h.b16 %v922
    %v2038 = vunpack.c.l.b16 %v923
    %v2039 = vunpack.c.h.b16 %v923
    %v2040 = vunpack.c.l.b16 %v924
    %v2041 = vunpack.c.h.b16 %v924
    %v2042 = vunpack.c.l.b16 %v925
    %v2043 = vunpack.c.h.b16 %v925
    %v2044 = vunpack.c.l.b16 %v926
    %v2045 = vunpack.c.h.b16 %v926
    %v2046 = vunpack.c.l.b16 %v927
    %v2047 = vunpack.c.h.b16 %v927
    %v2048 = vunpack.c.l.b16 %v928
    %v2049 = vunpack.c.h.b16 %v928
    %v2050 = vunpack.c.l.b16 %v929
    %v2051 = vunpack.c.h.b16 %v929
    %v2052 = vunpack.c.l.b16 %v930
    %v2053 = vunpack.c.h.b16 %v930
    %v2054 = vunpack.c.l.b16 %v931
    %v2055 = vunpack.c.h.b16 %v931
    %v2056 = vunpack.c.l.b16 %v932
    %v2057 = vunpack.c.h.b16 %v932
    %v2058 = vunpack.c.l.b16 %v933
    %v2059 = vunpack.c.h.b16 %v933
    %v2060 = vunpack.c.l.b16 %v934
    %v2061 = vunpack.c.h.b16 %v934
    %v2062 = vunpack.c.l.b16 %v935
    %v2063 = vunpack.c.h.b16 %v935
    %v2064 = vunpack.c.l.b16 %v936
    %v2065 = vunpack.c.h.b16 %v936
    %v2066 = vunpack.c.l.b16 %v937
    %v2067 = vunpack.c.h.b16 %v937
    %v2068 = vunpack.c.l.b16 %v938
    %v2069 = vunpack.c.h.b16 %v938
    %v2070 = vunpack.c.l.b16 %v939
    %v2071 = vunpack.c.h.b16 %v939
    %v2072 = vunpack.c.l.b16 %v940
    %v2073 = vunpack.c.h.b16 %v940
    %v2074 = vunpack.c.l.b16 %v941
    %v2075 = vunpack.c.h.b16 %v941
    %v2076 = vunpack.c.l.b16 %v942
    %v2077 = vunpack.c.h.b16 %v942
    %v2078 = vunpack.c.l.b16 %v943
    %v2079 = vunpack.c.h.b16 %v943
    %v2080 = vunpack.c.l.b16 %v944
    %v2081 = vunpack.c.h.b16 %v944
    %v2082 = vunpack.c.l.b16 %v945
    %v2083 = vunpack.c.h.b16 %v945
    %v2084 = vunpack.c.l.b16 %v946
    %v2085 = vunpack.c.h.b16 %v946
    %v2086 = vunpack.c.l.b16 %v947
    %v2087 = vunpack.c.h.b16 %v947
    %v2088 = vunpack.c.l.b16 %v948
    %v2089 = vunpack.c.h.b16 %v948
    %v2090 = vunpack.c.l.b16 %v949
    %v2091 = vunpack.c.h.b16 %v949
    %v2092 = vunpack.c.l.b16 %v950
    %v2093 = vunpack.c.h.b16 %v950
    %v2094 = vunpack.c.l.b16 %v951
    %v2095 = vunpack.c.h.b16 %v951
    %v2096 = vunpack.c.l.b16 %v952
    %v2097 = vunpack.c.h.b16 %v952
    %v2098 = vunpack.c.l.b16 %v953
    %v2099 = vunpack.c.h.b16 %v953
    %v2100 = vunpack.c.l.b16 %v954
    %v2101 = vunpack.c.h.b16 %v954
    %v2102 = vunpack.c.l.b16 %v955
    %v2103 = vunpack.c.h.b16 %v955
    %v2104 = vunpack.c.l.b16 %v956
    %v2105 = vunpack.c.h.b16 %v956
    %v2106 = vunpack.c.l.b16 %v957
    %v2107 = vunpack.c.h.b16 %v957
    %v2108 = vunpack.c.l.b16 %v958
    %v2109 = vunpack.c.h.b16 %v958
    %v2110 = vunpack.c.l.b16 %v959
    %v2111 = vunpack.c.h.b16 %v959
    %v2112 = vunpack.c.l.b16 %v960
    %v2113 = vunpack.c.h.b16 %v960
    %v2114 = vunpack.c.l.b16 %v961
    %v2115 = vunpack.c.h.b16 %v961
    %v2116 = vunpack.c.l.b16 %v962
    %v2117 = vunpack.c.h.b16 %v962
    %v2118 = vunpack.c.l.b16 %v963
    %v2119 = vunpack.c.h.b16 %v963
    %v2120 = vunpack.c.l.b16 %v964
    %v2121 = vunpack.c.h.b16 %v964
    %v2122 = vunpack.c.l.b16 %v965
    %v2123 = vunpack.c.h.b16 %v965
    %v2124 = vunpack.c.l.b16 %v966
    %v2125 = vunpack.c.h.b16 %v966
    %v2126 = vunpack.c.l.b16 %v967
    %v2127 = vunpack.c.h.b16 %v967
    %v2128 = vunpack.c.l.b16 %v968
    %v2129 = vunpack.c.h.b16 %v968
    %v2130 = vunpack.c.l.b16 %v969
    %v2131 = vunpack.c.h.b16 %v969
    %v2132 = vunpack.c.l.b16 %v970
    %v2133 = vunpack.c.h.b16 %v970
    %v2134 = vunpack.c.l.b16 %v971
    %v2135 = vunpack.c.h.b16 %v971
    %v2136 = vunpack.c.l.b16 %v972
    %v2137 = vunpack.c.h.b16 %v972
    %v2138 = vunpack.c.l.b16 %v973
    %v2139 = vunpack.c.h.b16 %v973
    %v2140 = vunpack.c.l.b16 %v974
    %v2141 = vunpack.c.h.b16 %v974
    %v2142 = vunpack.c.l.b16 %v975
    %v2143 = vunpack.c.h.b16 %v975
    %v2144 = vunpack.c.l.b16 %v976
    %v2145 = vunpack.c.h.b16 %v976
    %v2146 = vunpack.c.l.b16 %v977
    %v2147 = vunpack.c.h.b16 %v977
    %v2148 = vunpack.c.l.b16 %v978
    %v2149 = vunpack.c.h.b16 %v978
    %v2150 = vunpack.c.l.b16 %v979
    %v2151 = vunpack.c.h.b16 %v979
    %v2152 = vunpack.c.l.b16 %v980
    %v2153 = vunpack.c.h.b16 %v980
    %v2154 = vunpack.c.l.b16 %v981
    %v2155 = vunpack.c.h.b16 %v981
    %v2156 = vunpack.c.l.b16 %v982
    %v2157 = vunpack.c.h.b16 %v982
    %v2158 = vunpack.c.l.b16 %v983
    %v2159 = vunpack.c.h.b16 %v983
    %v2160 = vunpack.c.l.b16 %v984
    %v2161 = vunpack.c.h.b16 %v984
    %v2162 = vunpack.c.l.b16 %v985
    %v2163 = vunpack.c.h.b16 %v985
    %v2164 = vunpack.c.l.b16 %v986
    %v2165 = vunpack.c.h.b16 %v986
    %v2166 = vunpack.c.l.b16 %v987
    %v2167 = vunpack.c.h.b16 %v987
    %v2168 = vunpack.c.l.b16 %v988
    %v2169 = vunpack.c.h.b16 %v988
    %v2170 = vunpack.c.l.b16 %v989
    %v2171 = vunpack.c.h.b16 %v989
    %v2172 = vunpack.c.l.b16 %v990
    %v2173 = vunpack.c.h.b16 %v990
    %v2174 = vunpack.c.l.b16 %v991
    %v2175 = vunpack.c.h.b16 %v991
    %v2176 = vunpack.c.l.b16 %v992
    %v2177 = vunpack.c.h.b16 %v992
    %v2178 = vunpack.c.l.b16 %v993
    %v2179 = vunpack.c.h.b16 %v993
    %v2180 = vunpack.c.l.b16 %v994
    %v2181 = vunpack.c.h.b16 %v994
    %v2182 = vunpack.c.l.b16 %v995
    %v2183 = vunpack.c.h.b16 %v995
    %v2184 = vunpack.c.l.b16 %v996
    %v2185 = vunpack.c.h.b16 %v996
    %v2186 = vunpack.c.l.b16 %v997
    %v2187 = vunpack.c.h.b16 %v997
    %v2188 = vunpack.c.l.b16 %v998
    %v2189 = vunpack.c.h.b16 %v998
    %v2190 = vunpack.c.l.b16 %v999
    %v2191 = vunpack.c.h.b16 %v999
    %v2192 = vunpack.c.l.b16 %v1000
    %v2193 = vunpack.c.h.b16 %v1000
    %v2194 = vunpack.c.l.b16 %v1001
    %v2195 = vunpack.c.h.b16 %v1001
    %v2196 = vunpack.c.l.b16 %v1002
    %v2197 = vunpack.c.h.b16 %v1002
    %v2198 = vunpack.c.l.b16 %v1003
    %v2199 = vunpack.c.h.b16 %v1003
    %v2200 = vunpack.c.l.b16 %v1004
    %v2201 = vunpack.c.h.b16 %v1004
    %v2202 = vunpack.c.l.b16 %v1005
    %v2203 = vunpack.c.h.b16 %v1005
    %v2204 = vunpack.c.l.b16 %v1006
    %v2205 = vunpack.c.h.b16 %v1006
    %v2206 = vunpack.c.l.b16 %v1007
    %v2207 = vunpack.c.h.b16 %v1007
    %v2208 = vunpack.c.l.b16 %v1008
    %v2209 = vunpack.c.h.b16 %v1008
    %v2210 = vunpack.c.l.b16 %v1009
    %v2211 = vunpack.c.h.b16 %v1009
    %v2212 = vunpack.c.l.b16 %v1010
    %v2213 = vunpack.c.h.b16 %v1010
    %v2214 = vunpack.c.l.b16 %v1011
    %v2215 = vunpack.c.h.b16 %v1011
    %v2216 = vunpack.c.l.b16 %v1012
    %v2217 = vunpack.c.h.b16 %v1012
    %v2218 = vunpack.c.l.b16 %v1013
    %v2219 = vunpack.c.h.b16 %v1013
    %v2220 = vunpack.c.l.b16 %v1014
    %v2221 = vunpack.c.h.b16 %v1014
    %v2222 = vunpack.c.l.b16 %v1015
    %v2223 = vunpack.c.h.b16 %v1015
    %v2224 = vunpack.c.l.b16 %v1016
    %v2225 = vunpack.c.h.b16 %v1016
    %v2226 = vunpack.c.l.b16 %v1017
    %v2227 = vunpack.c.h.b16 %v1017
    %v2228 = vunpack.c.l.b16 %v1018
    %v2229 = vunpack.c.h.b16 %v1018
    %v2230 = vunpack.c.l.b16 %v1019
    %v2231 = vunpack.c.h.b16 %v1019
    %v2232 = vunpack.c.l.b16 %v1020
    %v2233 = vunpack.c.h.b16 %v1020
    %v2234 = vunpack.c.l.b16 %v1021
    %v2235 = vunpack.c.h.b16 %v1021
    %v2236 = vunpack.c.l.b16 %v1022
    %v2237 = vunpack.c.h.b16 %v1022
    %v2238 = vunpack.c.l.b16 %v1023
    %v2239 = vunpack.c.h.b16 %v1023
    %v2240 = vunpack.c.l.b16 %v1024
    %v2241 = vunpack.c.h.b16 %v1024
    %v2242 = vunpack.c.l.b16 %v1025
    %v2243 = vunpack.c.h.b16 %v1025
    %v2244 = vunpack.c.l.b16 %v1026
    %v2245 = vunpack.c.h.b16 %v1026
    %v2246 = vunpack.c.l.b16 %v1027
    %v2247 = vunpack.c.h.b16 %v1027
    %v2248 = vunpack.c.l.b16 %v1028
    %v2249 = vunpack.c.h.b16 %v1028
    %v2250 = vunpack.c.l.b16 %v1029
    %v2251 = vunpack.c.h.b16 %v1029
    %v2252 = vunpack.c.l.b16 %v1030
    %v2253 = vunpack.c.h.b16 %v1030
    %v2254 = vunpack.c.l.b16 %v1031
    %v2255 = vunpack.c.h.b16 %v1031
    %v2256 = vunpack.c.l.b16 %v1032
    %v2257 = vunpack.c.h.b16 %v1032
    %v2258 = vunpack.c.l.b16 %v1033
    %v2259 = vunpack.c.h.b16 %v1033
    %v2260 = vunpack.c.l.b16 %v1034
    %v2261 = vunpack.c.h.b16 %v1034
    %v2262 = vunpack.c.l.b16 %v1035
    %v2263 = vunpack.c.h.b16 %v1035
    %v2264 = vunpack.c.l.b16 %v1036
    %v2265 = vunpack.c.h.b16 %v1036
    %v2266 = vunpack.c.l.b16 %v1037
    %v2267 = vunpack.c.h.b16 %v1037
    %v2268 = vunpack.c.l.b16 %v1038
    %v2269 = vunpack.c.h.b16 %v1038
    %v2270 = vunpack.c.l.b16 %v1039
    %v2271 = vunpack.c.h.b16 %v1039
    %v2272 = vunpack.c.l.b16 %v1040
    %v2273 = vunpack.c.h.b16 %v1040
    %v2274 = vunpack.c.l.b16 %v1041
    %v2275 = vunpack.c.h.b16 %v1041
    %v2276 = vunpack.c.l.b16 %v1042
    %v2277 = vunpack.c.h.b16 %v1042
    %v2278 = vunpack.c.l.b16 %v1043
    %v2279 = vunpack.c.h.b16 %v1043
    %v2280 = vunpack.c.l.b16 %v1044
    %v2281 = vunpack.c.h.b16 %v1044
    %v2282 = vunpack.c.l.b16 %v1045
    %v2283 = vunpack.c.h.b16 %v1045
    %v2284 = vunpack.c.l.b16 %v1046
    %v2285 = vunpack.c.h.b16 %v1046
    %v2286 = vunpack.c.l.b16 %v1047
    %v2287 = vunpack.c.h.b16 %v1047
    %v2288 = vunpack.c.l.b16 %v1048
    %v2289 = vunpack.c.h.b16 %v1048
    %v2290 = vunpack.c.l.b16 %v1049
    %v2291 = vunpack.c.h.b16 %v1049
    %v2292 = vunpack.c.l.b16 %v1050
    %v2293 = vunpack.c.h.b16 %v1050
    %v2294 = vunpack.c.l.b16 %v1051
    %v2295 = vunpack.c.h.b16 %v1051
    %v2296 = vunpack.c.l.b16 %v1052
    %v2297 = vunpack.c.h.b16 %v1052
    %v2298 = vunpack.c.l.b16 %v1053
    %v2299 = vunpack.c.h.b16 %v1053
    %v2300 = vunpack.c.l.b16 %v1054
    %v2301 = vunpack.c.h.b16 %v1054
    %v2302 = vunpack.c.l.b16 %v1055
    %v2303 = vunpack.c.h.b16 %v1055
    %v2304 = vunpack.c.l.b16 %v1056
    %v2305 = vunpack.c.h.b16 %v1056
    %v2306 = vunpack.c.l.b16 %v1057
    %v2307 = vunpack.c.h.b16 %v1057
    %v2308 = vunpack.c.l.b16 %v1058
    %v2309 = vunpack.c.h.b16 %v1058
    %v2310 = vunpack.c.l.b16 %v1059
    %v2311 = vunpack.c.h.b16 %v1059
    %v2312 = vunpack.c.l.b16 %v1060
    %v2313 = vunpack.c.h.b16 %v1060
    %v2314 = vunpack.c.l.b16 %v1061
    %v2315 = vunpack.c.h.b16 %v1061
    %v2316 = vunpack.c.l.b16 %v1062
    %v2317 = vunpack.c.h.b16 %v1062
    %v2318 = vunpack.c.l.b16 %v1063
    %v2319 = vunpack.c.h.b16 %v1063
    %v2320 = vunpack.c.l.b16 %v1064
    %v2321 = vunpack.c.h.b16 %v1064
    %v2322 = vunpack.c.l.b16 %v1065
    %v2323 = vunpack.c.h.b16 %v1065
    %v2324 = vunpack.c.l.b16 %v1066
    %v2325 = vunpack.c.h.b16 %v1066
    %v2326 = vunpack.c.l.b16 %v1067
    %v2327 = vunpack.c.h.b16 %v1067
    %v2328 = vunpack.c.l.b16 %v1068
    %v2329 = vunpack.c.h.b16 %v1068
    %v2330 = vunpack.c.l.b16 %v1069
    %v2331 = vunpack.c.h.b16 %v1069
    %v2332 = vunpack.c.l.b16 %v1070
    %v2333 = vunpack.c.h.b16 %v1070
    %v2334 = vunpack.c.l.b16 %v1071
    %v2335 = vunpack.c.h.b16 %v1071
    %v2336 = vunpack.c.l.b16 %v1072
    %v2337 = vunpack.c.h.b16 %v1072
    %v2338 = vunpack.c.l.b16 %v1073
    %v2339 = vunpack.c.h.b16 %v1073
    %v2340 = vunpack.c.l.b16 %v1074
    %v2341 = vunpack.c.h.b16 %v1074
    %v2342 = vunpack.c.l.b16 %v1075
    %v2343 = vunpack.c.h.b16 %v1075
    %v2344 = vunpack.c.l.b16 %v1076
    %v2345 = vunpack.c.h.b16 %v1076
    %v2346 = vunpack.c.l.b16 %v1077
    %v2347 = vunpack.c.h.b16 %v1077
    %v2348 = vunpack.c.l.b16 %v1078
    %v2349 = vunpack.c.h.b16 %v1078
    %v2350 = vunpack.c.l.b16 %v1079
    %v2351 = vunpack.c.h.b16 %v1079
    %v2352 = vunpack.c.l.b16 %v1080
    %v2353 = vunpack.c.h.b16 %v1080
    %v2354 = vunpack.c.l.b16 %v1081
    %v2355 = vunpack.c.h.b16 %v1081
    %v2356 = vunpack.c.l.b16 %v1082
    %v2357 = vunpack.c.h.b16 %v1082
    %v2358 = vunpack.c.l.b16 %v1083
    %v2359 = vunpack.c.h.b16 %v1083
    %v2360 = vunpack.c.l.b16 %v1084
    %v2361 = vunpack.c.h.b16 %v1084
    %v2362 = vunpack.c.l.b16 %v1085
    %v2363 = vunpack.c.h.b16 %v1085
    %v2364 = vunpack.c.l.b16 %v1086
    %v2365 = vunpack.c.h.b16 %v1086
    %v2366 = vunpack.c.l.b16 %v1087
    %v2367 = vunpack.c.h.b16 %v1087
    %v2368 = vunpack.c.l.b16 %v1088
    %v2369 = vunpack.c.h.b16 %v1088
    %v2370 = vunpack.c.l.b16 %v1089
    %v2371 = vunpack.c.h.b16 %v1089
    %v2372 = vunpack.c.l.b16 %v1090
    %v2373 = vunpack.c.h.b16 %v1090
    %v2374 = vunpack.c.l.b16 %v1091
    %v2375 = vunpack.c.h.b16 %v1091
    %v2376 = vunpack.c.l.b16 %v1092
    %v2377 = vunpack.c.h.b16 %v1092
    %v2378 = vunpack.c.l.b16 %v1093
    %v2379 = vunpack.c.h.b16 %v1093
    %v2380 = vunpack.c.l.b16 %v1094
    %v2381 = vunpack.c.h.b16 %v1094
    %v2382 = vunpack.c.l.b16 %v1095
    %v2383 = vunpack.c.h.b16 %v1095
    %v2384 = vunpack.c.l.b16 %v1096
    %v2385 = vunpack.c.h.b16 %v1096
    %v2386 = vunpack.c.l.b16 %v1097
    %v2387 = vunpack.c.h.b16 %v1097
    %v2388 = vunpack.c.l.b16 %v1098
    %v2389 = vunpack.c.h.b16 %v1098
    %v2390 = vunpack.c.l.b16 %v1099
    %v2391 = vunpack.c.h.b16 %v1099
    %v2392 = vunpack.c.l.b16 %v1100
    %v2393 = vunpack.c.h.b16 %v1100
    %v2394 = vunpack.c.l.b16 %v1101
    %v2395 = vunpack.c.h.b16 %v1101
    %v2396 = vunpack.c.l.b16 %v1102
    %v2397 = vunpack.c.h.b16 %v1102
    %v2398 = vunpack.c.l.b16 %v1103
    %v2399 = vunpack.c.h.b16 %v1103
    %v2400 = vunpack.c.l.b16 %v1104
    %v2401 = vunpack.c.h.b16 %v1104
    %v2402 = vunpack.c.l.b16 %v1105
    %v2403 = vunpack.c.h.b16 %v1105
    %v2404 = vunpack.c.l.b16 %v1106
    %v2405 = vunpack.c.h.b16 %v1106
    %v2406 = vunpack.c.l.b16 %v1107
    %v2407 = vunpack.c.h.b16 %v1107
    %v2408 = vunpack.c.l.b16 %v1108
    %v2409 = vunpack.c.h.b16 %v1108
    %v2410 = vunpack.c.l.b16 %v1109
    %v2411 = vunpack.c.h.b16 %v1109
    %v2412 = vunpack.c.l.b16 %v1110
    %v2413 = vunpack.c.h.b16 %v1110
    %v2414 = vunpack.c.l.b16 %v1111
    %v2415 = vunpack.c.h.b16 %v1111
    %v2416 = vunpack.c.l.b16 %v1112
    %v2417 = vunpack.c.h.b16 %v1112
    %v2418 = vunpack.c.l.b16 %v1113
    %v2419 = vunpack.c.h.b16 %v1113
    %v2420 = vunpack.c.l.b16 %v1114
    %v2421 = vunpack.c.h.b16 %v1114
    %v2422 = vunpack.c.l.b16 %v1115
    %v2423 = vunpack.c.h.b16 %v1115
    %v2424 = vunpack.c.l.b16 %v1116
    %v2425 = vunpack.c.h.b16 %v1116
    %v2426 = vunpack.c.l.b16 %v1117
    %v2427 = vunpack.c.h.b16 %v1117
    %v2428 = vunpack.c.l.b16 %v1118
    %v2429 = vunpack.c.h.b16 %v1118
    %v2430 = vunpack.c.l.b16 %v1119
    %v2431 = vunpack.c.h.b16 %v1119
    %v2432 = vunpack.c.l.b16 %v1120
    %v2433 = vunpack.c.h.b16 %v1120
    %v2434 = vunpack.c.l.b16 %v1121
    %v2435 = vunpack.c.h.b16 %v1121
    %v2436 = vunpack.c.l.b16 %v1122
    %v2437 = vunpack.c.h.b16 %v1122
    %v2438 = vunpack.c.l.b16 %v1123
    %v2439 = vunpack.c.h.b16 %v1123
    %v2440 = vunpack.c.l.b16 %v1124
    %v2441 = vunpack.c.h.b16 %v1124
    %v2442 = vunpack.c.l.b16 %v1125
    %v2443 = vunpack.c.h.b16 %v1125
    %v2444 = vunpack.c.l.b16 %v1126
    %v2445 = vunpack.c.h.b16 %v1126
    %v2446 = vunpack.c.l.b16 %v1127
    %v2447 = vunpack.c.h.b16 %v1127
    %v2448 = vunpack.c.l.b16 %v1128
    %v2449 = vunpack.c.h.b16 %v1128
    %v2450 = vunpack.c.l.b16 %v1129
    %v2451 = vunpack.c.h.b16 %v1129
    %v2452 = vunpack.c.l.b16 %v1130
    %v2453 = vunpack.c.h.b16 %v1130
    %v2454 = vunpack.c.l.b16 %v1131
    %v2455 = vunpack.c.h.b16 %v1131
    %v2456 = vunpack.c.l.b16 %v1132
    %v2457 = vunpack.c.h.b16 %v1132
    %v2458 = vunpack.c.l.b16 %v1133
    %v2459 = vunpack.c.h.b16 %v1133
    %v2460 = vunpack.c.l.b16 %v1134
    %v2461 = vunpack.c.h.b16 %v1134
    %v2462 = vunpack.c.l.b16 %v1135
    %v2463 = vunpack.c.h.b16 %v1135
    %v2464 = vunpack.c.l.b16 %v1136
    %v2465 = vunpack.c.h.b16 %v1136
    %v2466 = vunpack.c.l.b16 %v1137
    %v2467 = vunpack.c.h.b16 %v1137
    %v2468 = vunpack.c.l.b16 %v1138
    %v2469 = vunpack.c.h.b16 %v1138
    %v2470 = vunpack.c.l.b16 %v1139
    %v2471 = vunpack.c.h.b16 %v1139
    %v2472 = vunpack.c.l.b16 %v1140
    %v2473 = vunpack.c.h.b16 %v1140
    %v2474 = vunpack.c.l.b16 %v1141
    %v2475 = vunpack.c.h.b16 %v1141
    %v2476 = vunpack.c.l.b16 %v1142
    %v2477 = vunpack.c.h.b16 %v1142
    %v2478 = vunpack.c.l.b16 %v1143
    %v2479 = vunpack.c.h.b16 %v1143
    %v2480 = vunpack.c.l.b16 %v1144
    %v2481 = vunpack.c.h.b16 %v1144
    %v2482 = vunpack.c.l.b16 %v1145
    %v2483 = vunpack.c.h.b16 %v1145
    %v2484 = vunpack.c.l.b16 %v1146
    %v2485 = vunpack.c.h.b16 %v1146
    %v2486 = vunpack.c.l.b16 %v1147
    %v2487 = vunpack.c.h.b16 %v1147
    %v2488 = vunpack.c.l.b16 %v1148
    %v2489 = vunpack.c.h.b16 %v1148
    %v2490 = vunpack.c.l.b16 %v1149
    %v2491 = vunpack.c.h.b16 %v1149
    %v2492 = vunpack.c.l.b16 %v1150
    %v2493 = vunpack.c.h.b16 %v1150
    %v2494 = vunpack.c.l.b16 %v1151
    %v2495 = vunpack.c.h.b16 %v1151
    %v2496 = vunpack.c.l.b16 %v1152
    %v2497 = vunpack.c.h.b16 %v1152
    %v2498 = vunpack.c.l.b16 %v1153
    %v2499 = vunpack.c.h.b16 %v1153
    %v2500 = vunpack.c.l.b16 %v1154
    %v2501 = vunpack.c.h.b16 %v1154
    %v2502 = vunpack.c.l.b16 %v1155
    %v2503 = vunpack.c.h.b16 %v1155
    %v2504 = vunpack.c.l.b16 %v1156
    %v2505 = vunpack.c.h.b16 %v1156
    %v2506 = vunpack.c.l.b16 %v1157
    %v2507 = vunpack.c.h.b16 %v1157
    %v2508 = vunpack.c.l.b16 %v1158
    %v2509 = vunpack.c.h.b16 %v1158
    %v2510 = vunpack.c.l.b16 %v1159
    %v2511 = vunpack.c.h.b16 %v1159
    %v2512 = vunpack.c.l.b16 %v1160
    %v2513 = vunpack.c.h.b16 %v1160
    %v2514 = vunpack.c.l.b16 %v1161
    %v2515 = vunpack.c.h.b16 %v1161
    %v2516 = vunpack.c.l.b16 %v1162
    %v2517 = vunpack.c.h.b16 %v1162
    %v2518 = vunpack.c.l.b16 %v1163
    %v2519 = vunpack.c.h.b16 %v1163
    %v2520 = vunpack.c.l.b16 %v1164
    %v2521 = vunpack.c.h.b16 %v1164
    %v2522 = vunpack.c.l.b16 %v1165
    %v2523 = vunpack.c.h.b16 %v1165
    %v2524 = vunpack.c.l.b16 %v1166
    %v2525 = vunpack.c.h.b16 %v1166
    %v2526 = vunpack.c.l.b16 %v1167
    %v2527 = vunpack.c.h.b16 %v1167
    %v2528 = vunpack.c.l.b16 %v1168
    %v2529 = vunpack.c.h.b16 %v1168
    %v2530 = vunpack.c.l.b16 %v1169
    %v2531 = vunpack.c.h.b16 %v1169
    %v2532 = vunpack.c.l.b16 %v1170
    %v2533 = vunpack.c.h.b16 %v1170
    %v2534 = vunpack.c.l.b16 %v1171
    %v2535 = vunpack.c.h.b16 %v1171
    %v2536 = vunpack.c.l.b16 %v1172
    %v2537 = vunpack.c.h.b16 %v1172
    %v2538 = vunpack.c.l.b16 %v1173
    %v2539 = vunpack.c.h.b16 %v1173
    %v2540 = vunpack.c.l.b16 %v1174
    %v2541 = vunpack.c.h.b16 %v1174
    %v2542 = vunpack.c.l.b16 %v1175
    %v2543 = vunpack.c.h.b16 %v1175
    %v2544 = vunpack.c.l.b16 %v1176
    %v2545 = vunpack.c.h.b16 %v1176
    %v2546 = vunpack.c.l.b16 %v1177
    %v2547 = vunpack.c.h.b16 %v1177
    %v2548 = vunpack.c.l.b16 %v1178
    %v2549 = vunpack.c.h.b16 %v1178
    %v2550 = vunpack.c.l.b16 %v1179
    %v2551 = vunpack.c.h.b16 %v1179
    %v2552 = vunpack.c.l.b16 %v1180
    %v2553 = vunpack.c.h.b16 %v1180
    %v2554 = vunpack.c.l.b16 %v1181
    %v2555 = vunpack.c.h.b16 %v1181
    %v2556 = vunpack.c.l.b16 %v1182
    %v2557 = vunpack.c.h.b16 %v1182
    %v2558 = vunpack.c.l.b16 %v1183
    %v2559 = vunpack.c.h.b16 %v1183
    %v2560 = vunpack.c.l.b16 %v1184
    %v2561 = vunpack.c.h.b16 %v1184
    %v2562 = vunpack.c.l.b16 %v1185
    %v2563 = vunpack.c.h.b16 %v1185
    %v2564 = vunpack.c.l.b16 %v1186
    %v2565 = vunpack.c.h.b16 %v1186
    %v2566 = vunpack.c.l.b16 %v1187
    %v2567 = vunpack.c.h.b16 %v1187
    %v2568 = vunpack.c.l.b16 %v1188
    %v2569 = vunpack.c.h.b16 %v1188
    %v2570 = vunpack.c.l.b16 %v1189
    %v2571 = vunpack.c.h.b16 %v1189
    %v2572 = vunpack.c.l.b16 %v1190
    %v2573 = vunpack.c.h.b16 %v1190
    %v2574 = vunpack.c.l.b16 %v1191
    %v2575 = vunpack.c.h.b16 %v1191
    %v2576 = vunpack.c.l.b16 %v1192
    %v2577 = vunpack.c.h.b16 %v1192
    %v2578 = vunpack.c.l.b16 %v1193
    %v2579 = vunpack.c.h.b16 %v1193
    %v2580 = vunpack.c.l.b16 %v1194
    %v2581 = vunpack.c.h.b16 %v1194
    %v2582 = vunpack.c.l.b16 %v1195
    %v2583 = vunpack.c.h.b16 %v1195
    %v2584 = vunpack.c.l.b16 %v1196
    %v2585 = vunpack.c.h.b16 %v1196
    %v2586 = vunpack.c.l.b16 %v1197
    %v2587 = vunpack.c.h.b16 %v1197
    %v2588 = vunpack.c.l.b16 %v1198
    %v2589 = vunpack.c.h.b16 %v1198
    %v2590 = vunpack.c.l.b16 %v1199
    %v2591 = vunpack.c.h.b16 %v1199
    %v2592 = vunpack.c.l.b16 %v1200
    %v2593 = vunpack.c.h.b16 %v1200
    %v2594 = vunpack.c.l.b16 %v1201
    %v2595 = vunpack.c.h.b16 %v1201
    %v2596 = vunpack.c.l.b16 %v1202
    %v2597 = vunpack.c.h.b16 %v1202
    %v2598 = vunpack.c.l.b16 %v1203
    %v2599 = vunpack.c.h.b16 %v1203
    %v2600 = vunpack.c.l.b16 %v1204
    %v2601 = vunpack.c.h.b16 %v1204
    %v2602 = vunpack.c.l.b16 %v1205
    %v2603 = vunpack.c.h.b16 %v1205
    %v2604 = vunpack.c.l.b16 %v1206
    %v2605 = vunpack.c.h.b16 %v1206
    %v2606 = vunpack.c.l.b16 %v1207
    %v2607 = vunpack.c.h.b16 %v1207
    %v2608 = vunpack.c.l.b16 %v1208
    %v2609 = vunpack.c.h.b16 %v1208
    %v2610 = vunpack.c.l.b16 %v1209
    %v2611 = vunpack.c.h.b16 %v1209
    %v2612 = vunpack.c.l.b16 %v1210
    %v2613 = vunpack.c.h.b16 %v1210
    %v2614 = vunpack.c.l.b16 %v1211
    %v2615 = vunpack.c.h.b16 %v1211
    %v2616 = vunpack.c.l.b16 %v1212
    %v2617 = vunpack.c.h.b16 %v1212
    %v2618 = vunpack.c.l.b16 %v1213
    %v2619 = vunpack.c.h.b16 %v1213
    %v2620 = vunpack.c.l.b16 %v1214
    %v2621 = vunpack.c.h.b16 %v1214
    %v2622 = vunpack.c.l.b16 %v1215
    %v2623 = vunpack.c.h.b16 %v1215
    %v2624 = vunpack.c.l.b16 %v1216
    %v2625 = vunpack.c.h.b16 %v1216
    %v2626 = vunpack.c.l.b16 %v1217
    %v2627 = vunpack.c.h.b16 %v1217
    %v2628 = vunpack.c.l.b16 %v1218
    %v2629 = vunpack.c.h.b16 %v1218
    %v2630 = vunpack.c.l.b16 %v1219
    %v2631 = vunpack.c.h.b16 %v1219
    %v2632 = vunpack.c.l.b16 %v1220
    %v2633 = vunpack.c.h.b16 %v1220
    %v2634 = vunpack.c.l.b16 %v1221
    %v2635 = vunpack.c.h.b16 %v1221
    %v2636 = vunpack.c.l.b16 %v1222
    %v2637 = vunpack.c.h.b16 %v1222
    %v2638 = vunpack.c.l.b16 %v1223
    %v2639 = vunpack.c.h.b16 %v1223
    %v2640 = vunpack.c.l.b16 %v1224
    %v2641 = vunpack.c.h.b16 %v1224
    %v2642 = vunpack.c.l.b16 %v1225
    %v2643 = vunpack.c.h.b16 %v1225
    %v2644 = vunpack.c.l.b16 %v1226
    %v2645 = vunpack.c.h.b16 %v1226
    %v2646 = vunpack.c.l.b16 %v1227
    %v2647 = vunpack.c.h.b16 %v1227
    %v2648 = vunpack.c.l.b16 %v1228
    %v2649 = vunpack.c.h.b16 %v1228
    %v2650 = vunpack.c.l.b16 %v1229
    %v2651 = vunpack.c.h.b16 %v1229
    %v2652 = vunpack.c.l.b16 %v1230
    %v2653 = vunpack.c.h.b16 %v1230
    %v2654 = vunpack.c.l.b16 %v1231
    %v2655 = vunpack.c.h.b16 %v1231
    %v2656 = vunpack.c.l.b16 %v1232
    %v2657 = vunpack.c.h.b16 %v1232
    %v2658 = vunpack.c.l.b16 %v1233
    %v2659 = vunpack.c.h.b16 %v1233
    %v2660 = vunpack.c.l.b16 %v1234
    %v2661 = vunpack.c.h.b16 %v1234
    %v2662 = vunpack.c.l.b16 %v1235
    %v2663 = vunpack.c.h.b16 %v1235
    %v2664 = vunpack.c.l.b16 %v1236
    %v2665 = vunpack.c.h.b16 %v1236
    %v2666 = vunpack.c.l.b16 %v1237
    %v2667 = vunpack.c.h.b16 %v1237
    %v2668 = vunpack.c.l.b16 %v1238
    %v2669 = vunpack.c.h.b16 %v1238
    %v2670 = vunpack.c.l.b16 %v1239
    %v2671 = vunpack.c.h.b16 %v1239
    %v2672 = vunpack.c.l.b16 %v1240
    %v2673 = vunpack.c.h.b16 %v1240
    %v2674 = vunpack.c.l.b16 %v1241
    %v2675 = vunpack.c.h.b16 %v1241
    %v2676 = vunpack.c.l.b16 %v1242
    %v2677 = vunpack.c.h.b16 %v1242
    %v2678 = vunpack.c.l.b16 %v1243
    %v2679 = vunpack.c.h.b16 %v1243
    %v2680 = vunpack.c.l.b16 %v1244
    %v2681 = vunpack.c.h.b16 %v1244
    %v2682 = vunpack.c.l.b16 %v1245
    %v2683 = vunpack.c.h.b16 %v1245
    %v2684 = vunpack.c.l.b16 %v1246
    %v2685 = vunpack.c.h.b16 %v1246
    %v2686 = vunpack.c.l.b16 %v1247
    %v2687 = vunpack.c.h.b16 %v1247
    %v2688 = vunpack.c.l.b16 %v1248
    %v2689 = vunpack.c.h.b16 %v1248
    %v2690 = vunpack.c.l.b16 %v1249
    %v2691 = vunpack.c.h.b16 %v1249
    %v2692 = vunpack.c.l.b16 %v1250
    %v2693 = vunpack.c.h.b16 %v1250
    %v2694 = vunpack.c.l.b16 %v1251
    %v2695 = vunpack.c.h.b16 %v1251
    %v2696 = vunpack.c.l.b16 %v1252
    %v2697 = vunpack.c.h.b16 %v1252
    %v2698 = vunpack.c.l.b16 %v1253
    %v2699 = vunpack.c.h.b16 %v1253
    %v2700 = vunpack.c.l.b16 %v1254
    %v2701 = vunpack.c.h.b16 %v1254
    %v2702 = vunpack.c.l.b16 %v1255
    %v2703 = vunpack.c.h.b16 %v1255
    %v2704 = vunpack.c.l.b16 %v1256
    %v2705 = vunpack.c.h.b16 %v1256
    %v2706 = vunpack.c.l.b16 %v1257
    %v2707 = vunpack.c.h.b16 %v1257
    %v2708 = vunpack.c.l.b16 %v1258
    %v2709 = vunpack.c.h.b16 %v1258
    %v2710 = vunpack.c.l.b16 %v1259
    %v2711 = vunpack.c.h.b16 %v1259
    %v2712 = vunpack.c.l.b16 %v1260
    %v2713 = vunpack.c.h.b16 %v1260
    %v2714 = vunpack.c.l.b16 %v1261
    %v2715 = vunpack.c.h.b16 %v1261
    %v2716 = vunpack.c.l.b16 %v1262
    %v2717 = vunpack.c.h.b16 %v1262
    %v2718 = vunpack.c.l.b16 %v1263
    %v2719 = vunpack.c.h.b16 %v1263
    %v2720 = vunpack.c.l.b16 %v1264
    %v2721 = vunpack.c.h.b16 %v1264
    %v2722 = vunpack.c.l.b16 %v1265
    %v2723 = vunpack.c.h.b16 %v1265
    %v2724 = vunpack.c.l.b16 %v1266
    %v2725 = vunpack.c.h.b16 %v1266
    %v2726 = vunpack.c.l.b16 %v1267
    %v2727 = vunpack.c.h.b16 %v1267
    %v2728 = vunpack.c.l.b16 %v1268
    %v2729 = vunpack.c.h.b16 %v1268
    %v2730 = vunpack.c.l.b16 %v1269
    %v2731 = vunpack.c.h.b16 %v1269
    %v2732 = vunpack.c.l.b16 %v1270
    %v2733 = vunpack.c.h.b16 %v1270
    %v2734 = vunpack.c.l.b16 %v1271
    %v2735 = vunpack.c.h.b16 %v1271
    %v2736 = vunpack.c.l.b16 %v1272
    %v2737 = vunpack.c.h.b16 %v1272
    %v2738 = vunpack.c.l.b16 %v1273
    %v2739 = vunpack.c.h.b16 %v1273
    %v2740 = vunpack.c.l.b16 %v1274
    %v2741 = vunpack.c.h.b16 %v1274
    %v2742 = vunpack.c.l.b16 %v1275
    %v2743 = vunpack.c.h.b16 %v1275
    %v2744 = vunpack.c.l.b16 %v1276
    %v2745 = vunpack.c.h.b16 %v1276
    %v2746 = vunpack.c.l.b16 %v1277
    %v2747 = vunpack.c.h.b16 %v1277
    %v2748 = vunpack.c.l.b16 %v1278
    %v2749 = vunpack.c.h.b16 %v1278
    %v2750 = vunpack.c.l.b16 %v1279
    %v2751 = vunpack.c.h.b16 %v1279
    %v2752 = vunpack.c.l.b16 %v1280
    %v2753 = vunpack.c.h.b16 %v1280
    %v2754 = vunpack.c.l.b16 %v1281
    %v2755 = vunpack.c.h.b16 %v1281
    %v2756 = vunpack.c.l.b16 %v1282
    %v2757 = vunpack.c.h.b16 %v1282
    %v2758 = vunpack.c.l.b16 %v1283
    %v2759 = vunpack.c.h.b16 %v1283
    %v2760 = vunpack.c.l.b16 %v1284
    %v2761 = vunpack.c.h.b16 %v1284
    %v2762 = vunpack.c.l.b16 %v1285
    %v2763 = vunpack.c.h.b16 %v1285
    %v2764 = vunpack.c.l.b16 %v1286
    %v2765 = vunpack.c.h.b16 %v1286
    %v2766 = vunpack.c.l.b16 %v1287
    %v2767 = vunpack.c.h.b16 %v1287
    %v2768 = vunpack.c.l.b16 %v1288
    %v2769 = vunpack.c.h.b16 %v1288
    %v2770 = vunpack.c.l.b16 %v1289
    %v2771 = vunpack.c.h.b16 %v1289
    %v2772 = vunpack.c.l.b16 %v1290
    %v2773 = vunpack.c.h.b16 %v1290
    %v2774 = vunpack.c.l.b16 %v1291
    %v2775 = vunpack.c.h.b16 %v1291
    %v2776 = vunpack.c.l.b16 %v1292
    %v2777 = vunpack.c.h.b16 %v1292
    %v2778 = vunpack.c.l.b16 %v1293
    %v2779 = vunpack.c.h.b16 %v1293
    %v2780 = vunpack.c.l.b16 %v1294
    %v2781 = vunpack.c.h.b16 %v1294
    %v2782 = vunpack.c.l.b16 %v1295
    %v2783 = vunpack.c.h.b16 %v1295
    %v2784 = vunpack.c.l.b16 %v1296
    %v2785 = vunpack.c.h.b16 %v1296
    %v2786 = vunpack.c.l.b16 %v1297
    %v2787 = vunpack.c.h.b16 %v1297
    %v2788 = vunpack.c.l.b16 %v1298
    %v2789 = vunpack.c.h.b16 %v1298
    %v2790 = vunpack.c.l.b16 %v1299
    %v2791 = vunpack.c.h.b16 %v1299
    %v2792 = vunpack.c.l.b16 %v1300
    %v2793 = vunpack.c.h.b16 %v1300
    %v2794 = vunpack.c.l.b16 %v1301
    %v2795 = vunpack.c.h.b16 %v1301
    %v2796 = vunpack.c.l.b16 %v1302
    %v2797 = vunpack.c.h.b16 %v1302
    %v2798 = vunpack.c.l.b16 %v1303
    %v2799 = vunpack.c.h.b16 %v1303
    %v2800 = vunpack.c.l.b16 %v1304
    %v2801 = vunpack.c.h.b16 %v1304
    %v2802 = vunpack.c.l.b16 %v1305
    %v2803 = vunpack.c.h.b16 %v1305
    %v2804 = vunpack.c.l.b16 %v1306
    %v2805 = vunpack.c.h.b16 %v1306
    %v2806 = vunpack.c.l.b16 %v1307
    %v2807 = vunpack.c.h.b16 %v1307
    %v2808 = vunpack.c.l.b16 %v1308
    %v2809 = vunpack.c.h.b16 %v1308
    %v2810 = vunpack.c.l.b16 %v1309
    %v2811 = vunpack.c.h.b16 %v1309
    %v2812 = vunpack.c.l.b16 %v1310
    %v2813 = vunpack.c.h.b16 %v1310
    %v2814 = vunpack.c.l.b16 %v1311
    %v2815 = vunpack.c.h.b16 %v1311
    %v2816 = vunpack.c.l.b16 %v1312
    %v2817 = vunpack.c.h.b16 %v1312
    %v2818 = vunpack.c.l.b16 %v1313
    %v2819 = vunpack.c.h.b16 %v1313
    %v2820 = vunpack.c.l.b16 %v1314
    %v2821 = vunpack.c.h.b16 %v1314
    %v2822 = vunpack.c.l.b16 %v1315
    %v2823 = vunpack.c.h.b16 %v1315
    %v2824 = vunpack.c.l.b16 %v1316
    %v2825 = vunpack.c.h.b16 %v1316
    %v2826 = vunpack.c.l.b16 %v1317
    %v2827 = vunpack.c.h.b16 %v1317
    %v2828 = vunpack.c.l.b16 %v1318
    %v2829 = vunpack.c.h.b16 %v1318
    %v2830 = vunpack.c.l.b16 %v1319
    %v2831 = vunpack.c.h.b16 %v1319
    %v2832 = vunpack.c.l.b16 %v1320
    %v2833 = vunpack.c.h.b16 %v1320
    %v2834 = vunpack.c.l.b16 %v1321
    %v2835 = vunpack.c.h.b16 %v1321
    %v2836 = vunpack.c.l.b16 %v1322
    %v2837 = vunpack.c.h.b16 %v1322
    %v2838 = vunpack.c.l.b16 %v1323
    %v2839 = vunpack.c.h.b16 %v1323
    %v2840 = vunpack.c.l.b16 %v1324
    %v2841 = vunpack.c.h.b16 %v1324
    %v2842 = vunpack.c.l.b16 %v1325
    %v2843 = vunpack.c.h.b16 %v1325
    %v2844 = vunpack.c.l.b16 %v1326
    %v2845 = vunpack.c.h.b16 %v1326
    %v2846 = vunpack.c.l.b16 %v1327
    %v2847 = vunpack.c.h.b16 %v1327
    %v2848 = vunpack.c.l.b16 %v1328
    %v2849 = vunpack.c.h.b16 %v1328
    %v2850 = vunpack.c.l.b16 %v1329
    %v2851 = vunpack.c.h.b16 %v1329
    %v2852 = vunpack.c.l.b16 %v1330
    %v2853 = vunpack.c.h.b16 %v1330
    %v2854 = vunpack.c.l.b16 %v1331
    %v2855 = vunpack.c.h.b16 %v1331
    %v2856 = vunpack.c.l.b16 %v1332
    %v2857 = vunpack.c.h.b16 %v1332
    %v2858 = vunpack.c.l.b16 %v1333
    %v2859 = vunpack.c.h.b16 %v1333
    %v2860 = vunpack.c.l.b16 %v1334
    %v2861 = vunpack.c.h.b16 %v1334
    %v2862 = vunpack.c.l.b16 %v1335
    %v2863 = vunpack.c.h.b16 %v1335
    %v2864 = vunpack.c.l.b16 %v1336
    %v2865 = vunpack.c.h.b16 %v1336
    %v2866 = vunpack.c.l.b16 %v1337
    %v2867 = vunpack.c.h.b16 %v1337
    %v2868 = vunpack.c.l.b16 %v1338
    %v2869 = vunpack.c.h.b16 %v1338
    %v2870 = vunpack.c.l.b16 %v1339
    %v2871 = vunpack.c.h.b16 %v1339
    %v2872 = vunpack.c.l.b16 %v1340
    %v2873 = vunpack.c.h.b16 %v1340
    %v2874 = vunpack.c.l.b16 %v1341
    %v2875 = vunpack.c.h.b16 %v1341
    %v2876 = vunpack.c.l.b16 %v1342
    %v2877 = vunpack.c.h.b16 %v1342
    %v2878 = vunpack.c.l.b16 %v1343
    %v2879 = vunpack.c.h.b16 %v1343
    %v2880 = vunpack.c.l.b16 %v1344
    %v2881 = vunpack.c.h.b16 %v1344
    %v2882 = vunpack.c.l.b16 %v1345
    %v2883 = vunpack.c.h.b16 %v1345
    %v2884 = vunpack.c.l.b16 %v1346
    %v2885 = vunpack.c.h.b16 %v1346
    %v2886 = vunpack.c.l.b16 %v1347
    %v2887 = vunpack.c.h.b16 %v1347
    %v2888 = vunpack.c.l.b16 %v1348
    %v2889 = vunpack.c.h.b16 %v1348
    %v2890 = vunpack.c.l.b16 %v1349
    %v2891 = vunpack.c.h.b16 %v1349
    %v2892 = vunpack.c.l.b16 %v1350
    %v2893 = vunpack.c.h.b16 %v1350
    %v2894 = vunpack.c.l.b16 %v1351
    %v2895 = vunpack.c.h.b16 %v1351
    %v2896 = vunpack.c.l.b16 %v1352
    %v2897 = vunpack.c.h.b16 %v1352
    %v2898 = vunpack.c.l.b16 %v1353
    %v2899 = vunpack.c.h.b16 %v1353
    %v2900 = vunpack.c.l.b16 %v1354
    %v2901 = vunpack.c.h.b16 %v1354
    %v2902 = vunpack.c.l.b16 %v1355
    %v2903 = vunpack.c.h.b16 %v1355
    %v2904 = vunpack.c.l.b16 %v1356
    %v2905 = vunpack.c.h.b16 %v1356
    %v2906 = vunpack.c.l.b16 %v1357
    %v2907 = vunpack.c.h.b16 %v1357
    %v2908 = vunpack.c.l.b16 %v1358
    %v2909 = vunpack.c.h.b16 %v1358
    %v2910 = vunpack.c.l.b16 %v1359
    %v2911 = vunpack.c.h.b16 %v1359
    %v2912 = vunpack.c.l.b16 %v1360
    %v2913 = vunpack.c.h.b16 %v1360
    %v2914 = vunpack.c.l.b16 %v1361
    %v2915 = vunpack.c.h.b16 %v1361
    %v2916 = vunpack.c.l.b16 %v1362
    %v2917 = vunpack.c.h.b16 %v1362
    %v2918 = vunpack.c.l.b16 %v1363
    %v2919 = vunpack.c.h.b16 %v1363
    %v2920 = vunpack.c.l.b16 %v1364
    %v2921 = vunpack.c.h.b16 %v1364
    %v2922 = vunpack.c.l.b16 %v1365
    %v2923 = vunpack.c.h.b16 %v1365
    %v2924 = vpack.c.b16 %v1904, %v1900
    %v2925 = vpack.c.b16 %v1905, %v1901
    %v2926 = vpack.c.b16 %v1906, %v1902
    %v2927 = vpack.c.b16 %v1907, %v1903
    %v2928 = vpack.c.b16 %v1912, %v1908
    %v2929 = vpack.c.b16 %v1913, %v1909
    %v2930 = vpack.c.b16 %v1914, %v1910
    %v2931 = vpack.c.b16 %v1915, %v1911
    %v2932 = vpack.c.b16 %v1920, %v1916
    %v2933 = vpack.c.b16 %v1921, %v1917
    %v2934 = vpack.c.b16 %v1922, %v1918
    %v2935 = vpack.c.b16 %v1923, %v1919
    %v2936 = vpack.c.b16 %v1928, %v1924
    %v2937 = vpack.c.b16 %v1929, %v1925
    %v2938 = vpack.c.b16 %v1930, %v1926
    %v2939 = vpack.c.b16 %v1931, %v1927
    %v2940 = vpack.c.b16 %v1936, %v1932
    %v2941 = vpack.c.b16 %v1937, %v1933
    %v2942 = vpack.c.b16 %v1938, %v1934
    %v2943 = vpack.c.b16 %v1939, %v1935
    %v2944 = vpack.c.b16 %v1944, %v1940
    %v2945 = vpack.c.b16 %v1945, %v1941
    %v2946 = vpack.c.b16 %v1946, %v1942
    %v2947 = vpack.c.b16 %v1947, %v1943
    %v2948 = vpack.c.b16 %v1952, %v1948
    %v2949 = vpack.c.b16 %v1953, %v1949
    %v2950 = vpack.c.b16 %v1954, %v1950
    %v2951 = vpack.c.b16 %v1955, %v1951
    %v2952 = vpack.c.b16 %v1960, %v1956
    %v2953 = vpack.c.b16 %v1961, %v1957
    %v2954 = vpack.c.b16 %v1962, %v1958
    %v2955 = vpack.c.b16 %v1963, %v1959
    %v2956 = vpack.c.b16 %v1968, %v1964
    %v2957 = vpack.c.b16 %v1969, %v1965
    %v2958 = vpack.c.b16 %v1970, %v1966
    %v2959 = vpack.c.b16 %v1971, %v1967
    %v2960 = vpack.c.b16 %v1976, %v1972
    %v2961 = vpack.c.b16 %v1977, %v1973
    %v2962 = vpack.c.b16 %v1978, %v1974
    %v2963 = vpack.c.b16 %v1979, %v1975
    %v2964 = vpack.c.b16 %v1984, %v1980
    %v2965 = vpack.c.b16 %v1985, %v1981
    %v2966 = vpack.c.b16 %v1986, %v1982
    %v2967 = vpack.c.b16 %v1987, %v1983
    %v2968 = vpack.c.b16 %v1992, %v1988
    %v2969 = vpack.c.b16 %v1993, %v1989
    %v2970 = vpack.c.b16 %v1994, %v1990
    %v2971 = vpack.c.b16 %v1995, %v1991
    %v2972 = vpack.c.b16 %v2000, %v1996
    %v2973 = vpack.c.b16 %v2001, %v1997
    %v2974 = vpack.c.b16 %v2002, %v1998
    %v2975 = vpack.c.b16 %v2003, %v1999
    %v2976 = vpack.c.b16 %v2008, %v2004
    %v2977 = vpack.c.b16 %v2009, %v2005
    %v2978 = vpack.c.b16 %v2010, %v2006
    %v2979 = vpack.c.b16 %v2011, %v2007
    %v2980 = vpack.c.b16 %v2016, %v2012
    %v2981 = vpack.c.b16 %v2017, %v2013
    %v2982 = vpack.c.b16 %v2018, %v2014
    %v2983 = vpack.c.b16 %v2019, %v2015
    %v2984 = vpack.c.b16 %v2024, %v2020
    %v2985 = vpack.c.b16 %v2025, %v2021
    %v2986 = vpack.c.b16 %v2026, %v2022
    %v2987 = vpack.c.b16 %v2027, %v2023
    %v2988 = vpack.c.b16 %v2032, %v2028
    %v2989 = vpack.c.b16 %v2033, %v2029
    %v2990 = vpack.c.b16 %v2034, %v2030
    %v2991 = vpack.c.b16 %v2035, %v2031
    %v2992 = vpack.c.b16 %v2040, %v2036
    %v2993 = vpack.c.b16 %v2041, %v2037
    %v2994 = vpack.c.b16 %v2042, %v2038
    %v2995 = vpack.c.b16 %v2043, %v2039
    %v2996 = vpack.c.b16 %v2048, %v2044
    %v2997 = vpack.c.b16 %v2049, %v2045
    %v2998 = vpack.c.b16 %v2050, %v2046
    %v2999 = vpack.c.b16 %v2051, %v2047
    %v3000 = vpack.c.b16 %v2056, %v2052
    %v3001 = vpack.c.b16 %v2057, %v2053
    %v3002 = vpack.c.b16 %v2058, %v2054
    %v3003 = vpack.c.b16 %v2059, %v2055
    %v3004 = vpack.c.b16 %v2064, %v2060
    %v3005 = vpack.c.b16 %v2065, %v2061
    %v3006 = vpack.c.b16 %v2066, %v2062
    %v3007 = vpack.c.b16 %v2067, %v2063
    %v3008 = vpack.c.b16 %v2072, %v2068
    %v3009 = vpack.c.b16 %v2073, %v2069
    %v3010 = vpack.c.b16 %v2074, %v2070
    %v3011 = vpack.c.b16 %v2075, %v2071
    %v3012 = vpack.c.b16 %v2080, %v2076
    %v3013 = vpack.c.b16 %v2081, %v2077
    %v3014 = vpack.c.b16 %v2082, %v2078
    %v3015 = vpack.c.b16 %v2083, %v2079
    %v3016 = vpack.c.b16 %v2088, %v2084
    %v3017 = vpack.c.b16 %v2089, %v2085
    %v3018 = vpack.c.b16 %v2090, %v2086
    %v3019 = vpack.c.b16 %v2091, %v2087
    %v3020 = vpack.c.b16 %v2096, %v2092
    %v3021 = vpack.c.b16 %v2097, %v2093
    %v3022 = vpack.c.b16 %v2098, %v2094
    %v3023 = vpack.c.b16 %v2099, %v2095
    %v3024 = vpack.c.b16 %v2104, %v2100
    %v3025 = vpack.c.b16 %v2105, %v2101
    %v3026 = vpack.c.b16 %v2106, %v2102
    %v3027 = vpack.c.b16 %v2107, %v2103
    %v3028 = vpack.c.b16 %v2112, %v2108
    %v3029 = vpack.c.b16 %v2113, %v2109
    %v3030 = vpack.c.b16 %v2114, %v2110
    %v3031 = vpack.c.b16 %v2115, %v2111
    %v3032 = vpack.c.b16 %v2120, %v2116
    %v3033 = vpack.c.b16 %v2121, %v2117
    %v3034 = vpack.c.b16 %v2122, %v2118
    %v3035 = vpack.c.b16 %v2123, %v2119
    %v3036 = vpack.c.b16 %v2128, %v2124
    %v3037 = vpack.c.b16 %v2129, %v2125
    %v3038 = vpack.c.b16 %v2130, %v2126
    %v3039 = vpack.c.b16 %v2131, %v2127
    %v3040 = vpack.c.b16 %v2136, %v2132
    %v3041 = vpack.c.b16 %v2137, %v2133
    %v3042 = vpack.c.b16 %v2138, %v2134
    %v3043 = vpack.c.b16 %v2139, %v2135
    %v3044 = vpack.c.b16 %v2144, %v2140
    %v3045 = vpack.c.b16 %v2145, %v2141
    %v3046 = vpack.c.b16 %v2146, %v2142
    %v3047 = vpack.c.b16 %v2147, %v2143
    %v3048 = vpack.c.b16 %v2152, %v2148
    %v3049 = vpack.c.b16 %v2153, %v2149
    %v3050 = vpack.c.b16 %v2154, %v2150
    %v3051 = vpack.c.b16 %v2155, %v2151
    %v3052 = vpack.c.b16 %v2160, %v2156
    %v3053 = vpack.c.b16 %v2161, %v2157
    %v3054 = vpack.c.b16 %v2162, %v2158
    %v3055 = vpack.c.b16 %v2163, %v2159
    %v3056 = vpack.c.b16 %v2168, %v2164
    %v3057 = vpack.c.b16 %v2169, %v2165
    %v3058 = vpack.c.b16 %v2170, %v2166
    %v3059 = vpack.c.b16 %v2171, %v2167
    %v3060 = vpack.c.b16 %v2176, %v2172
    %v3061 = vpack.c.b16 %v2177, %v2173
    %v3062 = vpack.c.b16 %v2178, %v2174
    %v3063 = vpack.c.b16 %v2179, %v2175
    %v3064 = vpack.c.b16 %v2184, %v2180
    %v3065 = vpack.c.b16 %v2185, %v2181
    %v3066 = vpack.c.b16 %v2186, %v2182
    %v3067 = vpack.c.b16 %v2187, %v2183
    %v3068 = vpack.c.b16 %v2192, %v2188
    %v3069 = vpack.c.b16 %v2193, %v2189
    %v3070 = vpack.c.b16 %v2194, %v2190
    %v3071 = vpack.c.b16 %v2195, %v2191
    %v3072 = vpack.c.b16 %v2200, %v2196
    %v3073 = vpack.c.b16 %v2201, %v2197
    %v3074 = vpack.c.b16 %v2202, %v2198
    %v3075 = vpack.c.b16 %v2203, %v2199
    %v3076 = vpack.c.b16 %v2208, %v2204
    %v3077 = vpack.c.b16 %v2209, %v2205
    %v3078 = vpack.c.b16 %v2210, %v2206
    %v3079 = vpack.c.b16 %v2211, %v2207
    %v3080 = vpack.c.b16 %v2216, %v2212
    %v3081 = vpack.c.b16 %v2217, %v2213
    %v3082 = vpack.c.b16 %v2218, %v2214
    %v3083 = vpack.c.b16 %v2219, %v2215
    %v3084 = vpack.c.b16 %v2224, %v2220
    %v3085 = vpack.c.b16 %v2225, %v2221
    %v3086 = vpack.c.b16 %v2226, %v2222
    %v3087 = vpack.c.b16 %v2227, %v2223
    %v3088 = vpack.c.b16 %v2232, %v2228
    %v3089 = vpack.c.b16 %v2233, %v2229
    %v3090 = vpack.c.b16 %v2234, %v2230
    %v3091 = vpack.c.b16 %v2235, %v2231
    %v3092 = vpack.c.b16 %v2240, %v2236
    %v3093 = vpack.c.b16 %v2241, %v2237
    %v3094 = vpack.c.b16 %v2242, %v2238
    %v3095 = vpack.c.b16 %v2243, %v2239
    %v3096 = vpack.c.b16 %v2248, %v2244
    %v3097 = vpack.c.b16 %v2249, %v2245
    %v3098 = vpack.c.b16 %v2250, %v2246
    %v3099 = vpack.c.b16 %v2251, %v2247
    %v3100 = vpack.c.b16 %v2256, %v2252
    %v3101 = vpack.c.b16 %v2257, %v2253
    %v3102 = vpack.c.b16 %v2258, %v2254
    %v3103 = vpack.c.b16 %v2259, %v2255
    %v3104 = vpack.c.b16 %v2264, %v2260
    %v3105 = vpack.c.b16 %v2265, %v2261
    %v3106 = vpack.c.b16 %v2266, %v2262
    %v3107 = vpack.c.b16 %v2267, %v2263
    %v3108 = vpack.c.b16 %v2272, %v2268
    %v3109 = vpack.c.b16 %v2273, %v2269
    %v3110 = vpack.c.b16 %v2274, %v2270
    %v3111 = vpack.c.b16 %v2275, %v2271
    %v3112 = vpack.c.b16 %v2280, %v2276
    %v3113 = vpack.c.b16 %v2281, %v2277
    %v3114 = vpack.c.b16 %v2282, %v2278
    %v3115 = vpack.c.b16 %v2283, %v2279
    %v3116 = vpack.c.b16 %v2288, %v2284
    %v3117 = vpack.c.b16 %v2289, %v2285
    %v3118 = vpack.c.b16 %v2290, %v2286
    %v3119 = vpack.c.b16 %v2291, %v2287
    %v3120 = vpack.c.b16 %v2296, %v2292
    %v3121 = vpack.c.b16 %v2297, %v2293
    %v3122 = vpack.c.b16 %v2298, %v2294
    %v3123 = vpack.c.b16 %v2299, %v2295
    %v3124 = vpack.c.b16 %v2304, %v2300
    %v3125 = vpack.c.b16 %v2305, %v2301
    %v3126 = vpack.c.b16 %v2306, %v2302
    %v3127 = vpack.c.b16 %v2307, %v2303
    %v3128 = vpack.c.b16 %v2312, %v2308
    %v3129 = vpack.c.b16 %v2313, %v2309
    %v3130 = vpack.c.b16 %v2314, %v2310
    %v3131 = vpack.c.b16 %v2315, %v2311
    %v3132 = vpack.c.b16 %v2320, %v2316
    %v3133 = vpack.c.b16 %v2321, %v2317
    %v3134 = vpack.c.b16 %v2322, %v2318
    %v3135 = vpack.c.b16 %v2323, %v2319
    %v3136 = vpack.c.b16 %v2328, %v2324
    %v3137 = vpack.c.b16 %v2329, %v2325
    %v3138 = vpack.c.b16 %v2330, %v2326
    %v3139 = vpack.c.b16 %v2331, %v2327
    %v3140 = vpack.c.b16 %v2336, %v2332
    %v3141 = vpack.c.b16 %v2337, %v2333
    %v3142 = vpack.c.b16 %v2338, %v2334
    %v3143 = vpack.c.b16 %v2339, %v2335
    %v3144 = vpack.c.b16 %v2344, %v2340
    %v3145 = vpack.c.b16 %v2345, %v2341
    %v3146 = vpack.c.b16 %v2346, %v2342
    %v3147 = vpack.c.b16 %v2347, %v2343
    %v3148 = vpack.c.b16 %v2352, %v2348
    %v3149 = vpack.c.b16 %v2353, %v2349
    %v3150 = vpack.c.b16 %v2354, %v2350
    %v3151 = vpack.c.b16 %v2355, %v2351
    %v3152 = vpack.c.b16 %v2360, %v2356
    %v3153 = vpack.c.b16 %v2361, %v2357
    %v3154 = vpack.c.b16 %v2362, %v2358
    %v3155 = vpack.c.b16 %v2363, %v2359
    %v3156 = vpack.c.b16 %v2368, %v2364
    %v3157 = vpack.c.b16 %v2369, %v2365
    %v3158 = vpack.c.b16 %v2370, %v2366
    %v3159 = vpack.c.b16 %v2371, %v2367
    %v3160 = vpack.c.b16 %v2376, %v2372
    %v3161 = vpack.c.b16 %v2377, %v2373
    %v3162 = vpack.c.b16 %v2378, %v2374
    %v3163 = vpack.c.b16 %v2379, %v2375
    %v3164 = vpack.c.b16 %v2384, %v2380
    %v3165 = vpack.c.b16 %v2385, %v2381
    %v3166 = vpack.c.b16 %v2386, %v2382
    %v3167 = vpack.c.b16 %v2387, %v2383
    %v3168 = vpack.c.b16 %v2392, %v2388
    %v3169 = vpack.c.b16 %v2393, %v2389
    %v3170 = vpack.c.b16 %v2394, %v2390
    %v3171 = vpack.c.b16 %v2395, %v2391
    %v3172 = vpack.c.b16 %v2400, %v2396
    %v3173 = vpack.c.b16 %v2401, %v2397
    %v3174 = vpack.c.b16 %v2402, %v2398
    %v3175 = vpack.c.b16 %v2403, %v2399
    %v3176 = vpack.c.b16 %v2408, %v2404
    %v3177 = vpack.c.b16 %v2409, %v2405
    %v3178 = vpack.c.b16 %v2410, %v2406
    %v3179 = vpack.c.b16 %v2411, %v2407
    %v3180 = vpack.c.b16 %v2416, %v2412
    %v3181 = vpack.c.b16 %v2417, %v2413
    %v3182 = vpack.c.b16 %v2418, %v2414
    %v3183 = vpack.c.b16 %v2419, %v2415
    %v3184 = vpack.c.b16 %v2424, %v2420
    %v3185 = vpack.c.b16 %v2425, %v2421
    %v3186 = vpack.c.b16 %v2426, %v2422
    %v3187 = vpack.c.b16 %v2427, %v2423
    %v3188 = vpack.c.b16 %v2432, %v2428
    %v3189 = vpack.c.b16 %v2433, %v2429
    %v3190 = vpack.c.b16 %v2434, %v2430
    %v3191 = vpack.c.b16 %v2435, %v2431
    %v3192 = vpack.c.b16 %v2440, %v2436
    %v3193 = vpack.c.b16 %v2441, %v2437
    %v3194 = vpack.c.b16 %v2442, %v2438
    %v3195 = vpack.c.b16 %v2443, %v2439
    %v3196 = vpack.c.b16 %v2448, %v2444
    %v3197 = vpack.c.b16 %v2449, %v2445
    %v3198 = vpack.c.b16 %v2450, %v2446
    %v3199 = vpack.c.b16 %v2451, %v2447
    %v3200 = vpack.c.b16 %v2456, %v2452
    %v3201 = vpack.c.b16 %v2457, %v2453
    %v3202 = vpack.c.b16 %v2458, %v2454
    %v3203 = vpack.c.b16 %v2459, %v2455
    %v3204 = vpack.c.b16 %v2464, %v2460
    %v3205 = vpack.c.b16 %v2465, %v2461
    %v3206 = vpack.c.b16 %v2466, %v2462
    %v3207 = vpack.c.b16 %v2467, %v2463
    %v3208 = vpack.c.b16 %v2472, %v2468
    %v3209 = vpack.c.b16 %v2473, %v2469
    %v3210 = vpack.c.b16 %v2474, %v2470
    %v3211 = vpack.c.b16 %v2475, %v2471
    %v3212 = vpack.c.b16 %v2480, %v2476
    %v3213 = vpack.c.b16 %v2481, %v2477
    %v3214 = vpack.c.b16 %v2482, %v2478
    %v3215 = vpack.c.b16 %v2483, %v2479
    %v3216 = vpack.c.b16 %v2488, %v2484
    %v3217 = vpack.c.b16 %v2489, %v2485
    %v3218 = vpack.c.b16 %v2490, %v2486
    %v3219 = vpack.c.b16 %v2491, %v2487
    %v3220 = vpack.c.b16 %v2496, %v2492
    %v3221 = vpack.c.b16 %v2497, %v2493
    %v3222 = vpack.c.b16 %v2498, %v2494
    %v3223 = vpack.c.b16 %v2499, %v2495
    %v3224 = vpack.c.b16 %v2504, %v2500
    %v3225 = vpack.c.b16 %v2505, %v2501
    %v3226 = vpack.c.b16 %v2506, %v2502
    %v3227 = vpack.c.b16 %v2507, %v2503
    %v3228 = vpack.c.b16 %v2512, %v2508
    %v3229 = vpack.c.b16 %v2513, %v2509
    %v3230 = vpack.c.b16 %v2514, %v2510
    %v3231 = vpack.c.b16 %v2515, %v2511
    %v3232 = vpack.c.b16 %v2520, %v2516
    %v3233 = vpack.c.b16 %v2521, %v2517
    %v3234 = vpack.c.b16 %v2522, %v2518
    %v3235 = vpack.c.b16 %v2523, %v2519
    %v3236 = vpack.c.b16 %v2528, %v2524
    %v3237 = vpack.c.b16 %v2529, %v2525
    %v3238 = vpack.c.b16 %v2530, %v2526
    %v3239 = vpack.c.b16 %v2531, %v2527
    %v3240 = vpack.c.b16 %v2536, %v2532
    %v3241 = vpack.c.b16 %v2537, %v2533
    %v3242 = vpack.c.b16 %v2538, %v2534
    %v3243 = vpack.c.b16 %v2539, %v2535
    %v3244 = vpack.c.b16 %v2544, %v2540
    %v3245 = vpack.c.b16 %v2545, %v2541
    %v3246 = vpack.c.b16 %v2546, %v2542
    %v3247 = vpack.c.b16 %v2547, %v2543
    %v3248 = vpack.c.b16 %v2552, %v2548
    %v3249 = vpack.c.b16 %v2553, %v2549
    %v3250 = vpack.c.b16 %v2554, %v2550
    %v3251 = vpack.c.b16 %v2555, %v2551
    %v3252 = vpack.c.b16 %v2560, %v2556
    %v3253 = vpack.c.b16 %v2561, %v2557
    %v3254 = vpack.c.b16 %v2562, %v2558
    %v3255 = vpack.c.b16 %v2563, %v2559
    %v3256 = vpack.c.b16 %v2568, %v2564
    %v3257 = vpack.c.b16 %v2569, %v2565
    %v3258 = vpack.c.b16 %v2570, %v2566
    %v3259 = vpack.c.b16 %v2571, %v2567
    %v3260 = vpack.c.b16 %v2576, %v2572
    %v3261 = vpack.c.b16 %v2577, %v2573
    %v3262 = vpack.c.b16 %v2578, %v2574
    %v3263 = vpack.c.b16 %v2579, %v2575
    %v3264 = vpack.c.b16 %v2584, %v2580
    %v3265 = vpack.c.b16 %v2585, %v2581
    %v3266 = vpack.c.b16 %v2586, %v2582
    %v3267 = vpack.c.b16 %v2587, %v2583
    %v3268 = vpack.c.b16 %v2592, %v2588
    %v3269 = vpack.c.b16 %v2593, %v2589
    %v3270 = vpack.c.b16 %v2594, %v2590
    %v3271 = vpack.c.b16 %v2595, %v2591
    %v3272 = vpack.c.b16 %v2600, %v2596
    %v3273 = vpack.c.b16 %v2601, %v2597
    %v3274 = vpack.c.b16 %v2602, %v2598
    %v3275 = vpack.c.b16 %v2603, %v2599
    %v3276 = vpack.c.b16 %v2608, %v2604
    %v3277 = vpack.c.b16 %v2609, %v2605
    %v3278 = vpack.c.b16 %v2610, %v2606
    %v3279 = vpack.c.b16 %v2611, %v2607
    %v3280 = vpack.c.b16 %v2616, %v2612
    %v3281 = vpack.c.b16 %v2617, %v2613
    %v3282 = vpack.c.b16 %v2618, %v2614
    %v3283 = vpack.c.b16 %v2619, %v2615
    %v3284 = vpack.c.b16 %v2624, %v2620
    %v3285 = vpack.c.b16 %v2625, %v2621
    %v3286 = vpack.c.b16 %v2626, %v2622
    %v3287 = vpack.c.b16 %v2627, %v2623
    %v3288 = vpack.c.b16 %v2632, %v2628
    %v3289 = vpack.c.b16 %v2633, %v2629
    %v3290 = vpack.c.b16 %v2634, %v2630
    %v3291 = vpack.c.b16 %v2635, %v2631
    %v3292 = vpack.c.b16 %v2640, %v2636
    %v3293 = vpack.c.b16 %v2641, %v2637
    %v3294 = vpack.c.b16 %v2642, %v2638
    %v3295 = vpack.c.b16 %v2643, %v2639
    %v3296 = vpack.c.b16 %v2648, %v2644
    %v3297 = vpack.c.b16 %v2649, %v2645
    %v3298 = vpack.c.b16 %v2650, %v2646
    %v3299 = vpack.c.b16 %v2651, %v2647
    %v3300 = vpack.c.b16 %v2656, %v2652
    %v3301 = vpack.c.b16 %v2657, %v2653
    %v3302 = vpack.c.b16 %v2658, %v2654
    %v3303 = vpack.c.b16 %v2659, %v2655
    %v3304 = vpack.c.b16 %v2664, %v2660
    %v3305 = vpack.c.b16 %v2665, %v2661
    %v3306 = vpack.c.b16 %v2666, %v2662
    %v3307 = vpack.c.b16 %v2667, %v2663
    %v3308 = vpack.c.b16 %v2672, %v2668
    %v3309 = vpack.c.b16 %v2673, %v2669
    %v3310 = vpack.c.b16 %v2674, %v2670
    %v3311 = vpack.c.b16 %v2675, %v2671
    %v3312 = vpack.c.b16 %v2680, %v2676
    %v3313 = vpack.c.b16 %v2681, %v2677
    %v3314 = vpack.c.b16 %v2682, %v2678
    %v3315 = vpack.c.b16 %v2683, %v2679
    %v3316 = vpack.c.b16 %v2688, %v2684
    %v3317 = vpack.c.b16 %v2689, %v2685
    %v3318 = vpack.c.b16 %v2690, %v2686
    %v3319 = vpack.c.b16 %v2691, %v2687
    %v3320 = vpack.c.b16 %v2696, %v2692
    %v3321 = vpack.c.b16 %v2697, %v2693
    %v3322 = vpack.c.b16 %v2698, %v2694
    %v3323 = vpack.c.b16 %v2699, %v2695
    %v3324 = vpack.c.b16 %v2704, %v2700
    %v3325 = vpack.c.b16 %v2705, %v2701
    %v3326 = vpack.c.b16 %v2706, %v2702
    %v3327 = vpack.c.b16 %v2707, %v2703
    %v3328 = vpack.c.b16 %v2712, %v2708
    %v3329 = vpack.c.b16 %v2713, %v2709
    %v3330 = vpack.c.b16 %v2714, %v2710
    %v3331 = vpack.c.b16 %v2715, %v2711
    %v3332 = vpack.c.b16 %v2720, %v2716
    %v3333 = vpack.c.b16 %v2721, %v2717
    %v3334 = vpack.c.b16 %v2722, %v2718
    %v3335 = vpack.c.b16 %v2723, %v2719
    %v3336 = vpack.c.b16 %v2728, %v2724
    %v3337 = vpack.c.b16 %v2729, %v2725
    %v3338 = vpack.c.b16 %v2730, %v2726
    %v3339 = vpack.c.b16 %v2731, %v2727
    %v3340 = vpack.c.b16 %v2736, %v2732
    %v3341 = vpack.c.b16 %v2737, %v2733
    %v3342 = vpack.c.b16 %v2738, %v2734
    %v3343 = vpack.c.b16 %v2739, %v2735
    %v3344 = vpack.c.b16 %v2744, %v2740
    %v3345 = vpack.c.b16 %v2745, %v2741
    %v3346 = vpack.c.b16 %v2746, %v2742
    %v3347 = vpack.c.b16 %v2747, %v2743
    %v3348 = vpack.c.b16 %v2752, %v2748
    %v3349 = vpack.c.b16 %v2753, %v2749
    %v3350 = vpack.c.b16 %v2754, %v2750
    %v3351 = vpack.c.b16 %v2755, %v2751
    %v3352 = vpack.c.b16 %v2760, %v2756
    %v3353 = vpack.c.b16 %v2761, %v2757
    %v3354 = vpack.c.b16 %v2762, %v2758
    %v3355 = vpack.c.b16 %v2763, %v2759
    %v3356 = vpack.c.b16 %v2768, %v2764
    %v3357 = vpack.c.b16 %v2769, %v2765
    %v3358 = vpack.c.b16 %v2770, %v2766
    %v3359 = vpack.c.b16 %v2771, %v2767
    %v3360 = vpack.c.b16 %v2776, %v2772
    %v3361 = vpack.c.b16 %v2777, %v2773
    %v3362 = vpack.c.b16 %v2778, %v2774
    %v3363 = vpack.c.b16 %v2779, %v2775
    %v3364 = vpack.c.b16 %v2784, %v2780
    %v3365 = vpack.c.b16 %v2785, %v2781
    %v3366 = vpack.c.b16 %v2786, %v2782
    %v3367 = vpack.c.b16 %v2787, %v2783
    %v3368 = vpack.c.b16 %v2792, %v2788
    %v3369 = vpack.c.b16 %v2793, %v2789
    %v3370 = vpack.c.b16 %v2794, %v2790
    %v3371 = vpack.c.b16 %v2795, %v2791
    %v3372 = vpack.c.b16 %v2800, %v2796
    %v3373 = vpack.c.b16 %v2801, %v2797
    %v3374 = vpack.c.b16 %v2802, %v2798
    %v3375 = vpack.c.b16 %v2803, %v2799
    %v3376 = vpack.c.b16 %v2808, %v2804
    %v3377 = vpack.c.b16 %v2809, %v2805
    %v3378 = vpack.c.b16 %v2810, %v2806
    %v3379 = vpack.c.b16 %v2811, %v2807
    %v3380 = vpack.c.b16 %v2816, %v2812
    %v3381 = vpack.c.b16 %v2817, %v2813
    %v3382 = vpack.c.b16 %v2818, %v2814
    %v3383 = vpack.c.b16 %v2819, %v2815
    %v3384 = vpack.c.b16 %v2824, %v2820
    %v3385 = vpack.c.b16 %v2825, %v2821
    %v3386 = vpack.c.b16 %v2826, %v2822
    %v3387 = vpack.c.b16 %v2827, %v2823
    %v3388 = vpack.c.b16 %v2832, %v2828
    %v3389 = vpack.c.b16 %v2833, %v2829
    %v3390 = vpack.c.b16 %v2834, %v2830
    %v3391 = vpack.c.b16 %v2835, %v2831
    %v3392 = vpack.c.b16 %v2840, %v2836
    %v3393 = vpack.c.b16 %v2841, %v2837
    %v3394 = vpack.c.b16 %v2842, %v2838
    %v3395 = vpack.c.b16 %v2843, %v2839
    %v3396 = vpack.c.b16 %v2848, %v2844
    %v3397 = vpack.c.b16 %v2849, %v2845
    %v3398 = vpack.c.b16 %v2850, %v2846
    %v3399 = vpack.c.b16 %v2851, %v2847
    %v3400 = vpack.c.b16 %v2856, %v2852
    %v3401 = vpack.c.b16 %v2857, %v2853
    %v3402 = vpack.c.b16 %v2858, %v2854
    %v3403 = vpack.c.b16 %v2859, %v2855
    %v3404 = vpack.c.b16 %v2864, %v2860
    %v3405 = vpack.c.b16 %v2865, %v2861
    %v3406 = vpack.c.b16 %v2866, %v2862
    %v3407 = vpack.c.b16 %v2867, %v2863
    %v3408 = vpack.c.b16 %v2872, %v2868
    %v3409 = vpack.c.b16 %v2873, %v2869
    %v3410 = vpack.c.b16 %v2874, %v2870
    %v3411 = vpack.c.b16 %v2875, %v2871
    %v3412 = vpack.c.b16 %v2880, %v2876
    %v3413 = vpack.c.b16 %v2881, %v2877
    %v3414 = vpack.c.b16 %v2882, %v2878
    %v3415 = vpack.c.b16 %v2883, %v2879
    %v3416 = vpack.c.b16 %v2888, %v2884
    %v3417 = vpack.c.b16 %v2889, %v2885
    %v3418 = vpack.c.b16 %v2890, %v2886
    %v3419 = vpack.c.b16 %v2891, %v2887
    %v3420 = vpack.c.b16 %v2896, %v2892
    %v3421 = vpack.c.b16 %v2897, %v2893
    %v3422 = vpack.c.b16 %v2898, %v2894
    %v3423 = vpack.c.b16 %v2899, %v2895
    %v3424 = vpack.c.b16 %v2904, %v2900
    %v3425 = vpack.c.b16 %v2905, %v2901
    %v3426 = vpack.c.b16 %v2906, %v2902
    %v3427 = vpack.c.b16 %v2907, %v2903
    %v3428 = vpack.c.b16 %v2912, %v2908
    %v3429 = vpack.c.b16 %v2913, %v2909
    %v3430 = vpack.c.b16 %v2914, %v2910
    %v3431 = vpack.c.b16 %v2915, %v2911
    %v3432 = vpack.c.b16 %v2920, %v2916
    %v3433 = vpack.c.b16 %v2921, %v2917
    %v3434 = vpack.c.b16 %v2922, %v2918
    %v3435 = vpack.c.b16 %v2923, %v2919
    %3948 = vmatprep.subr.bf16.mxu0 %v2925
    %3949 = vmatpush1.bf16.msra.mxu0 %v2924
    %3950 = vmatprep.subr.bf16.mxu0 %v2929
    %3951 = vmatpush1.bf16.msra.mxu0 %v2928
    %3952 = vmatprep.subr.bf16.mxu0 %v2933
    %3953 = vmatpush1.bf16.msra.mxu0 %v2932
    %3954 = vmatprep.subr.bf16.mxu0 %v2937
    %3955 = vmatpush1.bf16.msra.mxu0 %v2936
    %3956 = vmatprep.subr.bf16.mxu0 %v2941
    %3957 = vmatpush1.bf16.msra.mxu0 %v2940
    %3958 = vmatprep.subr.bf16.mxu0 %v2945
    %3959 = vmatpush1.bf16.msra.mxu0 %v2944
    %3960 = vmatprep.subr.bf16.mxu0 %v2949
    %3961 = vmatpush1.bf16.msra.mxu0 %v2948
    %3962 = vmatprep.subr.bf16.mxu0 %v2953
    %3963 = vmatpush1.bf16.msra.mxu0 %v2952
    %3964 = vmatprep.subr.bf16.mxu0 %v2957
    %3965 = vmatpush1.bf16.msra.mxu0 %v2956
    %3966 = vmatprep.subr.bf16.mxu0 %v2961
    %3967 = vmatpush1.bf16.msra.mxu0 %v2960
    %3968 = vmatprep.subr.bf16.mxu0 %v2965
    %3969 = vmatpush1.bf16.msra.mxu0 %v2964
    %3970 = vmatprep.subr.bf16.mxu0 %v2969
    %3971 = vmatpush1.bf16.msra.mxu0 %v2968
    %3972 = vmatprep.subr.bf16.mxu0 %v2973
    %3973 = vmatpush1.bf16.msra.mxu0 %v2972
    %3974 = vmatprep.subr.bf16.mxu0 %v2977
    %3975 = vmatpush1.bf16.msra.mxu0 %v2976
    %3976 = vmatprep.subr.bf16.mxu0 %v2981
    %3977 = vmatpush1.bf16.msra.mxu0 %v2980
    %3978 = vmatprep.subr.bf16.mxu0 %v2985
    %3979 = vmatpush1.bf16.msra.mxu0 %v2984
    %3980 = vmatprep.mubr.bf16.mxu0 %v839
    %3981 = vmatmul.mubr.bf16.gmra.mrb[0].mxu0 %v838
    %v3982 = vpop.f32.mrb[0].mxu0
    %v3983 = vadd.f32 %v1371, %v3982
    %v3984 = vpop.f32.mrb[0].mxu0
    %v3985 = vadd.f32 %v1375, %v3984
    %v3986 = vpop.f32.mrb[0].mxu0
    %v3987 = vadd.f32 %v1371, %v3986
    %v3988 = vpop.f32.mrb[0].mxu0
    %v3989 = vadd.f32 %v1375, %v3988
    %3990 = vdwg.mxu0
    %3991 = vmatprep.subr.bf16.mxu0 %v2989
    %3992 = vmatpush1.bf16.msra.mxu0 %v2988
    %3993 = vmatprep.subr.bf16.mxu0 %v2993
    %3994 = vmatpush1.bf16.msra.mxu0 %v2992
    %3995 = vmatprep.subr.bf16.mxu0 %v2997
    %3996 = vmatpush1.bf16.msra.mxu0 %v2996
    %3997 = vmatprep.subr.bf16.mxu0 %v3001
    %3998 = vmatpush1.bf16.msra.mxu0 %v3000
    %3999 = vmatprep.subr.bf16.mxu0 %v3005
    %4000 = vmatpush1.bf16.msra.mxu0 %v3004
    %4001 = vmatprep.subr.bf16.mxu0 %v3009
    %4002 = vmatpush1.bf16.msra.mxu0 %v3008
    %4003 = vmatprep.subr.bf16.mxu0 %v3013
    %4004 = vmatpush1.bf16.msra.mxu0 %v3012
    %4005 = vmatprep.subr.bf16.mxu0 %v3017
    %4006 = vmatpush1.bf16.msra.mxu0 %v3016
    %4007 = vmatprep.subr.bf16.mxu0 %v3021
    %4008 = vmatpush1.bf16.msra.mxu0 %v3020
    %4009 = vmatprep.subr.bf16.mxu0 %v3025
    %4010 = vmatpush1.bf16.msra.mxu0 %v3024
    %4011 = vmatprep.subr.bf16.mxu0 %v3029
    %4012 = vmatpush1.bf16.msra.mxu0 %v3028
    %4013 = vmatprep.subr.bf16.mxu0 %v3033
    %4014 = vmatpush1.bf16.msra.mxu0 %v3032
    %4015 = vmatprep.subr.bf16.mxu0 %v3037
    %4016 = vmatpush1.bf16.msra.mxu0 %v3036
    %4017 = vmatprep.subr.bf16.mxu0 %v3041
    %4018 = vmatpush1.bf16.msra.mxu0 %v3040
    %4019 = vmatprep.subr.bf16.mxu0 %v3045
    %4020 = vmatpush1.bf16.msra.mxu0 %v3044
    %4021 = vmatprep.subr.bf16.mxu0 %v3049
    %4022 = vmatpush1.bf16.msra.mxu0 %v3048
    %4023 = vmatprep.mubr.bf16.mxu0 %v841
    %4024 = vmatmul.mubr.bf16.gmra.mrb[0].mxu0 %v840
    %v4025 = vpop.f32.mrb[0].mxu0
    %v4026 = vadd.f32 %v3983, %v4025
    %v4027 = vpop.f32.mrb[0].mxu0
    %v4028 = vadd.f32 %v3985, %v4027
    %v4029 = vpop.f32.mrb[0].mxu0
    %v4030 = vadd.f32 %v3987, %v4029
    %v4031 = vpop.f32.mrb[0].mxu0
    %v4032 = vadd.f32 %v3989, %v4031
    %4033 = vdwg.mxu0
    %4034 = vmatprep.subr.bf16.mxu0 %v3053
    %4035 = vmatpush1.bf16.msra.mxu0 %v3052
    %4036 = vmatprep.subr.bf16.mxu0 %v3057
    %4037 = vmatpush1.bf16.msra.mxu0 %v3056
    %4038 = vmatprep.subr.bf16.mxu0 %v3061
    %4039 = vmatpush1.bf16.msra.mxu0 %v3060
    %4040 = vmatprep.subr.bf16.mxu0 %v3065
    %4041 = vmatpush1.bf16.msra.mxu0 %v3064
    %4042 = vmatprep.subr.bf16.mxu0 %v3069
    %4043 = vmatpush1.bf16.msra.mxu0 %v3068
    %4044 = vmatprep.subr.bf16.mxu0 %v3073
    %4045 = vmatpush1.bf16.msra.mxu0 %v3072
    %4046 = vmatprep.subr.bf16.mxu0 %v3077
    %4047 = vmatpush1.bf16.msra.mxu0 %v3076
    %4048 = vmatprep.subr.bf16.mxu0 %v3081
    %4049 = vmatpush1.bf16.msra.mxu0 %v3080
    %4050 = vmatprep.subr.bf16.mxu0 %v3085
    %4051 = vmatpush1.bf16.msra.mxu0 %v3084
    %4052 = vmatprep.subr.bf16.mxu0 %v3089
    %4053 = vmatpush1.bf16.msra.mxu0 %v3088
    %4054 = vmatprep.subr.bf16.mxu0 %v3093
    %4055 = vmatpush1.bf16.msra.mxu0 %v3092
    %4056 = vmatprep.subr.bf16.mxu0 %v3097
    %4057 = vmatpush1.bf16.msra.mxu0 %v3096
    %4058 = vmatprep.subr.bf16.mxu0 %v3101
    %4059 = vmatpush1.bf16.msra.mxu0 %v3100
    %4060 = vmatprep.subr.bf16.mxu0 %v3105
    %4061 = vmatpush1.bf16.msra.mxu0 %v3104
    %4062 = vmatprep.subr.bf16.mxu0 %v3109
    %4063 = vmatpush1.bf16.msra.mxu0 %v3108
    %4064 = vmatprep.subr.bf16.mxu0 %v3113
    %4065 = vmatpush1.bf16.msra.mxu0 %v3112
    %4066 = vmatprep.mubr.bf16.mxu0 %v843
    %4067 = vmatmul.mubr.bf16.gmra.mrb[0].mxu0 %v842
    %v4068 = vpop.f32.mrb[0].mxu0
    %v4069 = vadd.f32 %v4026, %v4068
    %v4070 = vpop.f32.mrb[0].mxu0
    %v4071 = vadd.f32 %v4028, %v4070
    %v4072 = vpop.f32.mrb[0].mxu0
    %v4073 = vadd.f32 %v4030, %v4072
    %v4074 = vpop.f32.mrb[0].mxu0
    %v4075 = vadd.f32 %v4032, %v4074
    %4076 = vdwg.mxu0
    %4077 = vmatprep.subr.bf16.mxu0 %v3117
    %4078 = vmatpush1.bf16.msra.mxu0 %v3116
    %4079 = vmatprep.subr.bf16.mxu0 %v3121
    %4080 = vmatpush1.bf16.msra.mxu0 %v3120
    %4081 = vmatprep.subr.bf16.mxu0 %v3125
    %4082 = vmatpush1.bf16.msra.mxu0 %v3124
    %4083 = vmatprep.subr.bf16.mxu0 %v3129
    %4084 = vmatpush1.bf16.msra.mxu0 %v3128
    %4085 = vmatprep.subr.bf16.mxu0 %v3133
    %4086 = vmatpush1.bf16.msra.mxu0 %v3132
    %4087 = vmatprep.subr.bf16.mxu0 %v3137
    %4088 = vmatpush1.bf16.msra.mxu0 %v3136
    %4089 = vmatprep.subr.bf16.mxu0 %v3141
    %4090 = vmatpush1.bf16.msra.mxu0 %v3140
    %4091 = vmatprep.subr.bf16.mxu0 %v3145
    %4092 = vmatpush1.bf16.msra.mxu0 %v3144
    %4093 = vmatprep.subr.bf16.mxu0 %v3149
    %4094 = vmatpush1.bf16.msra.mxu0 %v3148
    %4095 = vmatprep.subr.bf16.mxu0 %v3153
    %4096 = vmatpush1.bf16.msra.mxu0 %v3152
    %4097 = vmatprep.subr.bf16.mxu0 %v3157
    %4098 = vmatpush1.bf16.msra.mxu0 %v3156
    %4099 = vmatprep.subr.bf16.mxu0 %v3161
    %4100 = vmatpush1.bf16.msra.mxu0 %v3160
    %4101 = vmatprep.subr.bf16.mxu0 %v3165
    %4102 = vmatpush1.bf16.msra.mxu0 %v3164
    %4103 = vmatprep.subr.bf16.mxu0 %v3169
    %4104 = vmatpush1.bf16.msra.mxu0 %v3168
    %4105 = vmatprep.subr.bf16.mxu0 %v3173
    %4106 = vmatpush1.bf16.msra.mxu0 %v3172
    %4107 = vmatprep.subr.bf16.mxu0 %v3177
    %4108 = vmatpush1.bf16.msra.mxu0 %v3176
    %4109 = vmatprep.mubr.bf16.mxu0 %v845
    %4110 = vmatmul.mubr.bf16.gmra.mrb[0].mxu0 %v844
    %v4111 = vpop.f32.mrb[0].mxu0
    %v4112 = vadd.f32 %v4069, %v4111
    %v4113 = vpop.f32.mrb[0].mxu0
    %v4114 = vadd.f32 %v4071, %v4113
    %v4115 = vpop.f32.mrb[0].mxu0
    %v4116 = vadd.f32 %v4073, %v4115
    %v4117 = vpop.f32.mrb[0].mxu0
    %v4118 = vadd.f32 %v4075, %v4117
    %4119 = vdwg.mxu0
    %4120 = vmatprep.subr.bf16.mxu0 %v3181
    %4121 = vmatpush1.bf16.msra.mxu0 %v3180
    %4122 = vmatprep.subr.bf16.mxu0 %v3185
    %4123 = vmatpush1.bf16.msra.mxu0 %v3184
    %4124 = vmatprep.subr.bf16.mxu0 %v3189
    %4125 = vmatpush1.bf16.msra.mxu0 %v3188
    %4126 = vmatprep.subr.bf16.mxu0 %v3193
    %4127 = vmatpush1.bf16.msra.mxu0 %v3192
    %4128 = vmatprep.subr.bf16.mxu0 %v3197
    %4129 = vmatpush1.bf16.msra.mxu0 %v3196
    %4130 = vmatprep.subr.bf16.mxu0 %v3201
    %4131 = vmatpush1.bf16.msra.mxu0 %v3200
    %4132 = vmatprep.subr.bf16.mxu0 %v3205
    %4133 = vmatpush1.bf16.msra.mxu0 %v3204
    %4134 = vmatprep.subr.bf16.mxu0 %v3209
    %4135 = vmatpush1.bf16.msra.mxu0 %v3208
    %4136 = vmatprep.subr.bf16.mxu0 %v3213
    %4137 = vmatpush1.bf16.msra.mxu0 %v3212
    %4138 = vmatprep.subr.bf16.mxu0 %v3217
    %4139 = vmatpush1.bf16.msra.mxu0 %v3216
    %4140 = vmatprep.subr.bf16.mxu0 %v3221
    %4141 = vmatpush1.bf16.msra.mxu0 %v3220
    %4142 = vmatprep.subr.bf16.mxu0 %v3225
    %4143 = vmatpush1.bf16.msra.mxu0 %v3224
    %4144 = vmatprep.subr.bf16.mxu0 %v3229
    %4145 = vmatpush1.bf16.msra.mxu0 %v3228
    %4146 = vmatprep.subr.bf16.mxu0 %v3233
    %4147 = vmatpush1.bf16.msra.mxu0 %v3232
    %4148 = vmatprep.subr.bf16.mxu0 %v3237
    %4149 = vmatpush1.bf16.msra.mxu0 %v3236
    %4150 = vmatprep.subr.bf16.mxu0 %v3241
    %4151 = vmatpush1.bf16.msra.mxu0 %v3240
    %4152 = vmatprep.mubr.bf16.mxu0 %v847
    %4153 = vmatmul.mubr.bf16.gmra.mrb[0].mxu0 %v846
    %v4154 = vpop.f32.mrb[0].mxu0
    %v4155 = vadd.f32 %v4112, %v4154
    %v4156 = vpop.f32.mrb[0].mxu0
    %v4157 = vadd.f32 %v4114, %v4156
    %v4158 = vpop.f32.mrb[0].mxu0
    %v4159 = vadd.f32 %v4116, %v4158
    %v4160 = vpop.f32.mrb[0].mxu0
    %v4161 = vadd.f32 %v4118, %v4160
    %4162 = vdwg.mxu0
    %4163 = vmatprep.subr.bf16.mxu0 %v3245
    %4164 = vmatpush1.bf16.msra.mxu0 %v3244
    %4165 = vmatprep.subr.bf16.mxu0 %v3249
    %4166 = vmatpush1.bf16.msra.mxu0 %v3248
    %4167 = vmatprep.subr.bf16.mxu0 %v3253
    %4168 = vmatpush1.bf16.msra.mxu0 %v3252
    %4169 = vmatprep.subr.bf16.mxu0 %v3257
    %4170 = vmatpush1.bf16.msra.mxu0 %v3256
    %4171 = vmatprep.subr.bf16.mxu0 %v3261
    %4172 = vmatpush1.bf16.msra.mxu0 %v3260
    %4173 = vmatprep.subr.bf16.mxu0 %v3265
    %4174 = vmatpush1.bf16.msra.mxu0 %v3264
    %4175 = vmatprep.subr.bf16.mxu0 %v3269
    %4176 = vmatpush1.bf16.msra.mxu0 %v3268
    %4177 = vmatprep.subr.bf16.mxu0 %v3273
    %4178 = vmatpush1.bf16.msra.mxu0 %v3272
    %4179 = vmatprep.subr.bf16.mxu0 %v3277
    %4180 = vmatpush1.bf16.msra.mxu0 %v3276
    %4181 = vmatprep.subr.bf16.mxu0 %v3281
    %4182 = vmatpush1.bf16.msra.mxu0 %v3280
    %4183 = vmatprep.subr.bf16.mxu0 %v3285
    %4184 = vmatpush1.bf16.msra.mxu0 %v3284
    %4185 = vmatprep.subr.bf16.mxu0 %v3289
    %4186 = vmatpush1.bf16.msra.mxu0 %v3288
    %4187 = vmatprep.subr.bf16.mxu0 %v3293
    %4188 = vmatpush1.bf16.msra.mxu0 %v3292
    %4189 = vmatprep.subr.bf16.mxu0 %v3297
    %4190 = vmatpush1.bf16.msra.mxu0 %v3296
    %4191 = vmatprep.subr.bf16.mxu0 %v3301
    %4192 = vmatpush1.bf16.msra.mxu0 %v3300
    %4193 = vmatprep.subr.bf16.mxu0 %v3305
    %4194 = vmatpush1.bf16.msra.mxu0 %v3304
    %4195 = vmatprep.mubr.bf16.mxu0 %v849
    %4196 = vmatmul.mubr.bf16.gmra.mrb[0].mxu0 %v848
    %v4197 = vpop.f32.mrb[0].mxu0
    %v4198 = vadd.f32 %v4155, %v4197
    %v4199 = vpop.f32.mrb[0].mxu0
    %v4200 = vadd.f32 %v4157, %v4199
    %v4201 = vpop.f32.mrb[0].mxu0
    %v4202 = vadd.f32 %v4159, %v4201
    %v4203 = vpop.f32.mrb[0].mxu0
    %v4204 = vadd.f32 %v4161, %v4203
    %4205 = vdwg.mxu0
    %4206 = vmatprep.subr.bf16.mxu0 %v3309
    %4207 = vmatpush1.bf16.msra.mxu0 %v3308
    %4208 = vmatprep.subr.bf16.mxu0 %v3313
    %4209 = vmatpush1.bf16.msra.mxu0 %v3312
    %4210 = vmatprep.subr.bf16.mxu0 %v3317
    %4211 = vmatpush1.bf16.msra.mxu0 %v3316
    %4212 = vmatprep.subr.bf16.mxu0 %v3321
    %4213 = vmatpush1.bf16.msra.mxu0 %v3320
    %4214 = vmatprep.subr.bf16.mxu0 %v3325
    %4215 = vmatpush1.bf16.msra.mxu0 %v3324
    %4216 = vmatprep.subr.bf16.mxu0 %v3329
    %4217 = vmatpush1.bf16.msra.mxu0 %v3328
    %4218 = vmatprep.subr.bf16.mxu0 %v3333
    %4219 = vmatpush1.bf16.msra.mxu0 %v3332
    %4220 = vmatprep.subr.bf16.mxu0 %v3337
    %4221 = vmatpush1.bf16.msra.mxu0 %v3336
    %4222 = vmatprep.subr.bf16.mxu0 %v3341
    %4223 = vmatpush1.bf16.msra.mxu0 %v3340
    %4224 = vmatprep.subr.bf16.mxu0 %v3345
    %4225 = vmatpush1.bf16.msra.mxu0 %v3344
    %4226 = vmatprep.subr.bf16.mxu0 %v3349
    %4227 = vmatpush1.bf16.msra.mxu0 %v3348
    %4228 = vmatprep.subr.bf16.mxu0 %v3353
    %4229 = vmatpush1.bf16.msra.mxu0 %v3352
    %4230 = vmatprep.subr.bf16.mxu0 %v3357
    %4231 = vmatpush1.bf16.msra.mxu0 %v3356
    %4232 = vmatprep.subr.bf16.mxu0 %v3361
    %4233 = vmatpush1.bf16.msra.mxu0 %v3360
    %4234 = vmatprep.subr.bf16.mxu0 %v3365
    %4235 = vmatpush1.bf16.msra.mxu0 %v3364
    %4236 = vmatprep.subr.bf16.mxu0 %v3369
    %4237 = vmatpush1.bf16.msra.mxu0 %v3368
    %4238 = vmatprep.mubr.bf16.mxu0 %v851
    %4239 = vmatmul.mubr.bf16.gmra.mrb[0].mxu0 %v850
    %v4240 = vpop.f32.mrb[0].mxu0
    %v4241 = vadd.f32 %v4198, %v4240
    %v4242 = vpop.f32.mrb[0].mxu0
    %v4243 = vadd.f32 %v4200, %v4242
    %v4244 = vpop.f32.mrb[0].mxu0
    %v4245 = vadd.f32 %v4202, %v4244
    %v4246 = vpop.f32.mrb[0].mxu0
    %v4247 = vadd.f32 %v4204, %v4246
    %4248 = vdwg.mxu0
    %4249 = vmatprep.subr.bf16.mxu0 %v3373
    %4250 = vmatpush1.bf16.msra.mxu0 %v3372
    %4251 = vmatprep.subr.bf16.mxu0 %v3377
    %4252 = vmatpush1.bf16.msra.mxu0 %v3376
    %4253 = vmatprep.subr.bf16.mxu0 %v3381
    %4254 = vmatpush1.bf16.msra.mxu0 %v3380
    %4255 = vmatprep.subr.bf16.mxu0 %v3385
    %4256 = vmatpush1.bf16.msra.mxu0 %v3384
    %4257 = vmatprep.subr.bf16.mxu0 %v3389
    %4258 = vmatpush1.bf16.msra.mxu0 %v3388
    %4259 = vmatprep.subr.bf16.mxu0 %v3393
    %4260 = vmatpush1.bf16.msra.mxu0 %v3392
    %4261 = vmatprep.subr.bf16.mxu0 %v3397
    %4262 = vmatpush1.bf16.msra.mxu0 %v3396
    %4263 = vmatprep.subr.bf16.mxu0 %v3401
    %4264 = vmatpush1.bf16.msra.mxu0 %v3400
    %4265 = vmatprep.subr.bf16.mxu0 %v3405
    %4266 = vmatpush1.bf16.msra.mxu0 %v3404
    %4267 = vmatprep.subr.bf16.mxu0 %v3409
    %4268 = vmatpush1.bf16.msra.mxu0 %v3408
    %4269 = vmatprep.subr.bf16.mxu0 %v3413
    %4270 = vmatpush1.bf16.msra.mxu0 %v3412
    %4271 = vmatprep.subr.bf16.mxu0 %v3417
    %4272 = vmatpush1.bf16.msra.mxu0 %v3416
    %4273 = vmatprep.subr.bf16.mxu0 %v3421
    %4274 = vmatpush1.bf16.msra.mxu0 %v3420
    %4275 = vmatprep.subr.bf16.mxu0 %v3425
    %4276 = vmatpush1.bf16.msra.mxu0 %v3424
    %4277 = vmatprep.subr.bf16.mxu0 %v3429
    %4278 = vmatpush1.bf16.msra.mxu0 %v3428
    %4279 = vmatprep.subr.bf16.mxu0 %v3433
    %4280 = vmatpush1.bf16.msra.mxu0 %v3432
    %4281 = vmatprep.mubr.bf16.mxu0 %v853
    %4282 = vmatmul.mubr.bf16.gmra.mrb[0].mxu0 %v852
    %v4283 = vpop.f32.mrb[0].mxu0
    %v4284 = vadd.f32 %v4241, %v4283
    %v4285 = vpop.f32.mrb[0].mxu0
    %v4286 = vadd.f32 %v4243, %v4285
    %v4287 = vpop.f32.mrb[0].mxu0
    %v4288 = vadd.f32 %v4245, %v4287
    %v4289 = vpop.f32.mrb[0].mxu0
    %v4290 = vadd.f32 %v4247, %v4289
    %4291 = vdwg.mxu0
    %4292 = vmatprep.subr.bf16.mxu0 %v2927
    %4293 = vmatpush1.bf16.msra.mxu0 %v2926
    %4294 = vmatprep.subr.bf16.mxu0 %v2931
    %4295 = vmatpush1.bf16.msra.mxu0 %v2930
    %4296 = vmatprep.subr.bf16.mxu0 %v2935
    %4297 = vmatpush1.bf16.msra.mxu0 %v2934
    %4298 = vmatprep.subr.bf16.mxu0 %v2939
    %4299 = vmatpush1.bf16.msra.mxu0 %v2938
    %4300 = vmatprep.subr.bf16.mxu0 %v2943
    %4301 = vmatpush1.bf16.msra.mxu0 %v2942
    %4302 = vmatprep.subr.bf16.mxu0 %v2947
    %4303 = vmatpush1.bf16.msra.mxu0 %v2946
    %4304 = vmatprep.subr.bf16.mxu0 %v2951
    %4305 = vmatpush1.bf16.msra.mxu0 %v2950
    %4306 = vmatprep.subr.bf16.mxu0 %v2955
    %4307 = vmatpush1.bf16.msra.mxu0 %v2954
    %4308 = vmatprep.subr.bf16.mxu0 %v2959
    %4309 = vmatpush1.bf16.msra.mxu0 %v2958
    %4310 = vmatprep.subr.bf16.mxu0 %v2963
    %4311 = vmatpush1.bf16.msra.mxu0 %v2962
    %4312 = vmatprep.subr.bf16.mxu0 %v2967
    %4313 = vmatpush1.bf16.msra.mxu0 %v2966
    %4314 = vmatprep.subr.bf16.mxu0 %v2971
    %4315 = vmatpush1.bf16.msra.mxu0 %v2970
    %4316 = vmatprep.subr.bf16.mxu0 %v2975
    %4317 = vmatpush1.bf16.msra.mxu0 %v2974
    %4318 = vmatprep.subr.bf16.mxu0 %v2979
    %4319 = vmatpush1.bf16.msra.mxu0 %v2978
    %4320 = vmatprep.subr.bf16.mxu0 %v2983
    %4321 = vmatpush1.bf16.msra.mxu0 %v2982
    %4322 = vmatprep.subr.bf16.mxu0 %v2987
    %4323 = vmatpush1.bf16.msra.mxu0 %v2986
    %4324 = vmatprep.mubr.bf16.mxu0 %v839
    %4325 = vmatmul.mubr.bf16.gmra.mrb[0].mxu0 %v838
    %v4326 = vpop.f32.mrb[0].mxu0
    %v4327 = vadd.f32 %v1379, %v4326
    %v4328 = vpop.f32.mrb[0].mxu0
    %v4329 = vadd.f32 %v1383, %v4328
    %v4330 = vpop.f32.mrb[0].mxu0
    %v4331 = vadd.f32 %v1379, %v4330
    %v4332 = vpop.f32.mrb[0].mxu0
    %v4333 = vadd.f32 %v1383, %v4332
    %4334 = vdwg.mxu0
    %4335 = vmatprep.subr.bf16.mxu0 %v2991
    %4336 = vmatpush1.bf16.msra.mxu0 %v2990
    %4337 = vmatprep.subr.bf16.mxu0 %v2995
    %4338 = vmatpush1.bf16.msra.mxu0 %v2994
    %4339 = vmatprep.subr.bf16.mxu0 %v2999
    %4340 = vmatpush1.bf16.msra.mxu0 %v2998
    %4341 = vmatprep.subr.bf16.mxu0 %v3003
    %4342 = vmatpush1.bf16.msra.mxu0 %v3002
    %4343 = vmatprep.subr.bf16.mxu0 %v3007
    %4344 = vmatpush1.bf16.msra.mxu0 %v3006
    %4345 = vmatprep.subr.bf16.mxu0 %v3011
    %4346 = vmatpush1.bf16.msra.mxu0 %v3010
    %4347 = vmatprep.subr.bf16.mxu0 %v3015
    %4348 = vmatpush1.bf16.msra.mxu0 %v3014
    %4349 = vmatprep.subr.bf16.mxu0 %v3019
    %4350 = vmatpush1.bf16.msra.mxu0 %v3018
    %4351 = vmatprep.subr.bf16.mxu0 %v3023
    %4352 = vmatpush1.bf16.msra.mxu0 %v3022
    %4353 = vmatprep.subr.bf16.mxu0 %v3027
    %4354 = vmatpush1.bf16.msra.mxu0 %v3026
    %4355 = vmatprep.subr.bf16.mxu0 %v3031
    %4356 = vmatpush1.bf16.msra.mxu0 %v3030
    %4357 = vmatprep.subr.bf16.mxu0 %v3035
    %4358 = vmatpush1.bf16.msra.mxu0 %v3034
    %4359 = vmatprep.subr.bf16.mxu0 %v3039
    %4360 = vmatpush1.bf16.msra.mxu0 %v3038
    %4361 = vmatprep.subr.bf16.mxu0 %v3043
    %4362 = vmatpush1.bf16.msra.mxu0 %v3042
    %4363 = vmatprep.subr.bf16.mxu0 %v3047
    %4364 = vmatpush1.bf16.msra.mxu0 %v3046
    %4365 = vmatprep.subr.bf16.mxu0 %v3051
    %4366 = vmatpush1.bf16.msra.mxu0 %v3050
    %4367 = vmatprep.mubr.bf16.mxu0 %v841
    %4368 = vmatmul.mubr.bf16.gmra.mrb[0].mxu0 %v840
    %v4369 = vpop.f32.mrb[0].mxu0
    %v4370 = vadd.f32 %v4327, %v4369
    %v4371 = vpop.f32.mrb[0].mxu0
    %v4372 = vadd.f32 %v4329, %v4371
    %v4373 = vpop.f32.mrb[0].mxu0
    %v4374 = vadd.f32 %v4331, %v4373
    %v4375 = vpop.f32.mrb[0].mxu0
    %v4376 = vadd.f32 %v4333, %v4375
    %4377 = vdwg.mxu0
    %4378 = vmatprep.subr.bf16.mxu0 %v3055
    %4379 = vmatpush1.bf16.msra.mxu0 %v3054
    %4380 = vmatprep.subr.bf16.mxu0 %v3059
    %4381 = vmatpush1.bf16.msra.mxu0 %v3058
    %4382 = vmatprep.subr.bf16.mxu0 %v3063
    %4383 = vmatpush1.bf16.msra.mxu0 %v3062
    %4384 = vmatprep.subr.bf16.mxu0 %v3067
    %4385 = vmatpush1.bf16.msra.mxu0 %v3066
    %4386 = vmatprep.subr.bf16.mxu0 %v3071
    %4387 = vmatpush1.bf16.msra.mxu0 %v3070
    %4388 = vmatprep.subr.bf16.mxu0 %v3075
    %4389 = vmatpush1.bf16.msra.mxu0 %v3074
    %4390 = vmatprep.subr.bf16.mxu0 %v3079
    %4391 = vmatpush1.bf16.msra.mxu0 %v3078
    %4392 = vmatprep.subr.bf16.mxu0 %v3083
    %4393 = vmatpush1.bf16.msra.mxu0 %v3082
    %4394 = vmatprep.subr.bf16.mxu0 %v3087
    %4395 = vmatpush1.bf16.msra.mxu0 %v3086
    %4396 = vmatprep.subr.bf16.mxu0 %v3091
    %4397 = vmatpush1.bf16.msra.mxu0 %v3090
    %4398 = vmatprep.subr.bf16.mxu0 %v3095
    %4399 = vmatpush1.bf16.msra.mxu0 %v3094
    %4400 = vmatprep.subr.bf16.mxu0 %v3099
    %4401 = vmatpush1.bf16.msra.mxu0 %v3098
    %4402 = vmatprep.subr.bf16.mxu0 %v3103
    %4403 = vmatpush1.bf16.msra.mxu0 %v3102
    %4404 = vmatprep.subr.bf16.mxu0 %v3107
    %4405 = vmatpush1.bf16.msra.mxu0 %v3106
    %4406 = vmatprep.subr.bf16.mxu0 %v3111
    %4407 = vmatpush1.bf16.msra.mxu0 %v3110
    %4408 = vmatprep.subr.bf16.mxu0 %v3115
    %4409 = vmatpush1.bf16.msra.mxu0 %v3114
    %4410 = vmatprep.mubr.bf16.mxu0 %v843
    %4411 = vmatmul.mubr.bf16.gmra.mrb[0].mxu0 %v842
    %v4412 = vpop.f32.mrb[0].mxu0
    %v4413 = vadd.f32 %v4370, %v4412
    %v4414 = vpop.f32.mrb[0].mxu0
    %v4415 = vadd.f32 %v4372, %v4414
    %v4416 = vpop.f32.mrb[0].mxu0
    %v4417 = vadd.f32 %v4374, %v4416
    %v4418 = vpop.f32.mrb[0].mxu0
    %v4419 = vadd.f32 %v4376, %v4418
    %4420 = vdwg.mxu0
    %4421 = vmatprep.subr.bf16.mxu0 %v3119
    %4422 = vmatpush1.bf16.msra.mxu0 %v3118
    %4423 = vmatprep.subr.bf16.mxu0 %v3123
    %4424 = vmatpush1.bf16.msra.mxu0 %v3122
    %4425 = vmatprep.subr.bf16.mxu0 %v3127
    %4426 = vmatpush1.bf16.msra.mxu0 %v3126
    %4427 = vmatprep.subr.bf16.mxu0 %v3131
    %4428 = vmatpush1.bf16.msra.mxu0 %v3130
    %4429 = vmatprep.subr.bf16.mxu0 %v3135
    %4430 = vmatpush1.bf16.msra.mxu0 %v3134
    %4431 = vmatprep.subr.bf16.mxu0 %v3139
    %4432 = vmatpush1.bf16.msra.mxu0 %v3138
    %4433 = vmatprep.subr.bf16.mxu0 %v3143
    %4434 = vmatpush1.bf16.msra.mxu0 %v3142
    %4435 = vmatprep.subr.bf16.mxu0 %v3147
    %4436 = vmatpush1.bf16.msra.mxu0 %v3146
    %4437 = vmatprep.subr.bf16.mxu0 %v3151
    %4438 = vmatpush1.bf16.msra.mxu0 %v3150
    %4439 = vmatprep.subr.bf16.mxu0 %v3155
    %4440 = vmatpush1.bf16.msra.mxu0 %v3154
    %4441 = vmatprep.subr.bf16.mxu0 %v3159
    %4442 = vmatpush1.bf16.msra.mxu0 %v3158
    %4443 = vmatprep.subr.bf16.mxu0 %v3163
    %4444 = vmatpush1.bf16.msra.mxu0 %v3162
    %4445 = vmatprep.subr.bf16.mxu0 %v3167
    %4446 = vmatpush1.bf16.msra.mxu0 %v3166
    %4447 = vmatprep.subr.bf16.mxu0 %v3171
    %4448 = vmatpush1.bf16.msra.mxu0 %v3170
    %4449 = vmatprep.subr.bf16.mxu0 %v3175
    %4450 = vmatpush1.bf16.msra.mxu0 %v3174
    %4451 = vmatprep.subr.bf16.mxu0 %v3179
    %4452 = vmatpush1.bf16.msra.mxu0 %v3178
    %4453 = vmatprep.mubr.bf16.mxu0 %v845
    %4454 = vmatmul.mubr.bf16.gmra.mrb[0].mxu0 %v844
    %v4455 = vpop.f32.mrb[0].mxu0
    %v4456 = vadd.f32 %v4413, %v4455
    %v4457 = vpop.f32.mrb[0].mxu0
    %v4458 = vadd.f32 %v4415, %v4457
    %v4459 = vpop.f32.mrb[0].mxu0
    %v4460 = vadd.f32 %v4417, %v4459
    %v4461 = vpop.f32.mrb[0].mxu0
    %v4462 = vadd.f32 %v4419, %v4461
    %4463 = vdwg.mxu0
    %4464 = vmatprep.subr.bf16.mxu0 %v3183
    %4465 = vmatpush1.bf16.msra.mxu0 %v3182
    %4466 = vmatprep.subr.bf16.mxu0 %v3187
    %4467 = vmatpush1.bf16.msra.mxu0 %v3186
    %4468 = vmatprep.subr.bf16.mxu0 %v3191
    %4469 = vmatpush1.bf16.msra.mxu0 %v3190
    %4470 = vmatprep.subr.bf16.mxu0 %v3195
    %4471 = vmatpush1.bf16.msra.mxu0 %v3194
    %4472 = vmatprep.subr.bf16.mxu0 %v3199
    %4473 = vmatpush1.bf16.msra.mxu0 %v3198
    %4474 = vmatprep.subr.bf16.mxu0 %v3203
    %4475 = vmatpush1.bf16.msra.mxu0 %v3202
    %4476 = vmatprep.subr.bf16.mxu0 %v3207
    %4477 = vmatpush1.bf16.msra.mxu0 %v3206
    %4478 = vmatprep.subr.bf16.mxu0 %v3211
    %4479 = vmatpush1.bf16.msra.mxu0 %v3210
    %4480 = vmatprep.subr.bf16.mxu0 %v3215
    %4481 = vmatpush1.bf16.msra.mxu0 %v3214
    %4482 = vmatprep.subr.bf16.mxu0 %v3219
    %4483 = vmatpush1.bf16.msra.mxu0 %v3218
    %4484 = vmatprep.subr.bf16.mxu0 %v3223
    %4485 = vmatpush1.bf16.msra.mxu0 %v3222
    %4486 = vmatprep.subr.bf16.mxu0 %v3227
    %4487 = vmatpush1.bf16.msra.mxu0 %v3226
    %4488 = vmatprep.subr.bf16.mxu0 %v3231
    %4489 = vmatpush1.bf16.msra.mxu0 %v3230
    %4490 = vmatprep.subr.bf16.mxu0 %v3235
    %4491 = vmatpush1.bf16.msra.mxu0 %v3234
    %4492 = vmatprep.subr.bf16.mxu0 %v3239
    %4493 = vmatpush1.bf16.msra.mxu0 %v3238
    %4494 = vmatprep.subr.bf16.mxu0 %v3243
    %4495 = vmatpush1.bf16.msra.mxu0 %v3242
    %4496 = vmatprep.mubr.bf16.mxu0 %v847
    %4497 = vmatmul.mubr.bf16.gmra.mrb[0].mxu0 %v846
    %v4498 = vpop.f32.mrb[0].mxu0
    %v4499 = vadd.f32 %v4456, %v4498
    %v4500 = vpop.f32.mrb[0].mxu0
    %v4501 = vadd.f32 %v4458, %v4500
    %v4502 = vpop.f32.mrb[0].mxu0
    %v4503 = vadd.f32 %v4460, %v4502
    %v4504 = vpop.f32.mrb[0].mxu0
    %v4505 = vadd.f32 %v4462, %v4504
    %4506 = vdwg.mxu0
    %4507 = vmatprep.subr.bf16.mxu0 %v3247
    %4508 = vmatpush1.bf16.msra.mxu0 %v3246
    %4509 = vmatprep.subr.bf16.mxu0 %v3251
    %4510 = vmatpush1.bf16.msra.mxu0 %v3250
    %4511 = vmatprep.subr.bf16.mxu0 %v3255
    %4512 = vmatpush1.bf16.msra.mxu0 %v3254
    %4513 = vmatprep.subr.bf16.mxu0 %v3259
    %4514 = vmatpush1.bf16.msra.mxu0 %v3258
    %4515 = vmatprep.subr.bf16.mxu0 %v3263
    %4516 = vmatpush1.bf16.msra.mxu0 %v3262
    %4517 = vmatprep.subr.bf16.mxu0 %v3267
    %4518 = vmatpush1.bf16.msra.mxu0 %v3266
    %4519 = vmatprep.subr.bf16.mxu0 %v3271
    %4520 = vmatpush1.bf16.msra.mxu0 %v3270
    %4521 = vmatprep.subr.bf16.mxu0 %v3275
    %4522 = vmatpush1.bf16.msra.mxu0 %v3274
    %4523 = vmatprep.subr.bf16.mxu0 %v3279
    %4524 = vmatpush1.bf16.msra.mxu0 %v3278
    %4525 = vmatprep.subr.bf16.mxu0 %v3283
    %4526 = vmatpush1.bf16.msra.mxu0 %v3282
    %4527 = vmatprep.subr.bf16.mxu0 %v3287
    %4528 = vmatpush1.bf16.msra.mxu0 %v3286
    %4529 = vmatprep.subr.bf16.mxu0 %v3291
    %4530 = vmatpush1.bf16.msra.mxu0 %v3290
    %4531 = vmatprep.subr.bf16.mxu0 %v3295
    %4532 = vmatpush1.bf16.msra.mxu0 %v3294
    %4533 = vmatprep.subr.bf16.mxu0 %v3299
    %4534 = vmatpush1.bf16.msra.mxu0 %v3298
    %4535 = vmatprep.subr.bf16.mxu0 %v3303
    %4536 = vmatpush1.bf16.msra.mxu0 %v3302
    %4537 = vmatprep.subr.bf16.mxu0 %v3307
    %4538 = vmatpush1.bf16.msra.mxu0 %v3306
    %4539 = vmatprep.mubr.bf16.mxu0 %v849
    %4540 = vmatmul.mubr.bf16.gmra.mrb[0].mxu0 %v848
    %v4541 = vpop.f32.mrb[0].mxu0
    %v4542 = vadd.f32 %v4499, %v4541
    %v4543 = vpop.f32.mrb[0].mxu0
    %v4544 = vadd.f32 %v4501, %v4543
    %v4545 = vpop.f32.mrb[0].mxu0
    %v4546 = vadd.f32 %v4503, %v4545
    %v4547 = vpop.f32.mrb[0].mxu0
    %v4548 = vadd.f32 %v4505, %v4547
    %4549 = vdwg.mxu0
    %4550 = vmatprep.subr.bf16.mxu0 %v3311
    %4551 = vmatpush1.bf16.msra.mxu0 %v3310
    %4552 = vmatprep.subr.bf16.mxu0 %v3315
    %4553 = vmatpush1.bf16.msra.mxu0 %v3314
    %4554 = vmatprep.subr.bf16.mxu0 %v3319
    %4555 = vmatpush1.bf16.msra.mxu0 %v3318
    %4556 = vmatprep.subr.bf16.mxu0 %v3323
    %4557 = vmatpush1.bf16.msra.mxu0 %v3322
    %4558 = vmatprep.subr.bf16.mxu0 %v3327
    %4559 = vmatpush1.bf16.msra.mxu0 %v3326
    %4560 = vmatprep.subr.bf16.mxu0 %v3331
    %4561 = vmatpush1.bf16.msra.mxu0 %v3330
    %4562 = vmatprep.subr.bf16.mxu0 %v3335
    %4563 = vmatpush1.bf16.msra.mxu0 %v3334
    %4564 = vmatprep.subr.bf16.mxu0 %v3339
    %4565 = vmatpush1.bf16.msra.mxu0 %v3338
    %4566 = vmatprep.subr.bf16.mxu0 %v3343
    %4567 = vmatpush1.bf16.msra.mxu0 %v3342
    %4568 = vmatprep.subr.bf16.mxu0 %v3347
    %4569 = vmatpush1.bf16.msra.mxu0 %v3346
    %4570 = vmatprep.subr.bf16.mxu0 %v3351
    %4571 = vmatpush1.bf16.msra.mxu0 %v3350
    %4572 = vmatprep.subr.bf16.mxu0 %v3355
    %4573 = vmatpush1.bf16.msra.mxu0 %v3354
    %4574 = vmatprep.subr.bf16.mxu0 %v3359
    %4575 = vmatpush1.bf16.msra.mxu0 %v3358
    %4576 = vmatprep.subr.bf16.mxu0 %v3363
    %4577 = vmatpush1.bf16.msra.mxu0 %v3362
    %4578 = vmatprep.subr.bf16.mxu0 %v3367
    %4579 = vmatpush1.bf16.msra.mxu0 %v3366
    %4580 = vmatprep.subr.bf16.mxu0 %v3371
    %4581 = vmatpush1.bf16.msra.mxu0 %v3370
    %4582 = vmatprep.mubr.bf16.mxu0 %v851
    %4583 = vmatmul.mubr.bf16.gmra.mrb[0].mxu0 %v850
    %v4584 = vpop.f32.mrb[0].mxu0
    %v4585 = vadd.f32 %v4542, %v4584
    %v4586 = vpop.f32.mrb[0].mxu0
    %v4587 = vadd.f32 %v4544, %v4586
    %v4588 = vpop.f32.mrb[0].mxu0
    %v4589 = vadd.f32 %v4546, %v4588
    %v4590 = vpop.f32.mrb[0].mxu0
    %v4591 = vadd.f32 %v4548, %v4590
    %4592 = vdwg.mxu0
    %4593 = vmatprep.subr.bf16.mxu0 %v3375
    %4594 = vmatpush1.bf16.msra.mxu0 %v3374
    %4595 = vmatprep.subr.bf16.mxu0 %v3379
    %4596 = vmatpush1.bf16.msra.mxu0 %v3378
    %4597 = vmatprep.subr.bf16.mxu0 %v3383
    %4598 = vmatpush1.bf16.msra.mxu0 %v3382
    %4599 = vmatprep.subr.bf16.mxu0 %v3387
    %4600 = vmatpush1.bf16.msra.mxu0 %v3386
    %4601 = vmatprep.subr.bf16.mxu0 %v3391
    %4602 = vmatpush1.bf16.msra.mxu0 %v3390
    %4603 = vmatprep.subr.bf16.mxu0 %v3395
    %4604 = vmatpush1.bf16.msra.mxu0 %v3394
    %4605 = vmatprep.subr.bf16.mxu0 %v3399
    %4606 = vmatpush1.bf16.msra.mxu0 %v3398
    %4607 = vmatprep.subr.bf16.mxu0 %v3403
    %4608 = vmatpush1.bf16.msra.mxu0 %v3402
    %4609 = vmatprep.subr.bf16.mxu0 %v3407
    %4610 = vmatpush1.bf16.msra.mxu0 %v3406
    %4611 = vmatprep.subr.bf16.mxu0 %v3411
    %4612 = vmatpush1.bf16.msra.mxu0 %v3410
    %4613 = vmatprep.subr.bf16.mxu0 %v3415
    %4614 = vmatpush1.bf16.msra.mxu0 %v3414
    %4615 = vmatprep.subr.bf16.mxu0 %v3419
    %4616 = vmatpush1.bf16.msra.mxu0 %v3418
    %4617 = vmatprep.subr.bf16.mxu0 %v3423
    %4618 = vmatpush1.bf16.msra.mxu0 %v3422
    %4619 = vmatprep.subr.bf16.mxu0 %v3427
    %4620 = vmatpush1.bf16.msra.mxu0 %v3426
    %4621 = vmatprep.subr.bf16.mxu0 %v3431
    %4622 = vmatpush1.bf16.msra.mxu0 %v3430
    %4623 = vmatprep.subr.bf16.mxu0 %v3435
    %4624 = vmatpush1.bf16.msra.mxu0 %v3434
    %4625 = vmatprep.mubr.bf16.mxu0 %v853
    %4626 = vmatmul.mubr.bf16.gmra.mrb[0].mxu0 %v852
    %v4627 = vpop.f32.mrb[0].mxu0
    %v4628 = vadd.f32 %v4585, %v4627
    %v4629 = vpop.f32.mrb[0].mxu0
    %v4630 = vadd.f32 %v4587, %v4629
    %v4631 = vpop.f32.mrb[0].mxu0
    %v4632 = vadd.f32 %v4589, %v4631
    %v4633 = vpop.f32.mrb[0].mxu0
    %v4634 = vadd.f32 %v4591, %v4633
    %4635 = vdwg.mxu0
    %v4636 = vmax.f32 %v4284, 0.0
    %v4637 = vmax.f32 %v4286, 0.0
    %v4638 = vmax.f32 %v4628, 0.0
    %v4639 = vmax.f32 %v4630, 0.0
    %v4640 = vmax.f32 %v4288, 0.0
    %v4641 = vmax.f32 %v4290, 0.0
    %v4642 = vmax.f32 %v4632, 0.0
    %v4643 = vmax.f32 %v4634, 0.0
    %v4644 = vpack.c.bf16 %v4640, %v4636
    %v4645 = vpack.c.bf16 %v4641, %v4637
    %v4646 = vpack.c.bf16 %v4642, %v4638
    %v4647 = vpack.c.bf16 %v4643, %v4639
    %v4648 = vld [vmem:[#allocation11] sm:$0xff]
    %v4649 = vld [vmem:[#allocation11 + $0x8] sm:$0xff]
    %v4650 = vld [vmem:[#allocation11 + $0x10] sm:$0xff]
    %v4651 = vld [vmem:[#allocation11 + $0x18] sm:$0xff]
    %v4652 = vld [vmem:[#allocation11 + $0x20] sm:$0xff]
    %v4653 = vld [vmem:[#allocation11 + $0x28] sm:$0xff]
    %v4654 = vld [vmem:[#allocation11 + $0x30] sm:$0xff]
    %v4655 = vld [vmem:[#allocation11 + $0x38] sm:$0xff]
    %v4656 = vld [vmem:[#allocation11 + $0x40] sm:$0xff]
    %v4657 = vld [vmem:[#allocation11 + $0x48] sm:$0xff]
    %v4658 = vld [vmem:[#allocation11 + $0x50] sm:$0xff]
    %v4659 = vld [vmem:[#allocation11 + $0x58] sm:$0xff]
    %v4660 = vld [vmem:[#allocation11 + $0x60] sm:$0xff]
    %v4661 = vld [vmem:[#allocation11 + $0x68] sm:$0xff]
    %v4662 = vld [vmem:[#allocation11 + $0x70] sm:$0xff]
    %v4663 = vld [vmem:[#allocation11 + $0x78] sm:$0xff]
    %v4664 = vld [vmem:[#allocation11 + $0x80] sm:$0xff]
    %v4665 = vld [vmem:[#allocation11 + $0x88] sm:$0xff]
    %v4666 = vld [vmem:[#allocation11 + $0x90] sm:$0xff]
    %v4667 = vld [vmem:[#allocation11 + $0x98] sm:$0xff]
    %v4668 = vld [vmem:[#allocation11 + $0xa0] sm:$0xff]
    %v4669 = vld [vmem:[#allocation11 + $0xa8] sm:$0xff]
    %v4670 = vld [vmem:[#allocation11 + $0xb0] sm:$0xff]
    %v4671 = vld [vmem:[#allocation11 + $0xb8] sm:$0xff]
    %v4672 = vld [vmem:[#allocation11 + $0xc0] sm:$0xff]
    %v4673 = vld [vmem:[#allocation11 + $0xc8] sm:$0xff]
    %v4674 = vld [vmem:[#allocation11 + $0xd0] sm:$0xff]
    %v4675 = vld [vmem:[#allocation11 + $0xd8] sm:$0xff]
    %v4676 = vld [vmem:[#allocation11 + $0xe0] sm:$0xff]
    %v4677 = vld [vmem:[#allocation11 + $0xe8] sm:$0xff]
    %v4678 = vld [vmem:[#allocation11 + $0xf0] sm:$0xff]
    %v4679 = vld [vmem:[#allocation11 + $0xf8] sm:$0xff]
    %v4680 = vld [vmem:[#allocation11 + $0x100] sm:$0xff]
    %v4681 = vld [vmem:[#allocation11 + $0x108] sm:$0xff]
    %v4682 = vld [vmem:[#allocation11 + $0x110] sm:$0xff]
    %v4683 = vld [vmem:[#allocation11 + $0x118] sm:$0xff]
    %v4684 = vld [vmem:[#allocation11 + $0x120] sm:$0xff]
    %v4685 = vld [vmem:[#allocation11 + $0x128] sm:$0xff]
    %v4686 = vld [vmem:[#allocation11 + $0x130] sm:$0xff]
    %v4687 = vld [vmem:[#allocation11 + $0x138] sm:$0xff]
    %v4688 = vld [vmem:[#allocation11 + $0x140] sm:$0xff]
    %v4689 = vld [vmem:[#allocation11 + $0x148] sm:$0xff]
    %v4690 = vld [vmem:[#allocation11 + $0x150] sm:$0xff]
    %v4691 = vld [vmem:[#allocation11 + $0x158] sm:$0xff]
    %v4692 = vld [vmem:[#allocation11 + $0x160] sm:$0xff]
    %v4693 = vld [vmem:[#allocation11 + $0x168] sm:$0xff]
    %v4694 = vld [vmem:[#allocation11 + $0x170] sm:$0xff]
    %v4695 = vld [vmem:[#allocation11 + $0x178] sm:$0xff]
    %v4696 = vld [vmem:[#allocation11 + $0x180] sm:$0xff]
    %v4697 = vld [vmem:[#allocation11 + $0x188] sm:$0xff]
    %v4698 = vld [vmem:[#allocation11 + $0x190] sm:$0xff]
    %v4699 = vld [vmem:[#allocation11 + $0x198] sm:$0xff]
    %v4700 = vld [vmem:[#allocation11 + $0x1a0] sm:$0xff]
    %v4701 = vld [vmem:[#allocation11 + $0x1a8] sm:$0xff]
    %v4702 = vld [vmem:[#allocation11 + $0x1b0] sm:$0xff]
    %v4703 = vld [vmem:[#allocation11 + $0x1b8] sm:$0xff]
    %v4704 = vld [vmem:[#allocation11 + $0x1c0] sm:$0xff]
    %v4705 = vld [vmem:[#allocation11 + $0x1c8] sm:$0xff]
    %v4706 = vld [vmem:[#allocation11 + $0x1d0] sm:$0xff]
    %v4707 = vld [vmem:[#allocation11 + $0x1d8] sm:$0xff]
    %v4708 = vld [vmem:[#allocation11 + $0x1e0] sm:$0xff]
    %v4709 = vld [vmem:[#allocation11 + $0x1e8] sm:$0xff]
    %v4710 = vld [vmem:[#allocation11 + $0x1f0] sm:$0xff]
    %v4711 = vld [vmem:[#allocation11 + $0x1f8] sm:$0xff]
    %v4712 = vld [vmem:[#allocation13] sm:$0x3]
    %v4714 = vlaneseq
    %v4715 = vshrl.u32 %v4714, 7
    %v4716 = vsub.s32 0, %v4715
    %v4717 = vrot.slane %v4712, %v4716
    %v4718 = vlaneseq
    %v4719 = vshrl.u32 %v4718, 7
    %v4720 = vsub.s32 1, %v4719
    %v4721 = vrot.slane %v4712, %v4720
    %v4788 = vunpack.c.l.b16 %v4648
    %v4789 = vunpack.c.h.b16 %v4648
    %v4790 = vunpack.c.l.b16 %v4649
    %v4791 = vunpack.c.h.b16 %v4649
    %v4792 = vunpack.c.l.b16 %v4650
    %v4793 = vunpack.c.h.b16 %v4650
    %v4794 = vunpack.c.l.b16 %v4651
    %v4795 = vunpack.c.h.b16 %v4651
    %v4796 = vunpack.c.l.b16 %v4652
    %v4797 = vunpack.c.h.b16 %v4652
    %v4798 = vunpack.c.l.b16 %v4653
    %v4799 = vunpack.c.h.b16 %v4653
    %v4800 = vunpack.c.l.b16 %v4654
    %v4801 = vunpack.c.h.b16 %v4654
    %v4802 = vunpack.c.l.b16 %v4655
    %v4803 = vunpack.c.h.b16 %v4655
    %v4804 = vunpack.c.l.b16 %v4656
    %v4805 = vunpack.c.h.b16 %v4656
    %v4806 = vunpack.c.l.b16 %v4657
    %v4807 = vunpack.c.h.b16 %v4657
    %v4808 = vunpack.c.l.b16 %v4658
    %v4809 = vunpack.c.h.b16 %v4658
    %v4810 = vunpack.c.l.b16 %v4659
    %v4811 = vunpack.c.h.b16 %v4659
    %v4812 = vunpack.c.l.b16 %v4660
    %v4813 = vunpack.c.h.b16 %v4660
    %v4814 = vunpack.c.l.b16 %v4661
    %v4815 = vunpack.c.h.b16 %v4661
    %v4816 = vunpack.c.l.b16 %v4662
    %v4817 = vunpack.c.h.b16 %v4662
    %v4818 = vunpack.c.l.b16 %v4663
    %v4819 = vunpack.c.h.b16 %v4663
    %v4820 = vunpack.c.l.b16 %v4664
    %v4821 = vunpack.c.h.b16 %v4664
    %v4822 = vunpack.c.l.b16 %v4665
    %v4823 = vunpack.c.h.b16 %v4665
    %v4824 = vunpack.c.l.b16 %v4666
    %v4825 = vunpack.c.h.b16 %v4666
    %v4826 = vunpack.c.l.b16 %v4667
    %v4827 = vunpack.c.h.b16 %v4667
    %v4828 = vunpack.c.l.b16 %v4668
    %v4829 = vunpack.c.h.b16 %v4668
    %v4830 = vunpack.c.l.b16 %v4669
    %v4831 = vunpack.c.h.b16 %v4669
    %v4832 = vunpack.c.l.b16 %v4670
    %v4833 = vunpack.c.h.b16 %v4670
    %v4834 = vunpack.c.l.b16 %v4671
    %v4835 = vunpack.c.h.b16 %v4671
    %v4836 = vunpack.c.l.b16 %v4672
    %v4837 = vunpack.c.h.b16 %v4672
    %v4838 = vunpack.c.l.b16 %v4673
    %v4839 = vunpack.c.h.b16 %v4673
    %v4840 = vunpack.c.l.b16 %v4674
    %v4841 = vunpack.c.h.b16 %v4674
    %v4842 = vunpack.c.l.b16 %v4675
    %v4843 = vunpack.c.h.b16 %v4675
    %v4844 = vunpack.c.l.b16 %v4676
    %v4845 = vunpack.c.h.b16 %v4676
    %v4846 = vunpack.c.l.b16 %v4677
    %v4847 = vunpack.c.h.b16 %v4677
    %v4848 = vunpack.c.l.b16 %v4678
    %v4849 = vunpack.c.h.b16 %v4678
    %v4850 = vunpack.c.l.b16 %v4679
    %v4851 = vunpack.c.h.b16 %v4679
    %v4852 = vunpack.c.l.b16 %v4680
    %v4853 = vunpack.c.h.b16 %v4680
    %v4854 = vunpack.c.l.b16 %v4681
    %v4855 = vunpack.c.h.b16 %v4681
    %v4856 = vunpack.c.l.b16 %v4682
    %v4857 = vunpack.c.h.b16 %v4682
    %v4858 = vunpack.c.l.b16 %v4683
    %v4859 = vunpack.c.h.b16 %v4683
    %v4860 = vunpack.c.l.b16 %v4684
    %v4861 = vunpack.c.h.b16 %v4684
    %v4862 = vunpack.c.l.b16 %v4685
    %v4863 = vunpack.c.h.b16 %v4685
    %v4864 = vunpack.c.l.b16 %v4686
    %v4865 = vunpack.c.h.b16 %v4686
    %v4866 = vunpack.c.l.b16 %v4687
    %v4867 = vunpack.c.h.b16 %v4687
    %v4868 = vunpack.c.l.b16 %v4688
    %v4869 = vunpack.c.h.b16 %v4688
    %v4870 = vunpack.c.l.b16 %v4689
    %v4871 = vunpack.c.h.b16 %v4689
    %v4872 = vunpack.c.l.b16 %v4690
    %v4873 = vunpack.c.h.b16 %v4690
    %v4874 = vunpack.c.l.b16 %v4691
    %v4875 = vunpack.c.h.b16 %v4691
    %v4876 = vunpack.c.l.b16 %v4692
    %v4877 = vunpack.c.h.b16 %v4692
    %v4878 = vunpack.c.l.b16 %v4693
    %v4879 = vunpack.c.h.b16 %v4693
    %v4880 = vunpack.c.l.b16 %v4694
    %v4881 = vunpack.c.h.b16 %v4694
    %v4882 = vunpack.c.l.b16 %v4695
    %v4883 = vunpack.c.h.b16 %v4695
    %v4884 = vunpack.c.l.b16 %v4696
    %v4885 = vunpack.c.h.b16 %v4696
    %v4886 = vunpack.c.l.b16 %v4697
    %v4887 = vunpack.c.h.b16 %v4697
    %v4888 = vunpack.c.l.b16 %v4698
    %v4889 = vunpack.c.h.b16 %v4698
    %v4890 = vunpack.c.l.b16 %v4699
    %v4891 = vunpack.c.h.b16 %v4699
    %v4892 = vunpack.c.l.b16 %v4700
    %v4893 = vunpack.c.h.b16 %v4700
    %v4894 = vunpack.c.l.b16 %v4701
    %v4895 = vunpack.c.h.b16 %v4701
    %v4896 = vunpack.c.l.b16 %v4702
    %v4897 = vunpack.c.h.b16 %v4702
    %v4898 = vunpack.c.l.b16 %v4703
    %v4899 = vunpack.c.h.b16 %v4703
    %v4900 = vunpack.c.l.b16 %v4704
    %v4901 = vunpack.c.h.b16 %v4704
    %v4902 = vunpack.c.l.b16 %v4705
    %v4903 = vunpack.c.h.b16 %v4705
    %v4904 = vunpack.c.l.b16 %v4706
    %v4905 = vunpack.c.h.b16 %v4706
    %v4906 = vunpack.c.l.b16 %v4707
    %v4907 = vunpack.c.h.b16 %v4707
    %v4908 = vunpack.c.l.b16 %v4708
    %v4909 = vunpack.c.h.b16 %v4708
    %v4910 = vunpack.c.l.b16 %v4709
    %v4911 = vunpack.c.h.b16 %v4709
    %v4912 = vunpack.c.l.b16 %v4710
    %v4913 = vunpack.c.h.b16 %v4710
    %v4914 = vunpack.c.l.b16 %v4711
    %v4915 = vunpack.c.h.b16 %v4711
    %v4916 = vpack.c.b16 %v4790, %v4788
    %v4917 = vpack.c.b16 %v4791, %v4789
    %v4918 = vpack.c.b16 %v4794, %v4792
    %v4919 = vpack.c.b16 %v4795, %v4793
    %v4920 = vpack.c.b16 %v4798, %v4796
    %v4921 = vpack.c.b16 %v4799, %v4797
    %v4922 = vpack.c.b16 %v4802, %v4800
    %v4923 = vpack.c.b16 %v4803, %v4801
    %v4924 = vpack.c.b16 %v4806, %v4804
    %v4925 = vpack.c.b16 %v4807, %v4805
    %v4926 = vpack.c.b16 %v4810, %v4808
    %v4927 = vpack.c.b16 %v4811, %v4809
    %v4928 = vpack.c.b16 %v4814, %v4812
    %v4929 = vpack.c.b16 %v4815, %v4813
    %v4930 = vpack.c.b16 %v4818, %v4816
    %v4931 = vpack.c.b16 %v4819, %v4817
    %v4932 = vpack.c.b16 %v4822, %v4820
    %v4933 = vpack.c.b16 %v4823, %v4821
    %v4934 = vpack.c.b16 %v4826, %v4824
    %v4935 = vpack.c.b16 %v4827, %v4825
    %v4936 = vpack.c.b16 %v4830, %v4828
    %v4937 = vpack.c.b16 %v4831, %v4829
    %v4938 = vpack.c.b16 %v4834, %v4832
    %v4939 = vpack.c.b16 %v4835, %v4833
    %v4940 = vpack.c.b16 %v4838, %v4836
    %v4941 = vpack.c.b16 %v4839, %v4837
    %v4942 = vpack.c.b16 %v4842, %v4840
    %v4943 = vpack.c.b16 %v4843, %v4841
    %v4944 = vpack.c.b16 %v4846, %v4844
    %v4945 = vpack.c.b16 %v4847, %v4845
    %v4946 = vpack.c.b16 %v4850, %v4848
    %v4947 = vpack.c.b16 %v4851, %v4849
    %v4948 = vpack.c.b16 %v4854, %v4852
    %v4949 = vpack.c.b16 %v4855, %v4853
    %v4950 = vpack.c.b16 %v4858, %v4856
    %v4951 = vpack.c.b16 %v4859, %v4857
    %v4952 = vpack.c.b16 %v4862, %v4860
    %v4953 = vpack.c.b16 %v4863, %v4861
    %v4954 = vpack.c.b16 %v4866, %v4864
    %v4955 = vpack.c.b16 %v4867, %v4865
    %v4956 = vpack.c.b16 %v4870, %v4868
    %v4957 = vpack.c.b16 %v4871, %v4869
    %v4958 = vpack.c.b16 %v4874, %v4872
    %v4959 = vpack.c.b16 %v4875, %v4873
    %v4960 = vpack.c.b16 %v4878, %v4876
    %v4961 = vpack.c.b16 %v4879, %v4877
    %v4962 = vpack.c.b16 %v4882, %v4880
    %v4963 = vpack.c.b16 %v4883, %v4881
    %v4964 = vpack.c.b16 %v4886, %v4884
    %v4965 = vpack.c.b16 %v4887, %v4885
    %v4966 = vpack.c.b16 %v4890, %v4888
    %v4967 = vpack.c.b16 %v4891, %v4889
    %v4968 = vpack.c.b16 %v4894, %v4892
    %v4969 = vpack.c.b16 %v4895, %v4893
    %v4970 = vpack.c.b16 %v4898, %v4896
    %v4971 = vpack.c.b16 %v4899, %v4897
    %v4972 = vpack.c.b16 %v4902, %v4900
    %v4973 = vpack.c.b16 %v4903, %v4901
    %v4974 = vpack.c.b16 %v4906, %v4904
    %v4975 = vpack.c.b16 %v4907, %v4905
    %v4976 = vpack.c.b16 %v4910, %v4908
    %v4977 = vpack.c.b16 %v4911, %v4909
    %v4978 = vpack.c.b16 %v4914, %v4912
    %v4979 = vpack.c.b16 %v4915, %v4913
    %5044 = vmatprep.subr.bf16.mxu0 %v4917
    %5045 = vmatpush1.bf16.msra.mxu0 %v4916
    %5046 = vmatprep.subr.bf16.mxu0 %v4919
    %5047 = vmatpush1.bf16.msra.mxu0 %v4918
    %5048 = vmatprep.subr.bf16.mxu0 %v4921
    %5049 = vmatpush1.bf16.msra.mxu0 %v4920
    %5050 = vmatprep.subr.bf16.mxu0 %v4923
    %5051 = vmatpush1.bf16.msra.mxu0 %v4922
    %5052 = vmatprep.subr.bf16.mxu0 %v4925
    %5053 = vmatpush1.bf16.msra.mxu0 %v4924
    %5054 = vmatprep.subr.bf16.mxu0 %v4927
    %5055 = vmatpush1.bf16.msra.mxu0 %v4926
    %5056 = vmatprep.subr.bf16.mxu0 %v4929
    %5057 = vmatpush1.bf16.msra.mxu0 %v4928
    %5058 = vmatprep.subr.bf16.mxu0 %v4931
    %5059 = vmatpush1.bf16.msra.mxu0 %v4930
    %5060 = vmatprep.subr.bf16.mxu0 %v4933
    %5061 = vmatpush1.bf16.msra.mxu0 %v4932
    %5062 = vmatprep.subr.bf16.mxu0 %v4935
    %5063 = vmatpush1.bf16.msra.mxu0 %v4934
    %5064 = vmatprep.subr.bf16.mxu0 %v4937
    %5065 = vmatpush1.bf16.msra.mxu0 %v4936
    %5066 = vmatprep.subr.bf16.mxu0 %v4939
    %5067 = vmatpush1.bf16.msra.mxu0 %v4938
    %5068 = vmatprep.subr.bf16.mxu0 %v4941
    %5069 = vmatpush1.bf16.msra.mxu0 %v4940
    %5070 = vmatprep.subr.bf16.mxu0 %v4943
    %5071 = vmatpush1.bf16.msra.mxu0 %v4942
    %5072 = vmatprep.subr.bf16.mxu0 %v4945
    %5073 = vmatpush1.bf16.msra.mxu0 %v4944
    %5074 = vmatprep.subr.bf16.mxu0 %v4947
    %5075 = vmatpush1.bf16.msra.mxu0 %v4946
    %5076 = vmatprep.mubr.bf16.mxu0 %v4645
    %5077 = vmatmul.mubr.bf16.gmra.mrb[0].mxu0 %v4644
    %v5078 = vpop.f32.mrb[0].mxu0
    %v5079 = vadd.f32 %v4717, %v5078
    %v5080 = vpop.f32.mrb[0].mxu0
    %v5081 = vadd.f32 %v4721, %v5080
    %v5082 = vpop.f32.mrb[0].mxu0
    %v5083 = vadd.f32 %v4717, %v5082
    %v5084 = vpop.f32.mrb[0].mxu0
    %v5085 = vadd.f32 %v4721, %v5084
    %5086 = vdwg.mxu0
    %5087 = vmatprep.subr.bf16.mxu0 %v4949
    %5088 = vmatpush1.bf16.msra.mxu0 %v4948
    %5089 = vmatprep.subr.bf16.mxu0 %v4951
    %5090 = vmatpush1.bf16.msra.mxu0 %v4950
    %5091 = vmatprep.subr.bf16.mxu0 %v4953
    %5092 = vmatpush1.bf16.msra.mxu0 %v4952
    %5093 = vmatprep.subr.bf16.mxu0 %v4955
    %5094 = vmatpush1.bf16.msra.mxu0 %v4954
    %5095 = vmatprep.subr.bf16.mxu0 %v4957
    %5096 = vmatpush1.bf16.msra.mxu0 %v4956
    %5097 = vmatprep.subr.bf16.mxu0 %v4959
    %5098 = vmatpush1.bf16.msra.mxu0 %v4958
    %5099 = vmatprep.subr.bf16.mxu0 %v4961
    %5100 = vmatpush1.bf16.msra.mxu0 %v4960
    %5101 = vmatprep.subr.bf16.mxu0 %v4963
    %5102 = vmatpush1.bf16.msra.mxu0 %v4962
    %5103 = vmatprep.subr.bf16.mxu0 %v4965
    %5104 = vmatpush1.bf16.msra.mxu0 %v4964
    %5105 = vmatprep.subr.bf16.mxu0 %v4967
    %5106 = vmatpush1.bf16.msra.mxu0 %v4966
    %5107 = vmatprep.subr.bf16.mxu0 %v4969
    %5108 = vmatpush1.bf16.msra.mxu0 %v4968
    %5109 = vmatprep.subr.bf16.mxu0 %v4971
    %5110 = vmatpush1.bf16.msra.mxu0 %v4970
    %5111 = vmatprep.subr.bf16.mxu0 %v4973
    %5112 = vmatpush1.bf16.msra.mxu0 %v4972
    %5113 = vmatprep.subr.bf16.mxu0 %v4975
    %5114 = vmatpush1.bf16.msra.mxu0 %v4974
    %5115 = vmatprep.subr.bf16.mxu0 %v4977
    %5116 = vmatpush1.bf16.msra.mxu0 %v4976
    %5117 = vmatprep.subr.bf16.mxu0 %v4979
    %5118 = vmatpush1.bf16.msra.mxu0 %v4978
    %5119 = vmatprep.mubr.bf16.mxu0 %v4647
    %5120 = vmatmul.mubr.bf16.gmra.mrb[0].mxu0 %v4646
    %v5121 = vpop.f32.mrb[0].mxu0
    %v5122 = vadd.f32 %v5079, %v5121
    %v5123 = vpop.f32.mrb[0].mxu0
    %v5124 = vadd.f32 %v5081, %v5123
    %v5125 = vpop.f32.mrb[0].mxu0
    %v5126 = vadd.f32 %v5083, %v5125
    %v5127 = vpop.f32.mrb[0].mxu0
    %v5128 = vadd.f32 %v5085, %v5127
    %5129 = vdwg.mxu0
    %v5130 = vmax.f32 %v5122, 0.0
    %v5131 = vmax.f32 %v5124, 0.0
    %v5132 = vmax.f32 %v5126, 0.0
    %v5133 = vmax.f32 %v5128, 0.0
    %v5134 = vpack.c.bf16 %v5132, %v5130
    %v5135 = vpack.c.bf16 %v5133, %v5131
    %v5136 = vld [vmem:[#allocation14] sm:$0xf]
    %v5137 = vld [vmem:[#allocation14 + $0x4] sm:$0xf]
    %v5138 = vld [vmem:[#allocation14 + $0x8] sm:$0xf]
    %v5139 = vld [vmem:[#allocation14 + $0xc] sm:$0xf]
    %v5140 = vld [vmem:[#allocation14 + $0x10] sm:$0xf]
    %v5141 = vld [vmem:[#allocation14 + $0x14] sm:$0xf]
    %v5142 = vld [vmem:[#allocation14 + $0x18] sm:$0xf]
    %v5143 = vld [vmem:[#allocation14 + $0x1c] sm:$0xf]
    %v5144 = vld [vmem:[#allocation14 + $0x20] sm:$0xf]
    %v5145 = vld [vmem:[#allocation14 + $0x24] sm:$0xf]
    %v5146 = vld [vmem:[#allocation14 + $0x28] sm:$0xf]
    %v5147 = vld [vmem:[#allocation14 + $0x2c] sm:$0xf]
    %v5148 = vld [vmem:[#allocation14 + $0x30] sm:$0xf]
    %v5149 = vld [vmem:[#allocation14 + $0x34] sm:$0xf]
    %v5150 = vld [vmem:[#allocation14 + $0x38] sm:$0xf]
    %v5151 = vld [vmem:[#allocation14 + $0x3c] sm:$0xf]
    %v5152 = vld [vmem:[#allocation14 + $0x40] sm:$0xf]
    %v5153 = vld [vmem:[#allocation14 + $0x44] sm:$0xf]
    %v5154 = vld [vmem:[#allocation14 + $0x48] sm:$0xf]
    %v5155 = vld [vmem:[#allocation14 + $0x4c] sm:$0xf]
    %v5156 = vld [vmem:[#allocation14 + $0x50] sm:$0xf]
    %v5157 = vld [vmem:[#allocation14 + $0x54] sm:$0xf]
    %v5158 = vld [vmem:[#allocation14 + $0x58] sm:$0xf]
    %v5159 = vld [vmem:[#allocation14 + $0x5c] sm:$0xf]
    %v5160 = vld [vmem:[#allocation14 + $0x60] sm:$0xf]
    %v5161 = vld [vmem:[#allocation14 + $0x64] sm:$0xf]
    %v5162 = vld [vmem:[#allocation14 + $0x68] sm:$0xf]
    %v5163 = vld [vmem:[#allocation14 + $0x6c] sm:$0xf]
    %v5164 = vld [vmem:[#allocation14 + $0x70] sm:$0xf]
    %v5165 = vld [vmem:[#allocation14 + $0x74] sm:$0xf]
    %v5166 = vld [vmem:[#allocation14 + $0x78] sm:$0xf]
    %v5167 = vld [vmem:[#allocation14 + $0x7c] sm:$0xf]
    %v5168 = vld [vmem:[#allocation16] sm:$0x1]
    %v5170 = vlaneseq
    %v5171 = vshrl.u32 %v5170, 7
    %v5172 = vsub.s32 0, %v5171
    %v5173 = vrot.slane %v5168, %v5172
    %v5207 = vunpack.c.l.b16 %v5136
    %v5208 = vunpack.c.l.b16 %v5137
    %v5209 = vunpack.c.l.b16 %v5138
    %v5210 = vunpack.c.l.b16 %v5139
    %v5211 = vunpack.c.l.b16 %v5140
    %v5212 = vunpack.c.l.b16 %v5141
    %v5213 = vunpack.c.l.b16 %v5142
    %v5214 = vunpack.c.l.b16 %v5143
    %v5215 = vunpack.c.l.b16 %v5144
    %v5216 = vunpack.c.l.b16 %v5145
    %v5217 = vunpack.c.l.b16 %v5146
    %v5218 = vunpack.c.l.b16 %v5147
    %v5219 = vunpack.c.l.b16 %v5148
    %v5220 = vunpack.c.l.b16 %v5149
    %v5221 = vunpack.c.l.b16 %v5150
    %v5222 = vunpack.c.l.b16 %v5151
    %v5223 = vunpack.c.l.b16 %v5152
    %v5224 = vunpack.c.l.b16 %v5153
    %v5225 = vunpack.c.l.b16 %v5154
    %v5226 = vunpack.c.l.b16 %v5155
    %v5227 = vunpack.c.l.b16 %v5156
    %v5228 = vunpack.c.l.b16 %v5157
    %v5229 = vunpack.c.l.b16 %v5158
    %v5230 = vunpack.c.l.b16 %v5159
    %v5231 = vunpack.c.l.b16 %v5160
    %v5232 = vunpack.c.l.b16 %v5161
    %v5233 = vunpack.c.l.b16 %v5162
    %v5234 = vunpack.c.l.b16 %v5163
    %v5235 = vunpack.c.l.b16 %v5164
    %v5236 = vunpack.c.l.b16 %v5165
    %v5237 = vunpack.c.l.b16 %v5166
    %v5238 = vunpack.c.l.b16 %v5167
    %v5239 = vpack.c.b16 %v5208, %v5207
    %v5240 = vpack.c.b16 %v5210, %v5209
    %v5241 = vpack.c.b16 %v5212, %v5211
    %v5242 = vpack.c.b16 %v5214, %v5213
    %v5243 = vpack.c.b16 %v5216, %v5215
    %v5244 = vpack.c.b16 %v5218, %v5217
    %v5245 = vpack.c.b16 %v5220, %v5219
    %v5246 = vpack.c.b16 %v5222, %v5221
    %v5247 = vpack.c.b16 %v5224, %v5223
    %v5248 = vpack.c.b16 %v5226, %v5225
    %v5249 = vpack.c.b16 %v5228, %v5227
    %v5250 = vpack.c.b16 %v5230, %v5229
    %v5251 = vpack.c.b16 %v5232, %v5231
    %v5252 = vpack.c.b16 %v5234, %v5233
    %v5253 = vpack.c.b16 %v5236, %v5235
    %v5254 = vpack.c.b16 %v5238, %v5237
    %5271 = vmatprep.subr.bf16.mxu0 0
    %5272 = vmatpush1.bf16.msra.mxu0 %v5239
    %5273 = vmatprep.subr.bf16.mxu0 0
    %5274 = vmatpush1.bf16.msra.mxu0 %v5240
    %5275 = vmatprep.subr.bf16.mxu0 0
    %5276 = vmatpush1.bf16.msra.mxu0 %v5241
    %5277 = vmatprep.subr.bf16.mxu0 0
    %5278 = vmatpush1.bf16.msra.mxu0 %v5242
    %5279 = vmatprep.subr.bf16.mxu0 0
    %5280 = vmatpush1.bf16.msra.mxu0 %v5243
    %5281 = vmatprep.subr.bf16.mxu0 0
    %5282 = vmatpush1.bf16.msra.mxu0 %v5244
    %5283 = vmatprep.subr.bf16.mxu0 0
    %5284 = vmatpush1.bf16.msra.mxu0 %v5245
    %5285 = vmatprep.subr.bf16.mxu0 0
    %5286 = vmatpush1.bf16.msra.mxu0 %v5246
    %5287 = vmatprep.subr.bf16.mxu0 0
    %5288 = vmatpush1.bf16.msra.mxu0 %v5247
    %5289 = vmatprep.subr.bf16.mxu0 0
    %5290 = vmatpush1.bf16.msra.mxu0 %v5248
    %5291 = vmatprep.subr.bf16.mxu0 0
    %5292 = vmatpush1.bf16.msra.mxu0 %v5249
    %5293 = vmatprep.subr.bf16.mxu0 0
    %5294 = vmatpush1.bf16.msra.mxu0 %v5250
    %5295 = vmatprep.subr.bf16.mxu0 0
    %5296 = vmatpush1.bf16.msra.mxu0 %v5251
    %5297 = vmatprep.subr.bf16.mxu0 0
    %5298 = vmatpush1.bf16.msra.mxu0 %v5252
    %5299 = vmatprep.subr.bf16.mxu0 0
    %5300 = vmatpush1.bf16.msra.mxu0 %v5253
    %5301 = vmatprep.subr.bf16.mxu0 0
    %5302 = vmatpush1.bf16.msra.mxu0 %v5254
    %5303 = vmatprep.mubr.bf16.mxu0 %v5135
    %5304 = vmatmul.mubr.bf16.gmra.mrb[0].mxu0 %v5134
    %v5305 = vpop.f32.mrb[0].mxu0
    %v5306 = vadd.f32 %v5173, %v5305
    %v5307 = vpop.f32.mrb[0].mxu0
    %v5308 = vpop.f32.mrb[0].mxu0
    %v5309 = vadd.f32 %v5173, %v5308
    %v5310 = vpop.f32.mrb[0].mxu0
    %5311 = vdwg.mxu0
    %v5312 = vmax.f32 %v5306, 0.0
    %v5313 = vmax.f32 %v5309, 0.0
    %v5314 = vpack.c.bf16 %v5313, %v5312
    %v5315 = vld [vmem:[#allocation17] sm:$0xf]
    %v5316 = vld [vmem:[#allocation17 + $0x4] sm:$0xf]
    %v5317 = vld [vmem:[#allocation17 + $0x8] sm:$0xf]
    %v5318 = vld [vmem:[#allocation17 + $0xc] sm:$0xf]
    %v5319 = vld [vmem:[#allocation17 + $0x10] sm:$0xf]
    %v5320 = vld [vmem:[#allocation17 + $0x14] sm:$0xf]
    %v5321 = vld [vmem:[#allocation17 + $0x18] sm:$0xf]
    %v5322 = vld [vmem:[#allocation17 + $0x1c] sm:$0xf]
    %v5323 = vld [vmem:[#allocation17 + $0x20] sm:$0xf]
    %v5324 = vld [vmem:[#allocation17 + $0x24] sm:$0xf]
    %v5325 = vld [vmem:[#allocation17 + $0x28] sm:$0xf]
    %v5326 = vld [vmem:[#allocation17 + $0x2c] sm:$0xf]
    %v5327 = vld [vmem:[#allocation17 + $0x30] sm:$0xf]
    %v5328 = vld [vmem:[#allocation17 + $0x34] sm:$0xf]
    %v5329 = vld [vmem:[#allocation17 + $0x38] sm:$0xf]
    %v5330 = vld [vmem:[#allocation17 + $0x3c] sm:$0xf]
    %v5331 = vld [vmem:[#allocation19] sm:$0x1]
    %v5333 = vlaneseq
    %v5334 = vshrl.u32 %v5333, 7
    %v5335 = vsub.s32 0, %v5334
    %v5336 = vrot.slane %v5331, %v5335
    %v5354 = vunpack.c.l.b16 %v5315
    %v5355 = vunpack.c.l.b16 %v5316
    %v5356 = vunpack.c.l.b16 %v5317
    %v5357 = vunpack.c.l.b16 %v5318
    %v5358 = vunpack.c.l.b16 %v5319
    %v5359 = vunpack.c.l.b16 %v5320
    %v5360 = vunpack.c.l.b16 %v5321
    %v5361 = vunpack.c.l.b16 %v5322
    %v5362 = vunpack.c.l.b16 %v5323
    %v5363 = vunpack.c.l.b16 %v5324
    %v5364 = vunpack.c.l.b16 %v5325
    %v5365 = vunpack.c.l.b16 %v5326
    %v5366 = vunpack.c.l.b16 %v5327
    %v5367 = vunpack.c.l.b16 %v5328
    %v5368 = vunpack.c.l.b16 %v5329
    %v5369 = vunpack.c.l.b16 %v5330
    %v5370 = vpack.c.b16 %v5355, %v5354
    %v5371 = vpack.c.b16 %v5357, %v5356
    %v5372 = vpack.c.b16 %v5359, %v5358
    %v5373 = vpack.c.b16 %v5361, %v5360
    %v5374 = vpack.c.b16 %v5363, %v5362
    %v5375 = vpack.c.b16 %v5365, %v5364
    %v5376 = vpack.c.b16 %v5367, %v5366
    %v5377 = vpack.c.b16 %v5369, %v5368
    %5386 = vmatprep.subr.bf16.mxu0 0
    %5387 = vmatpush1.bf16.msra.mxu0 %v5370
    %5388 = vmatprep.subr.bf16.mxu0 0
    %5389 = vmatpush1.bf16.msra.mxu0 %v5371
    %5390 = vmatprep.subr.bf16.mxu0 0
    %5391 = vmatpush1.bf16.msra.mxu0 %v5372
    %5392 = vmatprep.subr.bf16.mxu0 0
    %5393 = vmatpush1.bf16.msra.mxu0 %v5373
    %5394 = vmatprep.subr.bf16.mxu0 0
    %5395 = vmatpush1.bf16.msra.mxu0 %v5374
    %5396 = vmatprep.subr.bf16.mxu0 0
    %5397 = vmatpush1.bf16.msra.mxu0 %v5375
    %5398 = vmatprep.subr.bf16.mxu0 0
    %5399 = vmatpush1.bf16.msra.mxu0 %v5376
    %5400 = vmatprep.subr.bf16.mxu0 0
    %5401 = vmatpush1.bf16.msra.mxu0 %v5377
    %5402 = vmatprep.subr.bf16.mxu0 0
    %5403 = vmatpush1.bf16.msra.mxu0 0
    %5404 = vmatprep.subr.bf16.mxu0 0
    %5405 = vmatpush1.bf16.msra.mxu0 0
    %5406 = vmatprep.subr.bf16.mxu0 0
    %5407 = vmatpush1.bf16.msra.mxu0 0
    %5408 = vmatprep.subr.bf16.mxu0 0
    %5409 = vmatpush1.bf16.msra.mxu0 0
    %5410 = vmatprep.subr.bf16.mxu0 0
    %5411 = vmatpush1.bf16.msra.mxu0 0
    %5412 = vmatprep.subr.bf16.mxu0 0
    %5413 = vmatpush1.bf16.msra.mxu0 0
    %5414 = vmatprep.subr.bf16.mxu0 0
    %5415 = vmatpush1.bf16.msra.mxu0 0
    %5416 = vmatprep.subr.bf16.mxu0 0
    %5417 = vmatpush1.bf16.msra.mxu0 0
    %5418 = vmatprep.mubr.bf16.mxu0 0
    %5419 = vmatmul.mubr.bf16.gmra.mrb[0].mxu0 %v5314
    %v5420 = vpop.f32.mrb[0].mxu0
    %v5421 = vadd.f32 %v5336, %v5420
    %v5422 = vpop.f32.mrb[0].mxu0
    %v5423 = vpop.f32.mrb[0].mxu0
    %v5424 = vadd.f32 %v5336, %v5423
    %v5425 = vpop.f32.mrb[0].mxu0
    %5426 = vdwg.mxu0
    %5427 = vst [vmem:[#allocation20] sm:$0xff] %v5421
    %5428 = vst [vmem:[#allocation20 + $0x8] sm:$0xff] %v5424
    // Predicated region
    $region90: #{tpu_custom_call.1} parent=1 // pred_check
      _
    $region91: #{tpu_custom_call.1} parent=1 // pred_check_branch
      %5430 = sbr.rel (0) target = $region93
    $region92: #{tpu_custom_call.1} parent=1 // pred_region
      %s5432 = ssub.s32 256, 256
      %5433 = vsyncadd [#allocation4], %s5432
      %s5434 = sshll.u32 [#allocation20], 4
      %s5435 = int_to_ptr.vmem [resolvable:$true] %s5434
      %5440 = dma.vmem_to_hbm [thread:$0]  %s5435, 256, %s11, [#allocation4], 128, 128, 8
    $region93: #{tpu_custom_call.1} parent=1 // pred_fallthru
      _
    // Predicated region
    $region94: #{tpu_custom_call.1} parent=1 // pred_check
      _
    $region95: #{tpu_custom_call.1} parent=1 // pred_check_branch
      %5442 = sbr.rel (0) target = $region97
    $region96: #{tpu_custom_call.1} parent=1 // pred_region
      %5443 = dma.done [#allocation4], 256
    $region97: #{tpu_custom_call.1} parent=1 // pred_fallthru
      _
    %5444 = vsyncpa [#allocation3], 1
    %5445 = vsyncpa [#allocation6], 1
    %5446 = vsyncpa [#allocation9], 1
    %5447 = vsyncpa [#allocation12], 1
    %5448 = vsyncpa [#allocation15], 1
    %5449 = vsyncpa [#allocation18], 1
    %5450 = vsyncpa [#allocation4], 1

</llo_original>
